<compile_context>
chip_gen: v7x
topology: tpu7x:2x2x1
jax: 0.10.0
libtpu: 0.0.40
codegen_flags: <defaults>
</compile_context>

<pallas_src>
import functools

import jax
import jax.numpy as jnp
import numpy as np
from jax.experimental import pallas as pl
from jax.experimental.pallas import tpu as pltpu


def _conv_relu3d_kernel(x_ref, w_ref, b_ref, o_ref, *,
                        dtile, kd_sz, kh_sz, kw_sz, wp, sp, cout):
    """One (batch n, depth-tile i) grid step.

    x_ref: (1, Dvol, Cin, Sp)  bf16  whole padded volume of batch element n
    w_ref: (KD*KH*KW, Cout, Cin) bf16 per-tap weight matrices
    b_ref: (Cout, 1)           f32   bias
    o_ref: (1, Cout, dtile*Sp) f32   output tile, NCDHW order, lane-dense
    """
    i = pl.program_id(1)
    d_base = i * dtile

    # Bias folded into the accumulator init (hoisted: broadcast is not CSE'd).
    bias = jnp.broadcast_to(b_ref[...].astype(jnp.float32), (cout, sp))

    # Depth slabs needed by this tile (dtile outputs + KD-1 halo), each a ready
    # (Cin, Sp) matmul RHS, loaded once from the resident volume block.
    slabs = [x_ref[0, d_base + s] for s in range(dtile + kd_sz - 1)]

    def shifted(slab, off):
        # Output lane j must read input lane j + off.  Wrapped lanes only land
        # in padding positions (Sp >= Hp*Wp) that are cropped on the host, so a
        # concat-based left rotate with guaranteed semantics is sufficient.
        if off == 0:
            return slab
        return jnp.concatenate([slab[:, off:], slab[:, :off]], axis=1)

    for dd in range(dtile):                      # static unroll
        acc = bias
        t = 0
        for dk in range(kd_sz):
            slab = slabs[dd + dk]
            for hk in range(kh_sz):
                for wk in range(kw_sz):
                    rhs = shifted(slab, hk * wp + wk)
                    acc = acc + jnp.dot(w_ref[t], rhs,
                                        preferred_element_type=jnp.float32)
                    t += 1
        o_ref[0, :, dd * sp:(dd + 1) * sp] = (
            jnp.maximum(acc, 0.0).astype(o_ref.dtype))


def conv_relu3d(x, weight, bias, *, compute_dtype=jnp.bfloat16):
    """ReLU(Conv3d(x, weight, bias)) with 'same' padding, stride 1.

    x:      (N, Cin, D, H, W)       float32 (PyTorch NCDHW layout)
    weight: (Cout, Cin, KD, KH, KW) float32
    bias:   (Cout,)                 float32
    returns (N, Cout, D, H, W)      float32
    """
    N, Cin, D, H, W = x.shape
    Cout, Cin_w, KD, KH, KW = weight.shape
    assert Cin == Cin_w
    # TODO(synk): only odd kernel sizes, stride 1, dilation 1, groups=1
    # (torch 'same' with even K needs asymmetric padding).
    assert KD % 2 == 1 and KH % 2 == 1 and KW % 2 == 1

    pd, ph, pw = KD // 2, KH // 2, KW // 2
    Hp, Wp = H + 2 * ph, W + 2 * pw
    S = Hp * Wp
    Sp = -(-S // 128) * 128                      # lane-dense slab stride

    # ---- generation-aware VMEM limit and VMEM-budget-driven depth tile ----
    try:
        vmem_cap = pltpu.get_tpu_info().vmem_capacity_bytes
    except Exception:
        vmem_cap = 64 * 1024 * 1024              # conservative (v7x per-TC)
    vmem_limit = int(min(0.75 * vmem_cap, 100 * 1024 * 1024))
    budget = vmem_limit // 2
    in_isz = jnp.dtype(compute_dtype).itemsize

    def _fits(dt):
        dpad = -(-D // dt) * dt
        dvol = dpad + KD - 1
        in_b = 2 * Cin * dvol * Sp * in_isz      # double-buffered volume block
        out_b = 2 * Cout * dt * Sp * 4           # double-buffered f32 out tile
        w_b = KD * KH * KW * Cout * Cin * in_isz + Cout * 4
        return in_b + out_b + w_b <= budget

    dtile = max(1, min(D, max(1, 4096 // Sp)))   # ~4K lanes/step target
    if D >= 2:
        dtile = min(dtile, (D + 1) // 2)         # >= 2 depth tiles (megacore)
    while dtile > 1 and not _fits(dtile):
        dtile //= 2
    # TODO(synk): add a depth-windowed (manual-DMA) variant for volumes whose
    # padded activations do not fit in VMEM; not needed at these shapes.
    assert _fits(dtile), "padded volume too large for volume-resident kernel"

    n_d_tiles = -(-D // dtile)
    Dpad = n_d_tiles * dtile
    Dvol = Dpad + KD - 1
    tm = dtile * Sp

    # ---- glue: one zero-pad + layout change, NO tap expansion ----
    xb = x.astype(compute_dtype)
    xp = jnp.pad(xb, ((0, 0), (0, 0),
                      (pd, pd + (Dpad - D)), (ph, ph), (pw, pw)))
    xp = jnp.transpose(xp, (0, 2, 1, 3, 4)).reshape(N, Dvol, Cin, S)
    if Sp != S:
        xp = jnp.pad(xp, ((0, 0), (0, 0), (0, 0), (0, Sp - S)))

    T = KD * KH * KW
    w_taps = jnp.transpose(weight, (2, 3, 4, 0, 1)).reshape(T, Cout, Cin)
    w_taps = w_taps.astype(compute_dtype)
    b_col = bias.astype(jnp.float32).reshape(Cout, 1)

    kernel = functools.partial(_conv_relu3d_kernel, dtile=dtile, kd_sz=KD,
                               kh_sz=KH, kw_sz=KW, wp=Wp, sp=Sp, cout=Cout)

    cost = pl.CostEstimate(
        flops=2 * N * Dpad * Sp * Cout * Cin * T,
        transcendentals=0,
        bytes_accessed=(xp.size * in_isz + w_taps.size * in_isz
                        + b_col.size * 4 + N * Cout * Dpad * Sp * 4))

    out = pl.pallas_call(
        kernel,
        out_shape=jax.ShapeDtypeStruct((N, Cout, Dpad * Sp), jnp.float32),
        grid_spec=pltpu.PrefetchScalarGridSpec(
            num_scalar_prefetch=0,
            grid=(N, n_d_tiles),
            in_specs=[
                # whole padded volume of batch n; constant over the depth-tile
                # axis -> fetched once per n by the pipeliner.
                pl.BlockSpec((1, Dvol, Cin, Sp), lambda n, i: (n, 0, 0, 0)),
                pl.BlockSpec((T, Cout, Cin), lambda n, i: (0, 0, 0)),
                pl.BlockSpec((Cout, 1), lambda n, i: (0, 0)),
            ],
            out_specs=pl.BlockSpec((1, Cout, tm), lambda n, i: (n, 0, i)),
        ),
        compiler_params=pltpu.CompilerParams(
            dimension_semantics=("parallel", "parallel"),
            vmem_limit_bytes=vmem_limit),
        cost_estimate=cost,
    )(xp, w_taps, b_col)

    # ---- crop padding; output is already in NCDHW order (no transpose) ----
    out = out.reshape(N, Cout, Dpad, Sp)[:, :, :D, :S]
    out = out.reshape(N, Cout, D, Hp, Wp)[:, :, :, :H, :W]
    return out


if __name__ == "__main__":
    key = jax.random.PRNGKey(0)
    kx, kw_key, kb = jax.random.split(key, 3)

    # ConvRelu3D(in_channels=4, out_channels=8, kernel_size=3, padding='same')
    N, Cin, Cout = 2, 4, 8
    D = H = W = 8
    K = 3

    x = jax.random.normal(kx, (N, Cin, D, H, W), dtype=jnp.float32)
    weight = jax.random.normal(kw_key, (Cout, Cin, K, K, K),
                               dtype=jnp.float32) * 0.1
    bias = jax.random.normal(kb, (Cout,), dtype=jnp.float32) * 0.1

    out = jax.block_until_ready(conv_relu3d(x, weight, bias))

    # Reference: XLA conv (same semantics as torch Conv3d + ReLU), f32.
    ref = jax.lax.conv_general_dilated(
        x, weight, window_strides=(1, 1, 1),
        padding=[(K // 2, K // 2)] * 3,
        dimension_numbers=("NCDHW", "OIDHW", "NCDHW"))
    ref = jnp.maximum(ref + bias[None, :, None, None, None], 0.0)

    # bf16 MXU operands, f32 accumulation -> loosened tolerance.
    np.testing.assert_allclose(np.asarray(out), np.asarray(ref),
                               rtol=2e-2, atol=2e-2)

    print("KERNEL_OK")
</pallas_src>

<mosaic_0001>
module attributes {stable_mosaic.version = 11 : i64} {
  func.func @_conv_relu3d_kernel(%arg0: i32, %arg1: i32, %arg2: memref<1x10x4x128xbf16, #tpu.memory_space<vmem>>, %arg3: memref<27x8x4xbf16, #tpu.memory_space<vmem>>, %arg4: memref<8x1xf32, #tpu.memory_space<vmem>>, %arg5: memref<1x8x512xf32, #tpu.memory_space<vmem>>) attributes {dimension_semantics = [#tpu.dimension_semantics<parallel>, #tpu.dimension_semantics<parallel>], iteration_bounds = array<i64: 2, 2>, scalar_prefetch = 0 : i64, scratch_operands = 0 : i64, tpu.core_type = #tpu.core_type<tc>, window_params = [{transform_indices = @transform_0, window_bounds = array<i64: 1, 10, 4, 128>}, {pipeline_mode = #tpu.pipeline_mode<synchronous>, transform_indices = @transform_1, window_bounds = array<i64: 27, 8, 4>}, {pipeline_mode = #tpu.pipeline_mode<synchronous>, transform_indices = @transform_2, window_bounds = array<i64: 8, 1>}, {transform_indices = @transform_3, window_bounds = array<i64: 1, 8, 512>}]} {
    %c4_i32 = arith.constant 4 : i32
    %0 = arith.muli %arg1, %c4_i32 : i32
    %c0 = arith.constant 0 : index
    %c0_0 = arith.constant 0 : index
    %1 = vector.load %arg4[%c0, %c0_0] : memref<8x1xf32, #tpu.memory_space<vmem>>, vector<8x1xf32>
    %2 = vector.shape_cast %1 : vector<8x1xf32> to vector<8x1xf32>
    %3 = vector.broadcast %2 : vector<8x1xf32> to vector<8x128xf32>
    %c0_i32 = arith.constant 0 : i32
    %4 = arith.addi %0, %c0_i32 : i32
    %c0_1 = arith.constant 0 : index
    %5 = arith.index_cast %4 : i32 to index
    %c0_2 = arith.constant 0 : index
    %c0_3 = arith.constant 0 : index
    %6 = vector.load %arg2[%c0_1, %5, %c0_2, %c0_3] : memref<1x10x4x128xbf16, #tpu.memory_space<vmem>>, vector<1x1x4x128xbf16>
    %7 = vector.shape_cast %6 : vector<1x1x4x128xbf16> to vector<4x128xbf16>
    %c1_i32 = arith.constant 1 : i32
    %8 = arith.addi %0, %c1_i32 : i32
    %c0_4 = arith.constant 0 : index
    %9 = arith.index_cast %8 : i32 to index
    %c0_5 = arith.constant 0 : index
    %c0_6 = arith.constant 0 : index
    %10 = vector.load %arg2[%c0_4, %9, %c0_5, %c0_6] : memref<1x10x4x128xbf16, #tpu.memory_space<vmem>>, vector<1x1x4x128xbf16>
    %11 = vector.shape_cast %10 : vector<1x1x4x128xbf16> to vector<4x128xbf16>
    %c2_i32 = arith.constant 2 : i32
    %12 = arith.addi %0, %c2_i32 : i32
    %c0_7 = arith.constant 0 : index
    %13 = arith.index_cast %12 : i32 to index
    %c0_8 = arith.constant 0 : index
    %c0_9 = arith.constant 0 : index
    %14 = vector.load %arg2[%c0_7, %13, %c0_8, %c0_9] : memref<1x10x4x128xbf16, #tpu.memory_space<vmem>>, vector<1x1x4x128xbf16>
    %15 = vector.shape_cast %14 : vector<1x1x4x128xbf16> to vector<4x128xbf16>
    %c3_i32 = arith.constant 3 : i32
    %16 = arith.addi %0, %c3_i32 : i32
    %c0_10 = arith.constant 0 : index
    %17 = arith.index_cast %16 : i32 to index
    %c0_11 = arith.constant 0 : index
    %c0_12 = arith.constant 0 : index
    %18 = vector.load %arg2[%c0_10, %17, %c0_11, %c0_12] : memref<1x10x4x128xbf16, #tpu.memory_space<vmem>>, vector<1x1x4x128xbf16>
    %19 = vector.shape_cast %18 : vector<1x1x4x128xbf16> to vector<4x128xbf16>
    %c4_i32_13 = arith.constant 4 : i32
    %20 = arith.addi %0, %c4_i32_13 : i32
    %c0_14 = arith.constant 0 : index
    %21 = arith.index_cast %20 : i32 to index
    %c0_15 = arith.constant 0 : index
    %c0_16 = arith.constant 0 : index
    %22 = vector.load %arg2[%c0_14, %21, %c0_15, %c0_16] : memref<1x10x4x128xbf16, #tpu.memory_space<vmem>>, vector<1x1x4x128xbf16>
    %23 = vector.shape_cast %22 : vector<1x1x4x128xbf16> to vector<4x128xbf16>
    %c5_i32 = arith.constant 5 : i32
    %24 = arith.addi %0, %c5_i32 : i32
    %c0_17 = arith.constant 0 : index
    %25 = arith.index_cast %24 : i32 to index
    %c0_18 = arith.constant 0 : index
    %c0_19 = arith.constant 0 : index
    %26 = vector.load %arg2[%c0_17, %25, %c0_18, %c0_19] : memref<1x10x4x128xbf16, #tpu.memory_space<vmem>>, vector<1x1x4x128xbf16>
    %27 = vector.shape_cast %26 : vector<1x1x4x128xbf16> to vector<4x128xbf16>
    %c0_20 = arith.constant 0 : index
    %c0_21 = arith.constant 0 : index
    %c0_22 = arith.constant 0 : index
    %28 = vector.load %arg3[%c0_20, %c0_21, %c0_22] : memref<27x8x4xbf16, #tpu.memory_space<vmem>>, vector<1x8x4xbf16>
    %29 = vector.shape_cast %28 : vector<1x8x4xbf16> to vector<8x4xbf16>
    %cst = arith.constant dense<0.000000e+00> : vector<8x128xf32>
    %30 = tpu.matmul %29, %7, %cst {dimension_numbers = #tpu.dot_dimension_numbers<[1], [0], [0], [1], [0, 0, 1, 1], [], []>} : vector<8x4xbf16>, vector<4x128xbf16>, vector<8x128xf32> -> vector<8x128xf32>
    %31 = arith.addf %3, %30 : vector<8x128xf32>
    %32 = vector.extract_strided_slice %7 {offsets = [0, 1], sizes = [4, 127], strides = [1, 1]} : vector<4x128xbf16> to vector<4x127xbf16>
    %33 = vector.extract_strided_slice %7 {offsets = [0, 0], sizes = [4, 1], strides = [1, 1]} : vector<4x128xbf16> to vector<4x1xbf16>
    %34 = tpu.concatenate %32, %33 in 1 : vector<4x127xbf16>, vector<4x1xbf16> -> vector<4x128xbf16>
    %c1 = arith.constant 1 : index
    %c0_23 = arith.constant 0 : index
    %c0_24 = arith.constant 0 : index
    %35 = vector.load %arg3[%c1, %c0_23, %c0_24] : memref<27x8x4xbf16, #tpu.memory_space<vmem>>, vector<1x8x4xbf16>
    %36 = vector.shape_cast %35 : vector<1x8x4xbf16> to vector<8x4xbf16>
    %cst_25 = arith.constant dense<0.000000e+00> : vector<8x128xf32>
    %37 = tpu.matmul %36, %34, %cst_25 {dimension_numbers = #tpu.dot_dimension_numbers<[1], [0], [0], [1], [0, 0, 1, 1], [], []>} : vector<8x4xbf16>, vector<4x128xbf16>, vector<8x128xf32> -> vector<8x128xf32>
    %38 = arith.addf %31, %37 : vector<8x128xf32>
    %39 = vector.extract_strided_slice %7 {offsets = [0, 2], sizes = [4, 126], strides = [1, 1]} : vector<4x128xbf16> to vector<4x126xbf16>
    %40 = vector.extract_strided_slice %7 {offsets = [0, 0], sizes = [4, 2], strides = [1, 1]} : vector<4x128xbf16> to vector<4x2xbf16>
    %41 = tpu.concatenate %39, %40 in 1 : vector<4x126xbf16>, vector<4x2xbf16> -> vector<4x128xbf16>
    %c2 = arith.constant 2 : index
    %c0_26 = arith.constant 0 : index
    %c0_27 = arith.constant 0 : index
    %42 = vector.load %arg3[%c2, %c0_26, %c0_27] : memref<27x8x4xbf16, #tpu.memory_space<vmem>>, vector<1x8x4xbf16>
    %43 = vector.shape_cast %42 : vector<1x8x4xbf16> to vector<8x4xbf16>
    %cst_28 = arith.constant dense<0.000000e+00> : vector<8x128xf32>
    %44 = tpu.matmul %43, %41, %cst_28 {dimension_numbers = #tpu.dot_dimension_numbers<[1], [0], [0], [1], [0, 0, 1, 1], [], []>} : vector<8x4xbf16>, vector<4x128xbf16>, vector<8x128xf32> -> vector<8x128xf32>
    %45 = arith.addf %38, %44 : vector<8x128xf32>
    %46 = vector.extract_strided_slice %7 {offsets = [0, 10], sizes = [4, 118], strides = [1, 1]} : vector<4x128xbf16> to vector<4x118xbf16>
    %47 = vector.extract_strided_slice %7 {offsets = [0, 0], sizes = [4, 10], strides = [1, 1]} : vector<4x128xbf16> to vector<4x10xbf16>
    %48 = tpu.concatenate %46, %47 in 1 : vector<4x118xbf16>, vector<4x10xbf16> -> vector<4x128xbf16>
    %c3 = arith.constant 3 : index
    %c0_29 = arith.constant 0 : index
    %c0_30 = arith.constant 0 : index
    %49 = vector.load %arg3[%c3, %c0_29, %c0_30] : memref<27x8x4xbf16, #tpu.memory_space<vmem>>, vector<1x8x4xbf16>
    %50 = vector.shape_cast %49 : vector<1x8x4xbf16> to vector<8x4xbf16>
    %cst_31 = arith.constant dense<0.000000e+00> : vector<8x128xf32>
    %51 = tpu.matmul %50, %48, %cst_31 {dimension_numbers = #tpu.dot_dimension_numbers<[1], [0], [0], [1], [0, 0, 1, 1], [], []>} : vector<8x4xbf16>, vector<4x128xbf16>, vector<8x128xf32> -> vector<8x128xf32>
    %52 = arith.addf %45, %51 : vector<8x128xf32>
    %53 = vector.extract_strided_slice %7 {offsets = [0, 11], sizes = [4, 117], strides = [1, 1]} : vector<4x128xbf16> to vector<4x117xbf16>
    %54 = vector.extract_strided_slice %7 {offsets = [0, 0], sizes = [4, 11], strides = [1, 1]} : vector<4x128xbf16> to vector<4x11xbf16>
    %55 = tpu.concatenate %53, %54 in 1 : vector<4x117xbf16>, vector<4x11xbf16> -> vector<4x128xbf16>
    %c4 = arith.constant 4 : index
    %c0_32 = arith.constant 0 : index
    %c0_33 = arith.constant 0 : index
    %56 = vector.load %arg3[%c4, %c0_32, %c0_33] : memref<27x8x4xbf16, #tpu.memory_space<vmem>>, vector<1x8x4xbf16>
    %57 = vector.shape_cast %56 : vector<1x8x4xbf16> to vector<8x4xbf16>
    %cst_34 = arith.constant dense<0.000000e+00> : vector<8x128xf32>
    %58 = tpu.matmul %57, %55, %cst_34 {dimension_numbers = #tpu.dot_dimension_numbers<[1], [0], [0], [1], [0, 0, 1, 1], [], []>} : vector<8x4xbf16>, vector<4x128xbf16>, vector<8x128xf32> -> vector<8x128xf32>
    %59 = arith.addf %52, %58 : vector<8x128xf32>
    %60 = vector.extract_strided_slice %7 {offsets = [0, 12], sizes = [4, 116], strides = [1, 1]} : vector<4x128xbf16> to vector<4x116xbf16>
    %61 = vector.extract_strided_slice %7 {offsets = [0, 0], sizes = [4, 12], strides = [1, 1]} : vector<4x128xbf16> to vector<4x12xbf16>
    %62 = tpu.concatenate %60, %61 in 1 : vector<4x116xbf16>, vector<4x12xbf16> -> vector<4x128xbf16>
    %c5 = arith.constant 5 : index
    %c0_35 = arith.constant 0 : index
    %c0_36 = arith.constant 0 : index
    %63 = vector.load %arg3[%c5, %c0_35, %c0_36] : memref<27x8x4xbf16, #tpu.memory_space<vmem>>, vector<1x8x4xbf16>
    %64 = vector.shape_cast %63 : vector<1x8x4xbf16> to vector<8x4xbf16>
    %cst_37 = arith.constant dense<0.000000e+00> : vector<8x128xf32>
    %65 = tpu.matmul %64, %62, %cst_37 {dimension_numbers = #tpu.dot_dimension_numbers<[1], [0], [0], [1], [0, 0, 1, 1], [], []>} : vector<8x4xbf16>, vector<4x128xbf16>, vector<8x128xf32> -> vector<8x128xf32>
    %66 = arith.addf %59, %65 : vector<8x128xf32>
    %67 = vector.extract_strided_slice %7 {offsets = [0, 20], sizes = [4, 108], strides = [1, 1]} : vector<4x128xbf16> to vector<4x108xbf16>
    %68 = vector.extract_strided_slice %7 {offsets = [0, 0], sizes = [4, 20], strides = [1, 1]} : vector<4x128xbf16> to vector<4x20xbf16>
    %69 = tpu.concatenate %67, %68 in 1 : vector<4x108xbf16>, vector<4x20xbf16> -> vector<4x128xbf16>
    %c6 = arith.constant 6 : index
    %c0_38 = arith.constant 0 : index
    %c0_39 = arith.constant 0 : index
    %70 = vector.load %arg3[%c6, %c0_38, %c0_39] : memref<27x8x4xbf16, #tpu.memory_space<vmem>>, vector<1x8x4xbf16>
    %71 = vector.shape_cast %70 : vector<1x8x4xbf16> to vector<8x4xbf16>
    %cst_40 = arith.constant dense<0.000000e+00> : vector<8x128xf32>
    %72 = tpu.matmul %71, %69, %cst_40 {dimension_numbers = #tpu.dot_dimension_numbers<[1], [0], [0], [1], [0, 0, 1, 1], [], []>} : vector<8x4xbf16>, vector<4x128xbf16>, vector<8x128xf32> -> vector<8x128xf32>
    %73 = arith.addf %66, %72 : vector<8x128xf32>
    %74 = vector.extract_strided_slice %7 {offsets = [0, 21], sizes = [4, 107], strides = [1, 1]} : vector<4x128xbf16> to vector<4x107xbf16>
    %75 = vector.extract_strided_slice %7 {offsets = [0, 0], sizes = [4, 21], strides = [1, 1]} : vector<4x128xbf16> to vector<4x21xbf16>
    %76 = tpu.concatenate %74, %75 in 1 : vector<4x107xbf16>, vector<4x21xbf16> -> vector<4x128xbf16>
    %c7 = arith.constant 7 : index
    %c0_41 = arith.constant 0 : index
    %c0_42 = arith.constant 0 : index
    %77 = vector.load %arg3[%c7, %c0_41, %c0_42] : memref<27x8x4xbf16, #tpu.memory_space<vmem>>, vector<1x8x4xbf16>
    %78 = vector.shape_cast %77 : vector<1x8x4xbf16> to vector<8x4xbf16>
    %cst_43 = arith.constant dense<0.000000e+00> : vector<8x128xf32>
    %79 = tpu.matmul %78, %76, %cst_43 {dimension_numbers = #tpu.dot_dimension_numbers<[1], [0], [0], [1], [0, 0, 1, 1], [], []>} : vector<8x4xbf16>, vector<4x128xbf16>, vector<8x128xf32> -> vector<8x128xf32>
    %80 = arith.addf %73, %79 : vector<8x128xf32>
    %81 = vector.extract_strided_slice %7 {offsets = [0, 22], sizes = [4, 106], strides = [1, 1]} : vector<4x128xbf16> to vector<4x106xbf16>
    %82 = vector.extract_strided_slice %7 {offsets = [0, 0], sizes = [4, 22], strides = [1, 1]} : vector<4x128xbf16> to vector<4x22xbf16>
    %83 = tpu.concatenate %81, %82 in 1 : vector<4x106xbf16>, vector<4x22xbf16> -> vector<4x128xbf16>
    %c8 = arith.constant 8 : index
    %c0_44 = arith.constant 0 : index
    %c0_45 = arith.constant 0 : index
    %84 = vector.load %arg3[%c8, %c0_44, %c0_45] : memref<27x8x4xbf16, #tpu.memory_space<vmem>>, vector<1x8x4xbf16>
    %85 = vector.shape_cast %84 : vector<1x8x4xbf16> to vector<8x4xbf16>
    %cst_46 = arith.constant dense<0.000000e+00> : vector<8x128xf32>
    %86 = tpu.matmul %85, %83, %cst_46 {dimension_numbers = #tpu.dot_dimension_numbers<[1], [0], [0], [1], [0, 0, 1, 1], [], []>} : vector<8x4xbf16>, vector<4x128xbf16>, vector<8x128xf32> -> vector<8x128xf32>
    %87 = arith.addf %80, %86 : vector<8x128xf32>
    %c9 = arith.constant 9 : index
    %c0_47 = arith.constant 0 : index
    %c0_48 = arith.constant 0 : index
    %88 = vector.load %arg3[%c9, %c0_47, %c0_48] : memref<27x8x4xbf16, #tpu.memory_space<vmem>>, vector<1x8x4xbf16>
    %89 = vector.shape_cast %88 : vector<1x8x4xbf16> to vector<8x4xbf16>
    %cst_49 = arith.constant dense<0.000000e+00> : vector<8x128xf32>
    %90 = tpu.matmul %89, %11, %cst_49 {dimension_numbers = #tpu.dot_dimension_numbers<[1], [0], [0], [1], [0, 0, 1, 1], [], []>} : vector<8x4xbf16>, vector<4x128xbf16>, vector<8x128xf32> -> vector<8x128xf32>
    %91 = arith.addf %87, %90 : vector<8x128xf32>
    %92 = vector.extract_strided_slice %11 {offsets = [0, 1], sizes = [4, 127], strides = [1, 1]} : vector<4x128xbf16> to vector<4x127xbf16>
    %93 = vector.extract_strided_slice %11 {offsets = [0, 0], sizes = [4, 1], strides = [1, 1]} : vector<4x128xbf16> to vector<4x1xbf16>
    %94 = tpu.concatenate %92, %93 in 1 : vector<4x127xbf16>, vector<4x1xbf16> -> vector<4x128xbf16>
    %c10 = arith.constant 10 : index
    %c0_50 = arith.constant 0 : index
    %c0_51 = arith.constant 0 : index
    %95 = vector.load %arg3[%c10, %c0_50, %c0_51] : memref<27x8x4xbf16, #tpu.memory_space<vmem>>, vector<1x8x4xbf16>
    %96 = vector.shape_cast %95 : vector<1x8x4xbf16> to vector<8x4xbf16>
    %cst_52 = arith.constant dense<0.000000e+00> : vector<8x128xf32>
    %97 = tpu.matmul %96, %94, %cst_52 {dimension_numbers = #tpu.dot_dimension_numbers<[1], [0], [0], [1], [0, 0, 1, 1], [], []>} : vector<8x4xbf16>, vector<4x128xbf16>, vector<8x128xf32> -> vector<8x128xf32>
    %98 = arith.addf %91, %97 : vector<8x128xf32>
    %99 = vector.extract_strided_slice %11 {offsets = [0, 2], sizes = [4, 126], strides = [1, 1]} : vector<4x128xbf16> to vector<4x126xbf16>
    %100 = vector.extract_strided_slice %11 {offsets = [0, 0], sizes = [4, 2], strides = [1, 1]} : vector<4x128xbf16> to vector<4x2xbf16>
    %101 = tpu.concatenate %99, %100 in 1 : vector<4x126xbf16>, vector<4x2xbf16> -> vector<4x128xbf16>
    %c11 = arith.constant 11 : index
    %c0_53 = arith.constant 0 : index
    %c0_54 = arith.constant 0 : index
    %102 = vector.load %arg3[%c11, %c0_53, %c0_54] : memref<27x8x4xbf16, #tpu.memory_space<vmem>>, vector<1x8x4xbf16>
    %103 = vector.shape_cast %102 : vector<1x8x4xbf16> to vector<8x4xbf16>
    %cst_55 = arith.constant dense<0.000000e+00> : vector<8x128xf32>
    %104 = tpu.matmul %103, %101, %cst_55 {dimension_numbers = #tpu.dot_dimension_numbers<[1], [0], [0], [1], [0, 0, 1, 1], [], []>} : vector<8x4xbf16>, vector<4x128xbf16>, vector<8x128xf32> -> vector<8x128xf32>
    %105 = arith.addf %98, %104 : vector<8x128xf32>
    %106 = vector.extract_strided_slice %11 {offsets = [0, 10], sizes = [4, 118], strides = [1, 1]} : vector<4x128xbf16> to vector<4x118xbf16>
    %107 = vector.extract_strided_slice %11 {offsets = [0, 0], sizes = [4, 10], strides = [1, 1]} : vector<4x128xbf16> to vector<4x10xbf16>
    %108 = tpu.concatenate %106, %107 in 1 : vector<4x118xbf16>, vector<4x10xbf16> -> vector<4x128xbf16>
    %c12 = arith.constant 12 : index
    %c0_56 = arith.constant 0 : index
    %c0_57 = arith.constant 0 : index
    %109 = vector.load %arg3[%c12, %c0_56, %c0_57] : memref<27x8x4xbf16, #tpu.memory_space<vmem>>, vector<1x8x4xbf16>
    %110 = vector.shape_cast %109 : vector<1x8x4xbf16> to vector<8x4xbf16>
    %cst_58 = arith.constant dense<0.000000e+00> : vector<8x128xf32>
    %111 = tpu.matmul %110, %108, %cst_58 {dimension_numbers = #tpu.dot_dimension_numbers<[1], [0], [0], [1], [0, 0, 1, 1], [], []>} : vector<8x4xbf16>, vector<4x128xbf16>, vector<8x128xf32> -> vector<8x128xf32>
    %112 = arith.addf %105, %111 : vector<8x128xf32>
    %113 = vector.extract_strided_slice %11 {offsets = [0, 11], sizes = [4, 117], strides = [1, 1]} : vector<4x128xbf16> to vector<4x117xbf16>
    %114 = vector.extract_strided_slice %11 {offsets = [0, 0], sizes = [4, 11], strides = [1, 1]} : vector<4x128xbf16> to vector<4x11xbf16>
    %115 = tpu.concatenate %113, %114 in 1 : vector<4x117xbf16>, vector<4x11xbf16> -> vector<4x128xbf16>
    %c13 = arith.constant 13 : index
    %c0_59 = arith.constant 0 : index
    %c0_60 = arith.constant 0 : index
    %116 = vector.load %arg3[%c13, %c0_59, %c0_60] : memref<27x8x4xbf16, #tpu.memory_space<vmem>>, vector<1x8x4xbf16>
    %117 = vector.shape_cast %116 : vector<1x8x4xbf16> to vector<8x4xbf16>
    %cst_61 = arith.constant dense<0.000000e+00> : vector<8x128xf32>
    %118 = tpu.matmul %117, %115, %cst_61 {dimension_numbers = #tpu.dot_dimension_numbers<[1], [0], [0], [1], [0, 0, 1, 1], [], []>} : vector<8x4xbf16>, vector<4x128xbf16>, vector<8x128xf32> -> vector<8x128xf32>
    %119 = arith.addf %112, %118 : vector<8x128xf32>
    %120 = vector.extract_strided_slice %11 {offsets = [0, 12], sizes = [4, 116], strides = [1, 1]} : vector<4x128xbf16> to vector<4x116xbf16>
    %121 = vector.extract_strided_slice %11 {offsets = [0, 0], sizes = [4, 12], strides = [1, 1]} : vector<4x128xbf16> to vector<4x12xbf16>
    %122 = tpu.concatenate %120, %121 in 1 : vector<4x116xbf16>, vector<4x12xbf16> -> vector<4x128xbf16>
    %c14 = arith.constant 14 : index
    %c0_62 = arith.constant 0 : index
    %c0_63 = arith.constant 0 : index
    %123 = vector.load %arg3[%c14, %c0_62, %c0_63] : memref<27x8x4xbf16, #tpu.memory_space<vmem>>, vector<1x8x4xbf16>
    %124 = vector.shape_cast %123 : vector<1x8x4xbf16> to vector<8x4xbf16>
    %cst_64 = arith.constant dense<0.000000e+00> : vector<8x128xf32>
    %125 = tpu.matmul %124, %122, %cst_64 {dimension_numbers = #tpu.dot_dimension_numbers<[1], [0], [0], [1], [0, 0, 1, 1], [], []>} : vector<8x4xbf16>, vector<4x128xbf16>, vector<8x128xf32> -> vector<8x128xf32>
    %126 = arith.addf %119, %125 : vector<8x128xf32>
    %127 = vector.extract_strided_slice %11 {offsets = [0, 20], sizes = [4, 108], strides = [1, 1]} : vector<4x128xbf16> to vector<4x108xbf16>
    %128 = vector.extract_strided_slice %11 {offsets = [0, 0], sizes = [4, 20], strides = [1, 1]} : vector<4x128xbf16> to vector<4x20xbf16>
    %129 = tpu.concatenate %127, %128 in 1 : vector<4x108xbf16>, vector<4x20xbf16> -> vector<4x128xbf16>
    %c15 = arith.constant 15 : index
    %c0_65 = arith.constant 0 : index
    %c0_66 = arith.constant 0 : index
    %130 = vector.load %arg3[%c15, %c0_65, %c0_66] : memref<27x8x4xbf16, #tpu.memory_space<vmem>>, vector<1x8x4xbf16>
    %131 = vector.shape_cast %130 : vector<1x8x4xbf16> to vector<8x4xbf16>
    %cst_67 = arith.constant dense<0.000000e+00> : vector<8x128xf32>
    %132 = tpu.matmul %131, %129, %cst_67 {dimension_numbers = #tpu.dot_dimension_numbers<[1], [0], [0], [1], [0, 0, 1, 1], [], []>} : vector<8x4xbf16>, vector<4x128xbf16>, vector<8x128xf32> -> vector<8x128xf32>
    %133 = arith.addf %126, %132 : vector<8x128xf32>
    %134 = vector.extract_strided_slice %11 {offsets = [0, 21], sizes = [4, 107], strides = [1, 1]} : vector<4x128xbf16> to vector<4x107xbf16>
    %135 = vector.extract_strided_slice %11 {offsets = [0, 0], sizes = [4, 21], strides = [1, 1]} : vector<4x128xbf16> to vector<4x21xbf16>
    %136 = tpu.concatenate %134, %135 in 1 : vector<4x107xbf16>, vector<4x21xbf16> -> vector<4x128xbf16>
    %c16 = arith.constant 16 : index
    %c0_68 = arith.constant 0 : index
    %c0_69 = arith.constant 0 : index
    %137 = vector.load %arg3[%c16, %c0_68, %c0_69] : memref<27x8x4xbf16, #tpu.memory_space<vmem>>, vector<1x8x4xbf16>
    %138 = vector.shape_cast %137 : vector<1x8x4xbf16> to vector<8x4xbf16>
    %cst_70 = arith.constant dense<0.000000e+00> : vector<8x128xf32>
    %139 = tpu.matmul %138, %136, %cst_70 {dimension_numbers = #tpu.dot_dimension_numbers<[1], [0], [0], [1], [0, 0, 1, 1], [], []>} : vector<8x4xbf16>, vector<4x128xbf16>, vector<8x128xf32> -> vector<8x128xf32>
    %140 = arith.addf %133, %139 : vector<8x128xf32>
    %141 = vector.extract_strided_slice %11 {offsets = [0, 22], sizes = [4, 106], strides = [1, 1]} : vector<4x128xbf16> to vector<4x106xbf16>
    %142 = vector.extract_strided_slice %11 {offsets = [0, 0], sizes = [4, 22], strides = [1, 1]} : vector<4x128xbf16> to vector<4x22xbf16>
    %143 = tpu.concatenate %141, %142 in 1 : vector<4x106xbf16>, vector<4x22xbf16> -> vector<4x128xbf16>
    %c17 = arith.constant 17 : index
    %c0_71 = arith.constant 0 : index
    %c0_72 = arith.constant 0 : index
    %144 = vector.load %arg3[%c17, %c0_71, %c0_72] : memref<27x8x4xbf16, #tpu.memory_space<vmem>>, vector<1x8x4xbf16>
    %145 = vector.shape_cast %144 : vector<1x8x4xbf16> to vector<8x4xbf16>
    %cst_73 = arith.constant dense<0.000000e+00> : vector<8x128xf32>
    %146 = tpu.matmul %145, %143, %cst_73 {dimension_numbers = #tpu.dot_dimension_numbers<[1], [0], [0], [1], [0, 0, 1, 1], [], []>} : vector<8x4xbf16>, vector<4x128xbf16>, vector<8x128xf32> -> vector<8x128xf32>
    %147 = arith.addf %140, %146 : vector<8x128xf32>
    %c18 = arith.constant 18 : index
    %c0_74 = arith.constant 0 : index
    %c0_75 = arith.constant 0 : index
    %148 = vector.load %arg3[%c18, %c0_74, %c0_75] : memref<27x8x4xbf16, #tpu.memory_space<vmem>>, vector<1x8x4xbf16>
    %149 = vector.shape_cast %148 : vector<1x8x4xbf16> to vector<8x4xbf16>
    %cst_76 = arith.constant dense<0.000000e+00> : vector<8x128xf32>
    %150 = tpu.matmul %149, %15, %cst_76 {dimension_numbers = #tpu.dot_dimension_numbers<[1], [0], [0], [1], [0, 0, 1, 1], [], []>} : vector<8x4xbf16>, vector<4x128xbf16>, vector<8x128xf32> -> vector<8x128xf32>
    %151 = arith.addf %147, %150 : vector<8x128xf32>
    %152 = vector.extract_strided_slice %15 {offsets = [0, 1], sizes = [4, 127], strides = [1, 1]} : vector<4x128xbf16> to vector<4x127xbf16>
    %153 = vector.extract_strided_slice %15 {offsets = [0, 0], sizes = [4, 1], strides = [1, 1]} : vector<4x128xbf16> to vector<4x1xbf16>
    %154 = tpu.concatenate %152, %153 in 1 : vector<4x127xbf16>, vector<4x1xbf16> -> vector<4x128xbf16>
    %c19 = arith.constant 19 : index
    %c0_77 = arith.constant 0 : index
    %c0_78 = arith.constant 0 : index
    %155 = vector.load %arg3[%c19, %c0_77, %c0_78] : memref<27x8x4xbf16, #tpu.memory_space<vmem>>, vector<1x8x4xbf16>
    %156 = vector.shape_cast %155 : vector<1x8x4xbf16> to vector<8x4xbf16>
    %cst_79 = arith.constant dense<0.000000e+00> : vector<8x128xf32>
    %157 = tpu.matmul %156, %154, %cst_79 {dimension_numbers = #tpu.dot_dimension_numbers<[1], [0], [0], [1], [0, 0, 1, 1], [], []>} : vector<8x4xbf16>, vector<4x128xbf16>, vector<8x128xf32> -> vector<8x128xf32>
    %158 = arith.addf %151, %157 : vector<8x128xf32>
    %159 = vector.extract_strided_slice %15 {offsets = [0, 2], sizes = [4, 126], strides = [1, 1]} : vector<4x128xbf16> to vector<4x126xbf16>
    %160 = vector.extract_strided_slice %15 {offsets = [0, 0], sizes = [4, 2], strides = [1, 1]} : vector<4x128xbf16> to vector<4x2xbf16>
    %161 = tpu.concatenate %159, %160 in 1 : vector<4x126xbf16>, vector<4x2xbf16> -> vector<4x128xbf16>
    %c20 = arith.constant 20 : index
    %c0_80 = arith.constant 0 : index
    %c0_81 = arith.constant 0 : index
    %162 = vector.load %arg3[%c20, %c0_80, %c0_81] : memref<27x8x4xbf16, #tpu.memory_space<vmem>>, vector<1x8x4xbf16>
    %163 = vector.shape_cast %162 : vector<1x8x4xbf16> to vector<8x4xbf16>
    %cst_82 = arith.constant dense<0.000000e+00> : vector<8x128xf32>
    %164 = tpu.matmul %163, %161, %cst_82 {dimension_numbers = #tpu.dot_dimension_numbers<[1], [0], [0], [1], [0, 0, 1, 1], [], []>} : vector<8x4xbf16>, vector<4x128xbf16>, vector<8x128xf32> -> vector<8x128xf32>
    %165 = arith.addf %158, %164 : vector<8x128xf32>
    %166 = vector.extract_strided_slice %15 {offsets = [0, 10], sizes = [4, 118], strides = [1, 1]} : vector<4x128xbf16> to vector<4x118xbf16>
    %167 = vector.extract_strided_slice %15 {offsets = [0, 0], sizes = [4, 10], strides = [1, 1]} : vector<4x128xbf16> to vector<4x10xbf16>
    %168 = tpu.concatenate %166, %167 in 1 : vector<4x118xbf16>, vector<4x10xbf16> -> vector<4x128xbf16>
    %c21 = arith.constant 21 : index
    %c0_83 = arith.constant 0 : index
    %c0_84 = arith.constant 0 : index
    %169 = vector.load %arg3[%c21, %c0_83, %c0_84] : memref<27x8x4xbf16, #tpu.memory_space<vmem>>, vector<1x8x4xbf16>
    %170 = vector.shape_cast %169 : vector<1x8x4xbf16> to vector<8x4xbf16>
    %cst_85 = arith.constant dense<0.000000e+00> : vector<8x128xf32>
    %171 = tpu.matmul %170, %168, %cst_85 {dimension_numbers = #tpu.dot_dimension_numbers<[1], [0], [0], [1], [0, 0, 1, 1], [], []>} : vector<8x4xbf16>, vector<4x128xbf16>, vector<8x128xf32> -> vector<8x128xf32>
    %172 = arith.addf %165, %171 : vector<8x128xf32>
    %173 = vector.extract_strided_slice %15 {offsets = [0, 11], sizes = [4, 117], strides = [1, 1]} : vector<4x128xbf16> to vector<4x117xbf16>
    %174 = vector.extract_strided_slice %15 {offsets = [0, 0], sizes = [4, 11], strides = [1, 1]} : vector<4x128xbf16> to vector<4x11xbf16>
    %175 = tpu.concatenate %173, %174 in 1 : vector<4x117xbf16>, vector<4x11xbf16> -> vector<4x128xbf16>
    %c22 = arith.constant 22 : index
    %c0_86 = arith.constant 0 : index
    %c0_87 = arith.constant 0 : index
    %176 = vector.load %arg3[%c22, %c0_86, %c0_87] : memref<27x8x4xbf16, #tpu.memory_space<vmem>>, vector<1x8x4xbf16>
    %177 = vector.shape_cast %176 : vector<1x8x4xbf16> to vector<8x4xbf16>
    %cst_88 = arith.constant dense<0.000000e+00> : vector<8x128xf32>
    %178 = tpu.matmul %177, %175, %cst_88 {dimension_numbers = #tpu.dot_dimension_numbers<[1], [0], [0], [1], [0, 0, 1, 1], [], []>} : vector<8x4xbf16>, vector<4x128xbf16>, vector<8x128xf32> -> vector<8x128xf32>
    %179 = arith.addf %172, %178 : vector<8x128xf32>
    %180 = vector.extract_strided_slice %15 {offsets = [0, 12], sizes = [4, 116], strides = [1, 1]} : vector<4x128xbf16> to vector<4x116xbf16>
    %181 = vector.extract_strided_slice %15 {offsets = [0, 0], sizes = [4, 12], strides = [1, 1]} : vector<4x128xbf16> to vector<4x12xbf16>
    %182 = tpu.concatenate %180, %181 in 1 : vector<4x116xbf16>, vector<4x12xbf16> -> vector<4x128xbf16>
    %c23 = arith.constant 23 : index
    %c0_89 = arith.constant 0 : index
    %c0_90 = arith.constant 0 : index
    %183 = vector.load %arg3[%c23, %c0_89, %c0_90] : memref<27x8x4xbf16, #tpu.memory_space<vmem>>, vector<1x8x4xbf16>
    %184 = vector.shape_cast %183 : vector<1x8x4xbf16> to vector<8x4xbf16>
    %cst_91 = arith.constant dense<0.000000e+00> : vector<8x128xf32>
    %185 = tpu.matmul %184, %182, %cst_91 {dimension_numbers = #tpu.dot_dimension_numbers<[1], [0], [0], [1], [0, 0, 1, 1], [], []>} : vector<8x4xbf16>, vector<4x128xbf16>, vector<8x128xf32> -> vector<8x128xf32>
    %186 = arith.addf %179, %185 : vector<8x128xf32>
    %187 = vector.extract_strided_slice %15 {offsets = [0, 20], sizes = [4, 108], strides = [1, 1]} : vector<4x128xbf16> to vector<4x108xbf16>
    %188 = vector.extract_strided_slice %15 {offsets = [0, 0], sizes = [4, 20], strides = [1, 1]} : vector<4x128xbf16> to vector<4x20xbf16>
    %189 = tpu.concatenate %187, %188 in 1 : vector<4x108xbf16>, vector<4x20xbf16> -> vector<4x128xbf16>
    %c24 = arith.constant 24 : index
    %c0_92 = arith.constant 0 : index
    %c0_93 = arith.constant 0 : index
    %190 = vector.load %arg3[%c24, %c0_92, %c0_93] : memref<27x8x4xbf16, #tpu.memory_space<vmem>>, vector<1x8x4xbf16>
    %191 = vector.shape_cast %190 : vector<1x8x4xbf16> to vector<8x4xbf16>
    %cst_94 = arith.constant dense<0.000000e+00> : vector<8x128xf32>
    %192 = tpu.matmul %191, %189, %cst_94 {dimension_numbers = #tpu.dot_dimension_numbers<[1], [0], [0], [1], [0, 0, 1, 1], [], []>} : vector<8x4xbf16>, vector<4x128xbf16>, vector<8x128xf32> -> vector<8x128xf32>
    %193 = arith.addf %186, %192 : vector<8x128xf32>
    %194 = vector.extract_strided_slice %15 {offsets = [0, 21], sizes = [4, 107], strides = [1, 1]} : vector<4x128xbf16> to vector<4x107xbf16>
    %195 = vector.extract_strided_slice %15 {offsets = [0, 0], sizes = [4, 21], strides = [1, 1]} : vector<4x128xbf16> to vector<4x21xbf16>
    %196 = tpu.concatenate %194, %195 in 1 : vector<4x107xbf16>, vector<4x21xbf16> -> vector<4x128xbf16>
    %c25 = arith.constant 25 : index
    %c0_95 = arith.constant 0 : index
    %c0_96 = arith.constant 0 : index
    %197 = vector.load %arg3[%c25, %c0_95, %c0_96] : memref<27x8x4xbf16, #tpu.memory_space<vmem>>, vector<1x8x4xbf16>
    %198 = vector.shape_cast %197 : vector<1x8x4xbf16> to vector<8x4xbf16>
    %cst_97 = arith.constant dense<0.000000e+00> : vector<8x128xf32>
    %199 = tpu.matmul %198, %196, %cst_97 {dimension_numbers = #tpu.dot_dimension_numbers<[1], [0], [0], [1], [0, 0, 1, 1], [], []>} : vector<8x4xbf16>, vector<4x128xbf16>, vector<8x128xf32> -> vector<8x128xf32>
    %200 = arith.addf %193, %199 : vector<8x128xf32>
    %201 = vector.extract_strided_slice %15 {offsets = [0, 22], sizes = [4, 106], strides = [1, 1]} : vector<4x128xbf16> to vector<4x106xbf16>
    %202 = vector.extract_strided_slice %15 {offsets = [0, 0], sizes = [4, 22], strides = [1, 1]} : vector<4x128xbf16> to vector<4x22xbf16>
    %203 = tpu.concatenate %201, %202 in 1 : vector<4x106xbf16>, vector<4x22xbf16> -> vector<4x128xbf16>
    %c26 = arith.constant 26 : index
    %c0_98 = arith.constant 0 : index
    %c0_99 = arith.constant 0 : index
    %204 = vector.load %arg3[%c26, %c0_98, %c0_99] : memref<27x8x4xbf16, #tpu.memory_space<vmem>>, vector<1x8x4xbf16>
    %205 = vector.shape_cast %204 : vector<1x8x4xbf16> to vector<8x4xbf16>
    %cst_100 = arith.constant dense<0.000000e+00> : vector<8x128xf32>
    %206 = tpu.matmul %205, %203, %cst_100 {dimension_numbers = #tpu.dot_dimension_numbers<[1], [0], [0], [1], [0, 0, 1, 1], [], []>} : vector<8x4xbf16>, vector<4x128xbf16>, vector<8x128xf32> -> vector<8x128xf32>
    %207 = arith.addf %200, %206 : vector<8x128xf32>
    %cst_101 = arith.constant 0.000000e+00 : f32
    %208 = vector.broadcast %cst_101 : f32 to vector<8x128xf32>
    %209 = arith.maximumf %207, %208 : vector<8x128xf32>
    %c0_102 = arith.constant 0 : index
    %c0_103 = arith.constant 0 : index
    %c0_104 = arith.constant 0 : index
    %210 = vector.load %arg5[%c0_102, %c0_103, %c0_104] : memref<1x8x512xf32, #tpu.memory_space<vmem>>, vector<1x8x128xf32>
    %211 = vector.shape_cast %210 : vector<1x8x128xf32> to vector<8x128xf32>
    %212 = vector.shape_cast %209 : vector<8x128xf32> to vector<1x8x128xf32>
    tpu.vector_store %arg5[%c0_102, %c0_103, %c0_104], %212 {strides = array<i32>} : memref<1x8x512xf32, #tpu.memory_space<vmem>>, vector<1x8x128xf32>,
    %c0_105 = arith.constant 0 : index
    %c0_106 = arith.constant 0 : index
    %c0_107 = arith.constant 0 : index
    %213 = vector.load %arg3[%c0_105, %c0_106, %c0_107] : memref<27x8x4xbf16, #tpu.memory_space<vmem>>, vector<1x8x4xbf16>
    %214 = vector.shape_cast %213 : vector<1x8x4xbf16> to vector<8x4xbf16>
    %cst_108 = arith.constant dense<0.000000e+00> : vector<8x128xf32>
    %215 = tpu.matmul %214, %11, %cst_108 {dimension_numbers = #tpu.dot_dimension_numbers<[1], [0], [0], [1], [0, 0, 1, 1], [], []>} : vector<8x4xbf16>, vector<4x128xbf16>, vector<8x128xf32> -> vector<8x128xf32>
    %216 = arith.addf %3, %215 : vector<8x128xf32>
    %217 = vector.extract_strided_slice %11 {offsets = [0, 1], sizes = [4, 127], strides = [1, 1]} : vector<4x128xbf16> to vector<4x127xbf16>
    %218 = vector.extract_strided_slice %11 {offsets = [0, 0], sizes = [4, 1], strides = [1, 1]} : vector<4x128xbf16> to vector<4x1xbf16>
    %219 = tpu.concatenate %217, %218 in 1 : vector<4x127xbf16>, vector<4x1xbf16> -> vector<4x128xbf16>
    %c1_109 = arith.constant 1 : index
    %c0_110 = arith.constant 0 : index
    %c0_111 = arith.constant 0 : index
    %220 = vector.load %arg3[%c1_109, %c0_110, %c0_111] : memref<27x8x4xbf16, #tpu.memory_space<vmem>>, vector<1x8x4xbf16>
    %221 = vector.shape_cast %220 : vector<1x8x4xbf16> to vector<8x4xbf16>
    %cst_112 = arith.constant dense<0.000000e+00> : vector<8x128xf32>
    %222 = tpu.matmul %221, %219, %cst_112 {dimension_numbers = #tpu.dot_dimension_numbers<[1], [0], [0], [1], [0, 0, 1, 1], [], []>} : vector<8x4xbf16>, vector<4x128xbf16>, vector<8x128xf32> -> vector<8x128xf32>
    %223 = arith.addf %216, %222 : vector<8x128xf32>
    %224 = vector.extract_strided_slice %11 {offsets = [0, 2], sizes = [4, 126], strides = [1, 1]} : vector<4x128xbf16> to vector<4x126xbf16>
    %225 = vector.extract_strided_slice %11 {offsets = [0, 0], sizes = [4, 2], strides = [1, 1]} : vector<4x128xbf16> to vector<4x2xbf16>
    %226 = tpu.concatenate %224, %225 in 1 : vector<4x126xbf16>, vector<4x2xbf16> -> vector<4x128xbf16>
    %c2_113 = arith.constant 2 : index
    %c0_114 = arith.constant 0 : index
    %c0_115 = arith.constant 0 : index
    %227 = vector.load %arg3[%c2_113, %c0_114, %c0_115] : memref<27x8x4xbf16, #tpu.memory_space<vmem>>, vector<1x8x4xbf16>
    %228 = vector.shape_cast %227 : vector<1x8x4xbf16> to vector<8x4xbf16>
    %cst_116 = arith.constant dense<0.000000e+00> : vector<8x128xf32>
    %229 = tpu.matmul %228, %226, %cst_116 {dimension_numbers = #tpu.dot_dimension_numbers<[1], [0], [0], [1], [0, 0, 1, 1], [], []>} : vector<8x4xbf16>, vector<4x128xbf16>, vector<8x128xf32> -> vector<8x128xf32>
    %230 = arith.addf %223, %229 : vector<8x128xf32>
    %231 = vector.extract_strided_slice %11 {offsets = [0, 10], sizes = [4, 118], strides = [1, 1]} : vector<4x128xbf16> to vector<4x118xbf16>
    %232 = vector.extract_strided_slice %11 {offsets = [0, 0], sizes = [4, 10], strides = [1, 1]} : vector<4x128xbf16> to vector<4x10xbf16>
    %233 = tpu.concatenate %231, %232 in 1 : vector<4x118xbf16>, vector<4x10xbf16> -> vector<4x128xbf16>
    %c3_117 = arith.constant 3 : index
    %c0_118 = arith.constant 0 : index
    %c0_119 = arith.constant 0 : index
    %234 = vector.load %arg3[%c3_117, %c0_118, %c0_119] : memref<27x8x4xbf16, #tpu.memory_space<vmem>>, vector<1x8x4xbf16>
    %235 = vector.shape_cast %234 : vector<1x8x4xbf16> to vector<8x4xbf16>
    %cst_120 = arith.constant dense<0.000000e+00> : vector<8x128xf32>
    %236 = tpu.matmul %235, %233, %cst_120 {dimension_numbers = #tpu.dot_dimension_numbers<[1], [0], [0], [1], [0, 0, 1, 1], [], []>} : vector<8x4xbf16>, vector<4x128xbf16>, vector<8x128xf32> -> vector<8x128xf32>
    %237 = arith.addf %230, %236 : vector<8x128xf32>
    %238 = vector.extract_strided_slice %11 {offsets = [0, 11], sizes = [4, 117], strides = [1, 1]} : vector<4x128xbf16> to vector<4x117xbf16>
    %239 = vector.extract_strided_slice %11 {offsets = [0, 0], sizes = [4, 11], strides = [1, 1]} : vector<4x128xbf16> to vector<4x11xbf16>
    %240 = tpu.concatenate %238, %239 in 1 : vector<4x117xbf16>, vector<4x11xbf16> -> vector<4x128xbf16>
    %c4_121 = arith.constant 4 : index
    %c0_122 = arith.constant 0 : index
    %c0_123 = arith.constant 0 : index
    %241 = vector.load %arg3[%c4_121, %c0_122, %c0_123] : memref<27x8x4xbf16, #tpu.memory_space<vmem>>, vector<1x8x4xbf16>
    %242 = vector.shape_cast %241 : vector<1x8x4xbf16> to vector<8x4xbf16>
    %cst_124 = arith.constant dense<0.000000e+00> : vector<8x128xf32>
    %243 = tpu.matmul %242, %240, %cst_124 {dimension_numbers = #tpu.dot_dimension_numbers<[1], [0], [0], [1], [0, 0, 1, 1], [], []>} : vector<8x4xbf16>, vector<4x128xbf16>, vector<8x128xf32> -> vector<8x128xf32>
    %244 = arith.addf %237, %243 : vector<8x128xf32>
    %245 = vector.extract_strided_slice %11 {offsets = [0, 12], sizes = [4, 116], strides = [1, 1]} : vector<4x128xbf16> to vector<4x116xbf16>
    %246 = vector.extract_strided_slice %11 {offsets = [0, 0], sizes = [4, 12], strides = [1, 1]} : vector<4x128xbf16> to vector<4x12xbf16>
    %247 = tpu.concatenate %245, %246 in 1 : vector<4x116xbf16>, vector<4x12xbf16> -> vector<4x128xbf16>
    %c5_125 = arith.constant 5 : index
    %c0_126 = arith.constant 0 : index
    %c0_127 = arith.constant 0 : index
    %248 = vector.load %arg3[%c5_125, %c0_126, %c0_127] : memref<27x8x4xbf16, #tpu.memory_space<vmem>>, vector<1x8x4xbf16>
    %249 = vector.shape_cast %248 : vector<1x8x4xbf16> to vector<8x4xbf16>
    %cst_128 = arith.constant dense<0.000000e+00> : vector<8x128xf32>
    %250 = tpu.matmul %249, %247, %cst_128 {dimension_numbers = #tpu.dot_dimension_numbers<[1], [0], [0], [1], [0, 0, 1, 1], [], []>} : vector<8x4xbf16>, vector<4x128xbf16>, vector<8x128xf32> -> vector<8x128xf32>
    %251 = arith.addf %244, %250 : vector<8x128xf32>
    %252 = vector.extract_strided_slice %11 {offsets = [0, 20], sizes = [4, 108], strides = [1, 1]} : vector<4x128xbf16> to vector<4x108xbf16>
    %253 = vector.extract_strided_slice %11 {offsets = [0, 0], sizes = [4, 20], strides = [1, 1]} : vector<4x128xbf16> to vector<4x20xbf16>
    %254 = tpu.concatenate %252, %253 in 1 : vector<4x108xbf16>, vector<4x20xbf16> -> vector<4x128xbf16>
    %c6_129 = arith.constant 6 : index
    %c0_130 = arith.constant 0 : index
    %c0_131 = arith.constant 0 : index
    %255 = vector.load %arg3[%c6_129, %c0_130, %c0_131] : memref<27x8x4xbf16, #tpu.memory_space<vmem>>, vector<1x8x4xbf16>
    %256 = vector.shape_cast %255 : vector<1x8x4xbf16> to vector<8x4xbf16>
    %cst_132 = arith.constant dense<0.000000e+00> : vector<8x128xf32>
    %257 = tpu.matmul %256, %254, %cst_132 {dimension_numbers = #tpu.dot_dimension_numbers<[1], [0], [0], [1], [0, 0, 1, 1], [], []>} : vector<8x4xbf16>, vector<4x128xbf16>, vector<8x128xf32> -> vector<8x128xf32>
    %258 = arith.addf %251, %257 : vector<8x128xf32>
    %259 = vector.extract_strided_slice %11 {offsets = [0, 21], sizes = [4, 107], strides = [1, 1]} : vector<4x128xbf16> to vector<4x107xbf16>
    %260 = vector.extract_strided_slice %11 {offsets = [0, 0], sizes = [4, 21], strides = [1, 1]} : vector<4x128xbf16> to vector<4x21xbf16>
    %261 = tpu.concatenate %259, %260 in 1 : vector<4x107xbf16>, vector<4x21xbf16> -> vector<4x128xbf16>
    %c7_133 = arith.constant 7 : index
    %c0_134 = arith.constant 0 : index
    %c0_135 = arith.constant 0 : index
    %262 = vector.load %arg3[%c7_133, %c0_134, %c0_135] : memref<27x8x4xbf16, #tpu.memory_space<vmem>>, vector<1x8x4xbf16>
    %263 = vector.shape_cast %262 : vector<1x8x4xbf16> to vector<8x4xbf16>
    %cst_136 = arith.constant dense<0.000000e+00> : vector<8x128xf32>
    %264 = tpu.matmul %263, %261, %cst_136 {dimension_numbers = #tpu.dot_dimension_numbers<[1], [0], [0], [1], [0, 0, 1, 1], [], []>} : vector<8x4xbf16>, vector<4x128xbf16>, vector<8x128xf32> -> vector<8x128xf32>
    %265 = arith.addf %258, %264 : vector<8x128xf32>
    %266 = vector.extract_strided_slice %11 {offsets = [0, 22], sizes = [4, 106], strides = [1, 1]} : vector<4x128xbf16> to vector<4x106xbf16>
    %267 = vector.extract_strided_slice %11 {offsets = [0, 0], sizes = [4, 22], strides = [1, 1]} : vector<4x128xbf16> to vector<4x22xbf16>
    %268 = tpu.concatenate %266, %267 in 1 : vector<4x106xbf16>, vector<4x22xbf16> -> vector<4x128xbf16>
    %c8_137 = arith.constant 8 : index
    %c0_138 = arith.constant 0 : index
    %c0_139 = arith.constant 0 : index
    %269 = vector.load %arg3[%c8_137, %c0_138, %c0_139] : memref<27x8x4xbf16, #tpu.memory_space<vmem>>, vector<1x8x4xbf16>
    %270 = vector.shape_cast %269 : vector<1x8x4xbf16> to vector<8x4xbf16>
    %cst_140 = arith.constant dense<0.000000e+00> : vector<8x128xf32>
    %271 = tpu.matmul %270, %268, %cst_140 {dimension_numbers = #tpu.dot_dimension_numbers<[1], [0], [0], [1], [0, 0, 1, 1], [], []>} : vector<8x4xbf16>, vector<4x128xbf16>, vector<8x128xf32> -> vector<8x128xf32>
    %272 = arith.addf %265, %271 : vector<8x128xf32>
    %c9_141 = arith.constant 9 : index
    %c0_142 = arith.constant 0 : index
    %c0_143 = arith.constant 0 : index
    %273 = vector.load %arg3[%c9_141, %c0_142, %c0_143] : memref<27x8x4xbf16, #tpu.memory_space<vmem>>, vector<1x8x4xbf16>
    %274 = vector.shape_cast %273 : vector<1x8x4xbf16> to vector<8x4xbf16>
    %cst_144 = arith.constant dense<0.000000e+00> : vector<8x128xf32>
    %275 = tpu.matmul %274, %15, %cst_144 {dimension_numbers = #tpu.dot_dimension_numbers<[1], [0], [0], [1], [0, 0, 1, 1], [], []>} : vector<8x4xbf16>, vector<4x128xbf16>, vector<8x128xf32> -> vector<8x128xf32>
    %276 = arith.addf %272, %275 : vector<8x128xf32>
    %277 = vector.extract_strided_slice %15 {offsets = [0, 1], sizes = [4, 127], strides = [1, 1]} : vector<4x128xbf16> to vector<4x127xbf16>
    %278 = vector.extract_strided_slice %15 {offsets = [0, 0], sizes = [4, 1], strides = [1, 1]} : vector<4x128xbf16> to vector<4x1xbf16>
    %279 = tpu.concatenate %277, %278 in 1 : vector<4x127xbf16>, vector<4x1xbf16> -> vector<4x128xbf16>
    %c10_145 = arith.constant 10 : index
    %c0_146 = arith.constant 0 : index
    %c0_147 = arith.constant 0 : index
    %280 = vector.load %arg3[%c10_145, %c0_146, %c0_147] : memref<27x8x4xbf16, #tpu.memory_space<vmem>>, vector<1x8x4xbf16>
    %281 = vector.shape_cast %280 : vector<1x8x4xbf16> to vector<8x4xbf16>
    %cst_148 = arith.constant dense<0.000000e+00> : vector<8x128xf32>
    %282 = tpu.matmul %281, %279, %cst_148 {dimension_numbers = #tpu.dot_dimension_numbers<[1], [0], [0], [1], [0, 0, 1, 1], [], []>} : vector<8x4xbf16>, vector<4x128xbf16>, vector<8x128xf32> -> vector<8x128xf32>
    %283 = arith.addf %276, %282 : vector<8x128xf32>
    %284 = vector.extract_strided_slice %15 {offsets = [0, 2], sizes = [4, 126], strides = [1, 1]} : vector<4x128xbf16> to vector<4x126xbf16>
    %285 = vector.extract_strided_slice %15 {offsets = [0, 0], sizes = [4, 2], strides = [1, 1]} : vector<4x128xbf16> to vector<4x2xbf16>
    %286 = tpu.concatenate %284, %285 in 1 : vector<4x126xbf16>, vector<4x2xbf16> -> vector<4x128xbf16>
    %c11_149 = arith.constant 11 : index
    %c0_150 = arith.constant 0 : index
    %c0_151 = arith.constant 0 : index
    %287 = vector.load %arg3[%c11_149, %c0_150, %c0_151] : memref<27x8x4xbf16, #tpu.memory_space<vmem>>, vector<1x8x4xbf16>
    %288 = vector.shape_cast %287 : vector<1x8x4xbf16> to vector<8x4xbf16>
    %cst_152 = arith.constant dense<0.000000e+00> : vector<8x128xf32>
    %289 = tpu.matmul %288, %286, %cst_152 {dimension_numbers = #tpu.dot_dimension_numbers<[1], [0], [0], [1], [0, 0, 1, 1], [], []>} : vector<8x4xbf16>, vector<4x128xbf16>, vector<8x128xf32> -> vector<8x128xf32>
    %290 = arith.addf %283, %289 : vector<8x128xf32>
    %291 = vector.extract_strided_slice %15 {offsets = [0, 10], sizes = [4, 118], strides = [1, 1]} : vector<4x128xbf16> to vector<4x118xbf16>
    %292 = vector.extract_strided_slice %15 {offsets = [0, 0], sizes = [4, 10], strides = [1, 1]} : vector<4x128xbf16> to vector<4x10xbf16>
    %293 = tpu.concatenate %291, %292 in 1 : vector<4x118xbf16>, vector<4x10xbf16> -> vector<4x128xbf16>
    %c12_153 = arith.constant 12 : index
    %c0_154 = arith.constant 0 : index
    %c0_155 = arith.constant 0 : index
    %294 = vector.load %arg3[%c12_153, %c0_154, %c0_155] : memref<27x8x4xbf16, #tpu.memory_space<vmem>>, vector<1x8x4xbf16>
    %295 = vector.shape_cast %294 : vector<1x8x4xbf16> to vector<8x4xbf16>
    %cst_156 = arith.constant dense<0.000000e+00> : vector<8x128xf32>
    %296 = tpu.matmul %295, %293, %cst_156 {dimension_numbers = #tpu.dot_dimension_numbers<[1], [0], [0], [1], [0, 0, 1, 1], [], []>} : vector<8x4xbf16>, vector<4x128xbf16>, vector<8x128xf32> -> vector<8x128xf32>
    %297 = arith.addf %290, %296 : vector<8x128xf32>
    %298 = vector.extract_strided_slice %15 {offsets = [0, 11], sizes = [4, 117], strides = [1, 1]} : vector<4x128xbf16> to vector<4x117xbf16>
    %299 = vector.extract_strided_slice %15 {offsets = [0, 0], sizes = [4, 11], strides = [1, 1]} : vector<4x128xbf16> to vector<4x11xbf16>
    %300 = tpu.concatenate %298, %299 in 1 : vector<4x117xbf16>, vector<4x11xbf16> -> vector<4x128xbf16>
    %c13_157 = arith.constant 13 : index
    %c0_158 = arith.constant 0 : index
    %c0_159 = arith.constant 0 : index
    %301 = vector.load %arg3[%c13_157, %c0_158, %c0_159] : memref<27x8x4xbf16, #tpu.memory_space<vmem>>, vector<1x8x4xbf16>
    %302 = vector.shape_cast %301 : vector<1x8x4xbf16> to vector<8x4xbf16>
    %cst_160 = arith.constant dense<0.000000e+00> : vector<8x128xf32>
    %303 = tpu.matmul %302, %300, %cst_160 {dimension_numbers = #tpu.dot_dimension_numbers<[1], [0], [0], [1], [0, 0, 1, 1], [], []>} : vector<8x4xbf16>, vector<4x128xbf16>, vector<8x128xf32> -> vector<8x128xf32>
    %304 = arith.addf %297, %303 : vector<8x128xf32>
    %305 = vector.extract_strided_slice %15 {offsets = [0, 12], sizes = [4, 116], strides = [1, 1]} : vector<4x128xbf16> to vector<4x116xbf16>
    %306 = vector.extract_strided_slice %15 {offsets = [0, 0], sizes = [4, 12], strides = [1, 1]} : vector<4x128xbf16> to vector<4x12xbf16>
    %307 = tpu.concatenate %305, %306 in 1 : vector<4x116xbf16>, vector<4x12xbf16> -> vector<4x128xbf16>
    %c14_161 = arith.constant 14 : index
    %c0_162 = arith.constant 0 : index
    %c0_163 = arith.constant 0 : index
    %308 = vector.load %arg3[%c14_161, %c0_162, %c0_163] : memref<27x8x4xbf16, #tpu.memory_space<vmem>>, vector<1x8x4xbf16>
    %309 = vector.shape_cast %308 : vector<1x8x4xbf16> to vector<8x4xbf16>
    %cst_164 = arith.constant dense<0.000000e+00> : vector<8x128xf32>
    %310 = tpu.matmul %309, %307, %cst_164 {dimension_numbers = #tpu.dot_dimension_numbers<[1], [0], [0], [1], [0, 0, 1, 1], [], []>} : vector<8x4xbf16>, vector<4x128xbf16>, vector<8x128xf32> -> vector<8x128xf32>
    %311 = arith.addf %304, %310 : vector<8x128xf32>
    %312 = vector.extract_strided_slice %15 {offsets = [0, 20], sizes = [4, 108], strides = [1, 1]} : vector<4x128xbf16> to vector<4x108xbf16>
    %313 = vector.extract_strided_slice %15 {offsets = [0, 0], sizes = [4, 20], strides = [1, 1]} : vector<4x128xbf16> to vector<4x20xbf16>
    %314 = tpu.concatenate %312, %313 in 1 : vector<4x108xbf16>, vector<4x20xbf16> -> vector<4x128xbf16>
    %c15_165 = arith.constant 15 : index
    %c0_166 = arith.constant 0 : index
    %c0_167 = arith.constant 0 : index
    %315 = vector.load %arg3[%c15_165, %c0_166, %c0_167] : memref<27x8x4xbf16, #tpu.memory_space<vmem>>, vector<1x8x4xbf16>
    %316 = vector.shape_cast %315 : vector<1x8x4xbf16> to vector<8x4xbf16>
    %cst_168 = arith.constant dense<0.000000e+00> : vector<8x128xf32>
    %317 = tpu.matmul %316, %314, %cst_168 {dimension_numbers = #tpu.dot_dimension_numbers<[1], [0], [0], [1], [0, 0, 1, 1], [], []>} : vector<8x4xbf16>, vector<4x128xbf16>, vector<8x128xf32> -> vector<8x128xf32>
    %318 = arith.addf %311, %317 : vector<8x128xf32>
    %319 = vector.extract_strided_slice %15 {offsets = [0, 21], sizes = [4, 107], strides = [1, 1]} : vector<4x128xbf16> to vector<4x107xbf16>
    %320 = vector.extract_strided_slice %15 {offsets = [0, 0], sizes = [4, 21], strides = [1, 1]} : vector<4x128xbf16> to vector<4x21xbf16>
    %321 = tpu.concatenate %319, %320 in 1 : vector<4x107xbf16>, vector<4x21xbf16> -> vector<4x128xbf16>
    %c16_169 = arith.constant 16 : index
    %c0_170 = arith.constant 0 : index
    %c0_171 = arith.constant 0 : index
    %322 = vector.load %arg3[%c16_169, %c0_170, %c0_171] : memref<27x8x4xbf16, #tpu.memory_space<vmem>>, vector<1x8x4xbf16>
    %323 = vector.shape_cast %322 : vector<1x8x4xbf16> to vector<8x4xbf16>
    %cst_172 = arith.constant dense<0.000000e+00> : vector<8x128xf32>
    %324 = tpu.matmul %323, %321, %cst_172 {dimension_numbers = #tpu.dot_dimension_numbers<[1], [0], [0], [1], [0, 0, 1, 1], [], []>} : vector<8x4xbf16>, vector<4x128xbf16>, vector<8x128xf32> -> vector<8x128xf32>
    %325 = arith.addf %318, %324 : vector<8x128xf32>
    %326 = vector.extract_strided_slice %15 {offsets = [0, 22], sizes = [4, 106], strides = [1, 1]} : vector<4x128xbf16> to vector<4x106xbf16>
    %327 = vector.extract_strided_slice %15 {offsets = [0, 0], sizes = [4, 22], strides = [1, 1]} : vector<4x128xbf16> to vector<4x22xbf16>
    %328 = tpu.concatenate %326, %327 in 1 : vector<4x106xbf16>, vector<4x22xbf16> -> vector<4x128xbf16>
    %c17_173 = arith.constant 17 : index
    %c0_174 = arith.constant 0 : index
    %c0_175 = arith.constant 0 : index
    %329 = vector.load %arg3[%c17_173, %c0_174, %c0_175] : memref<27x8x4xbf16, #tpu.memory_space<vmem>>, vector<1x8x4xbf16>
    %330 = vector.shape_cast %329 : vector<1x8x4xbf16> to vector<8x4xbf16>
    %cst_176 = arith.constant dense<0.000000e+00> : vector<8x128xf32>
    %331 = tpu.matmul %330, %328, %cst_176 {dimension_numbers = #tpu.dot_dimension_numbers<[1], [0], [0], [1], [0, 0, 1, 1], [], []>} : vector<8x4xbf16>, vector<4x128xbf16>, vector<8x128xf32> -> vector<8x128xf32>
    %332 = arith.addf %325, %331 : vector<8x128xf32>
    %c18_177 = arith.constant 18 : index
    %c0_178 = arith.constant 0 : index
    %c0_179 = arith.constant 0 : index
    %333 = vector.load %arg3[%c18_177, %c0_178, %c0_179] : memref<27x8x4xbf16, #tpu.memory_space<vmem>>, vector<1x8x4xbf16>
    %334 = vector.shape_cast %333 : vector<1x8x4xbf16> to vector<8x4xbf16>
    %cst_180 = arith.constant dense<0.000000e+00> : vector<8x128xf32>
    %335 = tpu.matmul %334, %19, %cst_180 {dimension_numbers = #tpu.dot_dimension_numbers<[1], [0], [0], [1], [0, 0, 1, 1], [], []>} : vector<8x4xbf16>, vector<4x128xbf16>, vector<8x128xf32> -> vector<8x128xf32>
    %336 = arith.addf %332, %335 : vector<8x128xf32>
    %337 = vector.extract_strided_slice %19 {offsets = [0, 1], sizes = [4, 127], strides = [1, 1]} : vector<4x128xbf16> to vector<4x127xbf16>
    %338 = vector.extract_strided_slice %19 {offsets = [0, 0], sizes = [4, 1], strides = [1, 1]} : vector<4x128xbf16> to vector<4x1xbf16>
    %339 = tpu.concatenate %337, %338 in 1 : vector<4x127xbf16>, vector<4x1xbf16> -> vector<4x128xbf16>
    %c19_181 = arith.constant 19 : index
    %c0_182 = arith.constant 0 : index
    %c0_183 = arith.constant 0 : index
    %340 = vector.load %arg3[%c19_181, %c0_182, %c0_183] : memref<27x8x4xbf16, #tpu.memory_space<vmem>>, vector<1x8x4xbf16>
    %341 = vector.shape_cast %340 : vector<1x8x4xbf16> to vector<8x4xbf16>
    %cst_184 = arith.constant dense<0.000000e+00> : vector<8x128xf32>
    %342 = tpu.matmul %341, %339, %cst_184 {dimension_numbers = #tpu.dot_dimension_numbers<[1], [0], [0], [1], [0, 0, 1, 1], [], []>} : vector<8x4xbf16>, vector<4x128xbf16>, vector<8x128xf32> -> vector<8x128xf32>
    %343 = arith.addf %336, %342 : vector<8x128xf32>
    %344 = vector.extract_strided_slice %19 {offsets = [0, 2], sizes = [4, 126], strides = [1, 1]} : vector<4x128xbf16> to vector<4x126xbf16>
    %345 = vector.extract_strided_slice %19 {offsets = [0, 0], sizes = [4, 2], strides = [1, 1]} : vector<4x128xbf16> to vector<4x2xbf16>
    %346 = tpu.concatenate %344, %345 in 1 : vector<4x126xbf16>, vector<4x2xbf16> -> vector<4x128xbf16>
    %c20_185 = arith.constant 20 : index
    %c0_186 = arith.constant 0 : index
    %c0_187 = arith.constant 0 : index
    %347 = vector.load %arg3[%c20_185, %c0_186, %c0_187] : memref<27x8x4xbf16, #tpu.memory_space<vmem>>, vector<1x8x4xbf16>
    %348 = vector.shape_cast %347 : vector<1x8x4xbf16> to vector<8x4xbf16>
    %cst_188 = arith.constant dense<0.000000e+00> : vector<8x128xf32>
    %349 = tpu.matmul %348, %346, %cst_188 {dimension_numbers = #tpu.dot_dimension_numbers<[1], [0], [0], [1], [0, 0, 1, 1], [], []>} : vector<8x4xbf16>, vector<4x128xbf16>, vector<8x128xf32> -> vector<8x128xf32>
    %350 = arith.addf %343, %349 : vector<8x128xf32>
    %351 = vector.extract_strided_slice %19 {offsets = [0, 10], sizes = [4, 118], strides = [1, 1]} : vector<4x128xbf16> to vector<4x118xbf16>
    %352 = vector.extract_strided_slice %19 {offsets = [0, 0], sizes = [4, 10], strides = [1, 1]} : vector<4x128xbf16> to vector<4x10xbf16>
    %353 = tpu.concatenate %351, %352 in 1 : vector<4x118xbf16>, vector<4x10xbf16> -> vector<4x128xbf16>
    %c21_189 = arith.constant 21 : index
    %c0_190 = arith.constant 0 : index
    %c0_191 = arith.constant 0 : index
    %354 = vector.load %arg3[%c21_189, %c0_190, %c0_191] : memref<27x8x4xbf16, #tpu.memory_space<vmem>>, vector<1x8x4xbf16>
    %355 = vector.shape_cast %354 : vector<1x8x4xbf16> to vector<8x4xbf16>
    %cst_192 = arith.constant dense<0.000000e+00> : vector<8x128xf32>
    %356 = tpu.matmul %355, %353, %cst_192 {dimension_numbers = #tpu.dot_dimension_numbers<[1], [0], [0], [1], [0, 0, 1, 1], [], []>} : vector<8x4xbf16>, vector<4x128xbf16>, vector<8x128xf32> -> vector<8x128xf32>
    %357 = arith.addf %350, %356 : vector<8x128xf32>
    %358 = vector.extract_strided_slice %19 {offsets = [0, 11], sizes = [4, 117], strides = [1, 1]} : vector<4x128xbf16> to vector<4x117xbf16>
    %359 = vector.extract_strided_slice %19 {offsets = [0, 0], sizes = [4, 11], strides = [1, 1]} : vector<4x128xbf16> to vector<4x11xbf16>
    %360 = tpu.concatenate %358, %359 in 1 : vector<4x117xbf16>, vector<4x11xbf16> -> vector<4x128xbf16>
    %c22_193 = arith.constant 22 : index
    %c0_194 = arith.constant 0 : index
    %c0_195 = arith.constant 0 : index
    %361 = vector.load %arg3[%c22_193, %c0_194, %c0_195] : memref<27x8x4xbf16, #tpu.memory_space<vmem>>, vector<1x8x4xbf16>
    %362 = vector.shape_cast %361 : vector<1x8x4xbf16> to vector<8x4xbf16>
    %cst_196 = arith.constant dense<0.000000e+00> : vector<8x128xf32>
    %363 = tpu.matmul %362, %360, %cst_196 {dimension_numbers = #tpu.dot_dimension_numbers<[1], [0], [0], [1], [0, 0, 1, 1], [], []>} : vector<8x4xbf16>, vector<4x128xbf16>, vector<8x128xf32> -> vector<8x128xf32>
    %364 = arith.addf %357, %363 : vector<8x128xf32>
    %365 = vector.extract_strided_slice %19 {offsets = [0, 12], sizes = [4, 116], strides = [1, 1]} : vector<4x128xbf16> to vector<4x116xbf16>
    %366 = vector.extract_strided_slice %19 {offsets = [0, 0], sizes = [4, 12], strides = [1, 1]} : vector<4x128xbf16> to vector<4x12xbf16>
    %367 = tpu.concatenate %365, %366 in 1 : vector<4x116xbf16>, vector<4x12xbf16> -> vector<4x128xbf16>
    %c23_197 = arith.constant 23 : index
    %c0_198 = arith.constant 0 : index
    %c0_199 = arith.constant 0 : index
    %368 = vector.load %arg3[%c23_197, %c0_198, %c0_199] : memref<27x8x4xbf16, #tpu.memory_space<vmem>>, vector<1x8x4xbf16>
    %369 = vector.shape_cast %368 : vector<1x8x4xbf16> to vector<8x4xbf16>
    %cst_200 = arith.constant dense<0.000000e+00> : vector<8x128xf32>
    %370 = tpu.matmul %369, %367, %cst_200 {dimension_numbers = #tpu.dot_dimension_numbers<[1], [0], [0], [1], [0, 0, 1, 1], [], []>} : vector<8x4xbf16>, vector<4x128xbf16>, vector<8x128xf32> -> vector<8x128xf32>
    %371 = arith.addf %364, %370 : vector<8x128xf32>
    %372 = vector.extract_strided_slice %19 {offsets = [0, 20], sizes = [4, 108], strides = [1, 1]} : vector<4x128xbf16> to vector<4x108xbf16>
    %373 = vector.extract_strided_slice %19 {offsets = [0, 0], sizes = [4, 20], strides = [1, 1]} : vector<4x128xbf16> to vector<4x20xbf16>
    %374 = tpu.concatenate %372, %373 in 1 : vector<4x108xbf16>, vector<4x20xbf16> -> vector<4x128xbf16>
    %c24_201 = arith.constant 24 : index
    %c0_202 = arith.constant 0 : index
    %c0_203 = arith.constant 0 : index
    %375 = vector.load %arg3[%c24_201, %c0_202, %c0_203] : memref<27x8x4xbf16, #tpu.memory_space<vmem>>, vector<1x8x4xbf16>
    %376 = vector.shape_cast %375 : vector<1x8x4xbf16> to vector<8x4xbf16>
    %cst_204 = arith.constant dense<0.000000e+00> : vector<8x128xf32>
    %377 = tpu.matmul %376, %374, %cst_204 {dimension_numbers = #tpu.dot_dimension_numbers<[1], [0], [0], [1], [0, 0, 1, 1], [], []>} : vector<8x4xbf16>, vector<4x128xbf16>, vector<8x128xf32> -> vector<8x128xf32>
    %378 = arith.addf %371, %377 : vector<8x128xf32>
    %379 = vector.extract_strided_slice %19 {offsets = [0, 21], sizes = [4, 107], strides = [1, 1]} : vector<4x128xbf16> to vector<4x107xbf16>
    %380 = vector.extract_strided_slice %19 {offsets = [0, 0], sizes = [4, 21], strides = [1, 1]} : vector<4x128xbf16> to vector<4x21xbf16>
    %381 = tpu.concatenate %379, %380 in 1 : vector<4x107xbf16>, vector<4x21xbf16> -> vector<4x128xbf16>
    %c25_205 = arith.constant 25 : index
    %c0_206 = arith.constant 0 : index
    %c0_207 = arith.constant 0 : index
    %382 = vector.load %arg3[%c25_205, %c0_206, %c0_207] : memref<27x8x4xbf16, #tpu.memory_space<vmem>>, vector<1x8x4xbf16>
    %383 = vector.shape_cast %382 : vector<1x8x4xbf16> to vector<8x4xbf16>
    %cst_208 = arith.constant dense<0.000000e+00> : vector<8x128xf32>
    %384 = tpu.matmul %383, %381, %cst_208 {dimension_numbers = #tpu.dot_dimension_numbers<[1], [0], [0], [1], [0, 0, 1, 1], [], []>} : vector<8x4xbf16>, vector<4x128xbf16>, vector<8x128xf32> -> vector<8x128xf32>
    %385 = arith.addf %378, %384 : vector<8x128xf32>
    %386 = vector.extract_strided_slice %19 {offsets = [0, 22], sizes = [4, 106], strides = [1, 1]} : vector<4x128xbf16> to vector<4x106xbf16>
    %387 = vector.extract_strided_slice %19 {offsets = [0, 0], sizes = [4, 22], strides = [1, 1]} : vector<4x128xbf16> to vector<4x22xbf16>
    %388 = tpu.concatenate %386, %387 in 1 : vector<4x106xbf16>, vector<4x22xbf16> -> vector<4x128xbf16>
    %c26_209 = arith.constant 26 : index
    %c0_210 = arith.constant 0 : index
    %c0_211 = arith.constant 0 : index
    %389 = vector.load %arg3[%c26_209, %c0_210, %c0_211] : memref<27x8x4xbf16, #tpu.memory_space<vmem>>, vector<1x8x4xbf16>
    %390 = vector.shape_cast %389 : vector<1x8x4xbf16> to vector<8x4xbf16>
    %cst_212 = arith.constant dense<0.000000e+00> : vector<8x128xf32>
    %391 = tpu.matmul %390, %388, %cst_212 {dimension_numbers = #tpu.dot_dimension_numbers<[1], [0], [0], [1], [0, 0, 1, 1], [], []>} : vector<8x4xbf16>, vector<4x128xbf16>, vector<8x128xf32> -> vector<8x128xf32>
    %392 = arith.addf %385, %391 : vector<8x128xf32>
    %cst_213 = arith.constant 0.000000e+00 : f32
    %393 = vector.broadcast %cst_213 : f32 to vector<8x128xf32>
    %394 = arith.maximumf %392, %393 : vector<8x128xf32>
    %c0_214 = arith.constant 0 : index
    %c0_215 = arith.constant 0 : index
    %c128 = arith.constant 128 : index
    %395 = vector.load %arg5[%c0_214, %c0_215, %c128] : memref<1x8x512xf32, #tpu.memory_space<vmem>>, vector<1x8x128xf32>
    %396 = vector.shape_cast %395 : vector<1x8x128xf32> to vector<8x128xf32>
    %397 = vector.shape_cast %394 : vector<8x128xf32> to vector<1x8x128xf32>
    tpu.vector_store %arg5[%c0_214, %c0_215, %c128], %397 {strides = array<i32>} : memref<1x8x512xf32, #tpu.memory_space<vmem>>, vector<1x8x128xf32>,
    %c0_216 = arith.constant 0 : index
    %c0_217 = arith.constant 0 : index
    %c0_218 = arith.constant 0 : index
    %398 = vector.load %arg3[%c0_216, %c0_217, %c0_218] : memref<27x8x4xbf16, #tpu.memory_space<vmem>>, vector<1x8x4xbf16>
    %399 = vector.shape_cast %398 : vector<1x8x4xbf16> to vector<8x4xbf16>
    %cst_219 = arith.constant dense<0.000000e+00> : vector<8x128xf32>
    %400 = tpu.matmul %399, %15, %cst_219 {dimension_numbers = #tpu.dot_dimension_numbers<[1], [0], [0], [1], [0, 0, 1, 1], [], []>} : vector<8x4xbf16>, vector<4x128xbf16>, vector<8x128xf32> -> vector<8x128xf32>
    %401 = arith.addf %3, %400 : vector<8x128xf32>
    %402 = vector.extract_strided_slice %15 {offsets = [0, 1], sizes = [4, 127], strides = [1, 1]} : vector<4x128xbf16> to vector<4x127xbf16>
    %403 = vector.extract_strided_slice %15 {offsets = [0, 0], sizes = [4, 1], strides = [1, 1]} : vector<4x128xbf16> to vector<4x1xbf16>
    %404 = tpu.concatenate %402, %403 in 1 : vector<4x127xbf16>, vector<4x1xbf16> -> vector<4x128xbf16>
    %c1_220 = arith.constant 1 : index
    %c0_221 = arith.constant 0 : index
    %c0_222 = arith.constant 0 : index
    %405 = vector.load %arg3[%c1_220, %c0_221, %c0_222] : memref<27x8x4xbf16, #tpu.memory_space<vmem>>, vector<1x8x4xbf16>
    %406 = vector.shape_cast %405 : vector<1x8x4xbf16> to vector<8x4xbf16>
    %cst_223 = arith.constant dense<0.000000e+00> : vector<8x128xf32>
    %407 = tpu.matmul %406, %404, %cst_223 {dimension_numbers = #tpu.dot_dimension_numbers<[1], [0], [0], [1], [0, 0, 1, 1], [], []>} : vector<8x4xbf16>, vector<4x128xbf16>, vector<8x128xf32> -> vector<8x128xf32>
    %408 = arith.addf %401, %407 : vector<8x128xf32>
    %409 = vector.extract_strided_slice %15 {offsets = [0, 2], sizes = [4, 126], strides = [1, 1]} : vector<4x128xbf16> to vector<4x126xbf16>
    %410 = vector.extract_strided_slice %15 {offsets = [0, 0], sizes = [4, 2], strides = [1, 1]} : vector<4x128xbf16> to vector<4x2xbf16>
    %411 = tpu.concatenate %409, %410 in 1 : vector<4x126xbf16>, vector<4x2xbf16> -> vector<4x128xbf16>
    %c2_224 = arith.constant 2 : index
    %c0_225 = arith.constant 0 : index
    %c0_226 = arith.constant 0 : index
    %412 = vector.load %arg3[%c2_224, %c0_225, %c0_226] : memref<27x8x4xbf16, #tpu.memory_space<vmem>>, vector<1x8x4xbf16>
    %413 = vector.shape_cast %412 : vector<1x8x4xbf16> to vector<8x4xbf16>
    %cst_227 = arith.constant dense<0.000000e+00> : vector<8x128xf32>
    %414 = tpu.matmul %413, %411, %cst_227 {dimension_numbers = #tpu.dot_dimension_numbers<[1], [0], [0], [1], [0, 0, 1, 1], [], []>} : vector<8x4xbf16>, vector<4x128xbf16>, vector<8x128xf32> -> vector<8x128xf32>
    %415 = arith.addf %408, %414 : vector<8x128xf32>
    %416 = vector.extract_strided_slice %15 {offsets = [0, 10], sizes = [4, 118], strides = [1, 1]} : vector<4x128xbf16> to vector<4x118xbf16>
    %417 = vector.extract_strided_slice %15 {offsets = [0, 0], sizes = [4, 10], strides = [1, 1]} : vector<4x128xbf16> to vector<4x10xbf16>
    %418 = tpu.concatenate %416, %417 in 1 : vector<4x118xbf16>, vector<4x10xbf16> -> vector<4x128xbf16>
    %c3_228 = arith.constant 3 : index
    %c0_229 = arith.constant 0 : index
    %c0_230 = arith.constant 0 : index
    %419 = vector.load %arg3[%c3_228, %c0_229, %c0_230] : memref<27x8x4xbf16, #tpu.memory_space<vmem>>, vector<1x8x4xbf16>
    %420 = vector.shape_cast %419 : vector<1x8x4xbf16> to vector<8x4xbf16>
    %cst_231 = arith.constant dense<0.000000e+00> : vector<8x128xf32>
    %421 = tpu.matmul %420, %418, %cst_231 {dimension_numbers = #tpu.dot_dimension_numbers<[1], [0], [0], [1], [0, 0, 1, 1], [], []>} : vector<8x4xbf16>, vector<4x128xbf16>, vector<8x128xf32> -> vector<8x128xf32>
    %422 = arith.addf %415, %421 : vector<8x128xf32>
    %423 = vector.extract_strided_slice %15 {offsets = [0, 11], sizes = [4, 117], strides = [1, 1]} : vector<4x128xbf16> to vector<4x117xbf16>
    %424 = vector.extract_strided_slice %15 {offsets = [0, 0], sizes = [4, 11], strides = [1, 1]} : vector<4x128xbf16> to vector<4x11xbf16>
    %425 = tpu.concatenate %423, %424 in 1 : vector<4x117xbf16>, vector<4x11xbf16> -> vector<4x128xbf16>
    %c4_232 = arith.constant 4 : index
    %c0_233 = arith.constant 0 : index
    %c0_234 = arith.constant 0 : index
    %426 = vector.load %arg3[%c4_232, %c0_233, %c0_234] : memref<27x8x4xbf16, #tpu.memory_space<vmem>>, vector<1x8x4xbf16>
    %427 = vector.shape_cast %426 : vector<1x8x4xbf16> to vector<8x4xbf16>
    %cst_235 = arith.constant dense<0.000000e+00> : vector<8x128xf32>
    %428 = tpu.matmul %427, %425, %cst_235 {dimension_numbers = #tpu.dot_dimension_numbers<[1], [0], [0], [1], [0, 0, 1, 1], [], []>} : vector<8x4xbf16>, vector<4x128xbf16>, vector<8x128xf32> -> vector<8x128xf32>
    %429 = arith.addf %422, %428 : vector<8x128xf32>
    %430 = vector.extract_strided_slice %15 {offsets = [0, 12], sizes = [4, 116], strides = [1, 1]} : vector<4x128xbf16> to vector<4x116xbf16>
    %431 = vector.extract_strided_slice %15 {offsets = [0, 0], sizes = [4, 12], strides = [1, 1]} : vector<4x128xbf16> to vector<4x12xbf16>
    %432 = tpu.concatenate %430, %431 in 1 : vector<4x116xbf16>, vector<4x12xbf16> -> vector<4x128xbf16>
    %c5_236 = arith.constant 5 : index
    %c0_237 = arith.constant 0 : index
    %c0_238 = arith.constant 0 : index
    %433 = vector.load %arg3[%c5_236, %c0_237, %c0_238] : memref<27x8x4xbf16, #tpu.memory_space<vmem>>, vector<1x8x4xbf16>
    %434 = vector.shape_cast %433 : vector<1x8x4xbf16> to vector<8x4xbf16>
    %cst_239 = arith.constant dense<0.000000e+00> : vector<8x128xf32>
    %435 = tpu.matmul %434, %432, %cst_239 {dimension_numbers = #tpu.dot_dimension_numbers<[1], [0], [0], [1], [0, 0, 1, 1], [], []>} : vector<8x4xbf16>, vector<4x128xbf16>, vector<8x128xf32> -> vector<8x128xf32>
    %436 = arith.addf %429, %435 : vector<8x128xf32>
    %437 = vector.extract_strided_slice %15 {offsets = [0, 20], sizes = [4, 108], strides = [1, 1]} : vector<4x128xbf16> to vector<4x108xbf16>
    %438 = vector.extract_strided_slice %15 {offsets = [0, 0], sizes = [4, 20], strides = [1, 1]} : vector<4x128xbf16> to vector<4x20xbf16>
    %439 = tpu.concatenate %437, %438 in 1 : vector<4x108xbf16>, vector<4x20xbf16> -> vector<4x128xbf16>
    %c6_240 = arith.constant 6 : index
    %c0_241 = arith.constant 0 : index
    %c0_242 = arith.constant 0 : index
    %440 = vector.load %arg3[%c6_240, %c0_241, %c0_242] : memref<27x8x4xbf16, #tpu.memory_space<vmem>>, vector<1x8x4xbf16>
    %441 = vector.shape_cast %440 : vector<1x8x4xbf16> to vector<8x4xbf16>
    %cst_243 = arith.constant dense<0.000000e+00> : vector<8x128xf32>
    %442 = tpu.matmul %441, %439, %cst_243 {dimension_numbers = #tpu.dot_dimension_numbers<[1], [0], [0], [1], [0, 0, 1, 1], [], []>} : vector<8x4xbf16>, vector<4x128xbf16>, vector<8x128xf32> -> vector<8x128xf32>
    %443 = arith.addf %436, %442 : vector<8x128xf32>
    %444 = vector.extract_strided_slice %15 {offsets = [0, 21], sizes = [4, 107], strides = [1, 1]} : vector<4x128xbf16> to vector<4x107xbf16>
    %445 = vector.extract_strided_slice %15 {offsets = [0, 0], sizes = [4, 21], strides = [1, 1]} : vector<4x128xbf16> to vector<4x21xbf16>
    %446 = tpu.concatenate %444, %445 in 1 : vector<4x107xbf16>, vector<4x21xbf16> -> vector<4x128xbf16>
    %c7_244 = arith.constant 7 : index
    %c0_245 = arith.constant 0 : index
    %c0_246 = arith.constant 0 : index
    %447 = vector.load %arg3[%c7_244, %c0_245, %c0_246] : memref<27x8x4xbf16, #tpu.memory_space<vmem>>, vector<1x8x4xbf16>
    %448 = vector.shape_cast %447 : vector<1x8x4xbf16> to vector<8x4xbf16>
    %cst_247 = arith.constant dense<0.000000e+00> : vector<8x128xf32>
    %449 = tpu.matmul %448, %446, %cst_247 {dimension_numbers = #tpu.dot_dimension_numbers<[1], [0], [0], [1], [0, 0, 1, 1], [], []>} : vector<8x4xbf16>, vector<4x128xbf16>, vector<8x128xf32> -> vector<8x128xf32>
    %450 = arith.addf %443, %449 : vector<8x128xf32>
    %451 = vector.extract_strided_slice %15 {offsets = [0, 22], sizes = [4, 106], strides = [1, 1]} : vector<4x128xbf16> to vector<4x106xbf16>
    %452 = vector.extract_strided_slice %15 {offsets = [0, 0], sizes = [4, 22], strides = [1, 1]} : vector<4x128xbf16> to vector<4x22xbf16>
    %453 = tpu.concatenate %451, %452 in 1 : vector<4x106xbf16>, vector<4x22xbf16> -> vector<4x128xbf16>
    %c8_248 = arith.constant 8 : index
    %c0_249 = arith.constant 0 : index
    %c0_250 = arith.constant 0 : index
    %454 = vector.load %arg3[%c8_248, %c0_249, %c0_250] : memref<27x8x4xbf16, #tpu.memory_space<vmem>>, vector<1x8x4xbf16>
    %455 = vector.shape_cast %454 : vector<1x8x4xbf16> to vector<8x4xbf16>
    %cst_251 = arith.constant dense<0.000000e+00> : vector<8x128xf32>
    %456 = tpu.matmul %455, %453, %cst_251 {dimension_numbers = #tpu.dot_dimension_numbers<[1], [0], [0], [1], [0, 0, 1, 1], [], []>} : vector<8x4xbf16>, vector<4x128xbf16>, vector<8x128xf32> -> vector<8x128xf32>
    %457 = arith.addf %450, %456 : vector<8x128xf32>
    %c9_252 = arith.constant 9 : index
    %c0_253 = arith.constant 0 : index
    %c0_254 = arith.constant 0 : index
    %458 = vector.load %arg3[%c9_252, %c0_253, %c0_254] : memref<27x8x4xbf16, #tpu.memory_space<vmem>>, vector<1x8x4xbf16>
    %459 = vector.shape_cast %458 : vector<1x8x4xbf16> to vector<8x4xbf16>
    %cst_255 = arith.constant dense<0.000000e+00> : vector<8x128xf32>
    %460 = tpu.matmul %459, %19, %cst_255 {dimension_numbers = #tpu.dot_dimension_numbers<[1], [0], [0], [1], [0, 0, 1, 1], [], []>} : vector<8x4xbf16>, vector<4x128xbf16>, vector<8x128xf32> -> vector<8x128xf32>
    %461 = arith.addf %457, %460 : vector<8x128xf32>
    %462 = vector.extract_strided_slice %19 {offsets = [0, 1], sizes = [4, 127], strides = [1, 1]} : vector<4x128xbf16> to vector<4x127xbf16>
    %463 = vector.extract_strided_slice %19 {offsets = [0, 0], sizes = [4, 1], strides = [1, 1]} : vector<4x128xbf16> to vector<4x1xbf16>
    %464 = tpu.concatenate %462, %463 in 1 : vector<4x127xbf16>, vector<4x1xbf16> -> vector<4x128xbf16>
    %c10_256 = arith.constant 10 : index
    %c0_257 = arith.constant 0 : index
    %c0_258 = arith.constant 0 : index
    %465 = vector.load %arg3[%c10_256, %c0_257, %c0_258] : memref<27x8x4xbf16, #tpu.memory_space<vmem>>, vector<1x8x4xbf16>
    %466 = vector.shape_cast %465 : vector<1x8x4xbf16> to vector<8x4xbf16>
    %cst_259 = arith.constant dense<0.000000e+00> : vector<8x128xf32>
    %467 = tpu.matmul %466, %464, %cst_259 {dimension_numbers = #tpu.dot_dimension_numbers<[1], [0], [0], [1], [0, 0, 1, 1], [], []>} : vector<8x4xbf16>, vector<4x128xbf16>, vector<8x128xf32> -> vector<8x128xf32>
    %468 = arith.addf %461, %467 : vector<8x128xf32>
    %469 = vector.extract_strided_slice %19 {offsets = [0, 2], sizes = [4, 126], strides = [1, 1]} : vector<4x128xbf16> to vector<4x126xbf16>
    %470 = vector.extract_strided_slice %19 {offsets = [0, 0], sizes = [4, 2], strides = [1, 1]} : vector<4x128xbf16> to vector<4x2xbf16>
    %471 = tpu.concatenate %469, %470 in 1 : vector<4x126xbf16>, vector<4x2xbf16> -> vector<4x128xbf16>
    %c11_260 = arith.constant 11 : index
    %c0_261 = arith.constant 0 : index
    %c0_262 = arith.constant 0 : index
    %472 = vector.load %arg3[%c11_260, %c0_261, %c0_262] : memref<27x8x4xbf16, #tpu.memory_space<vmem>>, vector<1x8x4xbf16>
    %473 = vector.shape_cast %472 : vector<1x8x4xbf16> to vector<8x4xbf16>
    %cst_263 = arith.constant dense<0.000000e+00> : vector<8x128xf32>
    %474 = tpu.matmul %473, %471, %cst_263 {dimension_numbers = #tpu.dot_dimension_numbers<[1], [0], [0], [1], [0, 0, 1, 1], [], []>} : vector<8x4xbf16>, vector<4x128xbf16>, vector<8x128xf32> -> vector<8x128xf32>
    %475 = arith.addf %468, %474 : vector<8x128xf32>
    %476 = vector.extract_strided_slice %19 {offsets = [0, 10], sizes = [4, 118], strides = [1, 1]} : vector<4x128xbf16> to vector<4x118xbf16>
    %477 = vector.extract_strided_slice %19 {offsets = [0, 0], sizes = [4, 10], strides = [1, 1]} : vector<4x128xbf16> to vector<4x10xbf16>
    %478 = tpu.concatenate %476, %477 in 1 : vector<4x118xbf16>, vector<4x10xbf16> -> vector<4x128xbf16>
    %c12_264 = arith.constant 12 : index
    %c0_265 = arith.constant 0 : index
    %c0_266 = arith.constant 0 : index
    %479 = vector.load %arg3[%c12_264, %c0_265, %c0_266] : memref<27x8x4xbf16, #tpu.memory_space<vmem>>, vector<1x8x4xbf16>
    %480 = vector.shape_cast %479 : vector<1x8x4xbf16> to vector<8x4xbf16>
    %cst_267 = arith.constant dense<0.000000e+00> : vector<8x128xf32>
    %481 = tpu.matmul %480, %478, %cst_267 {dimension_numbers = #tpu.dot_dimension_numbers<[1], [0], [0], [1], [0, 0, 1, 1], [], []>} : vector<8x4xbf16>, vector<4x128xbf16>, vector<8x128xf32> -> vector<8x128xf32>
    %482 = arith.addf %475, %481 : vector<8x128xf32>
    %483 = vector.extract_strided_slice %19 {offsets = [0, 11], sizes = [4, 117], strides = [1, 1]} : vector<4x128xbf16> to vector<4x117xbf16>
    %484 = vector.extract_strided_slice %19 {offsets = [0, 0], sizes = [4, 11], strides = [1, 1]} : vector<4x128xbf16> to vector<4x11xbf16>
    %485 = tpu.concatenate %483, %484 in 1 : vector<4x117xbf16>, vector<4x11xbf16> -> vector<4x128xbf16>
    %c13_268 = arith.constant 13 : index
    %c0_269 = arith.constant 0 : index
    %c0_270 = arith.constant 0 : index
    %486 = vector.load %arg3[%c13_268, %c0_269, %c0_270] : memref<27x8x4xbf16, #tpu.memory_space<vmem>>, vector<1x8x4xbf16>
    %487 = vector.shape_cast %486 : vector<1x8x4xbf16> to vector<8x4xbf16>
    %cst_271 = arith.constant dense<0.000000e+00> : vector<8x128xf32>
    %488 = tpu.matmul %487, %485, %cst_271 {dimension_numbers = #tpu.dot_dimension_numbers<[1], [0], [0], [1], [0, 0, 1, 1], [], []>} : vector<8x4xbf16>, vector<4x128xbf16>, vector<8x128xf32> -> vector<8x128xf32>
    %489 = arith.addf %482, %488 : vector<8x128xf32>
    %490 = vector.extract_strided_slice %19 {offsets = [0, 12], sizes = [4, 116], strides = [1, 1]} : vector<4x128xbf16> to vector<4x116xbf16>
    %491 = vector.extract_strided_slice %19 {offsets = [0, 0], sizes = [4, 12], strides = [1, 1]} : vector<4x128xbf16> to vector<4x12xbf16>
    %492 = tpu.concatenate %490, %491 in 1 : vector<4x116xbf16>, vector<4x12xbf16> -> vector<4x128xbf16>
    %c14_272 = arith.constant 14 : index
    %c0_273 = arith.constant 0 : index
    %c0_274 = arith.constant 0 : index
    %493 = vector.load %arg3[%c14_272, %c0_273, %c0_274] : memref<27x8x4xbf16, #tpu.memory_space<vmem>>, vector<1x8x4xbf16>
    %494 = vector.shape_cast %493 : vector<1x8x4xbf16> to vector<8x4xbf16>
    %cst_275 = arith.constant dense<0.000000e+00> : vector<8x128xf32>
    %495 = tpu.matmul %494, %492, %cst_275 {dimension_numbers = #tpu.dot_dimension_numbers<[1], [0], [0], [1], [0, 0, 1, 1], [], []>} : vector<8x4xbf16>, vector<4x128xbf16>, vector<8x128xf32> -> vector<8x128xf32>
    %496 = arith.addf %489, %495 : vector<8x128xf32>
    %497 = vector.extract_strided_slice %19 {offsets = [0, 20], sizes = [4, 108], strides = [1, 1]} : vector<4x128xbf16> to vector<4x108xbf16>
    %498 = vector.extract_strided_slice %19 {offsets = [0, 0], sizes = [4, 20], strides = [1, 1]} : vector<4x128xbf16> to vector<4x20xbf16>
    %499 = tpu.concatenate %497, %498 in 1 : vector<4x108xbf16>, vector<4x20xbf16> -> vector<4x128xbf16>
    %c15_276 = arith.constant 15 : index
    %c0_277 = arith.constant 0 : index
    %c0_278 = arith.constant 0 : index
    %500 = vector.load %arg3[%c15_276, %c0_277, %c0_278] : memref<27x8x4xbf16, #tpu.memory_space<vmem>>, vector<1x8x4xbf16>
    %501 = vector.shape_cast %500 : vector<1x8x4xbf16> to vector<8x4xbf16>
    %cst_279 = arith.constant dense<0.000000e+00> : vector<8x128xf32>
    %502 = tpu.matmul %501, %499, %cst_279 {dimension_numbers = #tpu.dot_dimension_numbers<[1], [0], [0], [1], [0, 0, 1, 1], [], []>} : vector<8x4xbf16>, vector<4x128xbf16>, vector<8x128xf32> -> vector<8x128xf32>
    %503 = arith.addf %496, %502 : vector<8x128xf32>
    %504 = vector.extract_strided_slice %19 {offsets = [0, 21], sizes = [4, 107], strides = [1, 1]} : vector<4x128xbf16> to vector<4x107xbf16>
    %505 = vector.extract_strided_slice %19 {offsets = [0, 0], sizes = [4, 21], strides = [1, 1]} : vector<4x128xbf16> to vector<4x21xbf16>
    %506 = tpu.concatenate %504, %505 in 1 : vector<4x107xbf16>, vector<4x21xbf16> -> vector<4x128xbf16>
    %c16_280 = arith.constant 16 : index
    %c0_281 = arith.constant 0 : index
    %c0_282 = arith.constant 0 : index
    %507 = vector.load %arg3[%c16_280, %c0_281, %c0_282] : memref<27x8x4xbf16, #tpu.memory_space<vmem>>, vector<1x8x4xbf16>
    %508 = vector.shape_cast %507 : vector<1x8x4xbf16> to vector<8x4xbf16>
    %cst_283 = arith.constant dense<0.000000e+00> : vector<8x128xf32>
    %509 = tpu.matmul %508, %506, %cst_283 {dimension_numbers = #tpu.dot_dimension_numbers<[1], [0], [0], [1], [0, 0, 1, 1], [], []>} : vector<8x4xbf16>, vector<4x128xbf16>, vector<8x128xf32> -> vector<8x128xf32>
    %510 = arith.addf %503, %509 : vector<8x128xf32>
    %511 = vector.extract_strided_slice %19 {offsets = [0, 22], sizes = [4, 106], strides = [1, 1]} : vector<4x128xbf16> to vector<4x106xbf16>
    %512 = vector.extract_strided_slice %19 {offsets = [0, 0], sizes = [4, 22], strides = [1, 1]} : vector<4x128xbf16> to vector<4x22xbf16>
    %513 = tpu.concatenate %511, %512 in 1 : vector<4x106xbf16>, vector<4x22xbf16> -> vector<4x128xbf16>
    %c17_284 = arith.constant 17 : index
    %c0_285 = arith.constant 0 : index
    %c0_286 = arith.constant 0 : index
    %514 = vector.load %arg3[%c17_284, %c0_285, %c0_286] : memref<27x8x4xbf16, #tpu.memory_space<vmem>>, vector<1x8x4xbf16>
    %515 = vector.shape_cast %514 : vector<1x8x4xbf16> to vector<8x4xbf16>
    %cst_287 = arith.constant dense<0.000000e+00> : vector<8x128xf32>
    %516 = tpu.matmul %515, %513, %cst_287 {dimension_numbers = #tpu.dot_dimension_numbers<[1], [0], [0], [1], [0, 0, 1, 1], [], []>} : vector<8x4xbf16>, vector<4x128xbf16>, vector<8x128xf32> -> vector<8x128xf32>
    %517 = arith.addf %510, %516 : vector<8x128xf32>
    %c18_288 = arith.constant 18 : index
    %c0_289 = arith.constant 0 : index
    %c0_290 = arith.constant 0 : index
    %518 = vector.load %arg3[%c18_288, %c0_289, %c0_290] : memref<27x8x4xbf16, #tpu.memory_space<vmem>>, vector<1x8x4xbf16>
    %519 = vector.shape_cast %518 : vector<1x8x4xbf16> to vector<8x4xbf16>
    %cst_291 = arith.constant dense<0.000000e+00> : vector<8x128xf32>
    %520 = tpu.matmul %519, %23, %cst_291 {dimension_numbers = #tpu.dot_dimension_numbers<[1], [0], [0], [1], [0, 0, 1, 1], [], []>} : vector<8x4xbf16>, vector<4x128xbf16>, vector<8x128xf32> -> vector<8x128xf32>
    %521 = arith.addf %517, %520 : vector<8x128xf32>
    %522 = vector.extract_strided_slice %23 {offsets = [0, 1], sizes = [4, 127], strides = [1, 1]} : vector<4x128xbf16> to vector<4x127xbf16>
    %523 = vector.extract_strided_slice %23 {offsets = [0, 0], sizes = [4, 1], strides = [1, 1]} : vector<4x128xbf16> to vector<4x1xbf16>
    %524 = tpu.concatenate %522, %523 in 1 : vector<4x127xbf16>, vector<4x1xbf16> -> vector<4x128xbf16>
    %c19_292 = arith.constant 19 : index
    %c0_293 = arith.constant 0 : index
    %c0_294 = arith.constant 0 : index
    %525 = vector.load %arg3[%c19_292, %c0_293, %c0_294] : memref<27x8x4xbf16, #tpu.memory_space<vmem>>, vector<1x8x4xbf16>
    %526 = vector.shape_cast %525 : vector<1x8x4xbf16> to vector<8x4xbf16>
    %cst_295 = arith.constant dense<0.000000e+00> : vector<8x128xf32>
    %527 = tpu.matmul %526, %524, %cst_295 {dimension_numbers = #tpu.dot_dimension_numbers<[1], [0], [0], [1], [0, 0, 1, 1], [], []>} : vector<8x4xbf16>, vector<4x128xbf16>, vector<8x128xf32> -> vector<8x128xf32>
    %528 = arith.addf %521, %527 : vector<8x128xf32>
    %529 = vector.extract_strided_slice %23 {offsets = [0, 2], sizes = [4, 126], strides = [1, 1]} : vector<4x128xbf16> to vector<4x126xbf16>
    %530 = vector.extract_strided_slice %23 {offsets = [0, 0], sizes = [4, 2], strides = [1, 1]} : vector<4x128xbf16> to vector<4x2xbf16>
    %531 = tpu.concatenate %529, %530 in 1 : vector<4x126xbf16>, vector<4x2xbf16> -> vector<4x128xbf16>
    %c20_296 = arith.constant 20 : index
    %c0_297 = arith.constant 0 : index
    %c0_298 = arith.constant 0 : index
    %532 = vector.load %arg3[%c20_296, %c0_297, %c0_298] : memref<27x8x4xbf16, #tpu.memory_space<vmem>>, vector<1x8x4xbf16>
    %533 = vector.shape_cast %532 : vector<1x8x4xbf16> to vector<8x4xbf16>
    %cst_299 = arith.constant dense<0.000000e+00> : vector<8x128xf32>
    %534 = tpu.matmul %533, %531, %cst_299 {dimension_numbers = #tpu.dot_dimension_numbers<[1], [0], [0], [1], [0, 0, 1, 1], [], []>} : vector<8x4xbf16>, vector<4x128xbf16>, vector<8x128xf32> -> vector<8x128xf32>
    %535 = arith.addf %528, %534 : vector<8x128xf32>
    %536 = vector.extract_strided_slice %23 {offsets = [0, 10], sizes = [4, 118], strides = [1, 1]} : vector<4x128xbf16> to vector<4x118xbf16>
    %537 = vector.extract_strided_slice %23 {offsets = [0, 0], sizes = [4, 10], strides = [1, 1]} : vector<4x128xbf16> to vector<4x10xbf16>
    %538 = tpu.concatenate %536, %537 in 1 : vector<4x118xbf16>, vector<4x10xbf16> -> vector<4x128xbf16>
    %c21_300 = arith.constant 21 : index
    %c0_301 = arith.constant 0 : index
    %c0_302 = arith.constant 0 : index
    %539 = vector.load %arg3[%c21_300, %c0_301, %c0_302] : memref<27x8x4xbf16, #tpu.memory_space<vmem>>, vector<1x8x4xbf16>
    %540 = vector.shape_cast %539 : vector<1x8x4xbf16> to vector<8x4xbf16>
    %cst_303 = arith.constant dense<0.000000e+00> : vector<8x128xf32>
    %541 = tpu.matmul %540, %538, %cst_303 {dimension_numbers = #tpu.dot_dimension_numbers<[1], [0], [0], [1], [0, 0, 1, 1], [], []>} : vector<8x4xbf16>, vector<4x128xbf16>, vector<8x128xf32> -> vector<8x128xf32>
    %542 = arith.addf %535, %541 : vector<8x128xf32>
    %543 = vector.extract_strided_slice %23 {offsets = [0, 11], sizes = [4, 117], strides = [1, 1]} : vector<4x128xbf16> to vector<4x117xbf16>
    %544 = vector.extract_strided_slice %23 {offsets = [0, 0], sizes = [4, 11], strides = [1, 1]} : vector<4x128xbf16> to vector<4x11xbf16>
    %545 = tpu.concatenate %543, %544 in 1 : vector<4x117xbf16>, vector<4x11xbf16> -> vector<4x128xbf16>
    %c22_304 = arith.constant 22 : index
    %c0_305 = arith.constant 0 : index
    %c0_306 = arith.constant 0 : index
    %546 = vector.load %arg3[%c22_304, %c0_305, %c0_306] : memref<27x8x4xbf16, #tpu.memory_space<vmem>>, vector<1x8x4xbf16>
    %547 = vector.shape_cast %546 : vector<1x8x4xbf16> to vector<8x4xbf16>
    %cst_307 = arith.constant dense<0.000000e+00> : vector<8x128xf32>
    %548 = tpu.matmul %547, %545, %cst_307 {dimension_numbers = #tpu.dot_dimension_numbers<[1], [0], [0], [1], [0, 0, 1, 1], [], []>} : vector<8x4xbf16>, vector<4x128xbf16>, vector<8x128xf32> -> vector<8x128xf32>
    %549 = arith.addf %542, %548 : vector<8x128xf32>
    %550 = vector.extract_strided_slice %23 {offsets = [0, 12], sizes = [4, 116], strides = [1, 1]} : vector<4x128xbf16> to vector<4x116xbf16>
    %551 = vector.extract_strided_slice %23 {offsets = [0, 0], sizes = [4, 12], strides = [1, 1]} : vector<4x128xbf16> to vector<4x12xbf16>
    %552 = tpu.concatenate %550, %551 in 1 : vector<4x116xbf16>, vector<4x12xbf16> -> vector<4x128xbf16>
    %c23_308 = arith.constant 23 : index
    %c0_309 = arith.constant 0 : index
    %c0_310 = arith.constant 0 : index
    %553 = vector.load %arg3[%c23_308, %c0_309, %c0_310] : memref<27x8x4xbf16, #tpu.memory_space<vmem>>, vector<1x8x4xbf16>
    %554 = vector.shape_cast %553 : vector<1x8x4xbf16> to vector<8x4xbf16>
    %cst_311 = arith.constant dense<0.000000e+00> : vector<8x128xf32>
    %555 = tpu.matmul %554, %552, %cst_311 {dimension_numbers = #tpu.dot_dimension_numbers<[1], [0], [0], [1], [0, 0, 1, 1], [], []>} : vector<8x4xbf16>, vector<4x128xbf16>, vector<8x128xf32> -> vector<8x128xf32>
    %556 = arith.addf %549, %555 : vector<8x128xf32>
    %557 = vector.extract_strided_slice %23 {offsets = [0, 20], sizes = [4, 108], strides = [1, 1]} : vector<4x128xbf16> to vector<4x108xbf16>
    %558 = vector.extract_strided_slice %23 {offsets = [0, 0], sizes = [4, 20], strides = [1, 1]} : vector<4x128xbf16> to vector<4x20xbf16>
    %559 = tpu.concatenate %557, %558 in 1 : vector<4x108xbf16>, vector<4x20xbf16> -> vector<4x128xbf16>
    %c24_312 = arith.constant 24 : index
    %c0_313 = arith.constant 0 : index
    %c0_314 = arith.constant 0 : index
    %560 = vector.load %arg3[%c24_312, %c0_313, %c0_314] : memref<27x8x4xbf16, #tpu.memory_space<vmem>>, vector<1x8x4xbf16>
    %561 = vector.shape_cast %560 : vector<1x8x4xbf16> to vector<8x4xbf16>
    %cst_315 = arith.constant dense<0.000000e+00> : vector<8x128xf32>
    %562 = tpu.matmul %561, %559, %cst_315 {dimension_numbers = #tpu.dot_dimension_numbers<[1], [0], [0], [1], [0, 0, 1, 1], [], []>} : vector<8x4xbf16>, vector<4x128xbf16>, vector<8x128xf32> -> vector<8x128xf32>
    %563 = arith.addf %556, %562 : vector<8x128xf32>
    %564 = vector.extract_strided_slice %23 {offsets = [0, 21], sizes = [4, 107], strides = [1, 1]} : vector<4x128xbf16> to vector<4x107xbf16>
    %565 = vector.extract_strided_slice %23 {offsets = [0, 0], sizes = [4, 21], strides = [1, 1]} : vector<4x128xbf16> to vector<4x21xbf16>
    %566 = tpu.concatenate %564, %565 in 1 : vector<4x107xbf16>, vector<4x21xbf16> -> vector<4x128xbf16>
    %c25_316 = arith.constant 25 : index
    %c0_317 = arith.constant 0 : index
    %c0_318 = arith.constant 0 : index
    %567 = vector.load %arg3[%c25_316, %c0_317, %c0_318] : memref<27x8x4xbf16, #tpu.memory_space<vmem>>, vector<1x8x4xbf16>
    %568 = vector.shape_cast %567 : vector<1x8x4xbf16> to vector<8x4xbf16>
    %cst_319 = arith.constant dense<0.000000e+00> : vector<8x128xf32>
    %569 = tpu.matmul %568, %566, %cst_319 {dimension_numbers = #tpu.dot_dimension_numbers<[1], [0], [0], [1], [0, 0, 1, 1], [], []>} : vector<8x4xbf16>, vector<4x128xbf16>, vector<8x128xf32> -> vector<8x128xf32>
    %570 = arith.addf %563, %569 : vector<8x128xf32>
    %571 = vector.extract_strided_slice %23 {offsets = [0, 22], sizes = [4, 106], strides = [1, 1]} : vector<4x128xbf16> to vector<4x106xbf16>
    %572 = vector.extract_strided_slice %23 {offsets = [0, 0], sizes = [4, 22], strides = [1, 1]} : vector<4x128xbf16> to vector<4x22xbf16>
    %573 = tpu.concatenate %571, %572 in 1 : vector<4x106xbf16>, vector<4x22xbf16> -> vector<4x128xbf16>
    %c26_320 = arith.constant 26 : index
    %c0_321 = arith.constant 0 : index
    %c0_322 = arith.constant 0 : index
    %574 = vector.load %arg3[%c26_320, %c0_321, %c0_322] : memref<27x8x4xbf16, #tpu.memory_space<vmem>>, vector<1x8x4xbf16>
    %575 = vector.shape_cast %574 : vector<1x8x4xbf16> to vector<8x4xbf16>
    %cst_323 = arith.constant dense<0.000000e+00> : vector<8x128xf32>
    %576 = tpu.matmul %575, %573, %cst_323 {dimension_numbers = #tpu.dot_dimension_numbers<[1], [0], [0], [1], [0, 0, 1, 1], [], []>} : vector<8x4xbf16>, vector<4x128xbf16>, vector<8x128xf32> -> vector<8x128xf32>
    %577 = arith.addf %570, %576 : vector<8x128xf32>
    %cst_324 = arith.constant 0.000000e+00 : f32
    %578 = vector.broadcast %cst_324 : f32 to vector<8x128xf32>
    %579 = arith.maximumf %577, %578 : vector<8x128xf32>
    %c0_325 = arith.constant 0 : index
    %c0_326 = arith.constant 0 : index
    %c256 = arith.constant 256 : index
    %580 = vector.load %arg5[%c0_325, %c0_326, %c256] : memref<1x8x512xf32, #tpu.memory_space<vmem>>, vector<1x8x128xf32>
    %581 = vector.shape_cast %580 : vector<1x8x128xf32> to vector<8x128xf32>
    %582 = vector.shape_cast %579 : vector<8x128xf32> to vector<1x8x128xf32>
    tpu.vector_store %arg5[%c0_325, %c0_326, %c256], %582 {strides = array<i32>} : memref<1x8x512xf32, #tpu.memory_space<vmem>>, vector<1x8x128xf32>,
    %c0_327 = arith.constant 0 : index
    %c0_328 = arith.constant 0 : index
    %c0_329 = arith.constant 0 : index
    %583 = vector.load %arg3[%c0_327, %c0_328, %c0_329] : memref<27x8x4xbf16, #tpu.memory_space<vmem>>, vector<1x8x4xbf16>
    %584 = vector.shape_cast %583 : vector<1x8x4xbf16> to vector<8x4xbf16>
    %cst_330 = arith.constant dense<0.000000e+00> : vector<8x128xf32>
    %585 = tpu.matmul %584, %19, %cst_330 {dimension_numbers = #tpu.dot_dimension_numbers<[1], [0], [0], [1], [0, 0, 1, 1], [], []>} : vector<8x4xbf16>, vector<4x128xbf16>, vector<8x128xf32> -> vector<8x128xf32>
    %586 = arith.addf %3, %585 : vector<8x128xf32>
    %587 = vector.extract_strided_slice %19 {offsets = [0, 1], sizes = [4, 127], strides = [1, 1]} : vector<4x128xbf16> to vector<4x127xbf16>
    %588 = vector.extract_strided_slice %19 {offsets = [0, 0], sizes = [4, 1], strides = [1, 1]} : vector<4x128xbf16> to vector<4x1xbf16>
    %589 = tpu.concatenate %587, %588 in 1 : vector<4x127xbf16>, vector<4x1xbf16> -> vector<4x128xbf16>
    %c1_331 = arith.constant 1 : index
    %c0_332 = arith.constant 0 : index
    %c0_333 = arith.constant 0 : index
    %590 = vector.load %arg3[%c1_331, %c0_332, %c0_333] : memref<27x8x4xbf16, #tpu.memory_space<vmem>>, vector<1x8x4xbf16>
    %591 = vector.shape_cast %590 : vector<1x8x4xbf16> to vector<8x4xbf16>
    %cst_334 = arith.constant dense<0.000000e+00> : vector<8x128xf32>
    %592 = tpu.matmul %591, %589, %cst_334 {dimension_numbers = #tpu.dot_dimension_numbers<[1], [0], [0], [1], [0, 0, 1, 1], [], []>} : vector<8x4xbf16>, vector<4x128xbf16>, vector<8x128xf32> -> vector<8x128xf32>
    %593 = arith.addf %586, %592 : vector<8x128xf32>
    %594 = vector.extract_strided_slice %19 {offsets = [0, 2], sizes = [4, 126], strides = [1, 1]} : vector<4x128xbf16> to vector<4x126xbf16>
    %595 = vector.extract_strided_slice %19 {offsets = [0, 0], sizes = [4, 2], strides = [1, 1]} : vector<4x128xbf16> to vector<4x2xbf16>
    %596 = tpu.concatenate %594, %595 in 1 : vector<4x126xbf16>, vector<4x2xbf16> -> vector<4x128xbf16>
    %c2_335 = arith.constant 2 : index
    %c0_336 = arith.constant 0 : index
    %c0_337 = arith.constant 0 : index
    %597 = vector.load %arg3[%c2_335, %c0_336, %c0_337] : memref<27x8x4xbf16, #tpu.memory_space<vmem>>, vector<1x8x4xbf16>
    %598 = vector.shape_cast %597 : vector<1x8x4xbf16> to vector<8x4xbf16>
    %cst_338 = arith.constant dense<0.000000e+00> : vector<8x128xf32>
    %599 = tpu.matmul %598, %596, %cst_338 {dimension_numbers = #tpu.dot_dimension_numbers<[1], [0], [0], [1], [0, 0, 1, 1], [], []>} : vector<8x4xbf16>, vector<4x128xbf16>, vector<8x128xf32> -> vector<8x128xf32>
    %600 = arith.addf %593, %599 : vector<8x128xf32>
    %601 = vector.extract_strided_slice %19 {offsets = [0, 10], sizes = [4, 118], strides = [1, 1]} : vector<4x128xbf16> to vector<4x118xbf16>
    %602 = vector.extract_strided_slice %19 {offsets = [0, 0], sizes = [4, 10], strides = [1, 1]} : vector<4x128xbf16> to vector<4x10xbf16>
    %603 = tpu.concatenate %601, %602 in 1 : vector<4x118xbf16>, vector<4x10xbf16> -> vector<4x128xbf16>
    %c3_339 = arith.constant 3 : index
    %c0_340 = arith.constant 0 : index
    %c0_341 = arith.constant 0 : index
    %604 = vector.load %arg3[%c3_339, %c0_340, %c0_341] : memref<27x8x4xbf16, #tpu.memory_space<vmem>>, vector<1x8x4xbf16>
    %605 = vector.shape_cast %604 : vector<1x8x4xbf16> to vector<8x4xbf16>
    %cst_342 = arith.constant dense<0.000000e+00> : vector<8x128xf32>
    %606 = tpu.matmul %605, %603, %cst_342 {dimension_numbers = #tpu.dot_dimension_numbers<[1], [0], [0], [1], [0, 0, 1, 1], [], []>} : vector<8x4xbf16>, vector<4x128xbf16>, vector<8x128xf32> -> vector<8x128xf32>
    %607 = arith.addf %600, %606 : vector<8x128xf32>
    %608 = vector.extract_strided_slice %19 {offsets = [0, 11], sizes = [4, 117], strides = [1, 1]} : vector<4x128xbf16> to vector<4x117xbf16>
    %609 = vector.extract_strided_slice %19 {offsets = [0, 0], sizes = [4, 11], strides = [1, 1]} : vector<4x128xbf16> to vector<4x11xbf16>
    %610 = tpu.concatenate %608, %609 in 1 : vector<4x117xbf16>, vector<4x11xbf16> -> vector<4x128xbf16>
    %c4_343 = arith.constant 4 : index
    %c0_344 = arith.constant 0 : index
    %c0_345 = arith.constant 0 : index
    %611 = vector.load %arg3[%c4_343, %c0_344, %c0_345] : memref<27x8x4xbf16, #tpu.memory_space<vmem>>, vector<1x8x4xbf16>
    %612 = vector.shape_cast %611 : vector<1x8x4xbf16> to vector<8x4xbf16>
    %cst_346 = arith.constant dense<0.000000e+00> : vector<8x128xf32>
    %613 = tpu.matmul %612, %610, %cst_346 {dimension_numbers = #tpu.dot_dimension_numbers<[1], [0], [0], [1], [0, 0, 1, 1], [], []>} : vector<8x4xbf16>, vector<4x128xbf16>, vector<8x128xf32> -> vector<8x128xf32>
    %614 = arith.addf %607, %613 : vector<8x128xf32>
    %615 = vector.extract_strided_slice %19 {offsets = [0, 12], sizes = [4, 116], strides = [1, 1]} : vector<4x128xbf16> to vector<4x116xbf16>
    %616 = vector.extract_strided_slice %19 {offsets = [0, 0], sizes = [4, 12], strides = [1, 1]} : vector<4x128xbf16> to vector<4x12xbf16>
    %617 = tpu.concatenate %615, %616 in 1 : vector<4x116xbf16>, vector<4x12xbf16> -> vector<4x128xbf16>
    %c5_347 = arith.constant 5 : index
    %c0_348 = arith.constant 0 : index
    %c0_349 = arith.constant 0 : index
    %618 = vector.load %arg3[%c5_347, %c0_348, %c0_349] : memref<27x8x4xbf16, #tpu.memory_space<vmem>>, vector<1x8x4xbf16>
    %619 = vector.shape_cast %618 : vector<1x8x4xbf16> to vector<8x4xbf16>
    %cst_350 = arith.constant dense<0.000000e+00> : vector<8x128xf32>
    %620 = tpu.matmul %619, %617, %cst_350 {dimension_numbers = #tpu.dot_dimension_numbers<[1], [0], [0], [1], [0, 0, 1, 1], [], []>} : vector<8x4xbf16>, vector<4x128xbf16>, vector<8x128xf32> -> vector<8x128xf32>
    %621 = arith.addf %614, %620 : vector<8x128xf32>
    %622 = vector.extract_strided_slice %19 {offsets = [0, 20], sizes = [4, 108], strides = [1, 1]} : vector<4x128xbf16> to vector<4x108xbf16>
    %623 = vector.extract_strided_slice %19 {offsets = [0, 0], sizes = [4, 20], strides = [1, 1]} : vector<4x128xbf16> to vector<4x20xbf16>
    %624 = tpu.concatenate %622, %623 in 1 : vector<4x108xbf16>, vector<4x20xbf16> -> vector<4x128xbf16>
    %c6_351 = arith.constant 6 : index
    %c0_352 = arith.constant 0 : index
    %c0_353 = arith.constant 0 : index
    %625 = vector.load %arg3[%c6_351, %c0_352, %c0_353] : memref<27x8x4xbf16, #tpu.memory_space<vmem>>, vector<1x8x4xbf16>
    %626 = vector.shape_cast %625 : vector<1x8x4xbf16> to vector<8x4xbf16>
    %cst_354 = arith.constant dense<0.000000e+00> : vector<8x128xf32>
    %627 = tpu.matmul %626, %624, %cst_354 {dimension_numbers = #tpu.dot_dimension_numbers<[1], [0], [0], [1], [0, 0, 1, 1], [], []>} : vector<8x4xbf16>, vector<4x128xbf16>, vector<8x128xf32> -> vector<8x128xf32>
    %628 = arith.addf %621, %627 : vector<8x128xf32>
    %629 = vector.extract_strided_slice %19 {offsets = [0, 21], sizes = [4, 107], strides = [1, 1]} : vector<4x128xbf16> to vector<4x107xbf16>
    %630 = vector.extract_strided_slice %19 {offsets = [0, 0], sizes = [4, 21], strides = [1, 1]} : vector<4x128xbf16> to vector<4x21xbf16>
    %631 = tpu.concatenate %629, %630 in 1 : vector<4x107xbf16>, vector<4x21xbf16> -> vector<4x128xbf16>
    %c7_355 = arith.constant 7 : index
    %c0_356 = arith.constant 0 : index
    %c0_357 = arith.constant 0 : index
    %632 = vector.load %arg3[%c7_355, %c0_356, %c0_357] : memref<27x8x4xbf16, #tpu.memory_space<vmem>>, vector<1x8x4xbf16>
    %633 = vector.shape_cast %632 : vector<1x8x4xbf16> to vector<8x4xbf16>
    %cst_358 = arith.constant dense<0.000000e+00> : vector<8x128xf32>
    %634 = tpu.matmul %633, %631, %cst_358 {dimension_numbers = #tpu.dot_dimension_numbers<[1], [0], [0], [1], [0, 0, 1, 1], [], []>} : vector<8x4xbf16>, vector<4x128xbf16>, vector<8x128xf32> -> vector<8x128xf32>
    %635 = arith.addf %628, %634 : vector<8x128xf32>
    %636 = vector.extract_strided_slice %19 {offsets = [0, 22], sizes = [4, 106], strides = [1, 1]} : vector<4x128xbf16> to vector<4x106xbf16>
    %637 = vector.extract_strided_slice %19 {offsets = [0, 0], sizes = [4, 22], strides = [1, 1]} : vector<4x128xbf16> to vector<4x22xbf16>
    %638 = tpu.concatenate %636, %637 in 1 : vector<4x106xbf16>, vector<4x22xbf16> -> vector<4x128xbf16>
    %c8_359 = arith.constant 8 : index
    %c0_360 = arith.constant 0 : index
    %c0_361 = arith.constant 0 : index
    %639 = vector.load %arg3[%c8_359, %c0_360, %c0_361] : memref<27x8x4xbf16, #tpu.memory_space<vmem>>, vector<1x8x4xbf16>
    %640 = vector.shape_cast %639 : vector<1x8x4xbf16> to vector<8x4xbf16>
    %cst_362 = arith.constant dense<0.000000e+00> : vector<8x128xf32>
    %641 = tpu.matmul %640, %638, %cst_362 {dimension_numbers = #tpu.dot_dimension_numbers<[1], [0], [0], [1], [0, 0, 1, 1], [], []>} : vector<8x4xbf16>, vector<4x128xbf16>, vector<8x128xf32> -> vector<8x128xf32>
    %642 = arith.addf %635, %641 : vector<8x128xf32>
    %c9_363 = arith.constant 9 : index
    %c0_364 = arith.constant 0 : index
    %c0_365 = arith.constant 0 : index
    %643 = vector.load %arg3[%c9_363, %c0_364, %c0_365] : memref<27x8x4xbf16, #tpu.memory_space<vmem>>, vector<1x8x4xbf16>
    %644 = vector.shape_cast %643 : vector<1x8x4xbf16> to vector<8x4xbf16>
    %cst_366 = arith.constant dense<0.000000e+00> : vector<8x128xf32>
    %645 = tpu.matmul %644, %23, %cst_366 {dimension_numbers = #tpu.dot_dimension_numbers<[1], [0], [0], [1], [0, 0, 1, 1], [], []>} : vector<8x4xbf16>, vector<4x128xbf16>, vector<8x128xf32> -> vector<8x128xf32>
    %646 = arith.addf %642, %645 : vector<8x128xf32>
    %647 = vector.extract_strided_slice %23 {offsets = [0, 1], sizes = [4, 127], strides = [1, 1]} : vector<4x128xbf16> to vector<4x127xbf16>
    %648 = vector.extract_strided_slice %23 {offsets = [0, 0], sizes = [4, 1], strides = [1, 1]} : vector<4x128xbf16> to vector<4x1xbf16>
    %649 = tpu.concatenate %647, %648 in 1 : vector<4x127xbf16>, vector<4x1xbf16> -> vector<4x128xbf16>
    %c10_367 = arith.constant 10 : index
    %c0_368 = arith.constant 0 : index
    %c0_369 = arith.constant 0 : index
    %650 = vector.load %arg3[%c10_367, %c0_368, %c0_369] : memref<27x8x4xbf16, #tpu.memory_space<vmem>>, vector<1x8x4xbf16>
    %651 = vector.shape_cast %650 : vector<1x8x4xbf16> to vector<8x4xbf16>
    %cst_370 = arith.constant dense<0.000000e+00> : vector<8x128xf32>
    %652 = tpu.matmul %651, %649, %cst_370 {dimension_numbers = #tpu.dot_dimension_numbers<[1], [0], [0], [1], [0, 0, 1, 1], [], []>} : vector<8x4xbf16>, vector<4x128xbf16>, vector<8x128xf32> -> vector<8x128xf32>
    %653 = arith.addf %646, %652 : vector<8x128xf32>
    %654 = vector.extract_strided_slice %23 {offsets = [0, 2], sizes = [4, 126], strides = [1, 1]} : vector<4x128xbf16> to vector<4x126xbf16>
    %655 = vector.extract_strided_slice %23 {offsets = [0, 0], sizes = [4, 2], strides = [1, 1]} : vector<4x128xbf16> to vector<4x2xbf16>
    %656 = tpu.concatenate %654, %655 in 1 : vector<4x126xbf16>, vector<4x2xbf16> -> vector<4x128xbf16>
    %c11_371 = arith.constant 11 : index
    %c0_372 = arith.constant 0 : index
    %c0_373 = arith.constant 0 : index
    %657 = vector.load %arg3[%c11_371, %c0_372, %c0_373] : memref<27x8x4xbf16, #tpu.memory_space<vmem>>, vector<1x8x4xbf16>
    %658 = vector.shape_cast %657 : vector<1x8x4xbf16> to vector<8x4xbf16>
    %cst_374 = arith.constant dense<0.000000e+00> : vector<8x128xf32>
    %659 = tpu.matmul %658, %656, %cst_374 {dimension_numbers = #tpu.dot_dimension_numbers<[1], [0], [0], [1], [0, 0, 1, 1], [], []>} : vector<8x4xbf16>, vector<4x128xbf16>, vector<8x128xf32> -> vector<8x128xf32>
    %660 = arith.addf %653, %659 : vector<8x128xf32>
    %661 = vector.extract_strided_slice %23 {offsets = [0, 10], sizes = [4, 118], strides = [1, 1]} : vector<4x128xbf16> to vector<4x118xbf16>
    %662 = vector.extract_strided_slice %23 {offsets = [0, 0], sizes = [4, 10], strides = [1, 1]} : vector<4x128xbf16> to vector<4x10xbf16>
    %663 = tpu.concatenate %661, %662 in 1 : vector<4x118xbf16>, vector<4x10xbf16> -> vector<4x128xbf16>
    %c12_375 = arith.constant 12 : index
    %c0_376 = arith.constant 0 : index
    %c0_377 = arith.constant 0 : index
    %664 = vector.load %arg3[%c12_375, %c0_376, %c0_377] : memref<27x8x4xbf16, #tpu.memory_space<vmem>>, vector<1x8x4xbf16>
    %665 = vector.shape_cast %664 : vector<1x8x4xbf16> to vector<8x4xbf16>
    %cst_378 = arith.constant dense<0.000000e+00> : vector<8x128xf32>
    %666 = tpu.matmul %665, %663, %cst_378 {dimension_numbers = #tpu.dot_dimension_numbers<[1], [0], [0], [1], [0, 0, 1, 1], [], []>} : vector<8x4xbf16>, vector<4x128xbf16>, vector<8x128xf32> -> vector<8x128xf32>
    %667 = arith.addf %660, %666 : vector<8x128xf32>
    %668 = vector.extract_strided_slice %23 {offsets = [0, 11], sizes = [4, 117], strides = [1, 1]} : vector<4x128xbf16> to vector<4x117xbf16>
    %669 = vector.extract_strided_slice %23 {offsets = [0, 0], sizes = [4, 11], strides = [1, 1]} : vector<4x128xbf16> to vector<4x11xbf16>
    %670 = tpu.concatenate %668, %669 in 1 : vector<4x117xbf16>, vector<4x11xbf16> -> vector<4x128xbf16>
    %c13_379 = arith.constant 13 : index
    %c0_380 = arith.constant 0 : index
    %c0_381 = arith.constant 0 : index
    %671 = vector.load %arg3[%c13_379, %c0_380, %c0_381] : memref<27x8x4xbf16, #tpu.memory_space<vmem>>, vector<1x8x4xbf16>
    %672 = vector.shape_cast %671 : vector<1x8x4xbf16> to vector<8x4xbf16>
    %cst_382 = arith.constant dense<0.000000e+00> : vector<8x128xf32>
    %673 = tpu.matmul %672, %670, %cst_382 {dimension_numbers = #tpu.dot_dimension_numbers<[1], [0], [0], [1], [0, 0, 1, 1], [], []>} : vector<8x4xbf16>, vector<4x128xbf16>, vector<8x128xf32> -> vector<8x128xf32>
    %674 = arith.addf %667, %673 : vector<8x128xf32>
    %675 = vector.extract_strided_slice %23 {offsets = [0, 12], sizes = [4, 116], strides = [1, 1]} : vector<4x128xbf16> to vector<4x116xbf16>
    %676 = vector.extract_strided_slice %23 {offsets = [0, 0], sizes = [4, 12], strides = [1, 1]} : vector<4x128xbf16> to vector<4x12xbf16>
    %677 = tpu.concatenate %675, %676 in 1 : vector<4x116xbf16>, vector<4x12xbf16> -> vector<4x128xbf16>
    %c14_383 = arith.constant 14 : index
    %c0_384 = arith.constant 0 : index
    %c0_385 = arith.constant 0 : index
    %678 = vector.load %arg3[%c14_383, %c0_384, %c0_385] : memref<27x8x4xbf16, #tpu.memory_space<vmem>>, vector<1x8x4xbf16>
    %679 = vector.shape_cast %678 : vector<1x8x4xbf16> to vector<8x4xbf16>
    %cst_386 = arith.constant dense<0.000000e+00> : vector<8x128xf32>
    %680 = tpu.matmul %679, %677, %cst_386 {dimension_numbers = #tpu.dot_dimension_numbers<[1], [0], [0], [1], [0, 0, 1, 1], [], []>} : vector<8x4xbf16>, vector<4x128xbf16>, vector<8x128xf32> -> vector<8x128xf32>
    %681 = arith.addf %674, %680 : vector<8x128xf32>
    %682 = vector.extract_strided_slice %23 {offsets = [0, 20], sizes = [4, 108], strides = [1, 1]} : vector<4x128xbf16> to vector<4x108xbf16>
    %683 = vector.extract_strided_slice %23 {offsets = [0, 0], sizes = [4, 20], strides = [1, 1]} : vector<4x128xbf16> to vector<4x20xbf16>
    %684 = tpu.concatenate %682, %683 in 1 : vector<4x108xbf16>, vector<4x20xbf16> -> vector<4x128xbf16>
    %c15_387 = arith.constant 15 : index
    %c0_388 = arith.constant 0 : index
    %c0_389 = arith.constant 0 : index
    %685 = vector.load %arg3[%c15_387, %c0_388, %c0_389] : memref<27x8x4xbf16, #tpu.memory_space<vmem>>, vector<1x8x4xbf16>
    %686 = vector.shape_cast %685 : vector<1x8x4xbf16> to vector<8x4xbf16>
    %cst_390 = arith.constant dense<0.000000e+00> : vector<8x128xf32>
    %687 = tpu.matmul %686, %684, %cst_390 {dimension_numbers = #tpu.dot_dimension_numbers<[1], [0], [0], [1], [0, 0, 1, 1], [], []>} : vector<8x4xbf16>, vector<4x128xbf16>, vector<8x128xf32> -> vector<8x128xf32>
    %688 = arith.addf %681, %687 : vector<8x128xf32>
    %689 = vector.extract_strided_slice %23 {offsets = [0, 21], sizes = [4, 107], strides = [1, 1]} : vector<4x128xbf16> to vector<4x107xbf16>
    %690 = vector.extract_strided_slice %23 {offsets = [0, 0], sizes = [4, 21], strides = [1, 1]} : vector<4x128xbf16> to vector<4x21xbf16>
    %691 = tpu.concatenate %689, %690 in 1 : vector<4x107xbf16>, vector<4x21xbf16> -> vector<4x128xbf16>
    %c16_391 = arith.constant 16 : index
    %c0_392 = arith.constant 0 : index
    %c0_393 = arith.constant 0 : index
    %692 = vector.load %arg3[%c16_391, %c0_392, %c0_393] : memref<27x8x4xbf16, #tpu.memory_space<vmem>>, vector<1x8x4xbf16>
    %693 = vector.shape_cast %692 : vector<1x8x4xbf16> to vector<8x4xbf16>
    %cst_394 = arith.constant dense<0.000000e+00> : vector<8x128xf32>
    %694 = tpu.matmul %693, %691, %cst_394 {dimension_numbers = #tpu.dot_dimension_numbers<[1], [0], [0], [1], [0, 0, 1, 1], [], []>} : vector<8x4xbf16>, vector<4x128xbf16>, vector<8x128xf32> -> vector<8x128xf32>
    %695 = arith.addf %688, %694 : vector<8x128xf32>
    %696 = vector.extract_strided_slice %23 {offsets = [0, 22], sizes = [4, 106], strides = [1, 1]} : vector<4x128xbf16> to vector<4x106xbf16>
    %697 = vector.extract_strided_slice %23 {offsets = [0, 0], sizes = [4, 22], strides = [1, 1]} : vector<4x128xbf16> to vector<4x22xbf16>
    %698 = tpu.concatenate %696, %697 in 1 : vector<4x106xbf16>, vector<4x22xbf16> -> vector<4x128xbf16>
    %c17_395 = arith.constant 17 : index
    %c0_396 = arith.constant 0 : index
    %c0_397 = arith.constant 0 : index
    %699 = vector.load %arg3[%c17_395, %c0_396, %c0_397] : memref<27x8x4xbf16, #tpu.memory_space<vmem>>, vector<1x8x4xbf16>
    %700 = vector.shape_cast %699 : vector<1x8x4xbf16> to vector<8x4xbf16>
    %cst_398 = arith.constant dense<0.000000e+00> : vector<8x128xf32>
    %701 = tpu.matmul %700, %698, %cst_398 {dimension_numbers = #tpu.dot_dimension_numbers<[1], [0], [0], [1], [0, 0, 1, 1], [], []>} : vector<8x4xbf16>, vector<4x128xbf16>, vector<8x128xf32> -> vector<8x128xf32>
    %702 = arith.addf %695, %701 : vector<8x128xf32>
    %c18_399 = arith.constant 18 : index
    %c0_400 = arith.constant 0 : index
    %c0_401 = arith.constant 0 : index
    %703 = vector.load %arg3[%c18_399, %c0_400, %c0_401] : memref<27x8x4xbf16, #tpu.memory_space<vmem>>, vector<1x8x4xbf16>
    %704 = vector.shape_cast %703 : vector<1x8x4xbf16> to vector<8x4xbf16>
    %cst_402 = arith.constant dense<0.000000e+00> : vector<8x128xf32>
    %705 = tpu.matmul %704, %27, %cst_402 {dimension_numbers = #tpu.dot_dimension_numbers<[1], [0], [0], [1], [0, 0, 1, 1], [], []>} : vector<8x4xbf16>, vector<4x128xbf16>, vector<8x128xf32> -> vector<8x128xf32>
    %706 = arith.addf %702, %705 : vector<8x128xf32>
    %707 = vector.extract_strided_slice %27 {offsets = [0, 1], sizes = [4, 127], strides = [1, 1]} : vector<4x128xbf16> to vector<4x127xbf16>
    %708 = vector.extract_strided_slice %27 {offsets = [0, 0], sizes = [4, 1], strides = [1, 1]} : vector<4x128xbf16> to vector<4x1xbf16>
    %709 = tpu.concatenate %707, %708 in 1 : vector<4x127xbf16>, vector<4x1xbf16> -> vector<4x128xbf16>
    %c19_403 = arith.constant 19 : index
    %c0_404 = arith.constant 0 : index
    %c0_405 = arith.constant 0 : index
    %710 = vector.load %arg3[%c19_403, %c0_404, %c0_405] : memref<27x8x4xbf16, #tpu.memory_space<vmem>>, vector<1x8x4xbf16>
    %711 = vector.shape_cast %710 : vector<1x8x4xbf16> to vector<8x4xbf16>
    %cst_406 = arith.constant dense<0.000000e+00> : vector<8x128xf32>
    %712 = tpu.matmul %711, %709, %cst_406 {dimension_numbers = #tpu.dot_dimension_numbers<[1], [0], [0], [1], [0, 0, 1, 1], [], []>} : vector<8x4xbf16>, vector<4x128xbf16>, vector<8x128xf32> -> vector<8x128xf32>
    %713 = arith.addf %706, %712 : vector<8x128xf32>
    %714 = vector.extract_strided_slice %27 {offsets = [0, 2], sizes = [4, 126], strides = [1, 1]} : vector<4x128xbf16> to vector<4x126xbf16>
    %715 = vector.extract_strided_slice %27 {offsets = [0, 0], sizes = [4, 2], strides = [1, 1]} : vector<4x128xbf16> to vector<4x2xbf16>
    %716 = tpu.concatenate %714, %715 in 1 : vector<4x126xbf16>, vector<4x2xbf16> -> vector<4x128xbf16>
    %c20_407 = arith.constant 20 : index
    %c0_408 = arith.constant 0 : index
    %c0_409 = arith.constant 0 : index
    %717 = vector.load %arg3[%c20_407, %c0_408, %c0_409] : memref<27x8x4xbf16, #tpu.memory_space<vmem>>, vector<1x8x4xbf16>
    %718 = vector.shape_cast %717 : vector<1x8x4xbf16> to vector<8x4xbf16>
    %cst_410 = arith.constant dense<0.000000e+00> : vector<8x128xf32>
    %719 = tpu.matmul %718, %716, %cst_410 {dimension_numbers = #tpu.dot_dimension_numbers<[1], [0], [0], [1], [0, 0, 1, 1], [], []>} : vector<8x4xbf16>, vector<4x128xbf16>, vector<8x128xf32> -> vector<8x128xf32>
    %720 = arith.addf %713, %719 : vector<8x128xf32>
    %721 = vector.extract_strided_slice %27 {offsets = [0, 10], sizes = [4, 118], strides = [1, 1]} : vector<4x128xbf16> to vector<4x118xbf16>
    %722 = vector.extract_strided_slice %27 {offsets = [0, 0], sizes = [4, 10], strides = [1, 1]} : vector<4x128xbf16> to vector<4x10xbf16>
    %723 = tpu.concatenate %721, %722 in 1 : vector<4x118xbf16>, vector<4x10xbf16> -> vector<4x128xbf16>
    %c21_411 = arith.constant 21 : index
    %c0_412 = arith.constant 0 : index
    %c0_413 = arith.constant 0 : index
    %724 = vector.load %arg3[%c21_411, %c0_412, %c0_413] : memref<27x8x4xbf16, #tpu.memory_space<vmem>>, vector<1x8x4xbf16>
    %725 = vector.shape_cast %724 : vector<1x8x4xbf16> to vector<8x4xbf16>
    %cst_414 = arith.constant dense<0.000000e+00> : vector<8x128xf32>
    %726 = tpu.matmul %725, %723, %cst_414 {dimension_numbers = #tpu.dot_dimension_numbers<[1], [0], [0], [1], [0, 0, 1, 1], [], []>} : vector<8x4xbf16>, vector<4x128xbf16>, vector<8x128xf32> -> vector<8x128xf32>
    %727 = arith.addf %720, %726 : vector<8x128xf32>
    %728 = vector.extract_strided_slice %27 {offsets = [0, 11], sizes = [4, 117], strides = [1, 1]} : vector<4x128xbf16> to vector<4x117xbf16>
    %729 = vector.extract_strided_slice %27 {offsets = [0, 0], sizes = [4, 11], strides = [1, 1]} : vector<4x128xbf16> to vector<4x11xbf16>
    %730 = tpu.concatenate %728, %729 in 1 : vector<4x117xbf16>, vector<4x11xbf16> -> vector<4x128xbf16>
    %c22_415 = arith.constant 22 : index
    %c0_416 = arith.constant 0 : index
    %c0_417 = arith.constant 0 : index
    %731 = vector.load %arg3[%c22_415, %c0_416, %c0_417] : memref<27x8x4xbf16, #tpu.memory_space<vmem>>, vector<1x8x4xbf16>
    %732 = vector.shape_cast %731 : vector<1x8x4xbf16> to vector<8x4xbf16>
    %cst_418 = arith.constant dense<0.000000e+00> : vector<8x128xf32>
    %733 = tpu.matmul %732, %730, %cst_418 {dimension_numbers = #tpu.dot_dimension_numbers<[1], [0], [0], [1], [0, 0, 1, 1], [], []>} : vector<8x4xbf16>, vector<4x128xbf16>, vector<8x128xf32> -> vector<8x128xf32>
    %734 = arith.addf %727, %733 : vector<8x128xf32>
    %735 = vector.extract_strided_slice %27 {offsets = [0, 12], sizes = [4, 116], strides = [1, 1]} : vector<4x128xbf16> to vector<4x116xbf16>
    %736 = vector.extract_strided_slice %27 {offsets = [0, 0], sizes = [4, 12], strides = [1, 1]} : vector<4x128xbf16> to vector<4x12xbf16>
    %737 = tpu.concatenate %735, %736 in 1 : vector<4x116xbf16>, vector<4x12xbf16> -> vector<4x128xbf16>
    %c23_419 = arith.constant 23 : index
    %c0_420 = arith.constant 0 : index
    %c0_421 = arith.constant 0 : index
    %738 = vector.load %arg3[%c23_419, %c0_420, %c0_421] : memref<27x8x4xbf16, #tpu.memory_space<vmem>>, vector<1x8x4xbf16>
    %739 = vector.shape_cast %738 : vector<1x8x4xbf16> to vector<8x4xbf16>
    %cst_422 = arith.constant dense<0.000000e+00> : vector<8x128xf32>
    %740 = tpu.matmul %739, %737, %cst_422 {dimension_numbers = #tpu.dot_dimension_numbers<[1], [0], [0], [1], [0, 0, 1, 1], [], []>} : vector<8x4xbf16>, vector<4x128xbf16>, vector<8x128xf32> -> vector<8x128xf32>
    %741 = arith.addf %734, %740 : vector<8x128xf32>
    %742 = vector.extract_strided_slice %27 {offsets = [0, 20], sizes = [4, 108], strides = [1, 1]} : vector<4x128xbf16> to vector<4x108xbf16>
    %743 = vector.extract_strided_slice %27 {offsets = [0, 0], sizes = [4, 20], strides = [1, 1]} : vector<4x128xbf16> to vector<4x20xbf16>
    %744 = tpu.concatenate %742, %743 in 1 : vector<4x108xbf16>, vector<4x20xbf16> -> vector<4x128xbf16>
    %c24_423 = arith.constant 24 : index
    %c0_424 = arith.constant 0 : index
    %c0_425 = arith.constant 0 : index
    %745 = vector.load %arg3[%c24_423, %c0_424, %c0_425] : memref<27x8x4xbf16, #tpu.memory_space<vmem>>, vector<1x8x4xbf16>
    %746 = vector.shape_cast %745 : vector<1x8x4xbf16> to vector<8x4xbf16>
    %cst_426 = arith.constant dense<0.000000e+00> : vector<8x128xf32>
    %747 = tpu.matmul %746, %744, %cst_426 {dimension_numbers = #tpu.dot_dimension_numbers<[1], [0], [0], [1], [0, 0, 1, 1], [], []>} : vector<8x4xbf16>, vector<4x128xbf16>, vector<8x128xf32> -> vector<8x128xf32>
    %748 = arith.addf %741, %747 : vector<8x128xf32>
    %749 = vector.extract_strided_slice %27 {offsets = [0, 21], sizes = [4, 107], strides = [1, 1]} : vector<4x128xbf16> to vector<4x107xbf16>
    %750 = vector.extract_strided_slice %27 {offsets = [0, 0], sizes = [4, 21], strides = [1, 1]} : vector<4x128xbf16> to vector<4x21xbf16>
    %751 = tpu.concatenate %749, %750 in 1 : vector<4x107xbf16>, vector<4x21xbf16> -> vector<4x128xbf16>
    %c25_427 = arith.constant 25 : index
    %c0_428 = arith.constant 0 : index
    %c0_429 = arith.constant 0 : index
    %752 = vector.load %arg3[%c25_427, %c0_428, %c0_429] : memref<27x8x4xbf16, #tpu.memory_space<vmem>>, vector<1x8x4xbf16>
    %753 = vector.shape_cast %752 : vector<1x8x4xbf16> to vector<8x4xbf16>
    %cst_430 = arith.constant dense<0.000000e+00> : vector<8x128xf32>
    %754 = tpu.matmul %753, %751, %cst_430 {dimension_numbers = #tpu.dot_dimension_numbers<[1], [0], [0], [1], [0, 0, 1, 1], [], []>} : vector<8x4xbf16>, vector<4x128xbf16>, vector<8x128xf32> -> vector<8x128xf32>
    %755 = arith.addf %748, %754 : vector<8x128xf32>
    %756 = vector.extract_strided_slice %27 {offsets = [0, 22], sizes = [4, 106], strides = [1, 1]} : vector<4x128xbf16> to vector<4x106xbf16>
    %757 = vector.extract_strided_slice %27 {offsets = [0, 0], sizes = [4, 22], strides = [1, 1]} : vector<4x128xbf16> to vector<4x22xbf16>
    %758 = tpu.concatenate %756, %757 in 1 : vector<4x106xbf16>, vector<4x22xbf16> -> vector<4x128xbf16>
    %c26_431 = arith.constant 26 : index
    %c0_432 = arith.constant 0 : index
    %c0_433 = arith.constant 0 : index
    %759 = vector.load %arg3[%c26_431, %c0_432, %c0_433] : memref<27x8x4xbf16, #tpu.memory_space<vmem>>, vector<1x8x4xbf16>
    %760 = vector.shape_cast %759 : vector<1x8x4xbf16> to vector<8x4xbf16>
    %cst_434 = arith.constant dense<0.000000e+00> : vector<8x128xf32>
    %761 = tpu.matmul %760, %758, %cst_434 {dimension_numbers = #tpu.dot_dimension_numbers<[1], [0], [0], [1], [0, 0, 1, 1], [], []>} : vector<8x4xbf16>, vector<4x128xbf16>, vector<8x128xf32> -> vector<8x128xf32>
    %762 = arith.addf %755, %761 : vector<8x128xf32>
    %cst_435 = arith.constant 0.000000e+00 : f32
    %763 = vector.broadcast %cst_435 : f32 to vector<8x128xf32>
    %764 = arith.maximumf %762, %763 : vector<8x128xf32>
    %c0_436 = arith.constant 0 : index
    %c0_437 = arith.constant 0 : index
    %c384 = arith.constant 384 : index
    %765 = vector.load %arg5[%c0_436, %c0_437, %c384] : memref<1x8x512xf32, #tpu.memory_space<vmem>>, vector<1x8x128xf32>
    %766 = vector.shape_cast %765 : vector<1x8x128xf32> to vector<8x128xf32>
    %767 = vector.shape_cast %764 : vector<8x128xf32> to vector<1x8x128xf32>
    tpu.vector_store %arg5[%c0_436, %c0_437, %c384], %767 {strides = array<i32>} : memref<1x8x512xf32, #tpu.memory_space<vmem>>, vector<1x8x128xf32>,
    return
  }
  func.func @transform_0(%arg0: i32, %arg1: i32) -> (i32, i32, i32, i32) {
    %c0_i32 = arith.constant 0 : i32
    %c0_i32_0 = arith.constant 0 : i32
    %c0_i32_1 = arith.constant 0 : i32
    %c0_i32_2 = arith.constant 0 : i32
    return %arg0, %c0_i32, %c0_i32_0, %c0_i32_1 : i32, i32, i32, i32
  }
  func.func @transform_1(%arg0: i32, %arg1: i32) -> (i32, i32, i32) {
    %c0_i32 = arith.constant 0 : i32
    %c0_i32_0 = arith.constant 0 : i32
    %c0_i32_1 = arith.constant 0 : i32
    %c0_i32_2 = arith.constant 0 : i32
    return %c0_i32, %c0_i32_0, %c0_i32_1 : i32, i32, i32
  }
  func.func @transform_2(%arg0: i32, %arg1: i32) -> (i32, i32) {
    %c0_i32 = arith.constant 0 : i32
    %c0_i32_0 = arith.constant 0 : i32
    %c0_i32_1 = arith.constant 0 : i32
    return %c0_i32, %c0_i32_0 : i32, i32
  }
  func.func @transform_3(%arg0: i32, %arg1: i32) -> (i32, i32, i32) {
    %c0_i32 = arith.constant 0 : i32
    %c0_i32_0 = arith.constant 0 : i32
    return %arg0, %c0_i32, %arg1 : i32, i32, i32
  }
}

</mosaic_0001>

<llo_original>
// kernel: tpu_custom_call.1
$region0: #{tpu_custom_call.1}
  #allocation0 [shape = 'u32[]', space=smem, size = 0x4, offset = 0x4, fixed_abs, tag = 'smem constant byte address 0x4 - core index']
  #allocation1 [shape = 'u32[144,128]{1,0:T(1,128)}', space=vmem, size = 0x12000, scoped, tag = 'internal scratch']
  %s0 = inlined_call_operand.vmem [shape: bf16[2,10,4,128], index: 0, kind: input, shape index: {}]
  %s1 = inlined_call_operand.vmem [shape: bf16[27,8,4], index: 1, kind: input, shape index: {}]
  %s2 = inlined_call_operand.vmem [shape: f32[8,1], index: 2, kind: input, shape index: {}]
  %s3 = inlined_call_operand.hbm [shape: f32[2,8,1024], index: 3, kind: output, shape index: {}]
  %s4 = sld [smem:[#allocation0]]
  $region45: #{tpu_custom_call.1} parent=0
    _
  %s6 = ssub.s32 1, %s4
  %s7 = scalar_select 0, %s6, %s4
  $region1: #{tpu_custom_call.1} parent=0
    #allocation2 [shape = 'u8[32768]{0}', space=vmem, size = 0x8000, scoped, tag = 'output window, operand 0']
    #allocation3 [shape = 's32[2]{0}', space=sflag, size = 0x8, scoped, tag = 'scoped memory for tpu_custom_call.1']
    %8 = vsyncpa [#allocation3], 0
    %s9 = scalar_lea.sflag [#allocation3], 1
    %10 = vsyncpa %s9, 0
    loop: start=0, step=1, limit=6
    $region2: #{tpu_custom_call.1} parent=1 // loop_pre_header
      _
    $region3: #{tpu_custom_call.1} parent=1 // loop_header
      %s12 = sphi 0, %s16
      %p13 = scmp.ge.s32.totalorder %s12, 6
      %s19 = sphi 0, %s31
      %s20 = sphi 0, %s27
      %s21 = sphi 0, %s19
      %s22 = sphi 0, %s20
      %s23 = sphi 0, %s21
      %s24 = sphi 0, %s22
      %s34 = sphi 0, %s36
      %s37 = sphi 0, %s34
      %s38 = sphi 0, %s37
      %s54 = sphi 0, %s38
      %s58 = sphi 0, %s58
      %s60 = sphi 0, %s58
      %s61 = sphi 0, %s60
      %s75 = sphi 0, %s61
      %s79 = sphi 0, %s79
      %s81 = sphi 0, %s79
      %s82 = sphi 0, %s81
      %s96 = sphi 0, %s82
      %s104 = sphi 0, %s106
      %s107 = sphi 0, %s104
      %s108 = sphi 0, %s107
      %s124 = sphi 0, %s108
    $region4: #{tpu_custom_call.1} parent=1 // loop_header_branch
      %15 = sbr.rel (%p13) target = $region8
    $region5: #{tpu_custom_call.1} parent=1 // loop_body
      %s17 = ssub.s32 %s12, 1
      %s18 = ssub.s32 %s12, 2
      %s25 = sadd.s32 1, %s20
      %p26 = scmp.ge.s32.totalorder %s25, 2
      %s27 = scalar_select %p26, 0, %s25
      %s28 = sadd.s32 1, %s19
      %s29 = scalar_select %p26, %s28, %s19
      %p30 = scmp.ge.s32.totalorder %s29, 2
      %s31 = scalar_select %p30, 0, %s29
      %s32 = ssub.s32 %s19, %s31
      %p33 = scmp.eq.s32.totalorder %s32, 0
      %s35 = sadd.s32 %s34, 1
      %s36 = scalar_select %p33, %s34, %s35
      %p39 = pneg %p33
      %p40 = scmp.eq.s32.totalorder %s12, 3
      %p41 = por %p39, %p40
      %p42 = scmp.ne.s32.totalorder %s34, %s37
      %p43 = scmp.eq.s32.totalorder %s12, 0
      %p44 = por %p42, %p43
      %p45 = scmp.ne.s32.totalorder %s34, %s37
      %p46 = scmp.eq.s32.totalorder %s17, 3
      %p47 = por %p45, %p46
      %p48 = scmp.ne.s32.totalorder %s37, %s38
      %p49 = scmp.eq.s32.totalorder %s17, 0
      %p50 = por %p48, %p49
      %p51 = scmp.ne.s32.totalorder %s37, %s38
      %p52 = scmp.eq.s32.totalorder %s18, 3
      %p53 = por %p51, %p52
      %p55 = scmp.ne.s32.totalorder %s38, %s54
      %p56 = scmp.eq.s32.totalorder %s18, 0
      %p57 = por %p55, %p56
      %s59 = sadd.s32 %s58, 1
      %p62 = scmp.eq.s32.totalorder %s12, 3
      %p63 = scmp.ne.s32.totalorder %s58, %s60
      %p64 = scmp.eq.s32.totalorder %s12, 0
      %p65 = por %p63, %p64
      %p66 = scmp.ne.s32.totalorder %s58, %s60
      %p67 = scmp.eq.s32.totalorder %s17, 3
      %p68 = por %p66, %p67
      %p69 = scmp.ne.s32.totalorder %s60, %s61
      %p70 = scmp.eq.s32.totalorder %s17, 0
      %p71 = por %p69, %p70
      %p72 = scmp.ne.s32.totalorder %s60, %s61
      %p73 = scmp.eq.s32.totalorder %s18, 3
      %p74 = por %p72, %p73
      %p76 = scmp.ne.s32.totalorder %s61, %s75
      %p77 = scmp.eq.s32.totalorder %s18, 0
      %p78 = por %p76, %p77
      %s80 = sadd.s32 %s79, 1
      %p83 = scmp.eq.s32.totalorder %s12, 3
      %p84 = scmp.ne.s32.totalorder %s79, %s81
      %p85 = scmp.eq.s32.totalorder %s12, 0
      %p86 = por %p84, %p85
      %p87 = scmp.ne.s32.totalorder %s79, %s81
      %p88 = scmp.eq.s32.totalorder %s17, 3
      %p89 = por %p87, %p88
      %p90 = scmp.ne.s32.totalorder %s81, %s82
      %p91 = scmp.eq.s32.totalorder %s17, 0
      %p92 = por %p90, %p91
      %p93 = scmp.ne.s32.totalorder %s81, %s82
      %p94 = scmp.eq.s32.totalorder %s18, 3
      %p95 = por %p93, %p94
      %p97 = scmp.ne.s32.totalorder %s82, %s96
      %p98 = scmp.eq.s32.totalorder %s18, 0
      %p99 = por %p97, %p98
      %s100 = ssub.s32 %s19, %s31
      %s101 = ssub.s32 %s20, %s27
      %s102 = sor.u32 %s100, %s101
      %p103 = scmp.eq.s32.totalorder %s102, 0
      %s105 = sadd.s32 %s104, 1
      %s106 = scalar_select %p103, %s104, %s105
      %p109 = pneg %p103
      %p110 = scmp.eq.s32.totalorder %s12, 3
      %p111 = por %p109, %p110
      %p112 = scmp.ne.s32.totalorder %s104, %s107
      %p113 = scmp.eq.s32.totalorder %s12, 0
      %p114 = por %p112, %p113
      %p115 = scmp.ne.s32.totalorder %s104, %s107
      %p116 = scmp.eq.s32.totalorder %s17, 3
      %p117 = por %p115, %p116
      %p118 = scmp.ne.s32.totalorder %s107, %s108
      %p119 = scmp.eq.s32.totalorder %s17, 0
      %p120 = por %p118, %p119
      %p121 = scmp.ne.s32.totalorder %s107, %s108
      %p122 = scmp.eq.s32.totalorder %s18, 3
      %p123 = por %p121, %p122
      %p125 = scmp.ne.s32.totalorder %s108, %s124
      %p126 = scmp.eq.s32.totalorder %s18, 0
      %p127 = por %p125, %p126
      %p128 = scmp.le.s32.totalorder 1, %s12
      %p129 = scmp.lt.s32.totalorder %s12, 5
      %p130 = pnand %p128, %p129
      %p131 = pneg %p130
      // Predicated region
      $region9: #{tpu_custom_call.1} parent=5 // pred_check
        _
      $region10: #{tpu_custom_call.1} parent=5 // pred_check_branch
        %133 = sbr.rel (%p130) target = $region12
      $region11: #{tpu_custom_call.1} parent=5 // pred_region
        %s134 = ssub.s32 %s12, 1
        // Predicated region
        $region13: #{tpu_custom_call.1} parent=11 // pred_check
          %p135 = pneg %p71
        $region14: #{tpu_custom_call.1} parent=11 // pred_check_branch
          %137 = sbr.rel (%p135) target = $region16
        $region15: #{tpu_custom_call.1} parent=11 // pred_region
          _
        $region16: #{tpu_custom_call.1} parent=11 // pred_fallthru
          _
        // Predicated region
        $region17: #{tpu_custom_call.1} parent=11 // pred_check
          %p138 = pneg %p92
        $region18: #{tpu_custom_call.1} parent=11 // pred_check_branch
          %140 = sbr.rel (%p138) target = $region20
        $region19: #{tpu_custom_call.1} parent=11 // pred_region
          _
        $region20: #{tpu_custom_call.1} parent=11 // pred_fallthru
          _
      $region12: #{tpu_custom_call.1} parent=5 // pred_fallthru
        _
      %p141 = scmp.lt.s32.totalorder %s12, 4
      // Predicated region
      $region21: #{tpu_custom_call.1} parent=5 // pred_check
        %p142 = pneg %p141
      $region22: #{tpu_custom_call.1} parent=5 // pred_check_branch
        %144 = sbr.rel (%p142) target = $region24
      $region23: #{tpu_custom_call.1} parent=5 // pred_region
        // Predicated region
        $region25: #{tpu_custom_call.1} parent=23 // pred_check
          %p145 = pneg %p44
        $region26: #{tpu_custom_call.1} parent=23 // pred_check_branch
          %147 = sbr.rel (%p145) target = $region28
        $region27: #{tpu_custom_call.1} parent=23 // pred_region
          %p148 = scmp.lt.s32.totalorder %s19, 1
          %s149 = scalar_select %p148, %s19, 1
          %s150 = smul.addr %s149, 10
          %s151 = smul.addr %s150, 2
          %s152 = scalar_lea.vmem %s0, %s151
        $region28: #{tpu_custom_call.1} parent=23 // pred_fallthru
          _
      $region24: #{tpu_custom_call.1} parent=5 // pred_fallthru
        _
      %p153 = scmp.le.s32.totalorder 1, %s12
      %p154 = scmp.lt.s32.totalorder %s12, 5
      %p155 = pnand %p153, %p154
      %p156 = pneg %p155
      // Predicated region
      $region29: #{tpu_custom_call.1} parent=5 // pred_check
        _
      $region30: #{tpu_custom_call.1} parent=5 // pred_check_branch
        %158 = sbr.rel (%p155) target = $region32
      $region31: #{tpu_custom_call.1} parent=5 // pred_region
        %s159 = ssub.s32 %s12, 1
        %p160 = scmp.lt.s32.totalorder %s21, 1
        %s161 = scalar_select %p160, %s21, 1
        %s162 = smul.addr %s161, 10
        %s163 = smul.addr %s162, 2
        %s164 = scalar_lea.vmem %s0, %s163
        %p165 = pneg %p50
        %p166 = pneg %p47
        %p167 = pneg %p71
        %p168 = pneg %p68
        %p169 = pneg %p92
        %p170 = pneg %p89
        %p171 = pneg %p120
        %p172 = pneg %p117
        %s173 = sand.u32 %s107, 1
        %s174 = scalar_lea.sflag [#allocation3], %s173
        %s175 = sand.u32 %s107, 1
        %s176 = smul.addr %s175, 32
        %s177 = scalar_lea.vmem [#allocation2], %s176
        %p178 = scmp.lt.s32.totalorder %s21, 1
        %s179 = scalar_select %p178, %s21, 1
        %s180 = smul.addr %s179, 10
        %s181 = smul.addr %s180, 2
        %s182 = scalar_lea.vmem %s0, %s181
        %s183 = smul.u32 4, %s22
        %s185 = smul.u32 %s22, 4
        %v186 = vld [vmem:[%s2] sm:$0xff]
        %188 = vset.pattern.permute.xlu0 0
        %189 = vperm.xlu0 %188, %v186
        %v190 = vpop.permute.xlu0 %189
        %s192 = smul.addr %s185, 2
        %s193 = scalar_lea.vmem %s182, %s192
        %v194 = vld [vmem:[%s193] sm:$0x3]
        %s195 = sadd.s32 %s185, 1
        %s196 = smul.addr %s195, 2
        %s197 = scalar_lea.vmem %s182, %s196
        %v198 = vld [vmem:[%s197] sm:$0x3]
        %s199 = sadd.s32 %s185, 2
        %s200 = smul.addr %s199, 2
        %s201 = scalar_lea.vmem %s182, %s200
        %v202 = vld [vmem:[%s201] sm:$0x3]
        %s203 = sadd.s32 %s185, 3
        %s204 = smul.addr %s203, 2
        %s205 = scalar_lea.vmem %s182, %s204
        %v206 = vld [vmem:[%s205] sm:$0x3]
        %s207 = sadd.s32 %s185, 4
        %s208 = smul.addr %s207, 2
        %s209 = scalar_lea.vmem %s182, %s208
        %v210 = vld [vmem:[%s209] sm:$0x3]
        %s211 = sadd.s32 %s185, 5
        %s212 = smul.addr %s211, 2
        %s213 = scalar_lea.vmem %s182, %s212
        %v214 = vld [vmem:[%s213] sm:$0x3]
        %v215 = vld [vmem:[%s1] sm:$0xf]
        %vm216 = vcmask 31744
        %v218 = vsel %vm216, %v215, 0
        %vm220 = vcmask 1041408
        %v222 = vsel %vm220, %v194, 0
        %224 = vmatprep.subr.bf16.mxu0 0
        %225 = vmatpush1.bf16.msra.mxu0 %v222
        %226 = vmatprep.subr.bf16.mxu0 0
        %227 = vmatpush1.bf16.msra.mxu0 0
        %228 = vmatprep.subr.bf16.mxu0 0
        %229 = vmatpush1.bf16.msra.mxu0 0
        %230 = vmatprep.subr.bf16.mxu0 0
        %231 = vmatpush1.bf16.msra.mxu0 0
        %232 = vmatprep.subr.bf16.mxu0 0
        %233 = vmatpush1.bf16.msra.mxu0 0
        %234 = vmatprep.subr.bf16.mxu0 0
        %235 = vmatpush1.bf16.msra.mxu0 0
        %236 = vmatprep.subr.bf16.mxu0 0
        %237 = vmatpush1.bf16.msra.mxu0 0
        %238 = vmatprep.subr.bf16.mxu0 0
        %239 = vmatpush1.bf16.msra.mxu0 0
        %240 = vmatprep.subr.bf16.mxu0 0
        %241 = vmatpush1.bf16.msra.mxu0 0
        %242 = vmatprep.subr.bf16.mxu0 0
        %243 = vmatpush1.bf16.msra.mxu0 0
        %244 = vmatprep.subr.bf16.mxu0 0
        %245 = vmatpush1.bf16.msra.mxu0 0
        %246 = vmatprep.subr.bf16.mxu0 0
        %247 = vmatpush1.bf16.msra.mxu0 0
        %248 = vmatprep.subr.bf16.mxu0 0
        %249 = vmatpush1.bf16.msra.mxu0 0
        %250 = vmatprep.subr.bf16.mxu0 0
        %251 = vmatpush1.bf16.msra.mxu0 0
        %252 = vmatprep.subr.bf16.mxu0 0
        %253 = vmatpush1.bf16.msra.mxu0 0
        %254 = vmatprep.subr.bf16.mxu0 0
        %255 = vmatpush1.bf16.msra.mxu0 0
        %256 = vmatprep.mubr.bf16.mxu0 0
        %257 = vmatmul.mubr.bf16.gmra.mrb[0].mxu0 %v218
        %v258 = vpop.f32.mrb[0].mxu0
        %v259 = vadd.f32 0.0, %v258
        %v260 = vpop.f32.mrb[0].mxu0
        %v261 = vpop.f32.mrb[0].mxu0
        %v262 = vpop.f32.mrb[0].mxu0
        %263 = vdwg.mxu0
        %v264 = vadd.f32 %v190, %v259
        %v267 = vunpack.c.l.s4 1983009808
        %v268 = vunpack.c.0.s8 %v267
        %v269 = vlaneseq
        %v270 = vshrl.u32 %v269, 7
        %v271 = vsub.s32 %v268, %v270
        %v272 = vrot.slane %v194, %v271
        %273 = vrot.lane.b32.xlu0 %v272, 127
        %v274 = vpop.permute.xlu0 %273
        %s276 = scalar_lea.vmem %s1, 4
        %v277 = vld [vmem:[%s276] sm:$0xf]
        %v279 = vsel %vm216, %v277, 0
        %v281 = vsel %vm220, %v274, 0
        %283 = vmatprep.subr.bf16.mxu0 0
        %284 = vmatpush1.bf16.msra.mxu0 %v281
        %285 = vmatprep.subr.bf16.mxu0 0
        %286 = vmatpush1.bf16.msra.mxu0 0
        %287 = vmatprep.subr.bf16.mxu0 0
        %288 = vmatpush1.bf16.msra.mxu0 0
        %289 = vmatprep.subr.bf16.mxu0 0
        %290 = vmatpush1.bf16.msra.mxu0 0
        %291 = vmatprep.subr.bf16.mxu0 0
        %292 = vmatpush1.bf16.msra.mxu0 0
        %293 = vmatprep.subr.bf16.mxu0 0
        %294 = vmatpush1.bf16.msra.mxu0 0
        %295 = vmatprep.subr.bf16.mxu0 0
        %296 = vmatpush1.bf16.msra.mxu0 0
        %297 = vmatprep.subr.bf16.mxu0 0
        %298 = vmatpush1.bf16.msra.mxu0 0
        %299 = vmatprep.subr.bf16.mxu0 0
        %300 = vmatpush1.bf16.msra.mxu0 0
        %301 = vmatprep.subr.bf16.mxu0 0
        %302 = vmatpush1.bf16.msra.mxu0 0
        %303 = vmatprep.subr.bf16.mxu0 0
        %304 = vmatpush1.bf16.msra.mxu0 0
        %305 = vmatprep.subr.bf16.mxu0 0
        %306 = vmatpush1.bf16.msra.mxu0 0
        %307 = vmatprep.subr.bf16.mxu0 0
        %308 = vmatpush1.bf16.msra.mxu0 0
        %309 = vmatprep.subr.bf16.mxu0 0
        %310 = vmatpush1.bf16.msra.mxu0 0
        %311 = vmatprep.subr.bf16.mxu0 0
        %312 = vmatpush1.bf16.msra.mxu0 0
        %313 = vmatprep.subr.bf16.mxu0 0
        %314 = vmatpush1.bf16.msra.mxu0 0
        %315 = vmatprep.mubr.bf16.mxu0 0
        %316 = vmatmul.mubr.bf16.gmra.mrb[0].mxu0 %v279
        %v317 = vpop.f32.mrb[0].mxu0
        %v318 = vadd.f32 0.0, %v317
        %v319 = vpop.f32.mrb[0].mxu0
        %v320 = vpop.f32.mrb[0].mxu0
        %v321 = vpop.f32.mrb[0].mxu0
        %322 = vdwg.mxu0
        %v323 = vadd.f32 %v264, %v318
        %324 = vrot.lane.b32.xlu0 %v272, 126
        %v325 = vpop.permute.xlu0 %324
        %s327 = scalar_lea.vmem %s1, 8
        %v328 = vld [vmem:[%s327] sm:$0xf]
        %v330 = vsel %vm216, %v328, 0
        %v332 = vsel %vm220, %v325, 0
        %334 = vmatprep.subr.bf16.mxu0 0
        %335 = vmatpush1.bf16.msra.mxu0 %v332
        %336 = vmatprep.subr.bf16.mxu0 0
        %337 = vmatpush1.bf16.msra.mxu0 0
        %338 = vmatprep.subr.bf16.mxu0 0
        %339 = vmatpush1.bf16.msra.mxu0 0
        %340 = vmatprep.subr.bf16.mxu0 0
        %341 = vmatpush1.bf16.msra.mxu0 0
        %342 = vmatprep.subr.bf16.mxu0 0
        %343 = vmatpush1.bf16.msra.mxu0 0
        %344 = vmatprep.subr.bf16.mxu0 0
        %345 = vmatpush1.bf16.msra.mxu0 0
        %346 = vmatprep.subr.bf16.mxu0 0
        %347 = vmatpush1.bf16.msra.mxu0 0
        %348 = vmatprep.subr.bf16.mxu0 0
        %349 = vmatpush1.bf16.msra.mxu0 0
        %350 = vmatprep.subr.bf16.mxu0 0
        %351 = vmatpush1.bf16.msra.mxu0 0
        %352 = vmatprep.subr.bf16.mxu0 0
        %353 = vmatpush1.bf16.msra.mxu0 0
        %354 = vmatprep.subr.bf16.mxu0 0
        %355 = vmatpush1.bf16.msra.mxu0 0
        %356 = vmatprep.subr.bf16.mxu0 0
        %357 = vmatpush1.bf16.msra.mxu0 0
        %358 = vmatprep.subr.bf16.mxu0 0
        %359 = vmatpush1.bf16.msra.mxu0 0
        %360 = vmatprep.subr.bf16.mxu0 0
        %361 = vmatpush1.bf16.msra.mxu0 0
        %362 = vmatprep.subr.bf16.mxu0 0
        %363 = vmatpush1.bf16.msra.mxu0 0
        %364 = vmatprep.subr.bf16.mxu0 0
        %365 = vmatpush1.bf16.msra.mxu0 0
        %366 = vmatprep.mubr.bf16.mxu0 0
        %367 = vmatmul.mubr.bf16.gmra.mrb[0].mxu0 %v330
        %v368 = vpop.f32.mrb[0].mxu0
        %v369 = vadd.f32 0.0, %v368
        %v370 = vpop.f32.mrb[0].mxu0
        %v371 = vpop.f32.mrb[0].mxu0
        %v372 = vpop.f32.mrb[0].mxu0
        %373 = vdwg.mxu0
        %v374 = vadd.f32 %v323, %v369
        %375 = vrot.lane.b32.xlu0 %v272, 118
        %v376 = vpop.permute.xlu0 %375
        %s378 = scalar_lea.vmem %s1, 12
        %v379 = vld [vmem:[%s378] sm:$0xf]
        %v381 = vsel %vm216, %v379, 0
        %v383 = vsel %vm220, %v376, 0
        %385 = vmatprep.subr.bf16.mxu0 0
        %386 = vmatpush1.bf16.msra.mxu0 %v383
        %387 = vmatprep.subr.bf16.mxu0 0
        %388 = vmatpush1.bf16.msra.mxu0 0
        %389 = vmatprep.subr.bf16.mxu0 0
        %390 = vmatpush1.bf16.msra.mxu0 0
        %391 = vmatprep.subr.bf16.mxu0 0
        %392 = vmatpush1.bf16.msra.mxu0 0
        %393 = vmatprep.subr.bf16.mxu0 0
        %394 = vmatpush1.bf16.msra.mxu0 0
        %395 = vmatprep.subr.bf16.mxu0 0
        %396 = vmatpush1.bf16.msra.mxu0 0
        %397 = vmatprep.subr.bf16.mxu0 0
        %398 = vmatpush1.bf16.msra.mxu0 0
        %399 = vmatprep.subr.bf16.mxu0 0
        %400 = vmatpush1.bf16.msra.mxu0 0
        %401 = vmatprep.subr.bf16.mxu0 0
        %402 = vmatpush1.bf16.msra.mxu0 0
        %403 = vmatprep.subr.bf16.mxu0 0
        %404 = vmatpush1.bf16.msra.mxu0 0
        %405 = vmatprep.subr.bf16.mxu0 0
        %406 = vmatpush1.bf16.msra.mxu0 0
        %407 = vmatprep.subr.bf16.mxu0 0
        %408 = vmatpush1.bf16.msra.mxu0 0
        %409 = vmatprep.subr.bf16.mxu0 0
        %410 = vmatpush1.bf16.msra.mxu0 0
        %411 = vmatprep.subr.bf16.mxu0 0
        %412 = vmatpush1.bf16.msra.mxu0 0
        %413 = vmatprep.subr.bf16.mxu0 0
        %414 = vmatpush1.bf16.msra.mxu0 0
        %415 = vmatprep.subr.bf16.mxu0 0
        %416 = vmatpush1.bf16.msra.mxu0 0
        %417 = vmatprep.mubr.bf16.mxu0 0
        %418 = vmatmul.mubr.bf16.gmra.mrb[0].mxu0 %v381
        %v419 = vpop.f32.mrb[0].mxu0
        %v420 = vadd.f32 0.0, %v419
        %v421 = vpop.f32.mrb[0].mxu0
        %v422 = vpop.f32.mrb[0].mxu0
        %v423 = vpop.f32.mrb[0].mxu0
        %424 = vdwg.mxu0
        %v425 = vadd.f32 %v374, %v420
        %426 = vrot.lane.b32.xlu0 %v272, 117
        %v427 = vpop.permute.xlu0 %426
        %s429 = scalar_lea.vmem %s1, 16
        %v430 = vld [vmem:[%s429] sm:$0xf]
        %v432 = vsel %vm216, %v430, 0
        %v434 = vsel %vm220, %v427, 0
        %436 = vmatprep.subr.bf16.mxu0 0
        %437 = vmatpush1.bf16.msra.mxu0 %v434
        %438 = vmatprep.subr.bf16.mxu0 0
        %439 = vmatpush1.bf16.msra.mxu0 0
        %440 = vmatprep.subr.bf16.mxu0 0
        %441 = vmatpush1.bf16.msra.mxu0 0
        %442 = vmatprep.subr.bf16.mxu0 0
        %443 = vmatpush1.bf16.msra.mxu0 0
        %444 = vmatprep.subr.bf16.mxu0 0
        %445 = vmatpush1.bf16.msra.mxu0 0
        %446 = vmatprep.subr.bf16.mxu0 0
        %447 = vmatpush1.bf16.msra.mxu0 0
        %448 = vmatprep.subr.bf16.mxu0 0
        %449 = vmatpush1.bf16.msra.mxu0 0
        %450 = vmatprep.subr.bf16.mxu0 0
        %451 = vmatpush1.bf16.msra.mxu0 0
        %452 = vmatprep.subr.bf16.mxu0 0
        %453 = vmatpush1.bf16.msra.mxu0 0
        %454 = vmatprep.subr.bf16.mxu0 0
        %455 = vmatpush1.bf16.msra.mxu0 0
        %456 = vmatprep.subr.bf16.mxu0 0
        %457 = vmatpush1.bf16.msra.mxu0 0
        %458 = vmatprep.subr.bf16.mxu0 0
        %459 = vmatpush1.bf16.msra.mxu0 0
        %460 = vmatprep.subr.bf16.mxu0 0
        %461 = vmatpush1.bf16.msra.mxu0 0
        %462 = vmatprep.subr.bf16.mxu0 0
        %463 = vmatpush1.bf16.msra.mxu0 0
        %464 = vmatprep.subr.bf16.mxu0 0
        %465 = vmatpush1.bf16.msra.mxu0 0
        %466 = vmatprep.subr.bf16.mxu0 0
        %467 = vmatpush1.bf16.msra.mxu0 0
        %468 = vmatprep.mubr.bf16.mxu0 0
        %469 = vmatmul.mubr.bf16.gmra.mrb[0].mxu0 %v432
        %v470 = vpop.f32.mrb[0].mxu0
        %v471 = vadd.f32 0.0, %v470
        %v472 = vpop.f32.mrb[0].mxu0
        %v473 = vpop.f32.mrb[0].mxu0
        %v474 = vpop.f32.mrb[0].mxu0
        %475 = vdwg.mxu0
        %v476 = vadd.f32 %v425, %v471
        %477 = vrot.lane.b32.xlu0 %v272, 116
        %v478 = vpop.permute.xlu0 %477
        %s480 = scalar_lea.vmem %s1, 20
        %v481 = vld [vmem:[%s480] sm:$0xf]
        %v483 = vsel %vm216, %v481, 0
        %v485 = vsel %vm220, %v478, 0
        %487 = vmatprep.subr.bf16.mxu0 0
        %488 = vmatpush1.bf16.msra.mxu0 %v485
        %489 = vmatprep.subr.bf16.mxu0 0
        %490 = vmatpush1.bf16.msra.mxu0 0
        %491 = vmatprep.subr.bf16.mxu0 0
        %492 = vmatpush1.bf16.msra.mxu0 0
        %493 = vmatprep.subr.bf16.mxu0 0
        %494 = vmatpush1.bf16.msra.mxu0 0
        %495 = vmatprep.subr.bf16.mxu0 0
        %496 = vmatpush1.bf16.msra.mxu0 0
        %497 = vmatprep.subr.bf16.mxu0 0
        %498 = vmatpush1.bf16.msra.mxu0 0
        %499 = vmatprep.subr.bf16.mxu0 0
        %500 = vmatpush1.bf16.msra.mxu0 0
        %501 = vmatprep.subr.bf16.mxu0 0
        %502 = vmatpush1.bf16.msra.mxu0 0
        %503 = vmatprep.subr.bf16.mxu0 0
        %504 = vmatpush1.bf16.msra.mxu0 0
        %505 = vmatprep.subr.bf16.mxu0 0
        %506 = vmatpush1.bf16.msra.mxu0 0
        %507 = vmatprep.subr.bf16.mxu0 0
        %508 = vmatpush1.bf16.msra.mxu0 0
        %509 = vmatprep.subr.bf16.mxu0 0
        %510 = vmatpush1.bf16.msra.mxu0 0
        %511 = vmatprep.subr.bf16.mxu0 0
        %512 = vmatpush1.bf16.msra.mxu0 0
        %513 = vmatprep.subr.bf16.mxu0 0
        %514 = vmatpush1.bf16.msra.mxu0 0
        %515 = vmatprep.subr.bf16.mxu0 0
        %516 = vmatpush1.bf16.msra.mxu0 0
        %517 = vmatprep.subr.bf16.mxu0 0
        %518 = vmatpush1.bf16.msra.mxu0 0
        %519 = vmatprep.mubr.bf16.mxu0 0
        %520 = vmatmul.mubr.bf16.gmra.mrb[0].mxu0 %v483
        %v521 = vpop.f32.mrb[0].mxu0
        %v522 = vadd.f32 0.0, %v521
        %v523 = vpop.f32.mrb[0].mxu0
        %v524 = vpop.f32.mrb[0].mxu0
        %v525 = vpop.f32.mrb[0].mxu0
        %526 = vdwg.mxu0
        %v527 = vadd.f32 %v476, %v522
        %528 = vrot.lane.b32.xlu0 %v272, 108
        %v529 = vpop.permute.xlu0 %528
        %s531 = scalar_lea.vmem %s1, 24
        %v532 = vld [vmem:[%s531] sm:$0xf]
        %v534 = vsel %vm216, %v532, 0
        %v536 = vsel %vm220, %v529, 0
        %538 = vmatprep.subr.bf16.mxu0 0
        %539 = vmatpush1.bf16.msra.mxu0 %v536
        %540 = vmatprep.subr.bf16.mxu0 0
        %541 = vmatpush1.bf16.msra.mxu0 0
        %542 = vmatprep.subr.bf16.mxu0 0
        %543 = vmatpush1.bf16.msra.mxu0 0
        %544 = vmatprep.subr.bf16.mxu0 0
        %545 = vmatpush1.bf16.msra.mxu0 0
        %546 = vmatprep.subr.bf16.mxu0 0
        %547 = vmatpush1.bf16.msra.mxu0 0
        %548 = vmatprep.subr.bf16.mxu0 0
        %549 = vmatpush1.bf16.msra.mxu0 0
        %550 = vmatprep.subr.bf16.mxu0 0
        %551 = vmatpush1.bf16.msra.mxu0 0
        %552 = vmatprep.subr.bf16.mxu0 0
        %553 = vmatpush1.bf16.msra.mxu0 0
        %554 = vmatprep.subr.bf16.mxu0 0
        %555 = vmatpush1.bf16.msra.mxu0 0
        %556 = vmatprep.subr.bf16.mxu0 0
        %557 = vmatpush1.bf16.msra.mxu0 0
        %558 = vmatprep.subr.bf16.mxu0 0
        %559 = vmatpush1.bf16.msra.mxu0 0
        %560 = vmatprep.subr.bf16.mxu0 0
        %561 = vmatpush1.bf16.msra.mxu0 0
        %562 = vmatprep.subr.bf16.mxu0 0
        %563 = vmatpush1.bf16.msra.mxu0 0
        %564 = vmatprep.subr.bf16.mxu0 0
        %565 = vmatpush1.bf16.msra.mxu0 0
        %566 = vmatprep.subr.bf16.mxu0 0
        %567 = vmatpush1.bf16.msra.mxu0 0
        %568 = vmatprep.subr.bf16.mxu0 0
        %569 = vmatpush1.bf16.msra.mxu0 0
        %570 = vmatprep.mubr.bf16.mxu0 0
        %571 = vmatmul.mubr.bf16.gmra.mrb[0].mxu0 %v534
        %v572 = vpop.f32.mrb[0].mxu0
        %v573 = vadd.f32 0.0, %v572
        %v574 = vpop.f32.mrb[0].mxu0
        %v575 = vpop.f32.mrb[0].mxu0
        %v576 = vpop.f32.mrb[0].mxu0
        %577 = vdwg.mxu0
        %v578 = vadd.f32 %v527, %v573
        %579 = vrot.lane.b32.xlu0 %v272, 107
        %v580 = vpop.permute.xlu0 %579
        %s582 = scalar_lea.vmem %s1, 28
        %v583 = vld [vmem:[%s582] sm:$0xf]
        %v585 = vsel %vm216, %v583, 0
        %v587 = vsel %vm220, %v580, 0
        %589 = vmatprep.subr.bf16.mxu0 0
        %590 = vmatpush1.bf16.msra.mxu0 %v587
        %591 = vmatprep.subr.bf16.mxu0 0
        %592 = vmatpush1.bf16.msra.mxu0 0
        %593 = vmatprep.subr.bf16.mxu0 0
        %594 = vmatpush1.bf16.msra.mxu0 0
        %595 = vmatprep.subr.bf16.mxu0 0
        %596 = vmatpush1.bf16.msra.mxu0 0
        %597 = vmatprep.subr.bf16.mxu0 0
        %598 = vmatpush1.bf16.msra.mxu0 0
        %599 = vmatprep.subr.bf16.mxu0 0
        %600 = vmatpush1.bf16.msra.mxu0 0
        %601 = vmatprep.subr.bf16.mxu0 0
        %602 = vmatpush1.bf16.msra.mxu0 0
        %603 = vmatprep.subr.bf16.mxu0 0
        %604 = vmatpush1.bf16.msra.mxu0 0
        %605 = vmatprep.subr.bf16.mxu0 0
        %606 = vmatpush1.bf16.msra.mxu0 0
        %607 = vmatprep.subr.bf16.mxu0 0
        %608 = vmatpush1.bf16.msra.mxu0 0
        %609 = vmatprep.subr.bf16.mxu0 0
        %610 = vmatpush1.bf16.msra.mxu0 0
        %611 = vmatprep.subr.bf16.mxu0 0
        %612 = vmatpush1.bf16.msra.mxu0 0
        %613 = vmatprep.subr.bf16.mxu0 0
        %614 = vmatpush1.bf16.msra.mxu0 0
        %615 = vmatprep.subr.bf16.mxu0 0
        %616 = vmatpush1.bf16.msra.mxu0 0
        %617 = vmatprep.subr.bf16.mxu0 0
        %618 = vmatpush1.bf16.msra.mxu0 0
        %619 = vmatprep.subr.bf16.mxu0 0
        %620 = vmatpush1.bf16.msra.mxu0 0
        %621 = vmatprep.mubr.bf16.mxu0 0
        %622 = vmatmul.mubr.bf16.gmra.mrb[0].mxu0 %v585
        %v623 = vpop.f32.mrb[0].mxu0
        %v624 = vadd.f32 0.0, %v623
        %v625 = vpop.f32.mrb[0].mxu0
        %v626 = vpop.f32.mrb[0].mxu0
        %v627 = vpop.f32.mrb[0].mxu0
        %628 = vdwg.mxu0
        %v629 = vadd.f32 %v578, %v624
        %630 = vrot.lane.b32.xlu0 %v272, 106
        %v631 = vpop.permute.xlu0 %630
        %s633 = scalar_lea.vmem %s1, 32
        %v634 = vld [vmem:[%s633] sm:$0xf]
        %v636 = vsel %vm216, %v634, 0
        %v638 = vsel %vm220, %v631, 0
        %640 = vmatprep.subr.bf16.mxu0 0
        %641 = vmatpush1.bf16.msra.mxu0 %v638
        %642 = vmatprep.subr.bf16.mxu0 0
        %643 = vmatpush1.bf16.msra.mxu0 0
        %644 = vmatprep.subr.bf16.mxu0 0
        %645 = vmatpush1.bf16.msra.mxu0 0
        %646 = vmatprep.subr.bf16.mxu0 0
        %647 = vmatpush1.bf16.msra.mxu0 0
        %648 = vmatprep.subr.bf16.mxu0 0
        %649 = vmatpush1.bf16.msra.mxu0 0
        %650 = vmatprep.subr.bf16.mxu0 0
        %651 = vmatpush1.bf16.msra.mxu0 0
        %652 = vmatprep.subr.bf16.mxu0 0
        %653 = vmatpush1.bf16.msra.mxu0 0
        %654 = vmatprep.subr.bf16.mxu0 0
        %655 = vmatpush1.bf16.msra.mxu0 0
        %656 = vmatprep.subr.bf16.mxu0 0
        %657 = vmatpush1.bf16.msra.mxu0 0
        %658 = vmatprep.subr.bf16.mxu0 0
        %659 = vmatpush1.bf16.msra.mxu0 0
        %660 = vmatprep.subr.bf16.mxu0 0
        %661 = vmatpush1.bf16.msra.mxu0 0
        %662 = vmatprep.subr.bf16.mxu0 0
        %663 = vmatpush1.bf16.msra.mxu0 0
        %664 = vmatprep.subr.bf16.mxu0 0
        %665 = vmatpush1.bf16.msra.mxu0 0
        %666 = vmatprep.subr.bf16.mxu0 0
        %667 = vmatpush1.bf16.msra.mxu0 0
        %668 = vmatprep.subr.bf16.mxu0 0
        %669 = vmatpush1.bf16.msra.mxu0 0
        %670 = vmatprep.subr.bf16.mxu0 0
        %671 = vmatpush1.bf16.msra.mxu0 0
        %672 = vmatprep.mubr.bf16.mxu0 0
        %673 = vmatmul.mubr.bf16.gmra.mrb[0].mxu0 %v636
        %v674 = vpop.f32.mrb[0].mxu0
        %v675 = vadd.f32 0.0, %v674
        %v676 = vpop.f32.mrb[0].mxu0
        %v677 = vpop.f32.mrb[0].mxu0
        %v678 = vpop.f32.mrb[0].mxu0
        %679 = vdwg.mxu0
        %v680 = vadd.f32 %v629, %v675
        %s681 = scalar_lea.vmem %s1, 36
        %v682 = vld [vmem:[%s681] sm:$0xf]
        %v684 = vsel %vm216, %v682, 0
        %v687 = vsel %vm220, %v198, 0
        %689 = vmatprep.subr.bf16.mxu0 0
        %690 = vmatpush1.bf16.msra.mxu0 %v687
        %691 = vmatprep.subr.bf16.mxu0 0
        %692 = vmatpush1.bf16.msra.mxu0 0
        %693 = vmatprep.subr.bf16.mxu0 0
        %694 = vmatpush1.bf16.msra.mxu0 0
        %695 = vmatprep.subr.bf16.mxu0 0
        %696 = vmatpush1.bf16.msra.mxu0 0
        %697 = vmatprep.subr.bf16.mxu0 0
        %698 = vmatpush1.bf16.msra.mxu0 0
        %699 = vmatprep.subr.bf16.mxu0 0
        %700 = vmatpush1.bf16.msra.mxu0 0
        %701 = vmatprep.subr.bf16.mxu0 0
        %702 = vmatpush1.bf16.msra.mxu0 0
        %703 = vmatprep.subr.bf16.mxu0 0
        %704 = vmatpush1.bf16.msra.mxu0 0
        %705 = vmatprep.subr.bf16.mxu0 0
        %706 = vmatpush1.bf16.msra.mxu0 0
        %707 = vmatprep.subr.bf16.mxu0 0
        %708 = vmatpush1.bf16.msra.mxu0 0
        %709 = vmatprep.subr.bf16.mxu0 0
        %710 = vmatpush1.bf16.msra.mxu0 0
        %711 = vmatprep.subr.bf16.mxu0 0
        %712 = vmatpush1.bf16.msra.mxu0 0
        %713 = vmatprep.subr.bf16.mxu0 0
        %714 = vmatpush1.bf16.msra.mxu0 0
        %715 = vmatprep.subr.bf16.mxu0 0
        %716 = vmatpush1.bf16.msra.mxu0 0
        %717 = vmatprep.subr.bf16.mxu0 0
        %718 = vmatpush1.bf16.msra.mxu0 0
        %719 = vmatprep.subr.bf16.mxu0 0
        %720 = vmatpush1.bf16.msra.mxu0 0
        %721 = vmatprep.mubr.bf16.mxu0 0
        %722 = vmatmul.mubr.bf16.gmra.mrb[0].mxu0 %v684
        %v723 = vpop.f32.mrb[0].mxu0
        %v724 = vadd.f32 0.0, %v723
        %v725 = vpop.f32.mrb[0].mxu0
        %v726 = vpop.f32.mrb[0].mxu0
        %v727 = vpop.f32.mrb[0].mxu0
        %728 = vdwg.mxu0
        %v729 = vadd.f32 %v680, %v724
        %v732 = vunpack.c.l.s4 1983009808
        %v733 = vunpack.c.0.s8 %v732
        %v734 = vlaneseq
        %v735 = vshrl.u32 %v734, 7
        %v736 = vsub.s32 %v733, %v735
        %v737 = vrot.slane %v198, %v736
        %738 = vrot.lane.b32.xlu0 %v737, 127
        %v739 = vpop.permute.xlu0 %738
        %s741 = scalar_lea.vmem %s1, 40
        %v742 = vld [vmem:[%s741] sm:$0xf]
        %v744 = vsel %vm216, %v742, 0
        %v746 = vsel %vm220, %v739, 0
        %748 = vmatprep.subr.bf16.mxu0 0
        %749 = vmatpush1.bf16.msra.mxu0 %v746
        %750 = vmatprep.subr.bf16.mxu0 0
        %751 = vmatpush1.bf16.msra.mxu0 0
        %752 = vmatprep.subr.bf16.mxu0 0
        %753 = vmatpush1.bf16.msra.mxu0 0
        %754 = vmatprep.subr.bf16.mxu0 0
        %755 = vmatpush1.bf16.msra.mxu0 0
        %756 = vmatprep.subr.bf16.mxu0 0
        %757 = vmatpush1.bf16.msra.mxu0 0
        %758 = vmatprep.subr.bf16.mxu0 0
        %759 = vmatpush1.bf16.msra.mxu0 0
        %760 = vmatprep.subr.bf16.mxu0 0
        %761 = vmatpush1.bf16.msra.mxu0 0
        %762 = vmatprep.subr.bf16.mxu0 0
        %763 = vmatpush1.bf16.msra.mxu0 0
        %764 = vmatprep.subr.bf16.mxu0 0
        %765 = vmatpush1.bf16.msra.mxu0 0
        %766 = vmatprep.subr.bf16.mxu0 0
        %767 = vmatpush1.bf16.msra.mxu0 0
        %768 = vmatprep.subr.bf16.mxu0 0
        %769 = vmatpush1.bf16.msra.mxu0 0
        %770 = vmatprep.subr.bf16.mxu0 0
        %771 = vmatpush1.bf16.msra.mxu0 0
        %772 = vmatprep.subr.bf16.mxu0 0
        %773 = vmatpush1.bf16.msra.mxu0 0
        %774 = vmatprep.subr.bf16.mxu0 0
        %775 = vmatpush1.bf16.msra.mxu0 0
        %776 = vmatprep.subr.bf16.mxu0 0
        %777 = vmatpush1.bf16.msra.mxu0 0
        %778 = vmatprep.subr.bf16.mxu0 0
        %779 = vmatpush1.bf16.msra.mxu0 0
        %780 = vmatprep.mubr.bf16.mxu0 0
        %781 = vmatmul.mubr.bf16.gmra.mrb[0].mxu0 %v744
        %v782 = vpop.f32.mrb[0].mxu0
        %v783 = vadd.f32 0.0, %v782
        %v784 = vpop.f32.mrb[0].mxu0
        %v785 = vpop.f32.mrb[0].mxu0
        %v786 = vpop.f32.mrb[0].mxu0
        %787 = vdwg.mxu0
        %v788 = vadd.f32 %v729, %v783
        %789 = vrot.lane.b32.xlu0 %v737, 126
        %v790 = vpop.permute.xlu0 %789
        %s792 = scalar_lea.vmem %s1, 44
        %v793 = vld [vmem:[%s792] sm:$0xf]
        %v795 = vsel %vm216, %v793, 0
        %v797 = vsel %vm220, %v790, 0
        %799 = vmatprep.subr.bf16.mxu0 0
        %800 = vmatpush1.bf16.msra.mxu0 %v797
        %801 = vmatprep.subr.bf16.mxu0 0
        %802 = vmatpush1.bf16.msra.mxu0 0
        %803 = vmatprep.subr.bf16.mxu0 0
        %804 = vmatpush1.bf16.msra.mxu0 0
        %805 = vmatprep.subr.bf16.mxu0 0
        %806 = vmatpush1.bf16.msra.mxu0 0
        %807 = vmatprep.subr.bf16.mxu0 0
        %808 = vmatpush1.bf16.msra.mxu0 0
        %809 = vmatprep.subr.bf16.mxu0 0
        %810 = vmatpush1.bf16.msra.mxu0 0
        %811 = vmatprep.subr.bf16.mxu0 0
        %812 = vmatpush1.bf16.msra.mxu0 0
        %813 = vmatprep.subr.bf16.mxu0 0
        %814 = vmatpush1.bf16.msra.mxu0 0
        %815 = vmatprep.subr.bf16.mxu0 0
        %816 = vmatpush1.bf16.msra.mxu0 0
        %817 = vmatprep.subr.bf16.mxu0 0
        %818 = vmatpush1.bf16.msra.mxu0 0
        %819 = vmatprep.subr.bf16.mxu0 0
        %820 = vmatpush1.bf16.msra.mxu0 0
        %821 = vmatprep.subr.bf16.mxu0 0
        %822 = vmatpush1.bf16.msra.mxu0 0
        %823 = vmatprep.subr.bf16.mxu0 0
        %824 = vmatpush1.bf16.msra.mxu0 0
        %825 = vmatprep.subr.bf16.mxu0 0
        %826 = vmatpush1.bf16.msra.mxu0 0
        %827 = vmatprep.subr.bf16.mxu0 0
        %828 = vmatpush1.bf16.msra.mxu0 0
        %829 = vmatprep.subr.bf16.mxu0 0
        %830 = vmatpush1.bf16.msra.mxu0 0
        %831 = vmatprep.mubr.bf16.mxu0 0
        %832 = vmatmul.mubr.bf16.gmra.mrb[0].mxu0 %v795
        %v833 = vpop.f32.mrb[0].mxu0
        %v834 = vadd.f32 0.0, %v833
        %v835 = vpop.f32.mrb[0].mxu0
        %v836 = vpop.f32.mrb[0].mxu0
        %v837 = vpop.f32.mrb[0].mxu0
        %838 = vdwg.mxu0
        %v839 = vadd.f32 %v788, %v834
        %840 = vrot.lane.b32.xlu0 %v737, 118
        %v841 = vpop.permute.xlu0 %840
        %s843 = scalar_lea.vmem %s1, 48
        %v844 = vld [vmem:[%s843] sm:$0xf]
        %v846 = vsel %vm216, %v844, 0
        %v848 = vsel %vm220, %v841, 0
        %850 = vmatprep.subr.bf16.mxu0 0
        %851 = vmatpush1.bf16.msra.mxu0 %v848
        %852 = vmatprep.subr.bf16.mxu0 0
        %853 = vmatpush1.bf16.msra.mxu0 0
        %854 = vmatprep.subr.bf16.mxu0 0
        %855 = vmatpush1.bf16.msra.mxu0 0
        %856 = vmatprep.subr.bf16.mxu0 0
        %857 = vmatpush1.bf16.msra.mxu0 0
        %858 = vmatprep.subr.bf16.mxu0 0
        %859 = vmatpush1.bf16.msra.mxu0 0
        %860 = vmatprep.subr.bf16.mxu0 0
        %861 = vmatpush1.bf16.msra.mxu0 0
        %862 = vmatprep.subr.bf16.mxu0 0
        %863 = vmatpush1.bf16.msra.mxu0 0
        %864 = vmatprep.subr.bf16.mxu0 0
        %865 = vmatpush1.bf16.msra.mxu0 0
        %866 = vmatprep.subr.bf16.mxu0 0
        %867 = vmatpush1.bf16.msra.mxu0 0
        %868 = vmatprep.subr.bf16.mxu0 0
        %869 = vmatpush1.bf16.msra.mxu0 0
        %870 = vmatprep.subr.bf16.mxu0 0
        %871 = vmatpush1.bf16.msra.mxu0 0
        %872 = vmatprep.subr.bf16.mxu0 0
        %873 = vmatpush1.bf16.msra.mxu0 0
        %874 = vmatprep.subr.bf16.mxu0 0
        %875 = vmatpush1.bf16.msra.mxu0 0
        %876 = vmatprep.subr.bf16.mxu0 0
        %877 = vmatpush1.bf16.msra.mxu0 0
        %878 = vmatprep.subr.bf16.mxu0 0
        %879 = vmatpush1.bf16.msra.mxu0 0
        %880 = vmatprep.subr.bf16.mxu0 0
        %881 = vmatpush1.bf16.msra.mxu0 0
        %882 = vmatprep.mubr.bf16.mxu0 0
        %883 = vmatmul.mubr.bf16.gmra.mrb[0].mxu0 %v846
        %v884 = vpop.f32.mrb[0].mxu0
        %v885 = vadd.f32 0.0, %v884
        %v886 = vpop.f32.mrb[0].mxu0
        %v887 = vpop.f32.mrb[0].mxu0
        %v888 = vpop.f32.mrb[0].mxu0
        %889 = vdwg.mxu0
        %v890 = vadd.f32 %v839, %v885
        %891 = vrot.lane.b32.xlu0 %v737, 117
        %v892 = vpop.permute.xlu0 %891
        %s894 = scalar_lea.vmem %s1, 52
        %v895 = vld [vmem:[%s894] sm:$0xf]
        %v897 = vsel %vm216, %v895, 0
        %v899 = vsel %vm220, %v892, 0
        %901 = vmatprep.subr.bf16.mxu0 0
        %902 = vmatpush1.bf16.msra.mxu0 %v899
        %903 = vmatprep.subr.bf16.mxu0 0
        %904 = vmatpush1.bf16.msra.mxu0 0
        %905 = vmatprep.subr.bf16.mxu0 0
        %906 = vmatpush1.bf16.msra.mxu0 0
        %907 = vmatprep.subr.bf16.mxu0 0
        %908 = vmatpush1.bf16.msra.mxu0 0
        %909 = vmatprep.subr.bf16.mxu0 0
        %910 = vmatpush1.bf16.msra.mxu0 0
        %911 = vmatprep.subr.bf16.mxu0 0
        %912 = vmatpush1.bf16.msra.mxu0 0
        %913 = vmatprep.subr.bf16.mxu0 0
        %914 = vmatpush1.bf16.msra.mxu0 0
        %915 = vmatprep.subr.bf16.mxu0 0
        %916 = vmatpush1.bf16.msra.mxu0 0
        %917 = vmatprep.subr.bf16.mxu0 0
        %918 = vmatpush1.bf16.msra.mxu0 0
        %919 = vmatprep.subr.bf16.mxu0 0
        %920 = vmatpush1.bf16.msra.mxu0 0
        %921 = vmatprep.subr.bf16.mxu0 0
        %922 = vmatpush1.bf16.msra.mxu0 0
        %923 = vmatprep.subr.bf16.mxu0 0
        %924 = vmatpush1.bf16.msra.mxu0 0
        %925 = vmatprep.subr.bf16.mxu0 0
        %926 = vmatpush1.bf16.msra.mxu0 0
        %927 = vmatprep.subr.bf16.mxu0 0
        %928 = vmatpush1.bf16.msra.mxu0 0
        %929 = vmatprep.subr.bf16.mxu0 0
        %930 = vmatpush1.bf16.msra.mxu0 0
        %931 = vmatprep.subr.bf16.mxu0 0
        %932 = vmatpush1.bf16.msra.mxu0 0
        %933 = vmatprep.mubr.bf16.mxu0 0
        %934 = vmatmul.mubr.bf16.gmra.mrb[0].mxu0 %v897
        %v935 = vpop.f32.mrb[0].mxu0
        %v936 = vadd.f32 0.0, %v935
        %v937 = vpop.f32.mrb[0].mxu0
        %v938 = vpop.f32.mrb[0].mxu0
        %v939 = vpop.f32.mrb[0].mxu0
        %940 = vdwg.mxu0
        %v941 = vadd.f32 %v890, %v936
        %942 = vrot.lane.b32.xlu0 %v737, 116
        %v943 = vpop.permute.xlu0 %942
        %s945 = scalar_lea.vmem %s1, 56
        %v946 = vld [vmem:[%s945] sm:$0xf]
        %v948 = vsel %vm216, %v946, 0
        %v950 = vsel %vm220, %v943, 0
        %952 = vmatprep.subr.bf16.mxu0 0
        %953 = vmatpush1.bf16.msra.mxu0 %v950
        %954 = vmatprep.subr.bf16.mxu0 0
        %955 = vmatpush1.bf16.msra.mxu0 0
        %956 = vmatprep.subr.bf16.mxu0 0
        %957 = vmatpush1.bf16.msra.mxu0 0
        %958 = vmatprep.subr.bf16.mxu0 0
        %959 = vmatpush1.bf16.msra.mxu0 0
        %960 = vmatprep.subr.bf16.mxu0 0
        %961 = vmatpush1.bf16.msra.mxu0 0
        %962 = vmatprep.subr.bf16.mxu0 0
        %963 = vmatpush1.bf16.msra.mxu0 0
        %964 = vmatprep.subr.bf16.mxu0 0
        %965 = vmatpush1.bf16.msra.mxu0 0
        %966 = vmatprep.subr.bf16.mxu0 0
        %967 = vmatpush1.bf16.msra.mxu0 0
        %968 = vmatprep.subr.bf16.mxu0 0
        %969 = vmatpush1.bf16.msra.mxu0 0
        %970 = vmatprep.subr.bf16.mxu0 0
        %971 = vmatpush1.bf16.msra.mxu0 0
        %972 = vmatprep.subr.bf16.mxu0 0
        %973 = vmatpush1.bf16.msra.mxu0 0
        %974 = vmatprep.subr.bf16.mxu0 0
        %975 = vmatpush1.bf16.msra.mxu0 0
        %976 = vmatprep.subr.bf16.mxu0 0
        %977 = vmatpush1.bf16.msra.mxu0 0
        %978 = vmatprep.subr.bf16.mxu0 0
        %979 = vmatpush1.bf16.msra.mxu0 0
        %980 = vmatprep.subr.bf16.mxu0 0
        %981 = vmatpush1.bf16.msra.mxu0 0
        %982 = vmatprep.subr.bf16.mxu0 0
        %983 = vmatpush1.bf16.msra.mxu0 0
        %984 = vmatprep.mubr.bf16.mxu0 0
        %985 = vmatmul.mubr.bf16.gmra.mrb[0].mxu0 %v948
        %v986 = vpop.f32.mrb[0].mxu0
        %v987 = vadd.f32 0.0, %v986
        %v988 = vpop.f32.mrb[0].mxu0
        %v989 = vpop.f32.mrb[0].mxu0
        %v990 = vpop.f32.mrb[0].mxu0
        %991 = vdwg.mxu0
        %v992 = vadd.f32 %v941, %v987
        %993 = vrot.lane.b32.xlu0 %v737, 108
        %v994 = vpop.permute.xlu0 %993
        %s996 = scalar_lea.vmem %s1, 60
        %v997 = vld [vmem:[%s996] sm:$0xf]
        %v999 = vsel %vm216, %v997, 0
        %v1001 = vsel %vm220, %v994, 0
        %1003 = vmatprep.subr.bf16.mxu0 0
        %1004 = vmatpush1.bf16.msra.mxu0 %v1001
        %1005 = vmatprep.subr.bf16.mxu0 0
        %1006 = vmatpush1.bf16.msra.mxu0 0
        %1007 = vmatprep.subr.bf16.mxu0 0
        %1008 = vmatpush1.bf16.msra.mxu0 0
        %1009 = vmatprep.subr.bf16.mxu0 0
        %1010 = vmatpush1.bf16.msra.mxu0 0
        %1011 = vmatprep.subr.bf16.mxu0 0
        %1012 = vmatpush1.bf16.msra.mxu0 0
        %1013 = vmatprep.subr.bf16.mxu0 0
        %1014 = vmatpush1.bf16.msra.mxu0 0
        %1015 = vmatprep.subr.bf16.mxu0 0
        %1016 = vmatpush1.bf16.msra.mxu0 0
        %1017 = vmatprep.subr.bf16.mxu0 0
        %1018 = vmatpush1.bf16.msra.mxu0 0
        %1019 = vmatprep.subr.bf16.mxu0 0
        %1020 = vmatpush1.bf16.msra.mxu0 0
        %1021 = vmatprep.subr.bf16.mxu0 0
        %1022 = vmatpush1.bf16.msra.mxu0 0
        %1023 = vmatprep.subr.bf16.mxu0 0
        %1024 = vmatpush1.bf16.msra.mxu0 0
        %1025 = vmatprep.subr.bf16.mxu0 0
        %1026 = vmatpush1.bf16.msra.mxu0 0
        %1027 = vmatprep.subr.bf16.mxu0 0
        %1028 = vmatpush1.bf16.msra.mxu0 0
        %1029 = vmatprep.subr.bf16.mxu0 0
        %1030 = vmatpush1.bf16.msra.mxu0 0
        %1031 = vmatprep.subr.bf16.mxu0 0
        %1032 = vmatpush1.bf16.msra.mxu0 0
        %1033 = vmatprep.subr.bf16.mxu0 0
        %1034 = vmatpush1.bf16.msra.mxu0 0
        %1035 = vmatprep.mubr.bf16.mxu0 0
        %1036 = vmatmul.mubr.bf16.gmra.mrb[0].mxu0 %v999
        %v1037 = vpop.f32.mrb[0].mxu0
        %v1038 = vadd.f32 0.0, %v1037
        %v1039 = vpop.f32.mrb[0].mxu0
        %v1040 = vpop.f32.mrb[0].mxu0
        %v1041 = vpop.f32.mrb[0].mxu0
        %1042 = vdwg.mxu0
        %v1043 = vadd.f32 %v992, %v1038
        %1044 = vrot.lane.b32.xlu0 %v737, 107
        %v1045 = vpop.permute.xlu0 %1044
        %s1047 = scalar_lea.vmem %s1, 64
        %v1048 = vld [vmem:[%s1047] sm:$0xf]
        %v1050 = vsel %vm216, %v1048, 0
        %v1052 = vsel %vm220, %v1045, 0
        %1054 = vmatprep.subr.bf16.mxu0 0
        %1055 = vmatpush1.bf16.msra.mxu0 %v1052
        %1056 = vmatprep.subr.bf16.mxu0 0
        %1057 = vmatpush1.bf16.msra.mxu0 0
        %1058 = vmatprep.subr.bf16.mxu0 0
        %1059 = vmatpush1.bf16.msra.mxu0 0
        %1060 = vmatprep.subr.bf16.mxu0 0
        %1061 = vmatpush1.bf16.msra.mxu0 0
        %1062 = vmatprep.subr.bf16.mxu0 0
        %1063 = vmatpush1.bf16.msra.mxu0 0
        %1064 = vmatprep.subr.bf16.mxu0 0
        %1065 = vmatpush1.bf16.msra.mxu0 0
        %1066 = vmatprep.subr.bf16.mxu0 0
        %1067 = vmatpush1.bf16.msra.mxu0 0
        %1068 = vmatprep.subr.bf16.mxu0 0
        %1069 = vmatpush1.bf16.msra.mxu0 0
        %1070 = vmatprep.subr.bf16.mxu0 0
        %1071 = vmatpush1.bf16.msra.mxu0 0
        %1072 = vmatprep.subr.bf16.mxu0 0
        %1073 = vmatpush1.bf16.msra.mxu0 0
        %1074 = vmatprep.subr.bf16.mxu0 0
        %1075 = vmatpush1.bf16.msra.mxu0 0
        %1076 = vmatprep.subr.bf16.mxu0 0
        %1077 = vmatpush1.bf16.msra.mxu0 0
        %1078 = vmatprep.subr.bf16.mxu0 0
        %1079 = vmatpush1.bf16.msra.mxu0 0
        %1080 = vmatprep.subr.bf16.mxu0 0
        %1081 = vmatpush1.bf16.msra.mxu0 0
        %1082 = vmatprep.subr.bf16.mxu0 0
        %1083 = vmatpush1.bf16.msra.mxu0 0
        %1084 = vmatprep.subr.bf16.mxu0 0
        %1085 = vmatpush1.bf16.msra.mxu0 0
        %1086 = vmatprep.mubr.bf16.mxu0 0
        %1087 = vmatmul.mubr.bf16.gmra.mrb[0].mxu0 %v1050
        %v1088 = vpop.f32.mrb[0].mxu0
        %v1089 = vadd.f32 0.0, %v1088
        %v1090 = vpop.f32.mrb[0].mxu0
        %v1091 = vpop.f32.mrb[0].mxu0
        %v1092 = vpop.f32.mrb[0].mxu0
        %1093 = vdwg.mxu0
        %v1094 = vadd.f32 %v1043, %v1089
        %1095 = vrot.lane.b32.xlu0 %v737, 106
        %v1096 = vpop.permute.xlu0 %1095
        %s1098 = scalar_lea.vmem %s1, 68
        %v1099 = vld [vmem:[%s1098] sm:$0xf]
        %v1101 = vsel %vm216, %v1099, 0
        %v1103 = vsel %vm220, %v1096, 0
        %1105 = vmatprep.subr.bf16.mxu0 0
        %1106 = vmatpush1.bf16.msra.mxu0 %v1103
        %1107 = vmatprep.subr.bf16.mxu0 0
        %1108 = vmatpush1.bf16.msra.mxu0 0
        %1109 = vmatprep.subr.bf16.mxu0 0
        %1110 = vmatpush1.bf16.msra.mxu0 0
        %1111 = vmatprep.subr.bf16.mxu0 0
        %1112 = vmatpush1.bf16.msra.mxu0 0
        %1113 = vmatprep.subr.bf16.mxu0 0
        %1114 = vmatpush1.bf16.msra.mxu0 0
        %1115 = vmatprep.subr.bf16.mxu0 0
        %1116 = vmatpush1.bf16.msra.mxu0 0
        %1117 = vmatprep.subr.bf16.mxu0 0
        %1118 = vmatpush1.bf16.msra.mxu0 0
        %1119 = vmatprep.subr.bf16.mxu0 0
        %1120 = vmatpush1.bf16.msra.mxu0 0
        %1121 = vmatprep.subr.bf16.mxu0 0
        %1122 = vmatpush1.bf16.msra.mxu0 0
        %1123 = vmatprep.subr.bf16.mxu0 0
        %1124 = vmatpush1.bf16.msra.mxu0 0
        %1125 = vmatprep.subr.bf16.mxu0 0
        %1126 = vmatpush1.bf16.msra.mxu0 0
        %1127 = vmatprep.subr.bf16.mxu0 0
        %1128 = vmatpush1.bf16.msra.mxu0 0
        %1129 = vmatprep.subr.bf16.mxu0 0
        %1130 = vmatpush1.bf16.msra.mxu0 0
        %1131 = vmatprep.subr.bf16.mxu0 0
        %1132 = vmatpush1.bf16.msra.mxu0 0
        %1133 = vmatprep.subr.bf16.mxu0 0
        %1134 = vmatpush1.bf16.msra.mxu0 0
        %1135 = vmatprep.subr.bf16.mxu0 0
        %1136 = vmatpush1.bf16.msra.mxu0 0
        %1137 = vmatprep.mubr.bf16.mxu0 0
        %1138 = vmatmul.mubr.bf16.gmra.mrb[0].mxu0 %v1101
        %v1139 = vpop.f32.mrb[0].mxu0
        %v1140 = vadd.f32 0.0, %v1139
        %v1141 = vpop.f32.mrb[0].mxu0
        %v1142 = vpop.f32.mrb[0].mxu0
        %v1143 = vpop.f32.mrb[0].mxu0
        %1144 = vdwg.mxu0
        %v1145 = vadd.f32 %v1094, %v1140
        %s1146 = scalar_lea.vmem %s1, 72
        %v1147 = vld [vmem:[%s1146] sm:$0xf]
        %v1149 = vsel %vm216, %v1147, 0
        %v1152 = vsel %vm220, %v202, 0
        %1154 = vmatprep.subr.bf16.mxu0 0
        %1155 = vmatpush1.bf16.msra.mxu0 %v1152
        %1156 = vmatprep.subr.bf16.mxu0 0
        %1157 = vmatpush1.bf16.msra.mxu0 0
        %1158 = vmatprep.subr.bf16.mxu0 0
        %1159 = vmatpush1.bf16.msra.mxu0 0
        %1160 = vmatprep.subr.bf16.mxu0 0
        %1161 = vmatpush1.bf16.msra.mxu0 0
        %1162 = vmatprep.subr.bf16.mxu0 0
        %1163 = vmatpush1.bf16.msra.mxu0 0
        %1164 = vmatprep.subr.bf16.mxu0 0
        %1165 = vmatpush1.bf16.msra.mxu0 0
        %1166 = vmatprep.subr.bf16.mxu0 0
        %1167 = vmatpush1.bf16.msra.mxu0 0
        %1168 = vmatprep.subr.bf16.mxu0 0
        %1169 = vmatpush1.bf16.msra.mxu0 0
        %1170 = vmatprep.subr.bf16.mxu0 0
        %1171 = vmatpush1.bf16.msra.mxu0 0
        %1172 = vmatprep.subr.bf16.mxu0 0
        %1173 = vmatpush1.bf16.msra.mxu0 0
        %1174 = vmatprep.subr.bf16.mxu0 0
        %1175 = vmatpush1.bf16.msra.mxu0 0
        %1176 = vmatprep.subr.bf16.mxu0 0
        %1177 = vmatpush1.bf16.msra.mxu0 0
        %1178 = vmatprep.subr.bf16.mxu0 0
        %1179 = vmatpush1.bf16.msra.mxu0 0
        %1180 = vmatprep.subr.bf16.mxu0 0
        %1181 = vmatpush1.bf16.msra.mxu0 0
        %1182 = vmatprep.subr.bf16.mxu0 0
        %1183 = vmatpush1.bf16.msra.mxu0 0
        %1184 = vmatprep.subr.bf16.mxu0 0
        %1185 = vmatpush1.bf16.msra.mxu0 0
        %1186 = vmatprep.mubr.bf16.mxu0 0
        %1187 = vmatmul.mubr.bf16.gmra.mrb[0].mxu0 %v1149
        %v1188 = vpop.f32.mrb[0].mxu0
        %v1189 = vadd.f32 0.0, %v1188
        %v1190 = vpop.f32.mrb[0].mxu0
        %v1191 = vpop.f32.mrb[0].mxu0
        %v1192 = vpop.f32.mrb[0].mxu0
        %1193 = vdwg.mxu0
        %v1194 = vadd.f32 %v1145, %v1189
        %v1197 = vunpack.c.l.s4 1983009808
        %v1198 = vunpack.c.0.s8 %v1197
        %v1199 = vlaneseq
        %v1200 = vshrl.u32 %v1199, 7
        %v1201 = vsub.s32 %v1198, %v1200
        %v1202 = vrot.slane %v202, %v1201
        %1203 = vrot.lane.b32.xlu0 %v1202, 127
        %v1204 = vpop.permute.xlu0 %1203
        %s1206 = scalar_lea.vmem %s1, 76
        %v1207 = vld [vmem:[%s1206] sm:$0xf]
        %v1209 = vsel %vm216, %v1207, 0
        %v1211 = vsel %vm220, %v1204, 0
        %1213 = vmatprep.subr.bf16.mxu0 0
        %1214 = vmatpush1.bf16.msra.mxu0 %v1211
        %1215 = vmatprep.subr.bf16.mxu0 0
        %1216 = vmatpush1.bf16.msra.mxu0 0
        %1217 = vmatprep.subr.bf16.mxu0 0
        %1218 = vmatpush1.bf16.msra.mxu0 0
        %1219 = vmatprep.subr.bf16.mxu0 0
        %1220 = vmatpush1.bf16.msra.mxu0 0
        %1221 = vmatprep.subr.bf16.mxu0 0
        %1222 = vmatpush1.bf16.msra.mxu0 0
        %1223 = vmatprep.subr.bf16.mxu0 0
        %1224 = vmatpush1.bf16.msra.mxu0 0
        %1225 = vmatprep.subr.bf16.mxu0 0
        %1226 = vmatpush1.bf16.msra.mxu0 0
        %1227 = vmatprep.subr.bf16.mxu0 0
        %1228 = vmatpush1.bf16.msra.mxu0 0
        %1229 = vmatprep.subr.bf16.mxu0 0
        %1230 = vmatpush1.bf16.msra.mxu0 0
        %1231 = vmatprep.subr.bf16.mxu0 0
        %1232 = vmatpush1.bf16.msra.mxu0 0
        %1233 = vmatprep.subr.bf16.mxu0 0
        %1234 = vmatpush1.bf16.msra.mxu0 0
        %1235 = vmatprep.subr.bf16.mxu0 0
        %1236 = vmatpush1.bf16.msra.mxu0 0
        %1237 = vmatprep.subr.bf16.mxu0 0
        %1238 = vmatpush1.bf16.msra.mxu0 0
        %1239 = vmatprep.subr.bf16.mxu0 0
        %1240 = vmatpush1.bf16.msra.mxu0 0
        %1241 = vmatprep.subr.bf16.mxu0 0
        %1242 = vmatpush1.bf16.msra.mxu0 0
        %1243 = vmatprep.subr.bf16.mxu0 0
        %1244 = vmatpush1.bf16.msra.mxu0 0
        %1245 = vmatprep.mubr.bf16.mxu0 0
        %1246 = vmatmul.mubr.bf16.gmra.mrb[0].mxu0 %v1209
        %v1247 = vpop.f32.mrb[0].mxu0
        %v1248 = vadd.f32 0.0, %v1247
        %v1249 = vpop.f32.mrb[0].mxu0
        %v1250 = vpop.f32.mrb[0].mxu0
        %v1251 = vpop.f32.mrb[0].mxu0
        %1252 = vdwg.mxu0
        %v1253 = vadd.f32 %v1194, %v1248
        %1254 = vrot.lane.b32.xlu0 %v1202, 126
        %v1255 = vpop.permute.xlu0 %1254
        %s1257 = scalar_lea.vmem %s1, 80
        %v1258 = vld [vmem:[%s1257] sm:$0xf]
        %v1260 = vsel %vm216, %v1258, 0
        %v1262 = vsel %vm220, %v1255, 0
        %1264 = vmatprep.subr.bf16.mxu0 0
        %1265 = vmatpush1.bf16.msra.mxu0 %v1262
        %1266 = vmatprep.subr.bf16.mxu0 0
        %1267 = vmatpush1.bf16.msra.mxu0 0
        %1268 = vmatprep.subr.bf16.mxu0 0
        %1269 = vmatpush1.bf16.msra.mxu0 0
        %1270 = vmatprep.subr.bf16.mxu0 0
        %1271 = vmatpush1.bf16.msra.mxu0 0
        %1272 = vmatprep.subr.bf16.mxu0 0
        %1273 = vmatpush1.bf16.msra.mxu0 0
        %1274 = vmatprep.subr.bf16.mxu0 0
        %1275 = vmatpush1.bf16.msra.mxu0 0
        %1276 = vmatprep.subr.bf16.mxu0 0
        %1277 = vmatpush1.bf16.msra.mxu0 0
        %1278 = vmatprep.subr.bf16.mxu0 0
        %1279 = vmatpush1.bf16.msra.mxu0 0
        %1280 = vmatprep.subr.bf16.mxu0 0
        %1281 = vmatpush1.bf16.msra.mxu0 0
        %1282 = vmatprep.subr.bf16.mxu0 0
        %1283 = vmatpush1.bf16.msra.mxu0 0
        %1284 = vmatprep.subr.bf16.mxu0 0
        %1285 = vmatpush1.bf16.msra.mxu0 0
        %1286 = vmatprep.subr.bf16.mxu0 0
        %1287 = vmatpush1.bf16.msra.mxu0 0
        %1288 = vmatprep.subr.bf16.mxu0 0
        %1289 = vmatpush1.bf16.msra.mxu0 0
        %1290 = vmatprep.subr.bf16.mxu0 0
        %1291 = vmatpush1.bf16.msra.mxu0 0
        %1292 = vmatprep.subr.bf16.mxu0 0
        %1293 = vmatpush1.bf16.msra.mxu0 0
        %1294 = vmatprep.subr.bf16.mxu0 0
        %1295 = vmatpush1.bf16.msra.mxu0 0
        %1296 = vmatprep.mubr.bf16.mxu0 0
        %1297 = vmatmul.mubr.bf16.gmra.mrb[0].mxu0 %v1260
        %v1298 = vpop.f32.mrb[0].mxu0
        %v1299 = vadd.f32 0.0, %v1298
        %v1300 = vpop.f32.mrb[0].mxu0
        %v1301 = vpop.f32.mrb[0].mxu0
        %v1302 = vpop.f32.mrb[0].mxu0
        %1303 = vdwg.mxu0
        %v1304 = vadd.f32 %v1253, %v1299
        %1305 = vrot.lane.b32.xlu0 %v1202, 118
        %v1306 = vpop.permute.xlu0 %1305
        %s1308 = scalar_lea.vmem %s1, 84
        %v1309 = vld [vmem:[%s1308] sm:$0xf]
        %v1311 = vsel %vm216, %v1309, 0
        %v1313 = vsel %vm220, %v1306, 0
        %1315 = vmatprep.subr.bf16.mxu0 0
        %1316 = vmatpush1.bf16.msra.mxu0 %v1313
        %1317 = vmatprep.subr.bf16.mxu0 0
        %1318 = vmatpush1.bf16.msra.mxu0 0
        %1319 = vmatprep.subr.bf16.mxu0 0
        %1320 = vmatpush1.bf16.msra.mxu0 0
        %1321 = vmatprep.subr.bf16.mxu0 0
        %1322 = vmatpush1.bf16.msra.mxu0 0
        %1323 = vmatprep.subr.bf16.mxu0 0
        %1324 = vmatpush1.bf16.msra.mxu0 0
        %1325 = vmatprep.subr.bf16.mxu0 0
        %1326 = vmatpush1.bf16.msra.mxu0 0
        %1327 = vmatprep.subr.bf16.mxu0 0
        %1328 = vmatpush1.bf16.msra.mxu0 0
        %1329 = vmatprep.subr.bf16.mxu0 0
        %1330 = vmatpush1.bf16.msra.mxu0 0
        %1331 = vmatprep.subr.bf16.mxu0 0
        %1332 = vmatpush1.bf16.msra.mxu0 0
        %1333 = vmatprep.subr.bf16.mxu0 0
        %1334 = vmatpush1.bf16.msra.mxu0 0
        %1335 = vmatprep.subr.bf16.mxu0 0
        %1336 = vmatpush1.bf16.msra.mxu0 0
        %1337 = vmatprep.subr.bf16.mxu0 0
        %1338 = vmatpush1.bf16.msra.mxu0 0
        %1339 = vmatprep.subr.bf16.mxu0 0
        %1340 = vmatpush1.bf16.msra.mxu0 0
        %1341 = vmatprep.subr.bf16.mxu0 0
        %1342 = vmatpush1.bf16.msra.mxu0 0
        %1343 = vmatprep.subr.bf16.mxu0 0
        %1344 = vmatpush1.bf16.msra.mxu0 0
        %1345 = vmatprep.subr.bf16.mxu0 0
        %1346 = vmatpush1.bf16.msra.mxu0 0
        %1347 = vmatprep.mubr.bf16.mxu0 0
        %1348 = vmatmul.mubr.bf16.gmra.mrb[0].mxu0 %v1311
        %v1349 = vpop.f32.mrb[0].mxu0
        %v1350 = vadd.f32 0.0, %v1349
        %v1351 = vpop.f32.mrb[0].mxu0
        %v1352 = vpop.f32.mrb[0].mxu0
        %v1353 = vpop.f32.mrb[0].mxu0
        %1354 = vdwg.mxu0
        %v1355 = vadd.f32 %v1304, %v1350
        %1356 = vrot.lane.b32.xlu0 %v1202, 117
        %v1357 = vpop.permute.xlu0 %1356
        %s1359 = scalar_lea.vmem %s1, 88
        %v1360 = vld [vmem:[%s1359] sm:$0xf]
        %v1362 = vsel %vm216, %v1360, 0
        %v1364 = vsel %vm220, %v1357, 0
        %1366 = vmatprep.subr.bf16.mxu0 0
        %1367 = vmatpush1.bf16.msra.mxu0 %v1364
        %1368 = vmatprep.subr.bf16.mxu0 0
        %1369 = vmatpush1.bf16.msra.mxu0 0
        %1370 = vmatprep.subr.bf16.mxu0 0
        %1371 = vmatpush1.bf16.msra.mxu0 0
        %1372 = vmatprep.subr.bf16.mxu0 0
        %1373 = vmatpush1.bf16.msra.mxu0 0
        %1374 = vmatprep.subr.bf16.mxu0 0
        %1375 = vmatpush1.bf16.msra.mxu0 0
        %1376 = vmatprep.subr.bf16.mxu0 0
        %1377 = vmatpush1.bf16.msra.mxu0 0
        %1378 = vmatprep.subr.bf16.mxu0 0
        %1379 = vmatpush1.bf16.msra.mxu0 0
        %1380 = vmatprep.subr.bf16.mxu0 0
        %1381 = vmatpush1.bf16.msra.mxu0 0
        %1382 = vmatprep.subr.bf16.mxu0 0
        %1383 = vmatpush1.bf16.msra.mxu0 0
        %1384 = vmatprep.subr.bf16.mxu0 0
        %1385 = vmatpush1.bf16.msra.mxu0 0
        %1386 = vmatprep.subr.bf16.mxu0 0
        %1387 = vmatpush1.bf16.msra.mxu0 0
        %1388 = vmatprep.subr.bf16.mxu0 0
        %1389 = vmatpush1.bf16.msra.mxu0 0
        %1390 = vmatprep.subr.bf16.mxu0 0
        %1391 = vmatpush1.bf16.msra.mxu0 0
        %1392 = vmatprep.subr.bf16.mxu0 0
        %1393 = vmatpush1.bf16.msra.mxu0 0
        %1394 = vmatprep.subr.bf16.mxu0 0
        %1395 = vmatpush1.bf16.msra.mxu0 0
        %1396 = vmatprep.subr.bf16.mxu0 0
        %1397 = vmatpush1.bf16.msra.mxu0 0
        %1398 = vmatprep.mubr.bf16.mxu0 0
        %1399 = vmatmul.mubr.bf16.gmra.mrb[0].mxu0 %v1362
        %v1400 = vpop.f32.mrb[0].mxu0
        %v1401 = vadd.f32 0.0, %v1400
        %v1402 = vpop.f32.mrb[0].mxu0
        %v1403 = vpop.f32.mrb[0].mxu0
        %v1404 = vpop.f32.mrb[0].mxu0
        %1405 = vdwg.mxu0
        %v1406 = vadd.f32 %v1355, %v1401
        %1407 = vrot.lane.b32.xlu0 %v1202, 116
        %v1408 = vpop.permute.xlu0 %1407
        %s1410 = scalar_lea.vmem %s1, 92
        %v1411 = vld [vmem:[%s1410] sm:$0xf]
        %v1413 = vsel %vm216, %v1411, 0
        %v1415 = vsel %vm220, %v1408, 0
        %1417 = vmatprep.subr.bf16.mxu0 0
        %1418 = vmatpush1.bf16.msra.mxu0 %v1415
        %1419 = vmatprep.subr.bf16.mxu0 0
        %1420 = vmatpush1.bf16.msra.mxu0 0
        %1421 = vmatprep.subr.bf16.mxu0 0
        %1422 = vmatpush1.bf16.msra.mxu0 0
        %1423 = vmatprep.subr.bf16.mxu0 0
        %1424 = vmatpush1.bf16.msra.mxu0 0
        %1425 = vmatprep.subr.bf16.mxu0 0
        %1426 = vmatpush1.bf16.msra.mxu0 0
        %1427 = vmatprep.subr.bf16.mxu0 0
        %1428 = vmatpush1.bf16.msra.mxu0 0
        %1429 = vmatprep.subr.bf16.mxu0 0
        %1430 = vmatpush1.bf16.msra.mxu0 0
        %1431 = vmatprep.subr.bf16.mxu0 0
        %1432 = vmatpush1.bf16.msra.mxu0 0
        %1433 = vmatprep.subr.bf16.mxu0 0
        %1434 = vmatpush1.bf16.msra.mxu0 0
        %1435 = vmatprep.subr.bf16.mxu0 0
        %1436 = vmatpush1.bf16.msra.mxu0 0
        %1437 = vmatprep.subr.bf16.mxu0 0
        %1438 = vmatpush1.bf16.msra.mxu0 0
        %1439 = vmatprep.subr.bf16.mxu0 0
        %1440 = vmatpush1.bf16.msra.mxu0 0
        %1441 = vmatprep.subr.bf16.mxu0 0
        %1442 = vmatpush1.bf16.msra.mxu0 0
        %1443 = vmatprep.subr.bf16.mxu0 0
        %1444 = vmatpush1.bf16.msra.mxu0 0
        %1445 = vmatprep.subr.bf16.mxu0 0
        %1446 = vmatpush1.bf16.msra.mxu0 0
        %1447 = vmatprep.subr.bf16.mxu0 0
        %1448 = vmatpush1.bf16.msra.mxu0 0
        %1449 = vmatprep.mubr.bf16.mxu0 0
        %1450 = vmatmul.mubr.bf16.gmra.mrb[0].mxu0 %v1413
        %v1451 = vpop.f32.mrb[0].mxu0
        %v1452 = vadd.f32 0.0, %v1451
        %v1453 = vpop.f32.mrb[0].mxu0
        %v1454 = vpop.f32.mrb[0].mxu0
        %v1455 = vpop.f32.mrb[0].mxu0
        %1456 = vdwg.mxu0
        %v1457 = vadd.f32 %v1406, %v1452
        %1458 = vrot.lane.b32.xlu0 %v1202, 108
        %v1459 = vpop.permute.xlu0 %1458
        %s1461 = scalar_lea.vmem %s1, 96
        %v1462 = vld [vmem:[%s1461] sm:$0xf]
        %v1464 = vsel %vm216, %v1462, 0
        %v1466 = vsel %vm220, %v1459, 0
        %1468 = vmatprep.subr.bf16.mxu0 0
        %1469 = vmatpush1.bf16.msra.mxu0 %v1466
        %1470 = vmatprep.subr.bf16.mxu0 0
        %1471 = vmatpush1.bf16.msra.mxu0 0
        %1472 = vmatprep.subr.bf16.mxu0 0
        %1473 = vmatpush1.bf16.msra.mxu0 0
        %1474 = vmatprep.subr.bf16.mxu0 0
        %1475 = vmatpush1.bf16.msra.mxu0 0
        %1476 = vmatprep.subr.bf16.mxu0 0
        %1477 = vmatpush1.bf16.msra.mxu0 0
        %1478 = vmatprep.subr.bf16.mxu0 0
        %1479 = vmatpush1.bf16.msra.mxu0 0
        %1480 = vmatprep.subr.bf16.mxu0 0
        %1481 = vmatpush1.bf16.msra.mxu0 0
        %1482 = vmatprep.subr.bf16.mxu0 0
        %1483 = vmatpush1.bf16.msra.mxu0 0
        %1484 = vmatprep.subr.bf16.mxu0 0
        %1485 = vmatpush1.bf16.msra.mxu0 0
        %1486 = vmatprep.subr.bf16.mxu0 0
        %1487 = vmatpush1.bf16.msra.mxu0 0
        %1488 = vmatprep.subr.bf16.mxu0 0
        %1489 = vmatpush1.bf16.msra.mxu0 0
        %1490 = vmatprep.subr.bf16.mxu0 0
        %1491 = vmatpush1.bf16.msra.mxu0 0
        %1492 = vmatprep.subr.bf16.mxu0 0
        %1493 = vmatpush1.bf16.msra.mxu0 0
        %1494 = vmatprep.subr.bf16.mxu0 0
        %1495 = vmatpush1.bf16.msra.mxu0 0
        %1496 = vmatprep.subr.bf16.mxu0 0
        %1497 = vmatpush1.bf16.msra.mxu0 0
        %1498 = vmatprep.subr.bf16.mxu0 0
        %1499 = vmatpush1.bf16.msra.mxu0 0
        %1500 = vmatprep.mubr.bf16.mxu0 0
        %1501 = vmatmul.mubr.bf16.gmra.mrb[0].mxu0 %v1464
        %v1502 = vpop.f32.mrb[0].mxu0
        %v1503 = vadd.f32 0.0, %v1502
        %v1504 = vpop.f32.mrb[0].mxu0
        %v1505 = vpop.f32.mrb[0].mxu0
        %v1506 = vpop.f32.mrb[0].mxu0
        %1507 = vdwg.mxu0
        %v1508 = vadd.f32 %v1457, %v1503
        %1509 = vrot.lane.b32.xlu0 %v1202, 107
        %v1510 = vpop.permute.xlu0 %1509
        %s1512 = scalar_lea.vmem %s1, 100
        %v1513 = vld [vmem:[%s1512] sm:$0xf]
        %v1515 = vsel %vm216, %v1513, 0
        %v1517 = vsel %vm220, %v1510, 0
        %1519 = vmatprep.subr.bf16.mxu0 0
        %1520 = vmatpush1.bf16.msra.mxu0 %v1517
        %1521 = vmatprep.subr.bf16.mxu0 0
        %1522 = vmatpush1.bf16.msra.mxu0 0
        %1523 = vmatprep.subr.bf16.mxu0 0
        %1524 = vmatpush1.bf16.msra.mxu0 0
        %1525 = vmatprep.subr.bf16.mxu0 0
        %1526 = vmatpush1.bf16.msra.mxu0 0
        %1527 = vmatprep.subr.bf16.mxu0 0
        %1528 = vmatpush1.bf16.msra.mxu0 0
        %1529 = vmatprep.subr.bf16.mxu0 0
        %1530 = vmatpush1.bf16.msra.mxu0 0
        %1531 = vmatprep.subr.bf16.mxu0 0
        %1532 = vmatpush1.bf16.msra.mxu0 0
        %1533 = vmatprep.subr.bf16.mxu0 0
        %1534 = vmatpush1.bf16.msra.mxu0 0
        %1535 = vmatprep.subr.bf16.mxu0 0
        %1536 = vmatpush1.bf16.msra.mxu0 0
        %1537 = vmatprep.subr.bf16.mxu0 0
        %1538 = vmatpush1.bf16.msra.mxu0 0
        %1539 = vmatprep.subr.bf16.mxu0 0
        %1540 = vmatpush1.bf16.msra.mxu0 0
        %1541 = vmatprep.subr.bf16.mxu0 0
        %1542 = vmatpush1.bf16.msra.mxu0 0
        %1543 = vmatprep.subr.bf16.mxu0 0
        %1544 = vmatpush1.bf16.msra.mxu0 0
        %1545 = vmatprep.subr.bf16.mxu0 0
        %1546 = vmatpush1.bf16.msra.mxu0 0
        %1547 = vmatprep.subr.bf16.mxu0 0
        %1548 = vmatpush1.bf16.msra.mxu0 0
        %1549 = vmatprep.subr.bf16.mxu0 0
        %1550 = vmatpush1.bf16.msra.mxu0 0
        %1551 = vmatprep.mubr.bf16.mxu0 0
        %1552 = vmatmul.mubr.bf16.gmra.mrb[0].mxu0 %v1515
        %v1553 = vpop.f32.mrb[0].mxu0
        %v1554 = vadd.f32 0.0, %v1553
        %v1555 = vpop.f32.mrb[0].mxu0
        %v1556 = vpop.f32.mrb[0].mxu0
        %v1557 = vpop.f32.mrb[0].mxu0
        %1558 = vdwg.mxu0
        %v1559 = vadd.f32 %v1508, %v1554
        %1560 = vrot.lane.b32.xlu0 %v1202, 106
        %v1561 = vpop.permute.xlu0 %1560
        %s1563 = scalar_lea.vmem %s1, 104
        %v1564 = vld [vmem:[%s1563] sm:$0xf]
        %v1566 = vsel %vm216, %v1564, 0
        %v1568 = vsel %vm220, %v1561, 0
        %1570 = vmatprep.subr.bf16.mxu0 0
        %1571 = vmatpush1.bf16.msra.mxu0 %v1568
        %1572 = vmatprep.subr.bf16.mxu0 0
        %1573 = vmatpush1.bf16.msra.mxu0 0
        %1574 = vmatprep.subr.bf16.mxu0 0
        %1575 = vmatpush1.bf16.msra.mxu0 0
        %1576 = vmatprep.subr.bf16.mxu0 0
        %1577 = vmatpush1.bf16.msra.mxu0 0
        %1578 = vmatprep.subr.bf16.mxu0 0
        %1579 = vmatpush1.bf16.msra.mxu0 0
        %1580 = vmatprep.subr.bf16.mxu0 0
        %1581 = vmatpush1.bf16.msra.mxu0 0
        %1582 = vmatprep.subr.bf16.mxu0 0
        %1583 = vmatpush1.bf16.msra.mxu0 0
        %1584 = vmatprep.subr.bf16.mxu0 0
        %1585 = vmatpush1.bf16.msra.mxu0 0
        %1586 = vmatprep.subr.bf16.mxu0 0
        %1587 = vmatpush1.bf16.msra.mxu0 0
        %1588 = vmatprep.subr.bf16.mxu0 0
        %1589 = vmatpush1.bf16.msra.mxu0 0
        %1590 = vmatprep.subr.bf16.mxu0 0
        %1591 = vmatpush1.bf16.msra.mxu0 0
        %1592 = vmatprep.subr.bf16.mxu0 0
        %1593 = vmatpush1.bf16.msra.mxu0 0
        %1594 = vmatprep.subr.bf16.mxu0 0
        %1595 = vmatpush1.bf16.msra.mxu0 0
        %1596 = vmatprep.subr.bf16.mxu0 0
        %1597 = vmatpush1.bf16.msra.mxu0 0
        %1598 = vmatprep.subr.bf16.mxu0 0
        %1599 = vmatpush1.bf16.msra.mxu0 0
        %1600 = vmatprep.subr.bf16.mxu0 0
        %1601 = vmatpush1.bf16.msra.mxu0 0
        %1602 = vmatprep.mubr.bf16.mxu0 0
        %1603 = vmatmul.mubr.bf16.gmra.mrb[0].mxu0 %v1566
        %v1604 = vpop.f32.mrb[0].mxu0
        %v1605 = vadd.f32 0.0, %v1604
        %v1606 = vpop.f32.mrb[0].mxu0
        %v1607 = vpop.f32.mrb[0].mxu0
        %v1608 = vpop.f32.mrb[0].mxu0
        %1609 = vdwg.mxu0
        %v1610 = vadd.f32 %v1559, %v1605
        %v1611 = vmax.f32 %v1610, 0.0
        %1612 = vst [vmem:[%s177] sm:$0xff] %v1611
        %v1613 = vld [vmem:[%s1] sm:$0xf]
        %v1615 = vsel %vm216, %v1613, 0
        %1617 = vmatprep.subr.bf16.mxu0 0
        %1618 = vmatpush1.bf16.msra.mxu0 %v687
        %1619 = vmatprep.subr.bf16.mxu0 0
        %1620 = vmatpush1.bf16.msra.mxu0 0
        %1621 = vmatprep.subr.bf16.mxu0 0
        %1622 = vmatpush1.bf16.msra.mxu0 0
        %1623 = vmatprep.subr.bf16.mxu0 0
        %1624 = vmatpush1.bf16.msra.mxu0 0
        %1625 = vmatprep.subr.bf16.mxu0 0
        %1626 = vmatpush1.bf16.msra.mxu0 0
        %1627 = vmatprep.subr.bf16.mxu0 0
        %1628 = vmatpush1.bf16.msra.mxu0 0
        %1629 = vmatprep.subr.bf16.mxu0 0
        %1630 = vmatpush1.bf16.msra.mxu0 0
        %1631 = vmatprep.subr.bf16.mxu0 0
        %1632 = vmatpush1.bf16.msra.mxu0 0
        %1633 = vmatprep.subr.bf16.mxu0 0
        %1634 = vmatpush1.bf16.msra.mxu0 0
        %1635 = vmatprep.subr.bf16.mxu0 0
        %1636 = vmatpush1.bf16.msra.mxu0 0
        %1637 = vmatprep.subr.bf16.mxu0 0
        %1638 = vmatpush1.bf16.msra.mxu0 0
        %1639 = vmatprep.subr.bf16.mxu0 0
        %1640 = vmatpush1.bf16.msra.mxu0 0
        %1641 = vmatprep.subr.bf16.mxu0 0
        %1642 = vmatpush1.bf16.msra.mxu0 0
        %1643 = vmatprep.subr.bf16.mxu0 0
        %1644 = vmatpush1.bf16.msra.mxu0 0
        %1645 = vmatprep.subr.bf16.mxu0 0
        %1646 = vmatpush1.bf16.msra.mxu0 0
        %1647 = vmatprep.subr.bf16.mxu0 0
        %1648 = vmatpush1.bf16.msra.mxu0 0
        %1649 = vmatprep.mubr.bf16.mxu0 0
        %1650 = vmatmul.mubr.bf16.gmra.mrb[0].mxu0 %v1615
        %v1651 = vpop.f32.mrb[0].mxu0
        %v1652 = vadd.f32 0.0, %v1651
        %v1653 = vpop.f32.mrb[0].mxu0
        %v1654 = vpop.f32.mrb[0].mxu0
        %v1655 = vpop.f32.mrb[0].mxu0
        %1656 = vdwg.mxu0
        %v1657 = vadd.f32 %v190, %v1652
        %v1658 = vld [vmem:[%s276] sm:$0xf]
        %v1660 = vsel %vm216, %v1658, 0
        %1662 = vmatprep.subr.bf16.mxu0 0
        %1663 = vmatpush1.bf16.msra.mxu0 %v746
        %1664 = vmatprep.subr.bf16.mxu0 0
        %1665 = vmatpush1.bf16.msra.mxu0 0
        %1666 = vmatprep.subr.bf16.mxu0 0
        %1667 = vmatpush1.bf16.msra.mxu0 0
        %1668 = vmatprep.subr.bf16.mxu0 0
        %1669 = vmatpush1.bf16.msra.mxu0 0
        %1670 = vmatprep.subr.bf16.mxu0 0
        %1671 = vmatpush1.bf16.msra.mxu0 0
        %1672 = vmatprep.subr.bf16.mxu0 0
        %1673 = vmatpush1.bf16.msra.mxu0 0
        %1674 = vmatprep.subr.bf16.mxu0 0
        %1675 = vmatpush1.bf16.msra.mxu0 0
        %1676 = vmatprep.subr.bf16.mxu0 0
        %1677 = vmatpush1.bf16.msra.mxu0 0
        %1678 = vmatprep.subr.bf16.mxu0 0
        %1679 = vmatpush1.bf16.msra.mxu0 0
        %1680 = vmatprep.subr.bf16.mxu0 0
        %1681 = vmatpush1.bf16.msra.mxu0 0
        %1682 = vmatprep.subr.bf16.mxu0 0
        %1683 = vmatpush1.bf16.msra.mxu0 0
        %1684 = vmatprep.subr.bf16.mxu0 0
        %1685 = vmatpush1.bf16.msra.mxu0 0
        %1686 = vmatprep.subr.bf16.mxu0 0
        %1687 = vmatpush1.bf16.msra.mxu0 0
        %1688 = vmatprep.subr.bf16.mxu0 0
        %1689 = vmatpush1.bf16.msra.mxu0 0
        %1690 = vmatprep.subr.bf16.mxu0 0
        %1691 = vmatpush1.bf16.msra.mxu0 0
        %1692 = vmatprep.subr.bf16.mxu0 0
        %1693 = vmatpush1.bf16.msra.mxu0 0
        %1694 = vmatprep.mubr.bf16.mxu0 0
        %1695 = vmatmul.mubr.bf16.gmra.mrb[0].mxu0 %v1660
        %v1696 = vpop.f32.mrb[0].mxu0
        %v1697 = vadd.f32 0.0, %v1696
        %v1698 = vpop.f32.mrb[0].mxu0
        %v1699 = vpop.f32.mrb[0].mxu0
        %v1700 = vpop.f32.mrb[0].mxu0
        %1701 = vdwg.mxu0
        %v1702 = vadd.f32 %v1657, %v1697
        %v1703 = vld [vmem:[%s327] sm:$0xf]
        %v1705 = vsel %vm216, %v1703, 0
        %1707 = vmatprep.subr.bf16.mxu0 0
        %1708 = vmatpush1.bf16.msra.mxu0 %v797
        %1709 = vmatprep.subr.bf16.mxu0 0
        %1710 = vmatpush1.bf16.msra.mxu0 0
        %1711 = vmatprep.subr.bf16.mxu0 0
        %1712 = vmatpush1.bf16.msra.mxu0 0
        %1713 = vmatprep.subr.bf16.mxu0 0
        %1714 = vmatpush1.bf16.msra.mxu0 0
        %1715 = vmatprep.subr.bf16.mxu0 0
        %1716 = vmatpush1.bf16.msra.mxu0 0
        %1717 = vmatprep.subr.bf16.mxu0 0
        %1718 = vmatpush1.bf16.msra.mxu0 0
        %1719 = vmatprep.subr.bf16.mxu0 0
        %1720 = vmatpush1.bf16.msra.mxu0 0
        %1721 = vmatprep.subr.bf16.mxu0 0
        %1722 = vmatpush1.bf16.msra.mxu0 0
        %1723 = vmatprep.subr.bf16.mxu0 0
        %1724 = vmatpush1.bf16.msra.mxu0 0
        %1725 = vmatprep.subr.bf16.mxu0 0
        %1726 = vmatpush1.bf16.msra.mxu0 0
        %1727 = vmatprep.subr.bf16.mxu0 0
        %1728 = vmatpush1.bf16.msra.mxu0 0
        %1729 = vmatprep.subr.bf16.mxu0 0
        %1730 = vmatpush1.bf16.msra.mxu0 0
        %1731 = vmatprep.subr.bf16.mxu0 0
        %1732 = vmatpush1.bf16.msra.mxu0 0
        %1733 = vmatprep.subr.bf16.mxu0 0
        %1734 = vmatpush1.bf16.msra.mxu0 0
        %1735 = vmatprep.subr.bf16.mxu0 0
        %1736 = vmatpush1.bf16.msra.mxu0 0
        %1737 = vmatprep.subr.bf16.mxu0 0
        %1738 = vmatpush1.bf16.msra.mxu0 0
        %1739 = vmatprep.mubr.bf16.mxu0 0
        %1740 = vmatmul.mubr.bf16.gmra.mrb[0].mxu0 %v1705
        %v1741 = vpop.f32.mrb[0].mxu0
        %v1742 = vadd.f32 0.0, %v1741
        %v1743 = vpop.f32.mrb[0].mxu0
        %v1744 = vpop.f32.mrb[0].mxu0
        %v1745 = vpop.f32.mrb[0].mxu0
        %1746 = vdwg.mxu0
        %v1747 = vadd.f32 %v1702, %v1742
        %v1748 = vld [vmem:[%s378] sm:$0xf]
        %v1750 = vsel %vm216, %v1748, 0
        %1752 = vmatprep.subr.bf16.mxu0 0
        %1753 = vmatpush1.bf16.msra.mxu0 %v848
        %1754 = vmatprep.subr.bf16.mxu0 0
        %1755 = vmatpush1.bf16.msra.mxu0 0
        %1756 = vmatprep.subr.bf16.mxu0 0
        %1757 = vmatpush1.bf16.msra.mxu0 0
        %1758 = vmatprep.subr.bf16.mxu0 0
        %1759 = vmatpush1.bf16.msra.mxu0 0
        %1760 = vmatprep.subr.bf16.mxu0 0
        %1761 = vmatpush1.bf16.msra.mxu0 0
        %1762 = vmatprep.subr.bf16.mxu0 0
        %1763 = vmatpush1.bf16.msra.mxu0 0
        %1764 = vmatprep.subr.bf16.mxu0 0
        %1765 = vmatpush1.bf16.msra.mxu0 0
        %1766 = vmatprep.subr.bf16.mxu0 0
        %1767 = vmatpush1.bf16.msra.mxu0 0
        %1768 = vmatprep.subr.bf16.mxu0 0
        %1769 = vmatpush1.bf16.msra.mxu0 0
        %1770 = vmatprep.subr.bf16.mxu0 0
        %1771 = vmatpush1.bf16.msra.mxu0 0
        %1772 = vmatprep.subr.bf16.mxu0 0
        %1773 = vmatpush1.bf16.msra.mxu0 0
        %1774 = vmatprep.subr.bf16.mxu0 0
        %1775 = vmatpush1.bf16.msra.mxu0 0
        %1776 = vmatprep.subr.bf16.mxu0 0
        %1777 = vmatpush1.bf16.msra.mxu0 0
        %1778 = vmatprep.subr.bf16.mxu0 0
        %1779 = vmatpush1.bf16.msra.mxu0 0
        %1780 = vmatprep.subr.bf16.mxu0 0
        %1781 = vmatpush1.bf16.msra.mxu0 0
        %1782 = vmatprep.subr.bf16.mxu0 0
        %1783 = vmatpush1.bf16.msra.mxu0 0
        %1784 = vmatprep.mubr.bf16.mxu0 0
        %1785 = vmatmul.mubr.bf16.gmra.mrb[0].mxu0 %v1750
        %v1786 = vpop.f32.mrb[0].mxu0
        %v1787 = vadd.f32 0.0, %v1786
        %v1788 = vpop.f32.mrb[0].mxu0
        %v1789 = vpop.f32.mrb[0].mxu0
        %v1790 = vpop.f32.mrb[0].mxu0
        %1791 = vdwg.mxu0
        %v1792 = vadd.f32 %v1747, %v1787
        %v1793 = vld [vmem:[%s429] sm:$0xf]
        %v1795 = vsel %vm216, %v1793, 0
        %1797 = vmatprep.subr.bf16.mxu0 0
        %1798 = vmatpush1.bf16.msra.mxu0 %v899
        %1799 = vmatprep.subr.bf16.mxu0 0
        %1800 = vmatpush1.bf16.msra.mxu0 0
        %1801 = vmatprep.subr.bf16.mxu0 0
        %1802 = vmatpush1.bf16.msra.mxu0 0
        %1803 = vmatprep.subr.bf16.mxu0 0
        %1804 = vmatpush1.bf16.msra.mxu0 0
        %1805 = vmatprep.subr.bf16.mxu0 0
        %1806 = vmatpush1.bf16.msra.mxu0 0
        %1807 = vmatprep.subr.bf16.mxu0 0
        %1808 = vmatpush1.bf16.msra.mxu0 0
        %1809 = vmatprep.subr.bf16.mxu0 0
        %1810 = vmatpush1.bf16.msra.mxu0 0
        %1811 = vmatprep.subr.bf16.mxu0 0
        %1812 = vmatpush1.bf16.msra.mxu0 0
        %1813 = vmatprep.subr.bf16.mxu0 0
        %1814 = vmatpush1.bf16.msra.mxu0 0
        %1815 = vmatprep.subr.bf16.mxu0 0
        %1816 = vmatpush1.bf16.msra.mxu0 0
        %1817 = vmatprep.subr.bf16.mxu0 0
        %1818 = vmatpush1.bf16.msra.mxu0 0
        %1819 = vmatprep.subr.bf16.mxu0 0
        %1820 = vmatpush1.bf16.msra.mxu0 0
        %1821 = vmatprep.subr.bf16.mxu0 0
        %1822 = vmatpush1.bf16.msra.mxu0 0
        %1823 = vmatprep.subr.bf16.mxu0 0
        %1824 = vmatpush1.bf16.msra.mxu0 0
        %1825 = vmatprep.subr.bf16.mxu0 0
        %1826 = vmatpush1.bf16.msra.mxu0 0
        %1827 = vmatprep.subr.bf16.mxu0 0
        %1828 = vmatpush1.bf16.msra.mxu0 0
        %1829 = vmatprep.mubr.bf16.mxu0 0
        %1830 = vmatmul.mubr.bf16.gmra.mrb[0].mxu0 %v1795
        %v1831 = vpop.f32.mrb[0].mxu0
        %v1832 = vadd.f32 0.0, %v1831
        %v1833 = vpop.f32.mrb[0].mxu0
        %v1834 = vpop.f32.mrb[0].mxu0
        %v1835 = vpop.f32.mrb[0].mxu0
        %1836 = vdwg.mxu0
        %v1837 = vadd.f32 %v1792, %v1832
        %v1838 = vld [vmem:[%s480] sm:$0xf]
        %v1840 = vsel %vm216, %v1838, 0
        %1842 = vmatprep.subr.bf16.mxu0 0
        %1843 = vmatpush1.bf16.msra.mxu0 %v950
        %1844 = vmatprep.subr.bf16.mxu0 0
        %1845 = vmatpush1.bf16.msra.mxu0 0
        %1846 = vmatprep.subr.bf16.mxu0 0
        %1847 = vmatpush1.bf16.msra.mxu0 0
        %1848 = vmatprep.subr.bf16.mxu0 0
        %1849 = vmatpush1.bf16.msra.mxu0 0
        %1850 = vmatprep.subr.bf16.mxu0 0
        %1851 = vmatpush1.bf16.msra.mxu0 0
        %1852 = vmatprep.subr.bf16.mxu0 0
        %1853 = vmatpush1.bf16.msra.mxu0 0
        %1854 = vmatprep.subr.bf16.mxu0 0
        %1855 = vmatpush1.bf16.msra.mxu0 0
        %1856 = vmatprep.subr.bf16.mxu0 0
        %1857 = vmatpush1.bf16.msra.mxu0 0
        %1858 = vmatprep.subr.bf16.mxu0 0
        %1859 = vmatpush1.bf16.msra.mxu0 0
        %1860 = vmatprep.subr.bf16.mxu0 0
        %1861 = vmatpush1.bf16.msra.mxu0 0
        %1862 = vmatprep.subr.bf16.mxu0 0
        %1863 = vmatpush1.bf16.msra.mxu0 0
        %1864 = vmatprep.subr.bf16.mxu0 0
        %1865 = vmatpush1.bf16.msra.mxu0 0
        %1866 = vmatprep.subr.bf16.mxu0 0
        %1867 = vmatpush1.bf16.msra.mxu0 0
        %1868 = vmatprep.subr.bf16.mxu0 0
        %1869 = vmatpush1.bf16.msra.mxu0 0
        %1870 = vmatprep.subr.bf16.mxu0 0
        %1871 = vmatpush1.bf16.msra.mxu0 0
        %1872 = vmatprep.subr.bf16.mxu0 0
        %1873 = vmatpush1.bf16.msra.mxu0 0
        %1874 = vmatprep.mubr.bf16.mxu0 0
        %1875 = vmatmul.mubr.bf16.gmra.mrb[0].mxu0 %v1840
        %v1876 = vpop.f32.mrb[0].mxu0
        %v1877 = vadd.f32 0.0, %v1876
        %v1878 = vpop.f32.mrb[0].mxu0
        %v1879 = vpop.f32.mrb[0].mxu0
        %v1880 = vpop.f32.mrb[0].mxu0
        %1881 = vdwg.mxu0
        %v1882 = vadd.f32 %v1837, %v1877
        %v1883 = vld [vmem:[%s531] sm:$0xf]
        %v1885 = vsel %vm216, %v1883, 0
        %1887 = vmatprep.subr.bf16.mxu0 0
        %1888 = vmatpush1.bf16.msra.mxu0 %v1001
        %1889 = vmatprep.subr.bf16.mxu0 0
        %1890 = vmatpush1.bf16.msra.mxu0 0
        %1891 = vmatprep.subr.bf16.mxu0 0
        %1892 = vmatpush1.bf16.msra.mxu0 0
        %1893 = vmatprep.subr.bf16.mxu0 0
        %1894 = vmatpush1.bf16.msra.mxu0 0
        %1895 = vmatprep.subr.bf16.mxu0 0
        %1896 = vmatpush1.bf16.msra.mxu0 0
        %1897 = vmatprep.subr.bf16.mxu0 0
        %1898 = vmatpush1.bf16.msra.mxu0 0
        %1899 = vmatprep.subr.bf16.mxu0 0
        %1900 = vmatpush1.bf16.msra.mxu0 0
        %1901 = vmatprep.subr.bf16.mxu0 0
        %1902 = vmatpush1.bf16.msra.mxu0 0
        %1903 = vmatprep.subr.bf16.mxu0 0
        %1904 = vmatpush1.bf16.msra.mxu0 0
        %1905 = vmatprep.subr.bf16.mxu0 0
        %1906 = vmatpush1.bf16.msra.mxu0 0
        %1907 = vmatprep.subr.bf16.mxu0 0
        %1908 = vmatpush1.bf16.msra.mxu0 0
        %1909 = vmatprep.subr.bf16.mxu0 0
        %1910 = vmatpush1.bf16.msra.mxu0 0
        %1911 = vmatprep.subr.bf16.mxu0 0
        %1912 = vmatpush1.bf16.msra.mxu0 0
        %1913 = vmatprep.subr.bf16.mxu0 0
        %1914 = vmatpush1.bf16.msra.mxu0 0
        %1915 = vmatprep.subr.bf16.mxu0 0
        %1916 = vmatpush1.bf16.msra.mxu0 0
        %1917 = vmatprep.subr.bf16.mxu0 0
        %1918 = vmatpush1.bf16.msra.mxu0 0
        %1919 = vmatprep.mubr.bf16.mxu0 0
        %1920 = vmatmul.mubr.bf16.gmra.mrb[0].mxu0 %v1885
        %v1921 = vpop.f32.mrb[0].mxu0
        %v1922 = vadd.f32 0.0, %v1921
        %v1923 = vpop.f32.mrb[0].mxu0
        %v1924 = vpop.f32.mrb[0].mxu0
        %v1925 = vpop.f32.mrb[0].mxu0
        %1926 = vdwg.mxu0
        %v1927 = vadd.f32 %v1882, %v1922
        %v1928 = vld [vmem:[%s582] sm:$0xf]
        %v1930 = vsel %vm216, %v1928, 0
        %1932 = vmatprep.subr.bf16.mxu0 0
        %1933 = vmatpush1.bf16.msra.mxu0 %v1052
        %1934 = vmatprep.subr.bf16.mxu0 0
        %1935 = vmatpush1.bf16.msra.mxu0 0
        %1936 = vmatprep.subr.bf16.mxu0 0
        %1937 = vmatpush1.bf16.msra.mxu0 0
        %1938 = vmatprep.subr.bf16.mxu0 0
        %1939 = vmatpush1.bf16.msra.mxu0 0
        %1940 = vmatprep.subr.bf16.mxu0 0
        %1941 = vmatpush1.bf16.msra.mxu0 0
        %1942 = vmatprep.subr.bf16.mxu0 0
        %1943 = vmatpush1.bf16.msra.mxu0 0
        %1944 = vmatprep.subr.bf16.mxu0 0
        %1945 = vmatpush1.bf16.msra.mxu0 0
        %1946 = vmatprep.subr.bf16.mxu0 0
        %1947 = vmatpush1.bf16.msra.mxu0 0
        %1948 = vmatprep.subr.bf16.mxu0 0
        %1949 = vmatpush1.bf16.msra.mxu0 0
        %1950 = vmatprep.subr.bf16.mxu0 0
        %1951 = vmatpush1.bf16.msra.mxu0 0
        %1952 = vmatprep.subr.bf16.mxu0 0
        %1953 = vmatpush1.bf16.msra.mxu0 0
        %1954 = vmatprep.subr.bf16.mxu0 0
        %1955 = vmatpush1.bf16.msra.mxu0 0
        %1956 = vmatprep.subr.bf16.mxu0 0
        %1957 = vmatpush1.bf16.msra.mxu0 0
        %1958 = vmatprep.subr.bf16.mxu0 0
        %1959 = vmatpush1.bf16.msra.mxu0 0
        %1960 = vmatprep.subr.bf16.mxu0 0
        %1961 = vmatpush1.bf16.msra.mxu0 0
        %1962 = vmatprep.subr.bf16.mxu0 0
        %1963 = vmatpush1.bf16.msra.mxu0 0
        %1964 = vmatprep.mubr.bf16.mxu0 0
        %1965 = vmatmul.mubr.bf16.gmra.mrb[0].mxu0 %v1930
        %v1966 = vpop.f32.mrb[0].mxu0
        %v1967 = vadd.f32 0.0, %v1966
        %v1968 = vpop.f32.mrb[0].mxu0
        %v1969 = vpop.f32.mrb[0].mxu0
        %v1970 = vpop.f32.mrb[0].mxu0
        %1971 = vdwg.mxu0
        %v1972 = vadd.f32 %v1927, %v1967
        %v1973 = vld [vmem:[%s633] sm:$0xf]
        %v1975 = vsel %vm216, %v1973, 0
        %1977 = vmatprep.subr.bf16.mxu0 0
        %1978 = vmatpush1.bf16.msra.mxu0 %v1103
        %1979 = vmatprep.subr.bf16.mxu0 0
        %1980 = vmatpush1.bf16.msra.mxu0 0
        %1981 = vmatprep.subr.bf16.mxu0 0
        %1982 = vmatpush1.bf16.msra.mxu0 0
        %1983 = vmatprep.subr.bf16.mxu0 0
        %1984 = vmatpush1.bf16.msra.mxu0 0
        %1985 = vmatprep.subr.bf16.mxu0 0
        %1986 = vmatpush1.bf16.msra.mxu0 0
        %1987 = vmatprep.subr.bf16.mxu0 0
        %1988 = vmatpush1.bf16.msra.mxu0 0
        %1989 = vmatprep.subr.bf16.mxu0 0
        %1990 = vmatpush1.bf16.msra.mxu0 0
        %1991 = vmatprep.subr.bf16.mxu0 0
        %1992 = vmatpush1.bf16.msra.mxu0 0
        %1993 = vmatprep.subr.bf16.mxu0 0
        %1994 = vmatpush1.bf16.msra.mxu0 0
        %1995 = vmatprep.subr.bf16.mxu0 0
        %1996 = vmatpush1.bf16.msra.mxu0 0
        %1997 = vmatprep.subr.bf16.mxu0 0
        %1998 = vmatpush1.bf16.msra.mxu0 0
        %1999 = vmatprep.subr.bf16.mxu0 0
        %2000 = vmatpush1.bf16.msra.mxu0 0
        %2001 = vmatprep.subr.bf16.mxu0 0
        %2002 = vmatpush1.bf16.msra.mxu0 0
        %2003 = vmatprep.subr.bf16.mxu0 0
        %2004 = vmatpush1.bf16.msra.mxu0 0
        %2005 = vmatprep.subr.bf16.mxu0 0
        %2006 = vmatpush1.bf16.msra.mxu0 0
        %2007 = vmatprep.subr.bf16.mxu0 0
        %2008 = vmatpush1.bf16.msra.mxu0 0
        %2009 = vmatprep.mubr.bf16.mxu0 0
        %2010 = vmatmul.mubr.bf16.gmra.mrb[0].mxu0 %v1975
        %v2011 = vpop.f32.mrb[0].mxu0
        %v2012 = vadd.f32 0.0, %v2011
        %v2013 = vpop.f32.mrb[0].mxu0
        %v2014 = vpop.f32.mrb[0].mxu0
        %v2015 = vpop.f32.mrb[0].mxu0
        %2016 = vdwg.mxu0
        %v2017 = vadd.f32 %v1972, %v2012
        %v2018 = vld [vmem:[%s681] sm:$0xf]
        %v2020 = vsel %vm216, %v2018, 0
        %2022 = vmatprep.subr.bf16.mxu0 0
        %2023 = vmatpush1.bf16.msra.mxu0 %v1152
        %2024 = vmatprep.subr.bf16.mxu0 0
        %2025 = vmatpush1.bf16.msra.mxu0 0
        %2026 = vmatprep.subr.bf16.mxu0 0
        %2027 = vmatpush1.bf16.msra.mxu0 0
        %2028 = vmatprep.subr.bf16.mxu0 0
        %2029 = vmatpush1.bf16.msra.mxu0 0
        %2030 = vmatprep.subr.bf16.mxu0 0
        %2031 = vmatpush1.bf16.msra.mxu0 0
        %2032 = vmatprep.subr.bf16.mxu0 0
        %2033 = vmatpush1.bf16.msra.mxu0 0
        %2034 = vmatprep.subr.bf16.mxu0 0
        %2035 = vmatpush1.bf16.msra.mxu0 0
        %2036 = vmatprep.subr.bf16.mxu0 0
        %2037 = vmatpush1.bf16.msra.mxu0 0
        %2038 = vmatprep.subr.bf16.mxu0 0
        %2039 = vmatpush1.bf16.msra.mxu0 0
        %2040 = vmatprep.subr.bf16.mxu0 0
        %2041 = vmatpush1.bf16.msra.mxu0 0
        %2042 = vmatprep.subr.bf16.mxu0 0
        %2043 = vmatpush1.bf16.msra.mxu0 0
        %2044 = vmatprep.subr.bf16.mxu0 0
        %2045 = vmatpush1.bf16.msra.mxu0 0
        %2046 = vmatprep.subr.bf16.mxu0 0
        %2047 = vmatpush1.bf16.msra.mxu0 0
        %2048 = vmatprep.subr.bf16.mxu0 0
        %2049 = vmatpush1.bf16.msra.mxu0 0
        %2050 = vmatprep.subr.bf16.mxu0 0
        %2051 = vmatpush1.bf16.msra.mxu0 0
        %2052 = vmatprep.subr.bf16.mxu0 0
        %2053 = vmatpush1.bf16.msra.mxu0 0
        %2054 = vmatprep.mubr.bf16.mxu0 0
        %2055 = vmatmul.mubr.bf16.gmra.mrb[0].mxu0 %v2020
        %v2056 = vpop.f32.mrb[0].mxu0
        %v2057 = vadd.f32 0.0, %v2056
        %v2058 = vpop.f32.mrb[0].mxu0
        %v2059 = vpop.f32.mrb[0].mxu0
        %v2060 = vpop.f32.mrb[0].mxu0
        %2061 = vdwg.mxu0
        %v2062 = vadd.f32 %v2017, %v2057
        %v2063 = vld [vmem:[%s741] sm:$0xf]
        %v2065 = vsel %vm216, %v2063, 0
        %2067 = vmatprep.subr.bf16.mxu0 0
        %2068 = vmatpush1.bf16.msra.mxu0 %v1211
        %2069 = vmatprep.subr.bf16.mxu0 0
        %2070 = vmatpush1.bf16.msra.mxu0 0
        %2071 = vmatprep.subr.bf16.mxu0 0
        %2072 = vmatpush1.bf16.msra.mxu0 0
        %2073 = vmatprep.subr.bf16.mxu0 0
        %2074 = vmatpush1.bf16.msra.mxu0 0
        %2075 = vmatprep.subr.bf16.mxu0 0
        %2076 = vmatpush1.bf16.msra.mxu0 0
        %2077 = vmatprep.subr.bf16.mxu0 0
        %2078 = vmatpush1.bf16.msra.mxu0 0
        %2079 = vmatprep.subr.bf16.mxu0 0
        %2080 = vmatpush1.bf16.msra.mxu0 0
        %2081 = vmatprep.subr.bf16.mxu0 0
        %2082 = vmatpush1.bf16.msra.mxu0 0
        %2083 = vmatprep.subr.bf16.mxu0 0
        %2084 = vmatpush1.bf16.msra.mxu0 0
        %2085 = vmatprep.subr.bf16.mxu0 0
        %2086 = vmatpush1.bf16.msra.mxu0 0
        %2087 = vmatprep.subr.bf16.mxu0 0
        %2088 = vmatpush1.bf16.msra.mxu0 0
        %2089 = vmatprep.subr.bf16.mxu0 0
        %2090 = vmatpush1.bf16.msra.mxu0 0
        %2091 = vmatprep.subr.bf16.mxu0 0
        %2092 = vmatpush1.bf16.msra.mxu0 0
        %2093 = vmatprep.subr.bf16.mxu0 0
        %2094 = vmatpush1.bf16.msra.mxu0 0
        %2095 = vmatprep.subr.bf16.mxu0 0
        %2096 = vmatpush1.bf16.msra.mxu0 0
        %2097 = vmatprep.subr.bf16.mxu0 0
        %2098 = vmatpush1.bf16.msra.mxu0 0
        %2099 = vmatprep.mubr.bf16.mxu0 0
        %2100 = vmatmul.mubr.bf16.gmra.mrb[0].mxu0 %v2065
        %v2101 = vpop.f32.mrb[0].mxu0
        %v2102 = vadd.f32 0.0, %v2101
        %v2103 = vpop.f32.mrb[0].mxu0
        %v2104 = vpop.f32.mrb[0].mxu0
        %v2105 = vpop.f32.mrb[0].mxu0
        %2106 = vdwg.mxu0
        %v2107 = vadd.f32 %v2062, %v2102
        %v2108 = vld [vmem:[%s792] sm:$0xf]
        %v2110 = vsel %vm216, %v2108, 0
        %2112 = vmatprep.subr.bf16.mxu0 0
        %2113 = vmatpush1.bf16.msra.mxu0 %v1262
        %2114 = vmatprep.subr.bf16.mxu0 0
        %2115 = vmatpush1.bf16.msra.mxu0 0
        %2116 = vmatprep.subr.bf16.mxu0 0
        %2117 = vmatpush1.bf16.msra.mxu0 0
        %2118 = vmatprep.subr.bf16.mxu0 0
        %2119 = vmatpush1.bf16.msra.mxu0 0
        %2120 = vmatprep.subr.bf16.mxu0 0
        %2121 = vmatpush1.bf16.msra.mxu0 0
        %2122 = vmatprep.subr.bf16.mxu0 0
        %2123 = vmatpush1.bf16.msra.mxu0 0
        %2124 = vmatprep.subr.bf16.mxu0 0
        %2125 = vmatpush1.bf16.msra.mxu0 0
        %2126 = vmatprep.subr.bf16.mxu0 0
        %2127 = vmatpush1.bf16.msra.mxu0 0
        %2128 = vmatprep.subr.bf16.mxu0 0
        %2129 = vmatpush1.bf16.msra.mxu0 0
        %2130 = vmatprep.subr.bf16.mxu0 0
        %2131 = vmatpush1.bf16.msra.mxu0 0
        %2132 = vmatprep.subr.bf16.mxu0 0
        %2133 = vmatpush1.bf16.msra.mxu0 0
        %2134 = vmatprep.subr.bf16.mxu0 0
        %2135 = vmatpush1.bf16.msra.mxu0 0
        %2136 = vmatprep.subr.bf16.mxu0 0
        %2137 = vmatpush1.bf16.msra.mxu0 0
        %2138 = vmatprep.subr.bf16.mxu0 0
        %2139 = vmatpush1.bf16.msra.mxu0 0
        %2140 = vmatprep.subr.bf16.mxu0 0
        %2141 = vmatpush1.bf16.msra.mxu0 0
        %2142 = vmatprep.subr.bf16.mxu0 0
        %2143 = vmatpush1.bf16.msra.mxu0 0
        %2144 = vmatprep.mubr.bf16.mxu0 0
        %2145 = vmatmul.mubr.bf16.gmra.mrb[0].mxu0 %v2110
        %v2146 = vpop.f32.mrb[0].mxu0
        %v2147 = vadd.f32 0.0, %v2146
        %v2148 = vpop.f32.mrb[0].mxu0
        %v2149 = vpop.f32.mrb[0].mxu0
        %v2150 = vpop.f32.mrb[0].mxu0
        %2151 = vdwg.mxu0
        %v2152 = vadd.f32 %v2107, %v2147
        %v2153 = vld [vmem:[%s843] sm:$0xf]
        %v2155 = vsel %vm216, %v2153, 0
        %2157 = vmatprep.subr.bf16.mxu0 0
        %2158 = vmatpush1.bf16.msra.mxu0 %v1313
        %2159 = vmatprep.subr.bf16.mxu0 0
        %2160 = vmatpush1.bf16.msra.mxu0 0
        %2161 = vmatprep.subr.bf16.mxu0 0
        %2162 = vmatpush1.bf16.msra.mxu0 0
        %2163 = vmatprep.subr.bf16.mxu0 0
        %2164 = vmatpush1.bf16.msra.mxu0 0
        %2165 = vmatprep.subr.bf16.mxu0 0
        %2166 = vmatpush1.bf16.msra.mxu0 0
        %2167 = vmatprep.subr.bf16.mxu0 0
        %2168 = vmatpush1.bf16.msra.mxu0 0
        %2169 = vmatprep.subr.bf16.mxu0 0
        %2170 = vmatpush1.bf16.msra.mxu0 0
        %2171 = vmatprep.subr.bf16.mxu0 0
        %2172 = vmatpush1.bf16.msra.mxu0 0
        %2173 = vmatprep.subr.bf16.mxu0 0
        %2174 = vmatpush1.bf16.msra.mxu0 0
        %2175 = vmatprep.subr.bf16.mxu0 0
        %2176 = vmatpush1.bf16.msra.mxu0 0
        %2177 = vmatprep.subr.bf16.mxu0 0
        %2178 = vmatpush1.bf16.msra.mxu0 0
        %2179 = vmatprep.subr.bf16.mxu0 0
        %2180 = vmatpush1.bf16.msra.mxu0 0
        %2181 = vmatprep.subr.bf16.mxu0 0
        %2182 = vmatpush1.bf16.msra.mxu0 0
        %2183 = vmatprep.subr.bf16.mxu0 0
        %2184 = vmatpush1.bf16.msra.mxu0 0
        %2185 = vmatprep.subr.bf16.mxu0 0
        %2186 = vmatpush1.bf16.msra.mxu0 0
        %2187 = vmatprep.subr.bf16.mxu0 0
        %2188 = vmatpush1.bf16.msra.mxu0 0
        %2189 = vmatprep.mubr.bf16.mxu0 0
        %2190 = vmatmul.mubr.bf16.gmra.mrb[0].mxu0 %v2155
        %v2191 = vpop.f32.mrb[0].mxu0
        %v2192 = vadd.f32 0.0, %v2191
        %v2193 = vpop.f32.mrb[0].mxu0
        %v2194 = vpop.f32.mrb[0].mxu0
        %v2195 = vpop.f32.mrb[0].mxu0
        %2196 = vdwg.mxu0
        %v2197 = vadd.f32 %v2152, %v2192
        %v2198 = vld [vmem:[%s894] sm:$0xf]
        %v2200 = vsel %vm216, %v2198, 0
        %2202 = vmatprep.subr.bf16.mxu0 0
        %2203 = vmatpush1.bf16.msra.mxu0 %v1364
        %2204 = vmatprep.subr.bf16.mxu0 0
        %2205 = vmatpush1.bf16.msra.mxu0 0
        %2206 = vmatprep.subr.bf16.mxu0 0
        %2207 = vmatpush1.bf16.msra.mxu0 0
        %2208 = vmatprep.subr.bf16.mxu0 0
        %2209 = vmatpush1.bf16.msra.mxu0 0
        %2210 = vmatprep.subr.bf16.mxu0 0
        %2211 = vmatpush1.bf16.msra.mxu0 0
        %2212 = vmatprep.subr.bf16.mxu0 0
        %2213 = vmatpush1.bf16.msra.mxu0 0
        %2214 = vmatprep.subr.bf16.mxu0 0
        %2215 = vmatpush1.bf16.msra.mxu0 0
        %2216 = vmatprep.subr.bf16.mxu0 0
        %2217 = vmatpush1.bf16.msra.mxu0 0
        %2218 = vmatprep.subr.bf16.mxu0 0
        %2219 = vmatpush1.bf16.msra.mxu0 0
        %2220 = vmatprep.subr.bf16.mxu0 0
        %2221 = vmatpush1.bf16.msra.mxu0 0
        %2222 = vmatprep.subr.bf16.mxu0 0
        %2223 = vmatpush1.bf16.msra.mxu0 0
        %2224 = vmatprep.subr.bf16.mxu0 0
        %2225 = vmatpush1.bf16.msra.mxu0 0
        %2226 = vmatprep.subr.bf16.mxu0 0
        %2227 = vmatpush1.bf16.msra.mxu0 0
        %2228 = vmatprep.subr.bf16.mxu0 0
        %2229 = vmatpush1.bf16.msra.mxu0 0
        %2230 = vmatprep.subr.bf16.mxu0 0
        %2231 = vmatpush1.bf16.msra.mxu0 0
        %2232 = vmatprep.subr.bf16.mxu0 0
        %2233 = vmatpush1.bf16.msra.mxu0 0
        %2234 = vmatprep.mubr.bf16.mxu0 0
        %2235 = vmatmul.mubr.bf16.gmra.mrb[0].mxu0 %v2200
        %v2236 = vpop.f32.mrb[0].mxu0
        %v2237 = vadd.f32 0.0, %v2236
        %v2238 = vpop.f32.mrb[0].mxu0
        %v2239 = vpop.f32.mrb[0].mxu0
        %v2240 = vpop.f32.mrb[0].mxu0
        %2241 = vdwg.mxu0
        %v2242 = vadd.f32 %v2197, %v2237
        %v2243 = vld [vmem:[%s945] sm:$0xf]
        %v2245 = vsel %vm216, %v2243, 0
        %2247 = vmatprep.subr.bf16.mxu0 0
        %2248 = vmatpush1.bf16.msra.mxu0 %v1415
        %2249 = vmatprep.subr.bf16.mxu0 0
        %2250 = vmatpush1.bf16.msra.mxu0 0
        %2251 = vmatprep.subr.bf16.mxu0 0
        %2252 = vmatpush1.bf16.msra.mxu0 0
        %2253 = vmatprep.subr.bf16.mxu0 0
        %2254 = vmatpush1.bf16.msra.mxu0 0
        %2255 = vmatprep.subr.bf16.mxu0 0
        %2256 = vmatpush1.bf16.msra.mxu0 0
        %2257 = vmatprep.subr.bf16.mxu0 0
        %2258 = vmatpush1.bf16.msra.mxu0 0
        %2259 = vmatprep.subr.bf16.mxu0 0
        %2260 = vmatpush1.bf16.msra.mxu0 0
        %2261 = vmatprep.subr.bf16.mxu0 0
        %2262 = vmatpush1.bf16.msra.mxu0 0
        %2263 = vmatprep.subr.bf16.mxu0 0
        %2264 = vmatpush1.bf16.msra.mxu0 0
        %2265 = vmatprep.subr.bf16.mxu0 0
        %2266 = vmatpush1.bf16.msra.mxu0 0
        %2267 = vmatprep.subr.bf16.mxu0 0
        %2268 = vmatpush1.bf16.msra.mxu0 0
        %2269 = vmatprep.subr.bf16.mxu0 0
        %2270 = vmatpush1.bf16.msra.mxu0 0
        %2271 = vmatprep.subr.bf16.mxu0 0
        %2272 = vmatpush1.bf16.msra.mxu0 0
        %2273 = vmatprep.subr.bf16.mxu0 0
        %2274 = vmatpush1.bf16.msra.mxu0 0
        %2275 = vmatprep.subr.bf16.mxu0 0
        %2276 = vmatpush1.bf16.msra.mxu0 0
        %2277 = vmatprep.subr.bf16.mxu0 0
        %2278 = vmatpush1.bf16.msra.mxu0 0
        %2279 = vmatprep.mubr.bf16.mxu0 0
        %2280 = vmatmul.mubr.bf16.gmra.mrb[0].mxu0 %v2245
        %v2281 = vpop.f32.mrb[0].mxu0
        %v2282 = vadd.f32 0.0, %v2281
        %v2283 = vpop.f32.mrb[0].mxu0
        %v2284 = vpop.f32.mrb[0].mxu0
        %v2285 = vpop.f32.mrb[0].mxu0
        %2286 = vdwg.mxu0
        %v2287 = vadd.f32 %v2242, %v2282
        %v2288 = vld [vmem:[%s996] sm:$0xf]
        %v2290 = vsel %vm216, %v2288, 0
        %2292 = vmatprep.subr.bf16.mxu0 0
        %2293 = vmatpush1.bf16.msra.mxu0 %v1466
        %2294 = vmatprep.subr.bf16.mxu0 0
        %2295 = vmatpush1.bf16.msra.mxu0 0
        %2296 = vmatprep.subr.bf16.mxu0 0
        %2297 = vmatpush1.bf16.msra.mxu0 0
        %2298 = vmatprep.subr.bf16.mxu0 0
        %2299 = vmatpush1.bf16.msra.mxu0 0
        %2300 = vmatprep.subr.bf16.mxu0 0
        %2301 = vmatpush1.bf16.msra.mxu0 0
        %2302 = vmatprep.subr.bf16.mxu0 0
        %2303 = vmatpush1.bf16.msra.mxu0 0
        %2304 = vmatprep.subr.bf16.mxu0 0
        %2305 = vmatpush1.bf16.msra.mxu0 0
        %2306 = vmatprep.subr.bf16.mxu0 0
        %2307 = vmatpush1.bf16.msra.mxu0 0
        %2308 = vmatprep.subr.bf16.mxu0 0
        %2309 = vmatpush1.bf16.msra.mxu0 0
        %2310 = vmatprep.subr.bf16.mxu0 0
        %2311 = vmatpush1.bf16.msra.mxu0 0
        %2312 = vmatprep.subr.bf16.mxu0 0
        %2313 = vmatpush1.bf16.msra.mxu0 0
        %2314 = vmatprep.subr.bf16.mxu0 0
        %2315 = vmatpush1.bf16.msra.mxu0 0
        %2316 = vmatprep.subr.bf16.mxu0 0
        %2317 = vmatpush1.bf16.msra.mxu0 0
        %2318 = vmatprep.subr.bf16.mxu0 0
        %2319 = vmatpush1.bf16.msra.mxu0 0
        %2320 = vmatprep.subr.bf16.mxu0 0
        %2321 = vmatpush1.bf16.msra.mxu0 0
        %2322 = vmatprep.subr.bf16.mxu0 0
        %2323 = vmatpush1.bf16.msra.mxu0 0
        %2324 = vmatprep.mubr.bf16.mxu0 0
        %2325 = vmatmul.mubr.bf16.gmra.mrb[0].mxu0 %v2290
        %v2326 = vpop.f32.mrb[0].mxu0
        %v2327 = vadd.f32 0.0, %v2326
        %v2328 = vpop.f32.mrb[0].mxu0
        %v2329 = vpop.f32.mrb[0].mxu0
        %v2330 = vpop.f32.mrb[0].mxu0
        %2331 = vdwg.mxu0
        %v2332 = vadd.f32 %v2287, %v2327
        %v2333 = vld [vmem:[%s1047] sm:$0xf]
        %v2335 = vsel %vm216, %v2333, 0
        %2337 = vmatprep.subr.bf16.mxu0 0
        %2338 = vmatpush1.bf16.msra.mxu0 %v1517
        %2339 = vmatprep.subr.bf16.mxu0 0
        %2340 = vmatpush1.bf16.msra.mxu0 0
        %2341 = vmatprep.subr.bf16.mxu0 0
        %2342 = vmatpush1.bf16.msra.mxu0 0
        %2343 = vmatprep.subr.bf16.mxu0 0
        %2344 = vmatpush1.bf16.msra.mxu0 0
        %2345 = vmatprep.subr.bf16.mxu0 0
        %2346 = vmatpush1.bf16.msra.mxu0 0
        %2347 = vmatprep.subr.bf16.mxu0 0
        %2348 = vmatpush1.bf16.msra.mxu0 0
        %2349 = vmatprep.subr.bf16.mxu0 0
        %2350 = vmatpush1.bf16.msra.mxu0 0
        %2351 = vmatprep.subr.bf16.mxu0 0
        %2352 = vmatpush1.bf16.msra.mxu0 0
        %2353 = vmatprep.subr.bf16.mxu0 0
        %2354 = vmatpush1.bf16.msra.mxu0 0
        %2355 = vmatprep.subr.bf16.mxu0 0
        %2356 = vmatpush1.bf16.msra.mxu0 0
        %2357 = vmatprep.subr.bf16.mxu0 0
        %2358 = vmatpush1.bf16.msra.mxu0 0
        %2359 = vmatprep.subr.bf16.mxu0 0
        %2360 = vmatpush1.bf16.msra.mxu0 0
        %2361 = vmatprep.subr.bf16.mxu0 0
        %2362 = vmatpush1.bf16.msra.mxu0 0
        %2363 = vmatprep.subr.bf16.mxu0 0
        %2364 = vmatpush1.bf16.msra.mxu0 0
        %2365 = vmatprep.subr.bf16.mxu0 0
        %2366 = vmatpush1.bf16.msra.mxu0 0
        %2367 = vmatprep.subr.bf16.mxu0 0
        %2368 = vmatpush1.bf16.msra.mxu0 0
        %2369 = vmatprep.mubr.bf16.mxu0 0
        %2370 = vmatmul.mubr.bf16.gmra.mrb[0].mxu0 %v2335
        %v2371 = vpop.f32.mrb[0].mxu0
        %v2372 = vadd.f32 0.0, %v2371
        %v2373 = vpop.f32.mrb[0].mxu0
        %v2374 = vpop.f32.mrb[0].mxu0
        %v2375 = vpop.f32.mrb[0].mxu0
        %2376 = vdwg.mxu0
        %v2377 = vadd.f32 %v2332, %v2372
        %v2378 = vld [vmem:[%s1098] sm:$0xf]
        %v2380 = vsel %vm216, %v2378, 0
        %2382 = vmatprep.subr.bf16.mxu0 0
        %2383 = vmatpush1.bf16.msra.mxu0 %v1568
        %2384 = vmatprep.subr.bf16.mxu0 0
        %2385 = vmatpush1.bf16.msra.mxu0 0
        %2386 = vmatprep.subr.bf16.mxu0 0
        %2387 = vmatpush1.bf16.msra.mxu0 0
        %2388 = vmatprep.subr.bf16.mxu0 0
        %2389 = vmatpush1.bf16.msra.mxu0 0
        %2390 = vmatprep.subr.bf16.mxu0 0
        %2391 = vmatpush1.bf16.msra.mxu0 0
        %2392 = vmatprep.subr.bf16.mxu0 0
        %2393 = vmatpush1.bf16.msra.mxu0 0
        %2394 = vmatprep.subr.bf16.mxu0 0
        %2395 = vmatpush1.bf16.msra.mxu0 0
        %2396 = vmatprep.subr.bf16.mxu0 0
        %2397 = vmatpush1.bf16.msra.mxu0 0
        %2398 = vmatprep.subr.bf16.mxu0 0
        %2399 = vmatpush1.bf16.msra.mxu0 0
        %2400 = vmatprep.subr.bf16.mxu0 0
        %2401 = vmatpush1.bf16.msra.mxu0 0
        %2402 = vmatprep.subr.bf16.mxu0 0
        %2403 = vmatpush1.bf16.msra.mxu0 0
        %2404 = vmatprep.subr.bf16.mxu0 0
        %2405 = vmatpush1.bf16.msra.mxu0 0
        %2406 = vmatprep.subr.bf16.mxu0 0
        %2407 = vmatpush1.bf16.msra.mxu0 0
        %2408 = vmatprep.subr.bf16.mxu0 0
        %2409 = vmatpush1.bf16.msra.mxu0 0
        %2410 = vmatprep.subr.bf16.mxu0 0
        %2411 = vmatpush1.bf16.msra.mxu0 0
        %2412 = vmatprep.subr.bf16.mxu0 0
        %2413 = vmatpush1.bf16.msra.mxu0 0
        %2414 = vmatprep.mubr.bf16.mxu0 0
        %2415 = vmatmul.mubr.bf16.gmra.mrb[0].mxu0 %v2380
        %v2416 = vpop.f32.mrb[0].mxu0
        %v2417 = vadd.f32 0.0, %v2416
        %v2418 = vpop.f32.mrb[0].mxu0
        %v2419 = vpop.f32.mrb[0].mxu0
        %v2420 = vpop.f32.mrb[0].mxu0
        %2421 = vdwg.mxu0
        %v2422 = vadd.f32 %v2377, %v2417
        %v2423 = vld [vmem:[%s1146] sm:$0xf]
        %v2425 = vsel %vm216, %v2423, 0
        %v2428 = vsel %vm220, %v206, 0
        %2430 = vmatprep.subr.bf16.mxu0 0
        %2431 = vmatpush1.bf16.msra.mxu0 %v2428
        %2432 = vmatprep.subr.bf16.mxu0 0
        %2433 = vmatpush1.bf16.msra.mxu0 0
        %2434 = vmatprep.subr.bf16.mxu0 0
        %2435 = vmatpush1.bf16.msra.mxu0 0
        %2436 = vmatprep.subr.bf16.mxu0 0
        %2437 = vmatpush1.bf16.msra.mxu0 0
        %2438 = vmatprep.subr.bf16.mxu0 0
        %2439 = vmatpush1.bf16.msra.mxu0 0
        %2440 = vmatprep.subr.bf16.mxu0 0
        %2441 = vmatpush1.bf16.msra.mxu0 0
        %2442 = vmatprep.subr.bf16.mxu0 0
        %2443 = vmatpush1.bf16.msra.mxu0 0
        %2444 = vmatprep.subr.bf16.mxu0 0
        %2445 = vmatpush1.bf16.msra.mxu0 0
        %2446 = vmatprep.subr.bf16.mxu0 0
        %2447 = vmatpush1.bf16.msra.mxu0 0
        %2448 = vmatprep.subr.bf16.mxu0 0
        %2449 = vmatpush1.bf16.msra.mxu0 0
        %2450 = vmatprep.subr.bf16.mxu0 0
        %2451 = vmatpush1.bf16.msra.mxu0 0
        %2452 = vmatprep.subr.bf16.mxu0 0
        %2453 = vmatpush1.bf16.msra.mxu0 0
        %2454 = vmatprep.subr.bf16.mxu0 0
        %2455 = vmatpush1.bf16.msra.mxu0 0
        %2456 = vmatprep.subr.bf16.mxu0 0
        %2457 = vmatpush1.bf16.msra.mxu0 0
        %2458 = vmatprep.subr.bf16.mxu0 0
        %2459 = vmatpush1.bf16.msra.mxu0 0
        %2460 = vmatprep.subr.bf16.mxu0 0
        %2461 = vmatpush1.bf16.msra.mxu0 0
        %2462 = vmatprep.mubr.bf16.mxu0 0
        %2463 = vmatmul.mubr.bf16.gmra.mrb[0].mxu0 %v2425
        %v2464 = vpop.f32.mrb[0].mxu0
        %v2465 = vadd.f32 0.0, %v2464
        %v2466 = vpop.f32.mrb[0].mxu0
        %v2467 = vpop.f32.mrb[0].mxu0
        %v2468 = vpop.f32.mrb[0].mxu0
        %2469 = vdwg.mxu0
        %v2470 = vadd.f32 %v2422, %v2465
        %v2473 = vunpack.c.l.s4 1983009808
        %v2474 = vunpack.c.0.s8 %v2473
        %v2475 = vlaneseq
        %v2476 = vshrl.u32 %v2475, 7
        %v2477 = vsub.s32 %v2474, %v2476
        %v2478 = vrot.slane %v206, %v2477
        %2479 = vrot.lane.b32.xlu0 %v2478, 127
        %v2480 = vpop.permute.xlu0 %2479
        %v2482 = vld [vmem:[%s1206] sm:$0xf]
        %v2484 = vsel %vm216, %v2482, 0
        %v2486 = vsel %vm220, %v2480, 0
        %2488 = vmatprep.subr.bf16.mxu0 0
        %2489 = vmatpush1.bf16.msra.mxu0 %v2486
        %2490 = vmatprep.subr.bf16.mxu0 0
        %2491 = vmatpush1.bf16.msra.mxu0 0
        %2492 = vmatprep.subr.bf16.mxu0 0
        %2493 = vmatpush1.bf16.msra.mxu0 0
        %2494 = vmatprep.subr.bf16.mxu0 0
        %2495 = vmatpush1.bf16.msra.mxu0 0
        %2496 = vmatprep.subr.bf16.mxu0 0
        %2497 = vmatpush1.bf16.msra.mxu0 0
        %2498 = vmatprep.subr.bf16.mxu0 0
        %2499 = vmatpush1.bf16.msra.mxu0 0
        %2500 = vmatprep.subr.bf16.mxu0 0
        %2501 = vmatpush1.bf16.msra.mxu0 0
        %2502 = vmatprep.subr.bf16.mxu0 0
        %2503 = vmatpush1.bf16.msra.mxu0 0
        %2504 = vmatprep.subr.bf16.mxu0 0
        %2505 = vmatpush1.bf16.msra.mxu0 0
        %2506 = vmatprep.subr.bf16.mxu0 0
        %2507 = vmatpush1.bf16.msra.mxu0 0
        %2508 = vmatprep.subr.bf16.mxu0 0
        %2509 = vmatpush1.bf16.msra.mxu0 0
        %2510 = vmatprep.subr.bf16.mxu0 0
        %2511 = vmatpush1.bf16.msra.mxu0 0
        %2512 = vmatprep.subr.bf16.mxu0 0
        %2513 = vmatpush1.bf16.msra.mxu0 0
        %2514 = vmatprep.subr.bf16.mxu0 0
        %2515 = vmatpush1.bf16.msra.mxu0 0
        %2516 = vmatprep.subr.bf16.mxu0 0
        %2517 = vmatpush1.bf16.msra.mxu0 0
        %2518 = vmatprep.subr.bf16.mxu0 0
        %2519 = vmatpush1.bf16.msra.mxu0 0
        %2520 = vmatprep.mubr.bf16.mxu0 0
        %2521 = vmatmul.mubr.bf16.gmra.mrb[0].mxu0 %v2484
        %v2522 = vpop.f32.mrb[0].mxu0
        %v2523 = vadd.f32 0.0, %v2522
        %v2524 = vpop.f32.mrb[0].mxu0
        %v2525 = vpop.f32.mrb[0].mxu0
        %v2526 = vpop.f32.mrb[0].mxu0
        %2527 = vdwg.mxu0
        %v2528 = vadd.f32 %v2470, %v2523
        %2529 = vrot.lane.b32.xlu0 %v2478, 126
        %v2530 = vpop.permute.xlu0 %2529
        %v2532 = vld [vmem:[%s1257] sm:$0xf]
        %v2534 = vsel %vm216, %v2532, 0
        %v2536 = vsel %vm220, %v2530, 0
        %2538 = vmatprep.subr.bf16.mxu0 0
        %2539 = vmatpush1.bf16.msra.mxu0 %v2536
        %2540 = vmatprep.subr.bf16.mxu0 0
        %2541 = vmatpush1.bf16.msra.mxu0 0
        %2542 = vmatprep.subr.bf16.mxu0 0
        %2543 = vmatpush1.bf16.msra.mxu0 0
        %2544 = vmatprep.subr.bf16.mxu0 0
        %2545 = vmatpush1.bf16.msra.mxu0 0
        %2546 = vmatprep.subr.bf16.mxu0 0
        %2547 = vmatpush1.bf16.msra.mxu0 0
        %2548 = vmatprep.subr.bf16.mxu0 0
        %2549 = vmatpush1.bf16.msra.mxu0 0
        %2550 = vmatprep.subr.bf16.mxu0 0
        %2551 = vmatpush1.bf16.msra.mxu0 0
        %2552 = vmatprep.subr.bf16.mxu0 0
        %2553 = vmatpush1.bf16.msra.mxu0 0
        %2554 = vmatprep.subr.bf16.mxu0 0
        %2555 = vmatpush1.bf16.msra.mxu0 0
        %2556 = vmatprep.subr.bf16.mxu0 0
        %2557 = vmatpush1.bf16.msra.mxu0 0
        %2558 = vmatprep.subr.bf16.mxu0 0
        %2559 = vmatpush1.bf16.msra.mxu0 0
        %2560 = vmatprep.subr.bf16.mxu0 0
        %2561 = vmatpush1.bf16.msra.mxu0 0
        %2562 = vmatprep.subr.bf16.mxu0 0
        %2563 = vmatpush1.bf16.msra.mxu0 0
        %2564 = vmatprep.subr.bf16.mxu0 0
        %2565 = vmatpush1.bf16.msra.mxu0 0
        %2566 = vmatprep.subr.bf16.mxu0 0
        %2567 = vmatpush1.bf16.msra.mxu0 0
        %2568 = vmatprep.subr.bf16.mxu0 0
        %2569 = vmatpush1.bf16.msra.mxu0 0
        %2570 = vmatprep.mubr.bf16.mxu0 0
        %2571 = vmatmul.mubr.bf16.gmra.mrb[0].mxu0 %v2534
        %v2572 = vpop.f32.mrb[0].mxu0
        %v2573 = vadd.f32 0.0, %v2572
        %v2574 = vpop.f32.mrb[0].mxu0
        %v2575 = vpop.f32.mrb[0].mxu0
        %v2576 = vpop.f32.mrb[0].mxu0
        %2577 = vdwg.mxu0
        %v2578 = vadd.f32 %v2528, %v2573
        %2579 = vrot.lane.b32.xlu0 %v2478, 118
        %v2580 = vpop.permute.xlu0 %2579
        %v2582 = vld [vmem:[%s1308] sm:$0xf]
        %v2584 = vsel %vm216, %v2582, 0
        %v2586 = vsel %vm220, %v2580, 0
        %2588 = vmatprep.subr.bf16.mxu0 0
        %2589 = vmatpush1.bf16.msra.mxu0 %v2586
        %2590 = vmatprep.subr.bf16.mxu0 0
        %2591 = vmatpush1.bf16.msra.mxu0 0
        %2592 = vmatprep.subr.bf16.mxu0 0
        %2593 = vmatpush1.bf16.msra.mxu0 0
        %2594 = vmatprep.subr.bf16.mxu0 0
        %2595 = vmatpush1.bf16.msra.mxu0 0
        %2596 = vmatprep.subr.bf16.mxu0 0
        %2597 = vmatpush1.bf16.msra.mxu0 0
        %2598 = vmatprep.subr.bf16.mxu0 0
        %2599 = vmatpush1.bf16.msra.mxu0 0
        %2600 = vmatprep.subr.bf16.mxu0 0
        %2601 = vmatpush1.bf16.msra.mxu0 0
        %2602 = vmatprep.subr.bf16.mxu0 0
        %2603 = vmatpush1.bf16.msra.mxu0 0
        %2604 = vmatprep.subr.bf16.mxu0 0
        %2605 = vmatpush1.bf16.msra.mxu0 0
        %2606 = vmatprep.subr.bf16.mxu0 0
        %2607 = vmatpush1.bf16.msra.mxu0 0
        %2608 = vmatprep.subr.bf16.mxu0 0
        %2609 = vmatpush1.bf16.msra.mxu0 0
        %2610 = vmatprep.subr.bf16.mxu0 0
        %2611 = vmatpush1.bf16.msra.mxu0 0
        %2612 = vmatprep.subr.bf16.mxu0 0
        %2613 = vmatpush1.bf16.msra.mxu0 0
        %2614 = vmatprep.subr.bf16.mxu0 0
        %2615 = vmatpush1.bf16.msra.mxu0 0
        %2616 = vmatprep.subr.bf16.mxu0 0
        %2617 = vmatpush1.bf16.msra.mxu0 0
        %2618 = vmatprep.subr.bf16.mxu0 0
        %2619 = vmatpush1.bf16.msra.mxu0 0
        %2620 = vmatprep.mubr.bf16.mxu0 0
        %2621 = vmatmul.mubr.bf16.gmra.mrb[0].mxu0 %v2584
        %v2622 = vpop.f32.mrb[0].mxu0
        %v2623 = vadd.f32 0.0, %v2622
        %v2624 = vpop.f32.mrb[0].mxu0
        %v2625 = vpop.f32.mrb[0].mxu0
        %v2626 = vpop.f32.mrb[0].mxu0
        %2627 = vdwg.mxu0
        %v2628 = vadd.f32 %v2578, %v2623
        %2629 = vrot.lane.b32.xlu0 %v2478, 117
        %v2630 = vpop.permute.xlu0 %2629
        %v2632 = vld [vmem:[%s1359] sm:$0xf]
        %v2634 = vsel %vm216, %v2632, 0
        %v2636 = vsel %vm220, %v2630, 0
        %2638 = vmatprep.subr.bf16.mxu0 0
        %2639 = vmatpush1.bf16.msra.mxu0 %v2636
        %2640 = vmatprep.subr.bf16.mxu0 0
        %2641 = vmatpush1.bf16.msra.mxu0 0
        %2642 = vmatprep.subr.bf16.mxu0 0
        %2643 = vmatpush1.bf16.msra.mxu0 0
        %2644 = vmatprep.subr.bf16.mxu0 0
        %2645 = vmatpush1.bf16.msra.mxu0 0
        %2646 = vmatprep.subr.bf16.mxu0 0
        %2647 = vmatpush1.bf16.msra.mxu0 0
        %2648 = vmatprep.subr.bf16.mxu0 0
        %2649 = vmatpush1.bf16.msra.mxu0 0
        %2650 = vmatprep.subr.bf16.mxu0 0
        %2651 = vmatpush1.bf16.msra.mxu0 0
        %2652 = vmatprep.subr.bf16.mxu0 0
        %2653 = vmatpush1.bf16.msra.mxu0 0
        %2654 = vmatprep.subr.bf16.mxu0 0
        %2655 = vmatpush1.bf16.msra.mxu0 0
        %2656 = vmatprep.subr.bf16.mxu0 0
        %2657 = vmatpush1.bf16.msra.mxu0 0
        %2658 = vmatprep.subr.bf16.mxu0 0
        %2659 = vmatpush1.bf16.msra.mxu0 0
        %2660 = vmatprep.subr.bf16.mxu0 0
        %2661 = vmatpush1.bf16.msra.mxu0 0
        %2662 = vmatprep.subr.bf16.mxu0 0
        %2663 = vmatpush1.bf16.msra.mxu0 0
        %2664 = vmatprep.subr.bf16.mxu0 0
        %2665 = vmatpush1.bf16.msra.mxu0 0
        %2666 = vmatprep.subr.bf16.mxu0 0
        %2667 = vmatpush1.bf16.msra.mxu0 0
        %2668 = vmatprep.subr.bf16.mxu0 0
        %2669 = vmatpush1.bf16.msra.mxu0 0
        %2670 = vmatprep.mubr.bf16.mxu0 0
        %2671 = vmatmul.mubr.bf16.gmra.mrb[0].mxu0 %v2634
        %v2672 = vpop.f32.mrb[0].mxu0
        %v2673 = vadd.f32 0.0, %v2672
        %v2674 = vpop.f32.mrb[0].mxu0
        %v2675 = vpop.f32.mrb[0].mxu0
        %v2676 = vpop.f32.mrb[0].mxu0
        %2677 = vdwg.mxu0
        %v2678 = vadd.f32 %v2628, %v2673
        %2679 = vrot.lane.b32.xlu0 %v2478, 116
        %v2680 = vpop.permute.xlu0 %2679
        %v2682 = vld [vmem:[%s1410] sm:$0xf]
        %v2684 = vsel %vm216, %v2682, 0
        %v2686 = vsel %vm220, %v2680, 0
        %2688 = vmatprep.subr.bf16.mxu0 0
        %2689 = vmatpush1.bf16.msra.mxu0 %v2686
        %2690 = vmatprep.subr.bf16.mxu0 0
        %2691 = vmatpush1.bf16.msra.mxu0 0
        %2692 = vmatprep.subr.bf16.mxu0 0
        %2693 = vmatpush1.bf16.msra.mxu0 0
        %2694 = vmatprep.subr.bf16.mxu0 0
        %2695 = vmatpush1.bf16.msra.mxu0 0
        %2696 = vmatprep.subr.bf16.mxu0 0
        %2697 = vmatpush1.bf16.msra.mxu0 0
        %2698 = vmatprep.subr.bf16.mxu0 0
        %2699 = vmatpush1.bf16.msra.mxu0 0
        %2700 = vmatprep.subr.bf16.mxu0 0
        %2701 = vmatpush1.bf16.msra.mxu0 0
        %2702 = vmatprep.subr.bf16.mxu0 0
        %2703 = vmatpush1.bf16.msra.mxu0 0
        %2704 = vmatprep.subr.bf16.mxu0 0
        %2705 = vmatpush1.bf16.msra.mxu0 0
        %2706 = vmatprep.subr.bf16.mxu0 0
        %2707 = vmatpush1.bf16.msra.mxu0 0
        %2708 = vmatprep.subr.bf16.mxu0 0
        %2709 = vmatpush1.bf16.msra.mxu0 0
        %2710 = vmatprep.subr.bf16.mxu0 0
        %2711 = vmatpush1.bf16.msra.mxu0 0
        %2712 = vmatprep.subr.bf16.mxu0 0
        %2713 = vmatpush1.bf16.msra.mxu0 0
        %2714 = vmatprep.subr.bf16.mxu0 0
        %2715 = vmatpush1.bf16.msra.mxu0 0
        %2716 = vmatprep.subr.bf16.mxu0 0
        %2717 = vmatpush1.bf16.msra.mxu0 0
        %2718 = vmatprep.subr.bf16.mxu0 0
        %2719 = vmatpush1.bf16.msra.mxu0 0
        %2720 = vmatprep.mubr.bf16.mxu0 0
        %2721 = vmatmul.mubr.bf16.gmra.mrb[0].mxu0 %v2684
        %v2722 = vpop.f32.mrb[0].mxu0
        %v2723 = vadd.f32 0.0, %v2722
        %v2724 = vpop.f32.mrb[0].mxu0
        %v2725 = vpop.f32.mrb[0].mxu0
        %v2726 = vpop.f32.mrb[0].mxu0
        %2727 = vdwg.mxu0
        %v2728 = vadd.f32 %v2678, %v2723
        %2729 = vrot.lane.b32.xlu0 %v2478, 108
        %v2730 = vpop.permute.xlu0 %2729
        %v2732 = vld [vmem:[%s1461] sm:$0xf]
        %v2734 = vsel %vm216, %v2732, 0
        %v2736 = vsel %vm220, %v2730, 0
        %2738 = vmatprep.subr.bf16.mxu0 0
        %2739 = vmatpush1.bf16.msra.mxu0 %v2736
        %2740 = vmatprep.subr.bf16.mxu0 0
        %2741 = vmatpush1.bf16.msra.mxu0 0
        %2742 = vmatprep.subr.bf16.mxu0 0
        %2743 = vmatpush1.bf16.msra.mxu0 0
        %2744 = vmatprep.subr.bf16.mxu0 0
        %2745 = vmatpush1.bf16.msra.mxu0 0
        %2746 = vmatprep.subr.bf16.mxu0 0
        %2747 = vmatpush1.bf16.msra.mxu0 0
        %2748 = vmatprep.subr.bf16.mxu0 0
        %2749 = vmatpush1.bf16.msra.mxu0 0
        %2750 = vmatprep.subr.bf16.mxu0 0
        %2751 = vmatpush1.bf16.msra.mxu0 0
        %2752 = vmatprep.subr.bf16.mxu0 0
        %2753 = vmatpush1.bf16.msra.mxu0 0
        %2754 = vmatprep.subr.bf16.mxu0 0
        %2755 = vmatpush1.bf16.msra.mxu0 0
        %2756 = vmatprep.subr.bf16.mxu0 0
        %2757 = vmatpush1.bf16.msra.mxu0 0
        %2758 = vmatprep.subr.bf16.mxu0 0
        %2759 = vmatpush1.bf16.msra.mxu0 0
        %2760 = vmatprep.subr.bf16.mxu0 0
        %2761 = vmatpush1.bf16.msra.mxu0 0
        %2762 = vmatprep.subr.bf16.mxu0 0
        %2763 = vmatpush1.bf16.msra.mxu0 0
        %2764 = vmatprep.subr.bf16.mxu0 0
        %2765 = vmatpush1.bf16.msra.mxu0 0
        %2766 = vmatprep.subr.bf16.mxu0 0
        %2767 = vmatpush1.bf16.msra.mxu0 0
        %2768 = vmatprep.subr.bf16.mxu0 0
        %2769 = vmatpush1.bf16.msra.mxu0 0
        %2770 = vmatprep.mubr.bf16.mxu0 0
        %2771 = vmatmul.mubr.bf16.gmra.mrb[0].mxu0 %v2734
        %v2772 = vpop.f32.mrb[0].mxu0
        %v2773 = vadd.f32 0.0, %v2772
        %v2774 = vpop.f32.mrb[0].mxu0
        %v2775 = vpop.f32.mrb[0].mxu0
        %v2776 = vpop.f32.mrb[0].mxu0
        %2777 = vdwg.mxu0
        %v2778 = vadd.f32 %v2728, %v2773
        %2779 = vrot.lane.b32.xlu0 %v2478, 107
        %v2780 = vpop.permute.xlu0 %2779
        %v2782 = vld [vmem:[%s1512] sm:$0xf]
        %v2784 = vsel %vm216, %v2782, 0
        %v2786 = vsel %vm220, %v2780, 0
        %2788 = vmatprep.subr.bf16.mxu0 0
        %2789 = vmatpush1.bf16.msra.mxu0 %v2786
        %2790 = vmatprep.subr.bf16.mxu0 0
        %2791 = vmatpush1.bf16.msra.mxu0 0
        %2792 = vmatprep.subr.bf16.mxu0 0
        %2793 = vmatpush1.bf16.msra.mxu0 0
        %2794 = vmatprep.subr.bf16.mxu0 0
        %2795 = vmatpush1.bf16.msra.mxu0 0
        %2796 = vmatprep.subr.bf16.mxu0 0
        %2797 = vmatpush1.bf16.msra.mxu0 0
        %2798 = vmatprep.subr.bf16.mxu0 0
        %2799 = vmatpush1.bf16.msra.mxu0 0
        %2800 = vmatprep.subr.bf16.mxu0 0
        %2801 = vmatpush1.bf16.msra.mxu0 0
        %2802 = vmatprep.subr.bf16.mxu0 0
        %2803 = vmatpush1.bf16.msra.mxu0 0
        %2804 = vmatprep.subr.bf16.mxu0 0
        %2805 = vmatpush1.bf16.msra.mxu0 0
        %2806 = vmatprep.subr.bf16.mxu0 0
        %2807 = vmatpush1.bf16.msra.mxu0 0
        %2808 = vmatprep.subr.bf16.mxu0 0
        %2809 = vmatpush1.bf16.msra.mxu0 0
        %2810 = vmatprep.subr.bf16.mxu0 0
        %2811 = vmatpush1.bf16.msra.mxu0 0
        %2812 = vmatprep.subr.bf16.mxu0 0
        %2813 = vmatpush1.bf16.msra.mxu0 0
        %2814 = vmatprep.subr.bf16.mxu0 0
        %2815 = vmatpush1.bf16.msra.mxu0 0
        %2816 = vmatprep.subr.bf16.mxu0 0
        %2817 = vmatpush1.bf16.msra.mxu0 0
        %2818 = vmatprep.subr.bf16.mxu0 0
        %2819 = vmatpush1.bf16.msra.mxu0 0
        %2820 = vmatprep.mubr.bf16.mxu0 0
        %2821 = vmatmul.mubr.bf16.gmra.mrb[0].mxu0 %v2784
        %v2822 = vpop.f32.mrb[0].mxu0
        %v2823 = vadd.f32 0.0, %v2822
        %v2824 = vpop.f32.mrb[0].mxu0
        %v2825 = vpop.f32.mrb[0].mxu0
        %v2826 = vpop.f32.mrb[0].mxu0
        %2827 = vdwg.mxu0
        %v2828 = vadd.f32 %v2778, %v2823
        %2829 = vrot.lane.b32.xlu0 %v2478, 106
        %v2830 = vpop.permute.xlu0 %2829
        %v2832 = vld [vmem:[%s1563] sm:$0xf]
        %v2834 = vsel %vm216, %v2832, 0
        %v2836 = vsel %vm220, %v2830, 0
        %2838 = vmatprep.subr.bf16.mxu0 0
        %2839 = vmatpush1.bf16.msra.mxu0 %v2836
        %2840 = vmatprep.subr.bf16.mxu0 0
        %2841 = vmatpush1.bf16.msra.mxu0 0
        %2842 = vmatprep.subr.bf16.mxu0 0
        %2843 = vmatpush1.bf16.msra.mxu0 0
        %2844 = vmatprep.subr.bf16.mxu0 0
        %2845 = vmatpush1.bf16.msra.mxu0 0
        %2846 = vmatprep.subr.bf16.mxu0 0
        %2847 = vmatpush1.bf16.msra.mxu0 0
        %2848 = vmatprep.subr.bf16.mxu0 0
        %2849 = vmatpush1.bf16.msra.mxu0 0
        %2850 = vmatprep.subr.bf16.mxu0 0
        %2851 = vmatpush1.bf16.msra.mxu0 0
        %2852 = vmatprep.subr.bf16.mxu0 0
        %2853 = vmatpush1.bf16.msra.mxu0 0
        %2854 = vmatprep.subr.bf16.mxu0 0
        %2855 = vmatpush1.bf16.msra.mxu0 0
        %2856 = vmatprep.subr.bf16.mxu0 0
        %2857 = vmatpush1.bf16.msra.mxu0 0
        %2858 = vmatprep.subr.bf16.mxu0 0
        %2859 = vmatpush1.bf16.msra.mxu0 0
        %2860 = vmatprep.subr.bf16.mxu0 0
        %2861 = vmatpush1.bf16.msra.mxu0 0
        %2862 = vmatprep.subr.bf16.mxu0 0
        %2863 = vmatpush1.bf16.msra.mxu0 0
        %2864 = vmatprep.subr.bf16.mxu0 0
        %2865 = vmatpush1.bf16.msra.mxu0 0
        %2866 = vmatprep.subr.bf16.mxu0 0
        %2867 = vmatpush1.bf16.msra.mxu0 0
        %2868 = vmatprep.subr.bf16.mxu0 0
        %2869 = vmatpush1.bf16.msra.mxu0 0
        %2870 = vmatprep.mubr.bf16.mxu0 0
        %2871 = vmatmul.mubr.bf16.gmra.mrb[0].mxu0 %v2834
        %v2872 = vpop.f32.mrb[0].mxu0
        %v2873 = vadd.f32 0.0, %v2872
        %v2874 = vpop.f32.mrb[0].mxu0
        %v2875 = vpop.f32.mrb[0].mxu0
        %v2876 = vpop.f32.mrb[0].mxu0
        %2877 = vdwg.mxu0
        %v2878 = vadd.f32 %v2828, %v2873
        %v2879 = vmax.f32 %v2878, 0.0
        %2880 = vst [vmem:[%s177 + $0x8] sm:$0xff] %v2879
        %v2881 = vld [vmem:[%s1] sm:$0xf]
        %v2883 = vsel %vm216, %v2881, 0
        %2885 = vmatprep.subr.bf16.mxu0 0
        %2886 = vmatpush1.bf16.msra.mxu0 %v1152
        %2887 = vmatprep.subr.bf16.mxu0 0
        %2888 = vmatpush1.bf16.msra.mxu0 0
        %2889 = vmatprep.subr.bf16.mxu0 0
        %2890 = vmatpush1.bf16.msra.mxu0 0
        %2891 = vmatprep.subr.bf16.mxu0 0
        %2892 = vmatpush1.bf16.msra.mxu0 0
        %2893 = vmatprep.subr.bf16.mxu0 0
        %2894 = vmatpush1.bf16.msra.mxu0 0
        %2895 = vmatprep.subr.bf16.mxu0 0
        %2896 = vmatpush1.bf16.msra.mxu0 0
        %2897 = vmatprep.subr.bf16.mxu0 0
        %2898 = vmatpush1.bf16.msra.mxu0 0
        %2899 = vmatprep.subr.bf16.mxu0 0
        %2900 = vmatpush1.bf16.msra.mxu0 0
        %2901 = vmatprep.subr.bf16.mxu0 0
        %2902 = vmatpush1.bf16.msra.mxu0 0
        %2903 = vmatprep.subr.bf16.mxu0 0
        %2904 = vmatpush1.bf16.msra.mxu0 0
        %2905 = vmatprep.subr.bf16.mxu0 0
        %2906 = vmatpush1.bf16.msra.mxu0 0
        %2907 = vmatprep.subr.bf16.mxu0 0
        %2908 = vmatpush1.bf16.msra.mxu0 0
        %2909 = vmatprep.subr.bf16.mxu0 0
        %2910 = vmatpush1.bf16.msra.mxu0 0
        %2911 = vmatprep.subr.bf16.mxu0 0
        %2912 = vmatpush1.bf16.msra.mxu0 0
        %2913 = vmatprep.subr.bf16.mxu0 0
        %2914 = vmatpush1.bf16.msra.mxu0 0
        %2915 = vmatprep.subr.bf16.mxu0 0
        %2916 = vmatpush1.bf16.msra.mxu0 0
        %2917 = vmatprep.mubr.bf16.mxu0 0
        %2918 = vmatmul.mubr.bf16.gmra.mrb[0].mxu0 %v2883
        %v2919 = vpop.f32.mrb[0].mxu0
        %v2920 = vadd.f32 0.0, %v2919
        %v2921 = vpop.f32.mrb[0].mxu0
        %v2922 = vpop.f32.mrb[0].mxu0
        %v2923 = vpop.f32.mrb[0].mxu0
        %2924 = vdwg.mxu0
        %v2925 = vadd.f32 %v190, %v2920
        %v2926 = vld [vmem:[%s276] sm:$0xf]
        %v2928 = vsel %vm216, %v2926, 0
        %2930 = vmatprep.subr.bf16.mxu0 0
        %2931 = vmatpush1.bf16.msra.mxu0 %v1211
        %2932 = vmatprep.subr.bf16.mxu0 0
        %2933 = vmatpush1.bf16.msra.mxu0 0
        %2934 = vmatprep.subr.bf16.mxu0 0
        %2935 = vmatpush1.bf16.msra.mxu0 0
        %2936 = vmatprep.subr.bf16.mxu0 0
        %2937 = vmatpush1.bf16.msra.mxu0 0
        %2938 = vmatprep.subr.bf16.mxu0 0
        %2939 = vmatpush1.bf16.msra.mxu0 0
        %2940 = vmatprep.subr.bf16.mxu0 0
        %2941 = vmatpush1.bf16.msra.mxu0 0
        %2942 = vmatprep.subr.bf16.mxu0 0
        %2943 = vmatpush1.bf16.msra.mxu0 0
        %2944 = vmatprep.subr.bf16.mxu0 0
        %2945 = vmatpush1.bf16.msra.mxu0 0
        %2946 = vmatprep.subr.bf16.mxu0 0
        %2947 = vmatpush1.bf16.msra.mxu0 0
        %2948 = vmatprep.subr.bf16.mxu0 0
        %2949 = vmatpush1.bf16.msra.mxu0 0
        %2950 = vmatprep.subr.bf16.mxu0 0
        %2951 = vmatpush1.bf16.msra.mxu0 0
        %2952 = vmatprep.subr.bf16.mxu0 0
        %2953 = vmatpush1.bf16.msra.mxu0 0
        %2954 = vmatprep.subr.bf16.mxu0 0
        %2955 = vmatpush1.bf16.msra.mxu0 0
        %2956 = vmatprep.subr.bf16.mxu0 0
        %2957 = vmatpush1.bf16.msra.mxu0 0
        %2958 = vmatprep.subr.bf16.mxu0 0
        %2959 = vmatpush1.bf16.msra.mxu0 0
        %2960 = vmatprep.subr.bf16.mxu0 0
        %2961 = vmatpush1.bf16.msra.mxu0 0
        %2962 = vmatprep.mubr.bf16.mxu0 0
        %2963 = vmatmul.mubr.bf16.gmra.mrb[0].mxu0 %v2928
        %v2964 = vpop.f32.mrb[0].mxu0
        %v2965 = vadd.f32 0.0, %v2964
        %v2966 = vpop.f32.mrb[0].mxu0
        %v2967 = vpop.f32.mrb[0].mxu0
        %v2968 = vpop.f32.mrb[0].mxu0
        %2969 = vdwg.mxu0
        %v2970 = vadd.f32 %v2925, %v2965
        %v2971 = vld [vmem:[%s327] sm:$0xf]
        %v2973 = vsel %vm216, %v2971, 0
        %2975 = vmatprep.subr.bf16.mxu0 0
        %2976 = vmatpush1.bf16.msra.mxu0 %v1262
        %2977 = vmatprep.subr.bf16.mxu0 0
        %2978 = vmatpush1.bf16.msra.mxu0 0
        %2979 = vmatprep.subr.bf16.mxu0 0
        %2980 = vmatpush1.bf16.msra.mxu0 0
        %2981 = vmatprep.subr.bf16.mxu0 0
        %2982 = vmatpush1.bf16.msra.mxu0 0
        %2983 = vmatprep.subr.bf16.mxu0 0
        %2984 = vmatpush1.bf16.msra.mxu0 0
        %2985 = vmatprep.subr.bf16.mxu0 0
        %2986 = vmatpush1.bf16.msra.mxu0 0
        %2987 = vmatprep.subr.bf16.mxu0 0
        %2988 = vmatpush1.bf16.msra.mxu0 0
        %2989 = vmatprep.subr.bf16.mxu0 0
        %2990 = vmatpush1.bf16.msra.mxu0 0
        %2991 = vmatprep.subr.bf16.mxu0 0
        %2992 = vmatpush1.bf16.msra.mxu0 0
        %2993 = vmatprep.subr.bf16.mxu0 0
        %2994 = vmatpush1.bf16.msra.mxu0 0
        %2995 = vmatprep.subr.bf16.mxu0 0
        %2996 = vmatpush1.bf16.msra.mxu0 0
        %2997 = vmatprep.subr.bf16.mxu0 0
        %2998 = vmatpush1.bf16.msra.mxu0 0
        %2999 = vmatprep.subr.bf16.mxu0 0
        %3000 = vmatpush1.bf16.msra.mxu0 0
        %3001 = vmatprep.subr.bf16.mxu0 0
        %3002 = vmatpush1.bf16.msra.mxu0 0
        %3003 = vmatprep.subr.bf16.mxu0 0
        %3004 = vmatpush1.bf16.msra.mxu0 0
        %3005 = vmatprep.subr.bf16.mxu0 0
        %3006 = vmatpush1.bf16.msra.mxu0 0
        %3007 = vmatprep.mubr.bf16.mxu0 0
        %3008 = vmatmul.mubr.bf16.gmra.mrb[0].mxu0 %v2973
        %v3009 = vpop.f32.mrb[0].mxu0
        %v3010 = vadd.f32 0.0, %v3009
        %v3011 = vpop.f32.mrb[0].mxu0
        %v3012 = vpop.f32.mrb[0].mxu0
        %v3013 = vpop.f32.mrb[0].mxu0
        %3014 = vdwg.mxu0
        %v3015 = vadd.f32 %v2970, %v3010
        %v3016 = vld [vmem:[%s378] sm:$0xf]
        %v3018 = vsel %vm216, %v3016, 0
        %3020 = vmatprep.subr.bf16.mxu0 0
        %3021 = vmatpush1.bf16.msra.mxu0 %v1313
        %3022 = vmatprep.subr.bf16.mxu0 0
        %3023 = vmatpush1.bf16.msra.mxu0 0
        %3024 = vmatprep.subr.bf16.mxu0 0
        %3025 = vmatpush1.bf16.msra.mxu0 0
        %3026 = vmatprep.subr.bf16.mxu0 0
        %3027 = vmatpush1.bf16.msra.mxu0 0
        %3028 = vmatprep.subr.bf16.mxu0 0
        %3029 = vmatpush1.bf16.msra.mxu0 0
        %3030 = vmatprep.subr.bf16.mxu0 0
        %3031 = vmatpush1.bf16.msra.mxu0 0
        %3032 = vmatprep.subr.bf16.mxu0 0
        %3033 = vmatpush1.bf16.msra.mxu0 0
        %3034 = vmatprep.subr.bf16.mxu0 0
        %3035 = vmatpush1.bf16.msra.mxu0 0
        %3036 = vmatprep.subr.bf16.mxu0 0
        %3037 = vmatpush1.bf16.msra.mxu0 0
        %3038 = vmatprep.subr.bf16.mxu0 0
        %3039 = vmatpush1.bf16.msra.mxu0 0
        %3040 = vmatprep.subr.bf16.mxu0 0
        %3041 = vmatpush1.bf16.msra.mxu0 0
        %3042 = vmatprep.subr.bf16.mxu0 0
        %3043 = vmatpush1.bf16.msra.mxu0 0
        %3044 = vmatprep.subr.bf16.mxu0 0
        %3045 = vmatpush1.bf16.msra.mxu0 0
        %3046 = vmatprep.subr.bf16.mxu0 0
        %3047 = vmatpush1.bf16.msra.mxu0 0
        %3048 = vmatprep.subr.bf16.mxu0 0
        %3049 = vmatpush1.bf16.msra.mxu0 0
        %3050 = vmatprep.subr.bf16.mxu0 0
        %3051 = vmatpush1.bf16.msra.mxu0 0
        %3052 = vmatprep.mubr.bf16.mxu0 0
        %3053 = vmatmul.mubr.bf16.gmra.mrb[0].mxu0 %v3018
        %v3054 = vpop.f32.mrb[0].mxu0
        %v3055 = vadd.f32 0.0, %v3054
        %v3056 = vpop.f32.mrb[0].mxu0
        %v3057 = vpop.f32.mrb[0].mxu0
        %v3058 = vpop.f32.mrb[0].mxu0
        %3059 = vdwg.mxu0
        %v3060 = vadd.f32 %v3015, %v3055
        %v3061 = vld [vmem:[%s429] sm:$0xf]
        %v3063 = vsel %vm216, %v3061, 0
        %3065 = vmatprep.subr.bf16.mxu0 0
        %3066 = vmatpush1.bf16.msra.mxu0 %v1364
        %3067 = vmatprep.subr.bf16.mxu0 0
        %3068 = vmatpush1.bf16.msra.mxu0 0
        %3069 = vmatprep.subr.bf16.mxu0 0
        %3070 = vmatpush1.bf16.msra.mxu0 0
        %3071 = vmatprep.subr.bf16.mxu0 0
        %3072 = vmatpush1.bf16.msra.mxu0 0
        %3073 = vmatprep.subr.bf16.mxu0 0
        %3074 = vmatpush1.bf16.msra.mxu0 0
        %3075 = vmatprep.subr.bf16.mxu0 0
        %3076 = vmatpush1.bf16.msra.mxu0 0
        %3077 = vmatprep.subr.bf16.mxu0 0
        %3078 = vmatpush1.bf16.msra.mxu0 0
        %3079 = vmatprep.subr.bf16.mxu0 0
        %3080 = vmatpush1.bf16.msra.mxu0 0
        %3081 = vmatprep.subr.bf16.mxu0 0
        %3082 = vmatpush1.bf16.msra.mxu0 0
        %3083 = vmatprep.subr.bf16.mxu0 0
        %3084 = vmatpush1.bf16.msra.mxu0 0
        %3085 = vmatprep.subr.bf16.mxu0 0
        %3086 = vmatpush1.bf16.msra.mxu0 0
        %3087 = vmatprep.subr.bf16.mxu0 0
        %3088 = vmatpush1.bf16.msra.mxu0 0
        %3089 = vmatprep.subr.bf16.mxu0 0
        %3090 = vmatpush1.bf16.msra.mxu0 0
        %3091 = vmatprep.subr.bf16.mxu0 0
        %3092 = vmatpush1.bf16.msra.mxu0 0
        %3093 = vmatprep.subr.bf16.mxu0 0
        %3094 = vmatpush1.bf16.msra.mxu0 0
        %3095 = vmatprep.subr.bf16.mxu0 0
        %3096 = vmatpush1.bf16.msra.mxu0 0
        %3097 = vmatprep.mubr.bf16.mxu0 0
        %3098 = vmatmul.mubr.bf16.gmra.mrb[0].mxu0 %v3063
        %v3099 = vpop.f32.mrb[0].mxu0
        %v3100 = vadd.f32 0.0, %v3099
        %v3101 = vpop.f32.mrb[0].mxu0
        %v3102 = vpop.f32.mrb[0].mxu0
        %v3103 = vpop.f32.mrb[0].mxu0
        %3104 = vdwg.mxu0
        %v3105 = vadd.f32 %v3060, %v3100
        %v3106 = vld [vmem:[%s480] sm:$0xf]
        %v3108 = vsel %vm216, %v3106, 0
        %3110 = vmatprep.subr.bf16.mxu0 0
        %3111 = vmatpush1.bf16.msra.mxu0 %v1415
        %3112 = vmatprep.subr.bf16.mxu0 0
        %3113 = vmatpush1.bf16.msra.mxu0 0
        %3114 = vmatprep.subr.bf16.mxu0 0
        %3115 = vmatpush1.bf16.msra.mxu0 0
        %3116 = vmatprep.subr.bf16.mxu0 0
        %3117 = vmatpush1.bf16.msra.mxu0 0
        %3118 = vmatprep.subr.bf16.mxu0 0
        %3119 = vmatpush1.bf16.msra.mxu0 0
        %3120 = vmatprep.subr.bf16.mxu0 0
        %3121 = vmatpush1.bf16.msra.mxu0 0
        %3122 = vmatprep.subr.bf16.mxu0 0
        %3123 = vmatpush1.bf16.msra.mxu0 0
        %3124 = vmatprep.subr.bf16.mxu0 0
        %3125 = vmatpush1.bf16.msra.mxu0 0
        %3126 = vmatprep.subr.bf16.mxu0 0
        %3127 = vmatpush1.bf16.msra.mxu0 0
        %3128 = vmatprep.subr.bf16.mxu0 0
        %3129 = vmatpush1.bf16.msra.mxu0 0
        %3130 = vmatprep.subr.bf16.mxu0 0
        %3131 = vmatpush1.bf16.msra.mxu0 0
        %3132 = vmatprep.subr.bf16.mxu0 0
        %3133 = vmatpush1.bf16.msra.mxu0 0
        %3134 = vmatprep.subr.bf16.mxu0 0
        %3135 = vmatpush1.bf16.msra.mxu0 0
        %3136 = vmatprep.subr.bf16.mxu0 0
        %3137 = vmatpush1.bf16.msra.mxu0 0
        %3138 = vmatprep.subr.bf16.mxu0 0
        %3139 = vmatpush1.bf16.msra.mxu0 0
        %3140 = vmatprep.subr.bf16.mxu0 0
        %3141 = vmatpush1.bf16.msra.mxu0 0
        %3142 = vmatprep.mubr.bf16.mxu0 0
        %3143 = vmatmul.mubr.bf16.gmra.mrb[0].mxu0 %v3108
        %v3144 = vpop.f32.mrb[0].mxu0
        %v3145 = vadd.f32 0.0, %v3144
        %v3146 = vpop.f32.mrb[0].mxu0
        %v3147 = vpop.f32.mrb[0].mxu0
        %v3148 = vpop.f32.mrb[0].mxu0
        %3149 = vdwg.mxu0
        %v3150 = vadd.f32 %v3105, %v3145
        %v3151 = vld [vmem:[%s531] sm:$0xf]
        %v3153 = vsel %vm216, %v3151, 0
        %3155 = vmatprep.subr.bf16.mxu0 0
        %3156 = vmatpush1.bf16.msra.mxu0 %v1466
        %3157 = vmatprep.subr.bf16.mxu0 0
        %3158 = vmatpush1.bf16.msra.mxu0 0
        %3159 = vmatprep.subr.bf16.mxu0 0
        %3160 = vmatpush1.bf16.msra.mxu0 0
        %3161 = vmatprep.subr.bf16.mxu0 0
        %3162 = vmatpush1.bf16.msra.mxu0 0
        %3163 = vmatprep.subr.bf16.mxu0 0
        %3164 = vmatpush1.bf16.msra.mxu0 0
        %3165 = vmatprep.subr.bf16.mxu0 0
        %3166 = vmatpush1.bf16.msra.mxu0 0
        %3167 = vmatprep.subr.bf16.mxu0 0
        %3168 = vmatpush1.bf16.msra.mxu0 0
        %3169 = vmatprep.subr.bf16.mxu0 0
        %3170 = vmatpush1.bf16.msra.mxu0 0
        %3171 = vmatprep.subr.bf16.mxu0 0
        %3172 = vmatpush1.bf16.msra.mxu0 0
        %3173 = vmatprep.subr.bf16.mxu0 0
        %3174 = vmatpush1.bf16.msra.mxu0 0
        %3175 = vmatprep.subr.bf16.mxu0 0
        %3176 = vmatpush1.bf16.msra.mxu0 0
        %3177 = vmatprep.subr.bf16.mxu0 0
        %3178 = vmatpush1.bf16.msra.mxu0 0
        %3179 = vmatprep.subr.bf16.mxu0 0
        %3180 = vmatpush1.bf16.msra.mxu0 0
        %3181 = vmatprep.subr.bf16.mxu0 0
        %3182 = vmatpush1.bf16.msra.mxu0 0
        %3183 = vmatprep.subr.bf16.mxu0 0
        %3184 = vmatpush1.bf16.msra.mxu0 0
        %3185 = vmatprep.subr.bf16.mxu0 0
        %3186 = vmatpush1.bf16.msra.mxu0 0
        %3187 = vmatprep.mubr.bf16.mxu0 0
        %3188 = vmatmul.mubr.bf16.gmra.mrb[0].mxu0 %v3153
        %v3189 = vpop.f32.mrb[0].mxu0
        %v3190 = vadd.f32 0.0, %v3189
        %v3191 = vpop.f32.mrb[0].mxu0
        %v3192 = vpop.f32.mrb[0].mxu0
        %v3193 = vpop.f32.mrb[0].mxu0
        %3194 = vdwg.mxu0
        %v3195 = vadd.f32 %v3150, %v3190
        %v3196 = vld [vmem:[%s582] sm:$0xf]
        %v3198 = vsel %vm216, %v3196, 0
        %3200 = vmatprep.subr.bf16.mxu0 0
        %3201 = vmatpush1.bf16.msra.mxu0 %v1517
        %3202 = vmatprep.subr.bf16.mxu0 0
        %3203 = vmatpush1.bf16.msra.mxu0 0
        %3204 = vmatprep.subr.bf16.mxu0 0
        %3205 = vmatpush1.bf16.msra.mxu0 0
        %3206 = vmatprep.subr.bf16.mxu0 0
        %3207 = vmatpush1.bf16.msra.mxu0 0
        %3208 = vmatprep.subr.bf16.mxu0 0
        %3209 = vmatpush1.bf16.msra.mxu0 0
        %3210 = vmatprep.subr.bf16.mxu0 0
        %3211 = vmatpush1.bf16.msra.mxu0 0
        %3212 = vmatprep.subr.bf16.mxu0 0
        %3213 = vmatpush1.bf16.msra.mxu0 0
        %3214 = vmatprep.subr.bf16.mxu0 0
        %3215 = vmatpush1.bf16.msra.mxu0 0
        %3216 = vmatprep.subr.bf16.mxu0 0
        %3217 = vmatpush1.bf16.msra.mxu0 0
        %3218 = vmatprep.subr.bf16.mxu0 0
        %3219 = vmatpush1.bf16.msra.mxu0 0
        %3220 = vmatprep.subr.bf16.mxu0 0
        %3221 = vmatpush1.bf16.msra.mxu0 0
        %3222 = vmatprep.subr.bf16.mxu0 0
        %3223 = vmatpush1.bf16.msra.mxu0 0
        %3224 = vmatprep.subr.bf16.mxu0 0
        %3225 = vmatpush1.bf16.msra.mxu0 0
        %3226 = vmatprep.subr.bf16.mxu0 0
        %3227 = vmatpush1.bf16.msra.mxu0 0
        %3228 = vmatprep.subr.bf16.mxu0 0
        %3229 = vmatpush1.bf16.msra.mxu0 0
        %3230 = vmatprep.subr.bf16.mxu0 0
        %3231 = vmatpush1.bf16.msra.mxu0 0
        %3232 = vmatprep.mubr.bf16.mxu0 0
        %3233 = vmatmul.mubr.bf16.gmra.mrb[0].mxu0 %v3198
        %v3234 = vpop.f32.mrb[0].mxu0
        %v3235 = vadd.f32 0.0, %v3234
        %v3236 = vpop.f32.mrb[0].mxu0
        %v3237 = vpop.f32.mrb[0].mxu0
        %v3238 = vpop.f32.mrb[0].mxu0
        %3239 = vdwg.mxu0
        %v3240 = vadd.f32 %v3195, %v3235
        %v3241 = vld [vmem:[%s633] sm:$0xf]
        %v3243 = vsel %vm216, %v3241, 0
        %3245 = vmatprep.subr.bf16.mxu0 0
        %3246 = vmatpush1.bf16.msra.mxu0 %v1568
        %3247 = vmatprep.subr.bf16.mxu0 0
        %3248 = vmatpush1.bf16.msra.mxu0 0
        %3249 = vmatprep.subr.bf16.mxu0 0
        %3250 = vmatpush1.bf16.msra.mxu0 0
        %3251 = vmatprep.subr.bf16.mxu0 0
        %3252 = vmatpush1.bf16.msra.mxu0 0
        %3253 = vmatprep.subr.bf16.mxu0 0
        %3254 = vmatpush1.bf16.msra.mxu0 0
        %3255 = vmatprep.subr.bf16.mxu0 0
        %3256 = vmatpush1.bf16.msra.mxu0 0
        %3257 = vmatprep.subr.bf16.mxu0 0
        %3258 = vmatpush1.bf16.msra.mxu0 0
        %3259 = vmatprep.subr.bf16.mxu0 0
        %3260 = vmatpush1.bf16.msra.mxu0 0
        %3261 = vmatprep.subr.bf16.mxu0 0
        %3262 = vmatpush1.bf16.msra.mxu0 0
        %3263 = vmatprep.subr.bf16.mxu0 0
        %3264 = vmatpush1.bf16.msra.mxu0 0
        %3265 = vmatprep.subr.bf16.mxu0 0
        %3266 = vmatpush1.bf16.msra.mxu0 0
        %3267 = vmatprep.subr.bf16.mxu0 0
        %3268 = vmatpush1.bf16.msra.mxu0 0
        %3269 = vmatprep.subr.bf16.mxu0 0
        %3270 = vmatpush1.bf16.msra.mxu0 0
        %3271 = vmatprep.subr.bf16.mxu0 0
        %3272 = vmatpush1.bf16.msra.mxu0 0
        %3273 = vmatprep.subr.bf16.mxu0 0
        %3274 = vmatpush1.bf16.msra.mxu0 0
        %3275 = vmatprep.subr.bf16.mxu0 0
        %3276 = vmatpush1.bf16.msra.mxu0 0
        %3277 = vmatprep.mubr.bf16.mxu0 0
        %3278 = vmatmul.mubr.bf16.gmra.mrb[0].mxu0 %v3243
        %v3279 = vpop.f32.mrb[0].mxu0
        %v3280 = vadd.f32 0.0, %v3279
        %v3281 = vpop.f32.mrb[0].mxu0
        %v3282 = vpop.f32.mrb[0].mxu0
        %v3283 = vpop.f32.mrb[0].mxu0
        %3284 = vdwg.mxu0
        %v3285 = vadd.f32 %v3240, %v3280
        %v3286 = vld [vmem:[%s681] sm:$0xf]
        %v3288 = vsel %vm216, %v3286, 0
        %3290 = vmatprep.subr.bf16.mxu0 0
        %3291 = vmatpush1.bf16.msra.mxu0 %v2428
        %3292 = vmatprep.subr.bf16.mxu0 0
        %3293 = vmatpush1.bf16.msra.mxu0 0
        %3294 = vmatprep.subr.bf16.mxu0 0
        %3295 = vmatpush1.bf16.msra.mxu0 0
        %3296 = vmatprep.subr.bf16.mxu0 0
        %3297 = vmatpush1.bf16.msra.mxu0 0
        %3298 = vmatprep.subr.bf16.mxu0 0
        %3299 = vmatpush1.bf16.msra.mxu0 0
        %3300 = vmatprep.subr.bf16.mxu0 0
        %3301 = vmatpush1.bf16.msra.mxu0 0
        %3302 = vmatprep.subr.bf16.mxu0 0
        %3303 = vmatpush1.bf16.msra.mxu0 0
        %3304 = vmatprep.subr.bf16.mxu0 0
        %3305 = vmatpush1.bf16.msra.mxu0 0
        %3306 = vmatprep.subr.bf16.mxu0 0
        %3307 = vmatpush1.bf16.msra.mxu0 0
        %3308 = vmatprep.subr.bf16.mxu0 0
        %3309 = vmatpush1.bf16.msra.mxu0 0
        %3310 = vmatprep.subr.bf16.mxu0 0
        %3311 = vmatpush1.bf16.msra.mxu0 0
        %3312 = vmatprep.subr.bf16.mxu0 0
        %3313 = vmatpush1.bf16.msra.mxu0 0
        %3314 = vmatprep.subr.bf16.mxu0 0
        %3315 = vmatpush1.bf16.msra.mxu0 0
        %3316 = vmatprep.subr.bf16.mxu0 0
        %3317 = vmatpush1.bf16.msra.mxu0 0
        %3318 = vmatprep.subr.bf16.mxu0 0
        %3319 = vmatpush1.bf16.msra.mxu0 0
        %3320 = vmatprep.subr.bf16.mxu0 0
        %3321 = vmatpush1.bf16.msra.mxu0 0
        %3322 = vmatprep.mubr.bf16.mxu0 0
        %3323 = vmatmul.mubr.bf16.gmra.mrb[0].mxu0 %v3288
        %v3324 = vpop.f32.mrb[0].mxu0
        %v3325 = vadd.f32 0.0, %v3324
        %v3326 = vpop.f32.mrb[0].mxu0
        %v3327 = vpop.f32.mrb[0].mxu0
        %v3328 = vpop.f32.mrb[0].mxu0
        %3329 = vdwg.mxu0
        %v3330 = vadd.f32 %v3285, %v3325
        %v3331 = vld [vmem:[%s741] sm:$0xf]
        %v3333 = vsel %vm216, %v3331, 0
        %3335 = vmatprep.subr.bf16.mxu0 0
        %3336 = vmatpush1.bf16.msra.mxu0 %v2486
        %3337 = vmatprep.subr.bf16.mxu0 0
        %3338 = vmatpush1.bf16.msra.mxu0 0
        %3339 = vmatprep.subr.bf16.mxu0 0
        %3340 = vmatpush1.bf16.msra.mxu0 0
        %3341 = vmatprep.subr.bf16.mxu0 0
        %3342 = vmatpush1.bf16.msra.mxu0 0
        %3343 = vmatprep.subr.bf16.mxu0 0
        %3344 = vmatpush1.bf16.msra.mxu0 0
        %3345 = vmatprep.subr.bf16.mxu0 0
        %3346 = vmatpush1.bf16.msra.mxu0 0
        %3347 = vmatprep.subr.bf16.mxu0 0
        %3348 = vmatpush1.bf16.msra.mxu0 0
        %3349 = vmatprep.subr.bf16.mxu0 0
        %3350 = vmatpush1.bf16.msra.mxu0 0
        %3351 = vmatprep.subr.bf16.mxu0 0
        %3352 = vmatpush1.bf16.msra.mxu0 0
        %3353 = vmatprep.subr.bf16.mxu0 0
        %3354 = vmatpush1.bf16.msra.mxu0 0
        %3355 = vmatprep.subr.bf16.mxu0 0
        %3356 = vmatpush1.bf16.msra.mxu0 0
        %3357 = vmatprep.subr.bf16.mxu0 0
        %3358 = vmatpush1.bf16.msra.mxu0 0
        %3359 = vmatprep.subr.bf16.mxu0 0
        %3360 = vmatpush1.bf16.msra.mxu0 0
        %3361 = vmatprep.subr.bf16.mxu0 0
        %3362 = vmatpush1.bf16.msra.mxu0 0
        %3363 = vmatprep.subr.bf16.mxu0 0
        %3364 = vmatpush1.bf16.msra.mxu0 0
        %3365 = vmatprep.subr.bf16.mxu0 0
        %3366 = vmatpush1.bf16.msra.mxu0 0
        %3367 = vmatprep.mubr.bf16.mxu0 0
        %3368 = vmatmul.mubr.bf16.gmra.mrb[0].mxu0 %v3333
        %v3369 = vpop.f32.mrb[0].mxu0
        %v3370 = vadd.f32 0.0, %v3369
        %v3371 = vpop.f32.mrb[0].mxu0
        %v3372 = vpop.f32.mrb[0].mxu0
        %v3373 = vpop.f32.mrb[0].mxu0
        %3374 = vdwg.mxu0
        %v3375 = vadd.f32 %v3330, %v3370
        %v3376 = vld [vmem:[%s792] sm:$0xf]
        %v3378 = vsel %vm216, %v3376, 0
        %3380 = vmatprep.subr.bf16.mxu0 0
        %3381 = vmatpush1.bf16.msra.mxu0 %v2536
        %3382 = vmatprep.subr.bf16.mxu0 0
        %3383 = vmatpush1.bf16.msra.mxu0 0
        %3384 = vmatprep.subr.bf16.mxu0 0
        %3385 = vmatpush1.bf16.msra.mxu0 0
        %3386 = vmatprep.subr.bf16.mxu0 0
        %3387 = vmatpush1.bf16.msra.mxu0 0
        %3388 = vmatprep.subr.bf16.mxu0 0
        %3389 = vmatpush1.bf16.msra.mxu0 0
        %3390 = vmatprep.subr.bf16.mxu0 0
        %3391 = vmatpush1.bf16.msra.mxu0 0
        %3392 = vmatprep.subr.bf16.mxu0 0
        %3393 = vmatpush1.bf16.msra.mxu0 0
        %3394 = vmatprep.subr.bf16.mxu0 0
        %3395 = vmatpush1.bf16.msra.mxu0 0
        %3396 = vmatprep.subr.bf16.mxu0 0
        %3397 = vmatpush1.bf16.msra.mxu0 0
        %3398 = vmatprep.subr.bf16.mxu0 0
        %3399 = vmatpush1.bf16.msra.mxu0 0
        %3400 = vmatprep.subr.bf16.mxu0 0
        %3401 = vmatpush1.bf16.msra.mxu0 0
        %3402 = vmatprep.subr.bf16.mxu0 0
        %3403 = vmatpush1.bf16.msra.mxu0 0
        %3404 = vmatprep.subr.bf16.mxu0 0
        %3405 = vmatpush1.bf16.msra.mxu0 0
        %3406 = vmatprep.subr.bf16.mxu0 0
        %3407 = vmatpush1.bf16.msra.mxu0 0
        %3408 = vmatprep.subr.bf16.mxu0 0
        %3409 = vmatpush1.bf16.msra.mxu0 0
        %3410 = vmatprep.subr.bf16.mxu0 0
        %3411 = vmatpush1.bf16.msra.mxu0 0
        %3412 = vmatprep.mubr.bf16.mxu0 0
        %3413 = vmatmul.mubr.bf16.gmra.mrb[0].mxu0 %v3378
        %v3414 = vpop.f32.mrb[0].mxu0
        %v3415 = vadd.f32 0.0, %v3414
        %v3416 = vpop.f32.mrb[0].mxu0
        %v3417 = vpop.f32.mrb[0].mxu0
        %v3418 = vpop.f32.mrb[0].mxu0
        %3419 = vdwg.mxu0
        %v3420 = vadd.f32 %v3375, %v3415
        %v3421 = vld [vmem:[%s843] sm:$0xf]
        %v3423 = vsel %vm216, %v3421, 0
        %3425 = vmatprep.subr.bf16.mxu0 0
        %3426 = vmatpush1.bf16.msra.mxu0 %v2586
        %3427 = vmatprep.subr.bf16.mxu0 0
        %3428 = vmatpush1.bf16.msra.mxu0 0
        %3429 = vmatprep.subr.bf16.mxu0 0
        %3430 = vmatpush1.bf16.msra.mxu0 0
        %3431 = vmatprep.subr.bf16.mxu0 0
        %3432 = vmatpush1.bf16.msra.mxu0 0
        %3433 = vmatprep.subr.bf16.mxu0 0
        %3434 = vmatpush1.bf16.msra.mxu0 0
        %3435 = vmatprep.subr.bf16.mxu0 0
        %3436 = vmatpush1.bf16.msra.mxu0 0
        %3437 = vmatprep.subr.bf16.mxu0 0
        %3438 = vmatpush1.bf16.msra.mxu0 0
        %3439 = vmatprep.subr.bf16.mxu0 0
        %3440 = vmatpush1.bf16.msra.mxu0 0
        %3441 = vmatprep.subr.bf16.mxu0 0
        %3442 = vmatpush1.bf16.msra.mxu0 0
        %3443 = vmatprep.subr.bf16.mxu0 0
        %3444 = vmatpush1.bf16.msra.mxu0 0
        %3445 = vmatprep.subr.bf16.mxu0 0
        %3446 = vmatpush1.bf16.msra.mxu0 0
        %3447 = vmatprep.subr.bf16.mxu0 0
        %3448 = vmatpush1.bf16.msra.mxu0 0
        %3449 = vmatprep.subr.bf16.mxu0 0
        %3450 = vmatpush1.bf16.msra.mxu0 0
        %3451 = vmatprep.subr.bf16.mxu0 0
        %3452 = vmatpush1.bf16.msra.mxu0 0
        %3453 = vmatprep.subr.bf16.mxu0 0
        %3454 = vmatpush1.bf16.msra.mxu0 0
        %3455 = vmatprep.subr.bf16.mxu0 0
        %3456 = vmatpush1.bf16.msra.mxu0 0
        %3457 = vmatprep.mubr.bf16.mxu0 0
        %3458 = vmatmul.mubr.bf16.gmra.mrb[0].mxu0 %v3423
        %v3459 = vpop.f32.mrb[0].mxu0
        %v3460 = vadd.f32 0.0, %v3459
        %v3461 = vpop.f32.mrb[0].mxu0
        %v3462 = vpop.f32.mrb[0].mxu0
        %v3463 = vpop.f32.mrb[0].mxu0
        %3464 = vdwg.mxu0
        %v3465 = vadd.f32 %v3420, %v3460
        %v3466 = vld [vmem:[%s894] sm:$0xf]
        %v3468 = vsel %vm216, %v3466, 0
        %3470 = vmatprep.subr.bf16.mxu0 0
        %3471 = vmatpush1.bf16.msra.mxu0 %v2636
        %3472 = vmatprep.subr.bf16.mxu0 0
        %3473 = vmatpush1.bf16.msra.mxu0 0
        %3474 = vmatprep.subr.bf16.mxu0 0
        %3475 = vmatpush1.bf16.msra.mxu0 0
        %3476 = vmatprep.subr.bf16.mxu0 0
        %3477 = vmatpush1.bf16.msra.mxu0 0
        %3478 = vmatprep.subr.bf16.mxu0 0
        %3479 = vmatpush1.bf16.msra.mxu0 0
        %3480 = vmatprep.subr.bf16.mxu0 0
        %3481 = vmatpush1.bf16.msra.mxu0 0
        %3482 = vmatprep.subr.bf16.mxu0 0
        %3483 = vmatpush1.bf16.msra.mxu0 0
        %3484 = vmatprep.subr.bf16.mxu0 0
        %3485 = vmatpush1.bf16.msra.mxu0 0
        %3486 = vmatprep.subr.bf16.mxu0 0
        %3487 = vmatpush1.bf16.msra.mxu0 0
        %3488 = vmatprep.subr.bf16.mxu0 0
        %3489 = vmatpush1.bf16.msra.mxu0 0
        %3490 = vmatprep.subr.bf16.mxu0 0
        %3491 = vmatpush1.bf16.msra.mxu0 0
        %3492 = vmatprep.subr.bf16.mxu0 0
        %3493 = vmatpush1.bf16.msra.mxu0 0
        %3494 = vmatprep.subr.bf16.mxu0 0
        %3495 = vmatpush1.bf16.msra.mxu0 0
        %3496 = vmatprep.subr.bf16.mxu0 0
        %3497 = vmatpush1.bf16.msra.mxu0 0
        %3498 = vmatprep.subr.bf16.mxu0 0
        %3499 = vmatpush1.bf16.msra.mxu0 0
        %3500 = vmatprep.subr.bf16.mxu0 0
        %3501 = vmatpush1.bf16.msra.mxu0 0
        %3502 = vmatprep.mubr.bf16.mxu0 0
        %3503 = vmatmul.mubr.bf16.gmra.mrb[0].mxu0 %v3468
        %v3504 = vpop.f32.mrb[0].mxu0
        %v3505 = vadd.f32 0.0, %v3504
        %v3506 = vpop.f32.mrb[0].mxu0
        %v3507 = vpop.f32.mrb[0].mxu0
        %v3508 = vpop.f32.mrb[0].mxu0
        %3509 = vdwg.mxu0
        %v3510 = vadd.f32 %v3465, %v3505
        %v3511 = vld [vmem:[%s945] sm:$0xf]
        %v3513 = vsel %vm216, %v3511, 0
        %3515 = vmatprep.subr.bf16.mxu0 0
        %3516 = vmatpush1.bf16.msra.mxu0 %v2686
        %3517 = vmatprep.subr.bf16.mxu0 0
        %3518 = vmatpush1.bf16.msra.mxu0 0
        %3519 = vmatprep.subr.bf16.mxu0 0
        %3520 = vmatpush1.bf16.msra.mxu0 0
        %3521 = vmatprep.subr.bf16.mxu0 0
        %3522 = vmatpush1.bf16.msra.mxu0 0
        %3523 = vmatprep.subr.bf16.mxu0 0
        %3524 = vmatpush1.bf16.msra.mxu0 0
        %3525 = vmatprep.subr.bf16.mxu0 0
        %3526 = vmatpush1.bf16.msra.mxu0 0
        %3527 = vmatprep.subr.bf16.mxu0 0
        %3528 = vmatpush1.bf16.msra.mxu0 0
        %3529 = vmatprep.subr.bf16.mxu0 0
        %3530 = vmatpush1.bf16.msra.mxu0 0
        %3531 = vmatprep.subr.bf16.mxu0 0
        %3532 = vmatpush1.bf16.msra.mxu0 0
        %3533 = vmatprep.subr.bf16.mxu0 0
        %3534 = vmatpush1.bf16.msra.mxu0 0
        %3535 = vmatprep.subr.bf16.mxu0 0
        %3536 = vmatpush1.bf16.msra.mxu0 0
        %3537 = vmatprep.subr.bf16.mxu0 0
        %3538 = vmatpush1.bf16.msra.mxu0 0
        %3539 = vmatprep.subr.bf16.mxu0 0
        %3540 = vmatpush1.bf16.msra.mxu0 0
        %3541 = vmatprep.subr.bf16.mxu0 0
        %3542 = vmatpush1.bf16.msra.mxu0 0
        %3543 = vmatprep.subr.bf16.mxu0 0
        %3544 = vmatpush1.bf16.msra.mxu0 0
        %3545 = vmatprep.subr.bf16.mxu0 0
        %3546 = vmatpush1.bf16.msra.mxu0 0
        %3547 = vmatprep.mubr.bf16.mxu0 0
        %3548 = vmatmul.mubr.bf16.gmra.mrb[0].mxu0 %v3513
        %v3549 = vpop.f32.mrb[0].mxu0
        %v3550 = vadd.f32 0.0, %v3549
        %v3551 = vpop.f32.mrb[0].mxu0
        %v3552 = vpop.f32.mrb[0].mxu0
        %v3553 = vpop.f32.mrb[0].mxu0
        %3554 = vdwg.mxu0
        %v3555 = vadd.f32 %v3510, %v3550
        %v3556 = vld [vmem:[%s996] sm:$0xf]
        %v3558 = vsel %vm216, %v3556, 0
        %3560 = vmatprep.subr.bf16.mxu0 0
        %3561 = vmatpush1.bf16.msra.mxu0 %v2736
        %3562 = vmatprep.subr.bf16.mxu0 0
        %3563 = vmatpush1.bf16.msra.mxu0 0
        %3564 = vmatprep.subr.bf16.mxu0 0
        %3565 = vmatpush1.bf16.msra.mxu0 0
        %3566 = vmatprep.subr.bf16.mxu0 0
        %3567 = vmatpush1.bf16.msra.mxu0 0
        %3568 = vmatprep.subr.bf16.mxu0 0
        %3569 = vmatpush1.bf16.msra.mxu0 0
        %3570 = vmatprep.subr.bf16.mxu0 0
        %3571 = vmatpush1.bf16.msra.mxu0 0
        %3572 = vmatprep.subr.bf16.mxu0 0
        %3573 = vmatpush1.bf16.msra.mxu0 0
        %3574 = vmatprep.subr.bf16.mxu0 0
        %3575 = vmatpush1.bf16.msra.mxu0 0
        %3576 = vmatprep.subr.bf16.mxu0 0
        %3577 = vmatpush1.bf16.msra.mxu0 0
        %3578 = vmatprep.subr.bf16.mxu0 0
        %3579 = vmatpush1.bf16.msra.mxu0 0
        %3580 = vmatprep.subr.bf16.mxu0 0
        %3581 = vmatpush1.bf16.msra.mxu0 0
        %3582 = vmatprep.subr.bf16.mxu0 0
        %3583 = vmatpush1.bf16.msra.mxu0 0
        %3584 = vmatprep.subr.bf16.mxu0 0
        %3585 = vmatpush1.bf16.msra.mxu0 0
        %3586 = vmatprep.subr.bf16.mxu0 0
        %3587 = vmatpush1.bf16.msra.mxu0 0
        %3588 = vmatprep.subr.bf16.mxu0 0
        %3589 = vmatpush1.bf16.msra.mxu0 0
        %3590 = vmatprep.subr.bf16.mxu0 0
        %3591 = vmatpush1.bf16.msra.mxu0 0
        %3592 = vmatprep.mubr.bf16.mxu0 0
        %3593 = vmatmul.mubr.bf16.gmra.mrb[0].mxu0 %v3558
        %v3594 = vpop.f32.mrb[0].mxu0
        %v3595 = vadd.f32 0.0, %v3594
        %v3596 = vpop.f32.mrb[0].mxu0
        %v3597 = vpop.f32.mrb[0].mxu0
        %v3598 = vpop.f32.mrb[0].mxu0
        %3599 = vdwg.mxu0
        %v3600 = vadd.f32 %v3555, %v3595
        %v3601 = vld [vmem:[%s1047] sm:$0xf]
        %v3603 = vsel %vm216, %v3601, 0
        %3605 = vmatprep.subr.bf16.mxu0 0
        %3606 = vmatpush1.bf16.msra.mxu0 %v2786
        %3607 = vmatprep.subr.bf16.mxu0 0
        %3608 = vmatpush1.bf16.msra.mxu0 0
        %3609 = vmatprep.subr.bf16.mxu0 0
        %3610 = vmatpush1.bf16.msra.mxu0 0
        %3611 = vmatprep.subr.bf16.mxu0 0
        %3612 = vmatpush1.bf16.msra.mxu0 0
        %3613 = vmatprep.subr.bf16.mxu0 0
        %3614 = vmatpush1.bf16.msra.mxu0 0
        %3615 = vmatprep.subr.bf16.mxu0 0
        %3616 = vmatpush1.bf16.msra.mxu0 0
        %3617 = vmatprep.subr.bf16.mxu0 0
        %3618 = vmatpush1.bf16.msra.mxu0 0
        %3619 = vmatprep.subr.bf16.mxu0 0
        %3620 = vmatpush1.bf16.msra.mxu0 0
        %3621 = vmatprep.subr.bf16.mxu0 0
        %3622 = vmatpush1.bf16.msra.mxu0 0
        %3623 = vmatprep.subr.bf16.mxu0 0
        %3624 = vmatpush1.bf16.msra.mxu0 0
        %3625 = vmatprep.subr.bf16.mxu0 0
        %3626 = vmatpush1.bf16.msra.mxu0 0
        %3627 = vmatprep.subr.bf16.mxu0 0
        %3628 = vmatpush1.bf16.msra.mxu0 0
        %3629 = vmatprep.subr.bf16.mxu0 0
        %3630 = vmatpush1.bf16.msra.mxu0 0
        %3631 = vmatprep.subr.bf16.mxu0 0
        %3632 = vmatpush1.bf16.msra.mxu0 0
        %3633 = vmatprep.subr.bf16.mxu0 0
        %3634 = vmatpush1.bf16.msra.mxu0 0
        %3635 = vmatprep.subr.bf16.mxu0 0
        %3636 = vmatpush1.bf16.msra.mxu0 0
        %3637 = vmatprep.mubr.bf16.mxu0 0
        %3638 = vmatmul.mubr.bf16.gmra.mrb[0].mxu0 %v3603
        %v3639 = vpop.f32.mrb[0].mxu0
        %v3640 = vadd.f32 0.0, %v3639
        %v3641 = vpop.f32.mrb[0].mxu0
        %v3642 = vpop.f32.mrb[0].mxu0
        %v3643 = vpop.f32.mrb[0].mxu0
        %3644 = vdwg.mxu0
        %v3645 = vadd.f32 %v3600, %v3640
        %v3646 = vld [vmem:[%s1098] sm:$0xf]
        %v3648 = vsel %vm216, %v3646, 0
        %3650 = vmatprep.subr.bf16.mxu0 0
        %3651 = vmatpush1.bf16.msra.mxu0 %v2836
        %3652 = vmatprep.subr.bf16.mxu0 0
        %3653 = vmatpush1.bf16.msra.mxu0 0
        %3654 = vmatprep.subr.bf16.mxu0 0
        %3655 = vmatpush1.bf16.msra.mxu0 0
        %3656 = vmatprep.subr.bf16.mxu0 0
        %3657 = vmatpush1.bf16.msra.mxu0 0
        %3658 = vmatprep.subr.bf16.mxu0 0
        %3659 = vmatpush1.bf16.msra.mxu0 0
        %3660 = vmatprep.subr.bf16.mxu0 0
        %3661 = vmatpush1.bf16.msra.mxu0 0
        %3662 = vmatprep.subr.bf16.mxu0 0
        %3663 = vmatpush1.bf16.msra.mxu0 0
        %3664 = vmatprep.subr.bf16.mxu0 0
        %3665 = vmatpush1.bf16.msra.mxu0 0
        %3666 = vmatprep.subr.bf16.mxu0 0
        %3667 = vmatpush1.bf16.msra.mxu0 0
        %3668 = vmatprep.subr.bf16.mxu0 0
        %3669 = vmatpush1.bf16.msra.mxu0 0
        %3670 = vmatprep.subr.bf16.mxu0 0
        %3671 = vmatpush1.bf16.msra.mxu0 0
        %3672 = vmatprep.subr.bf16.mxu0 0
        %3673 = vmatpush1.bf16.msra.mxu0 0
        %3674 = vmatprep.subr.bf16.mxu0 0
        %3675 = vmatpush1.bf16.msra.mxu0 0
        %3676 = vmatprep.subr.bf16.mxu0 0
        %3677 = vmatpush1.bf16.msra.mxu0 0
        %3678 = vmatprep.subr.bf16.mxu0 0
        %3679 = vmatpush1.bf16.msra.mxu0 0
        %3680 = vmatprep.subr.bf16.mxu0 0
        %3681 = vmatpush1.bf16.msra.mxu0 0
        %3682 = vmatprep.mubr.bf16.mxu0 0
        %3683 = vmatmul.mubr.bf16.gmra.mrb[0].mxu0 %v3648
        %v3684 = vpop.f32.mrb[0].mxu0
        %v3685 = vadd.f32 0.0, %v3684
        %v3686 = vpop.f32.mrb[0].mxu0
        %v3687 = vpop.f32.mrb[0].mxu0
        %v3688 = vpop.f32.mrb[0].mxu0
        %3689 = vdwg.mxu0
        %v3690 = vadd.f32 %v3645, %v3685
        %v3691 = vld [vmem:[%s1146] sm:$0xf]
        %v3693 = vsel %vm216, %v3691, 0
        %v3696 = vsel %vm220, %v210, 0
        %3698 = vmatprep.subr.bf16.mxu0 0
        %3699 = vmatpush1.bf16.msra.mxu0 %v3696
        %3700 = vmatprep.subr.bf16.mxu0 0
        %3701 = vmatpush1.bf16.msra.mxu0 0
        %3702 = vmatprep.subr.bf16.mxu0 0
        %3703 = vmatpush1.bf16.msra.mxu0 0
        %3704 = vmatprep.subr.bf16.mxu0 0
        %3705 = vmatpush1.bf16.msra.mxu0 0
        %3706 = vmatprep.subr.bf16.mxu0 0
        %3707 = vmatpush1.bf16.msra.mxu0 0
        %3708 = vmatprep.subr.bf16.mxu0 0
        %3709 = vmatpush1.bf16.msra.mxu0 0
        %3710 = vmatprep.subr.bf16.mxu0 0
        %3711 = vmatpush1.bf16.msra.mxu0 0
        %3712 = vmatprep.subr.bf16.mxu0 0
        %3713 = vmatpush1.bf16.msra.mxu0 0
        %3714 = vmatprep.subr.bf16.mxu0 0
        %3715 = vmatpush1.bf16.msra.mxu0 0
        %3716 = vmatprep.subr.bf16.mxu0 0
        %3717 = vmatpush1.bf16.msra.mxu0 0
        %3718 = vmatprep.subr.bf16.mxu0 0
        %3719 = vmatpush1.bf16.msra.mxu0 0
        %3720 = vmatprep.subr.bf16.mxu0 0
        %3721 = vmatpush1.bf16.msra.mxu0 0
        %3722 = vmatprep.subr.bf16.mxu0 0
        %3723 = vmatpush1.bf16.msra.mxu0 0
        %3724 = vmatprep.subr.bf16.mxu0 0
        %3725 = vmatpush1.bf16.msra.mxu0 0
        %3726 = vmatprep.subr.bf16.mxu0 0
        %3727 = vmatpush1.bf16.msra.mxu0 0
        %3728 = vmatprep.subr.bf16.mxu0 0
        %3729 = vmatpush1.bf16.msra.mxu0 0
        %3730 = vmatprep.mubr.bf16.mxu0 0
        %3731 = vmatmul.mubr.bf16.gmra.mrb[0].mxu0 %v3693
        %v3732 = vpop.f32.mrb[0].mxu0
        %v3733 = vadd.f32 0.0, %v3732
        %v3734 = vpop.f32.mrb[0].mxu0
        %v3735 = vpop.f32.mrb[0].mxu0
        %v3736 = vpop.f32.mrb[0].mxu0
        %3737 = vdwg.mxu0
        %v3738 = vadd.f32 %v3690, %v3733
        %v3741 = vunpack.c.l.s4 1983009808
        %v3742 = vunpack.c.0.s8 %v3741
        %v3743 = vlaneseq
        %v3744 = vshrl.u32 %v3743, 7
        %v3745 = vsub.s32 %v3742, %v3744
        %v3746 = vrot.slane %v210, %v3745
        %3747 = vrot.lane.b32.xlu0 %v3746, 127
        %v3748 = vpop.permute.xlu0 %3747
        %v3750 = vld [vmem:[%s1206] sm:$0xf]
        %v3752 = vsel %vm216, %v3750, 0
        %v3754 = vsel %vm220, %v3748, 0
        %3756 = vmatprep.subr.bf16.mxu0 0
        %3757 = vmatpush1.bf16.msra.mxu0 %v3754
        %3758 = vmatprep.subr.bf16.mxu0 0
        %3759 = vmatpush1.bf16.msra.mxu0 0
        %3760 = vmatprep.subr.bf16.mxu0 0
        %3761 = vmatpush1.bf16.msra.mxu0 0
        %3762 = vmatprep.subr.bf16.mxu0 0
        %3763 = vmatpush1.bf16.msra.mxu0 0
        %3764 = vmatprep.subr.bf16.mxu0 0
        %3765 = vmatpush1.bf16.msra.mxu0 0
        %3766 = vmatprep.subr.bf16.mxu0 0
        %3767 = vmatpush1.bf16.msra.mxu0 0
        %3768 = vmatprep.subr.bf16.mxu0 0
        %3769 = vmatpush1.bf16.msra.mxu0 0
        %3770 = vmatprep.subr.bf16.mxu0 0
        %3771 = vmatpush1.bf16.msra.mxu0 0
        %3772 = vmatprep.subr.bf16.mxu0 0
        %3773 = vmatpush1.bf16.msra.mxu0 0
        %3774 = vmatprep.subr.bf16.mxu0 0
        %3775 = vmatpush1.bf16.msra.mxu0 0
        %3776 = vmatprep.subr.bf16.mxu0 0
        %3777 = vmatpush1.bf16.msra.mxu0 0
        %3778 = vmatprep.subr.bf16.mxu0 0
        %3779 = vmatpush1.bf16.msra.mxu0 0
        %3780 = vmatprep.subr.bf16.mxu0 0
        %3781 = vmatpush1.bf16.msra.mxu0 0
        %3782 = vmatprep.subr.bf16.mxu0 0
        %3783 = vmatpush1.bf16.msra.mxu0 0
        %3784 = vmatprep.subr.bf16.mxu0 0
        %3785 = vmatpush1.bf16.msra.mxu0 0
        %3786 = vmatprep.subr.bf16.mxu0 0
        %3787 = vmatpush1.bf16.msra.mxu0 0
        %3788 = vmatprep.mubr.bf16.mxu0 0
        %3789 = vmatmul.mubr.bf16.gmra.mrb[0].mxu0 %v3752
        %v3790 = vpop.f32.mrb[0].mxu0
        %v3791 = vadd.f32 0.0, %v3790
        %v3792 = vpop.f32.mrb[0].mxu0
        %v3793 = vpop.f32.mrb[0].mxu0
        %v3794 = vpop.f32.mrb[0].mxu0
        %3795 = vdwg.mxu0
        %v3796 = vadd.f32 %v3738, %v3791
        %3797 = vrot.lane.b32.xlu0 %v3746, 126
        %v3798 = vpop.permute.xlu0 %3797
        %v3800 = vld [vmem:[%s1257] sm:$0xf]
        %v3802 = vsel %vm216, %v3800, 0
        %v3804 = vsel %vm220, %v3798, 0
        %3806 = vmatprep.subr.bf16.mxu0 0
        %3807 = vmatpush1.bf16.msra.mxu0 %v3804
        %3808 = vmatprep.subr.bf16.mxu0 0
        %3809 = vmatpush1.bf16.msra.mxu0 0
        %3810 = vmatprep.subr.bf16.mxu0 0
        %3811 = vmatpush1.bf16.msra.mxu0 0
        %3812 = vmatprep.subr.bf16.mxu0 0
        %3813 = vmatpush1.bf16.msra.mxu0 0
        %3814 = vmatprep.subr.bf16.mxu0 0
        %3815 = vmatpush1.bf16.msra.mxu0 0
        %3816 = vmatprep.subr.bf16.mxu0 0
        %3817 = vmatpush1.bf16.msra.mxu0 0
        %3818 = vmatprep.subr.bf16.mxu0 0
        %3819 = vmatpush1.bf16.msra.mxu0 0
        %3820 = vmatprep.subr.bf16.mxu0 0
        %3821 = vmatpush1.bf16.msra.mxu0 0
        %3822 = vmatprep.subr.bf16.mxu0 0
        %3823 = vmatpush1.bf16.msra.mxu0 0
        %3824 = vmatprep.subr.bf16.mxu0 0
        %3825 = vmatpush1.bf16.msra.mxu0 0
        %3826 = vmatprep.subr.bf16.mxu0 0
        %3827 = vmatpush1.bf16.msra.mxu0 0
        %3828 = vmatprep.subr.bf16.mxu0 0
        %3829 = vmatpush1.bf16.msra.mxu0 0
        %3830 = vmatprep.subr.bf16.mxu0 0
        %3831 = vmatpush1.bf16.msra.mxu0 0
        %3832 = vmatprep.subr.bf16.mxu0 0
        %3833 = vmatpush1.bf16.msra.mxu0 0
        %3834 = vmatprep.subr.bf16.mxu0 0
        %3835 = vmatpush1.bf16.msra.mxu0 0
        %3836 = vmatprep.subr.bf16.mxu0 0
        %3837 = vmatpush1.bf16.msra.mxu0 0
        %3838 = vmatprep.mubr.bf16.mxu0 0
        %3839 = vmatmul.mubr.bf16.gmra.mrb[0].mxu0 %v3802
        %v3840 = vpop.f32.mrb[0].mxu0
        %v3841 = vadd.f32 0.0, %v3840
        %v3842 = vpop.f32.mrb[0].mxu0
        %v3843 = vpop.f32.mrb[0].mxu0
        %v3844 = vpop.f32.mrb[0].mxu0
        %3845 = vdwg.mxu0
        %v3846 = vadd.f32 %v3796, %v3841
        %3847 = vrot.lane.b32.xlu0 %v3746, 118
        %v3848 = vpop.permute.xlu0 %3847
        %v3850 = vld [vmem:[%s1308] sm:$0xf]
        %v3852 = vsel %vm216, %v3850, 0
        %v3854 = vsel %vm220, %v3848, 0
        %3856 = vmatprep.subr.bf16.mxu0 0
        %3857 = vmatpush1.bf16.msra.mxu0 %v3854
        %3858 = vmatprep.subr.bf16.mxu0 0
        %3859 = vmatpush1.bf16.msra.mxu0 0
        %3860 = vmatprep.subr.bf16.mxu0 0
        %3861 = vmatpush1.bf16.msra.mxu0 0
        %3862 = vmatprep.subr.bf16.mxu0 0
        %3863 = vmatpush1.bf16.msra.mxu0 0
        %3864 = vmatprep.subr.bf16.mxu0 0
        %3865 = vmatpush1.bf16.msra.mxu0 0
        %3866 = vmatprep.subr.bf16.mxu0 0
        %3867 = vmatpush1.bf16.msra.mxu0 0
        %3868 = vmatprep.subr.bf16.mxu0 0
        %3869 = vmatpush1.bf16.msra.mxu0 0
        %3870 = vmatprep.subr.bf16.mxu0 0
        %3871 = vmatpush1.bf16.msra.mxu0 0
        %3872 = vmatprep.subr.bf16.mxu0 0
        %3873 = vmatpush1.bf16.msra.mxu0 0
        %3874 = vmatprep.subr.bf16.mxu0 0
        %3875 = vmatpush1.bf16.msra.mxu0 0
        %3876 = vmatprep.subr.bf16.mxu0 0
        %3877 = vmatpush1.bf16.msra.mxu0 0
        %3878 = vmatprep.subr.bf16.mxu0 0
        %3879 = vmatpush1.bf16.msra.mxu0 0
        %3880 = vmatprep.subr.bf16.mxu0 0
        %3881 = vmatpush1.bf16.msra.mxu0 0
        %3882 = vmatprep.subr.bf16.mxu0 0
        %3883 = vmatpush1.bf16.msra.mxu0 0
        %3884 = vmatprep.subr.bf16.mxu0 0
        %3885 = vmatpush1.bf16.msra.mxu0 0
        %3886 = vmatprep.subr.bf16.mxu0 0
        %3887 = vmatpush1.bf16.msra.mxu0 0
        %3888 = vmatprep.mubr.bf16.mxu0 0
        %3889 = vmatmul.mubr.bf16.gmra.mrb[0].mxu0 %v3852
        %v3890 = vpop.f32.mrb[0].mxu0
        %v3891 = vadd.f32 0.0, %v3890
        %v3892 = vpop.f32.mrb[0].mxu0
        %v3893 = vpop.f32.mrb[0].mxu0
        %v3894 = vpop.f32.mrb[0].mxu0
        %3895 = vdwg.mxu0
        %v3896 = vadd.f32 %v3846, %v3891
        %3897 = vrot.lane.b32.xlu0 %v3746, 117
        %v3898 = vpop.permute.xlu0 %3897
        %v3900 = vld [vmem:[%s1359] sm:$0xf]
        %v3902 = vsel %vm216, %v3900, 0
        %v3904 = vsel %vm220, %v3898, 0
        %3906 = vmatprep.subr.bf16.mxu0 0
        %3907 = vmatpush1.bf16.msra.mxu0 %v3904
        %3908 = vmatprep.subr.bf16.mxu0 0
        %3909 = vmatpush1.bf16.msra.mxu0 0
        %3910 = vmatprep.subr.bf16.mxu0 0
        %3911 = vmatpush1.bf16.msra.mxu0 0
        %3912 = vmatprep.subr.bf16.mxu0 0
        %3913 = vmatpush1.bf16.msra.mxu0 0
        %3914 = vmatprep.subr.bf16.mxu0 0
        %3915 = vmatpush1.bf16.msra.mxu0 0
        %3916 = vmatprep.subr.bf16.mxu0 0
        %3917 = vmatpush1.bf16.msra.mxu0 0
        %3918 = vmatprep.subr.bf16.mxu0 0
        %3919 = vmatpush1.bf16.msra.mxu0 0
        %3920 = vmatprep.subr.bf16.mxu0 0
        %3921 = vmatpush1.bf16.msra.mxu0 0
        %3922 = vmatprep.subr.bf16.mxu0 0
        %3923 = vmatpush1.bf16.msra.mxu0 0
        %3924 = vmatprep.subr.bf16.mxu0 0
        %3925 = vmatpush1.bf16.msra.mxu0 0
        %3926 = vmatprep.subr.bf16.mxu0 0
        %3927 = vmatpush1.bf16.msra.mxu0 0
        %3928 = vmatprep.subr.bf16.mxu0 0
        %3929 = vmatpush1.bf16.msra.mxu0 0
        %3930 = vmatprep.subr.bf16.mxu0 0
        %3931 = vmatpush1.bf16.msra.mxu0 0
        %3932 = vmatprep.subr.bf16.mxu0 0
        %3933 = vmatpush1.bf16.msra.mxu0 0
        %3934 = vmatprep.subr.bf16.mxu0 0
        %3935 = vmatpush1.bf16.msra.mxu0 0
        %3936 = vmatprep.subr.bf16.mxu0 0
        %3937 = vmatpush1.bf16.msra.mxu0 0
        %3938 = vmatprep.mubr.bf16.mxu0 0
        %3939 = vmatmul.mubr.bf16.gmra.mrb[0].mxu0 %v3902
        %v3940 = vpop.f32.mrb[0].mxu0
        %v3941 = vadd.f32 0.0, %v3940
        %v3942 = vpop.f32.mrb[0].mxu0
        %v3943 = vpop.f32.mrb[0].mxu0
        %v3944 = vpop.f32.mrb[0].mxu0
        %3945 = vdwg.mxu0
        %v3946 = vadd.f32 %v3896, %v3941
        %3947 = vrot.lane.b32.xlu0 %v3746, 116
        %v3948 = vpop.permute.xlu0 %3947
        %v3950 = vld [vmem:[%s1410] sm:$0xf]
        %v3952 = vsel %vm216, %v3950, 0
        %v3954 = vsel %vm220, %v3948, 0
        %3956 = vmatprep.subr.bf16.mxu0 0
        %3957 = vmatpush1.bf16.msra.mxu0 %v3954
        %3958 = vmatprep.subr.bf16.mxu0 0
        %3959 = vmatpush1.bf16.msra.mxu0 0
        %3960 = vmatprep.subr.bf16.mxu0 0
        %3961 = vmatpush1.bf16.msra.mxu0 0
        %3962 = vmatprep.subr.bf16.mxu0 0
        %3963 = vmatpush1.bf16.msra.mxu0 0
        %3964 = vmatprep.subr.bf16.mxu0 0
        %3965 = vmatpush1.bf16.msra.mxu0 0
        %3966 = vmatprep.subr.bf16.mxu0 0
        %3967 = vmatpush1.bf16.msra.mxu0 0
        %3968 = vmatprep.subr.bf16.mxu0 0
        %3969 = vmatpush1.bf16.msra.mxu0 0
        %3970 = vmatprep.subr.bf16.mxu0 0
        %3971 = vmatpush1.bf16.msra.mxu0 0
        %3972 = vmatprep.subr.bf16.mxu0 0
        %3973 = vmatpush1.bf16.msra.mxu0 0
        %3974 = vmatprep.subr.bf16.mxu0 0
        %3975 = vmatpush1.bf16.msra.mxu0 0
        %3976 = vmatprep.subr.bf16.mxu0 0
        %3977 = vmatpush1.bf16.msra.mxu0 0
        %3978 = vmatprep.subr.bf16.mxu0 0
        %3979 = vmatpush1.bf16.msra.mxu0 0
        %3980 = vmatprep.subr.bf16.mxu0 0
        %3981 = vmatpush1.bf16.msra.mxu0 0
        %3982 = vmatprep.subr.bf16.mxu0 0
        %3983 = vmatpush1.bf16.msra.mxu0 0
        %3984 = vmatprep.subr.bf16.mxu0 0
        %3985 = vmatpush1.bf16.msra.mxu0 0
        %3986 = vmatprep.subr.bf16.mxu0 0
        %3987 = vmatpush1.bf16.msra.mxu0 0
        %3988 = vmatprep.mubr.bf16.mxu0 0
        %3989 = vmatmul.mubr.bf16.gmra.mrb[0].mxu0 %v3952
        %v3990 = vpop.f32.mrb[0].mxu0
        %v3991 = vadd.f32 0.0, %v3990
        %v3992 = vpop.f32.mrb[0].mxu0
        %v3993 = vpop.f32.mrb[0].mxu0
        %v3994 = vpop.f32.mrb[0].mxu0
        %3995 = vdwg.mxu0
        %v3996 = vadd.f32 %v3946, %v3991
        %3997 = vrot.lane.b32.xlu0 %v3746, 108
        %v3998 = vpop.permute.xlu0 %3997
        %v4000 = vld [vmem:[%s1461] sm:$0xf]
        %v4002 = vsel %vm216, %v4000, 0
        %v4004 = vsel %vm220, %v3998, 0
        %4006 = vmatprep.subr.bf16.mxu0 0
        %4007 = vmatpush1.bf16.msra.mxu0 %v4004
        %4008 = vmatprep.subr.bf16.mxu0 0
        %4009 = vmatpush1.bf16.msra.mxu0 0
        %4010 = vmatprep.subr.bf16.mxu0 0
        %4011 = vmatpush1.bf16.msra.mxu0 0
        %4012 = vmatprep.subr.bf16.mxu0 0
        %4013 = vmatpush1.bf16.msra.mxu0 0
        %4014 = vmatprep.subr.bf16.mxu0 0
        %4015 = vmatpush1.bf16.msra.mxu0 0
        %4016 = vmatprep.subr.bf16.mxu0 0
        %4017 = vmatpush1.bf16.msra.mxu0 0
        %4018 = vmatprep.subr.bf16.mxu0 0
        %4019 = vmatpush1.bf16.msra.mxu0 0
        %4020 = vmatprep.subr.bf16.mxu0 0
        %4021 = vmatpush1.bf16.msra.mxu0 0
        %4022 = vmatprep.subr.bf16.mxu0 0
        %4023 = vmatpush1.bf16.msra.mxu0 0
        %4024 = vmatprep.subr.bf16.mxu0 0
        %4025 = vmatpush1.bf16.msra.mxu0 0
        %4026 = vmatprep.subr.bf16.mxu0 0
        %4027 = vmatpush1.bf16.msra.mxu0 0
        %4028 = vmatprep.subr.bf16.mxu0 0
        %4029 = vmatpush1.bf16.msra.mxu0 0
        %4030 = vmatprep.subr.bf16.mxu0 0
        %4031 = vmatpush1.bf16.msra.mxu0 0
        %4032 = vmatprep.subr.bf16.mxu0 0
        %4033 = vmatpush1.bf16.msra.mxu0 0
        %4034 = vmatprep.subr.bf16.mxu0 0
        %4035 = vmatpush1.bf16.msra.mxu0 0
        %4036 = vmatprep.subr.bf16.mxu0 0
        %4037 = vmatpush1.bf16.msra.mxu0 0
        %4038 = vmatprep.mubr.bf16.mxu0 0
        %4039 = vmatmul.mubr.bf16.gmra.mrb[0].mxu0 %v4002
        %v4040 = vpop.f32.mrb[0].mxu0
        %v4041 = vadd.f32 0.0, %v4040
        %v4042 = vpop.f32.mrb[0].mxu0
        %v4043 = vpop.f32.mrb[0].mxu0
        %v4044 = vpop.f32.mrb[0].mxu0
        %4045 = vdwg.mxu0
        %v4046 = vadd.f32 %v3996, %v4041
        %4047 = vrot.lane.b32.xlu0 %v3746, 107
        %v4048 = vpop.permute.xlu0 %4047
        %v4050 = vld [vmem:[%s1512] sm:$0xf]
        %v4052 = vsel %vm216, %v4050, 0
        %v4054 = vsel %vm220, %v4048, 0
        %4056 = vmatprep.subr.bf16.mxu0 0
        %4057 = vmatpush1.bf16.msra.mxu0 %v4054
        %4058 = vmatprep.subr.bf16.mxu0 0
        %4059 = vmatpush1.bf16.msra.mxu0 0
        %4060 = vmatprep.subr.bf16.mxu0 0
        %4061 = vmatpush1.bf16.msra.mxu0 0
        %4062 = vmatprep.subr.bf16.mxu0 0
        %4063 = vmatpush1.bf16.msra.mxu0 0
        %4064 = vmatprep.subr.bf16.mxu0 0
        %4065 = vmatpush1.bf16.msra.mxu0 0
        %4066 = vmatprep.subr.bf16.mxu0 0
        %4067 = vmatpush1.bf16.msra.mxu0 0
        %4068 = vmatprep.subr.bf16.mxu0 0
        %4069 = vmatpush1.bf16.msra.mxu0 0
        %4070 = vmatprep.subr.bf16.mxu0 0
        %4071 = vmatpush1.bf16.msra.mxu0 0
        %4072 = vmatprep.subr.bf16.mxu0 0
        %4073 = vmatpush1.bf16.msra.mxu0 0
        %4074 = vmatprep.subr.bf16.mxu0 0
        %4075 = vmatpush1.bf16.msra.mxu0 0
        %4076 = vmatprep.subr.bf16.mxu0 0
        %4077 = vmatpush1.bf16.msra.mxu0 0
        %4078 = vmatprep.subr.bf16.mxu0 0
        %4079 = vmatpush1.bf16.msra.mxu0 0
        %4080 = vmatprep.subr.bf16.mxu0 0
        %4081 = vmatpush1.bf16.msra.mxu0 0
        %4082 = vmatprep.subr.bf16.mxu0 0
        %4083 = vmatpush1.bf16.msra.mxu0 0
        %4084 = vmatprep.subr.bf16.mxu0 0
        %4085 = vmatpush1.bf16.msra.mxu0 0
        %4086 = vmatprep.subr.bf16.mxu0 0
        %4087 = vmatpush1.bf16.msra.mxu0 0
        %4088 = vmatprep.mubr.bf16.mxu0 0
        %4089 = vmatmul.mubr.bf16.gmra.mrb[0].mxu0 %v4052
        %v4090 = vpop.f32.mrb[0].mxu0
        %v4091 = vadd.f32 0.0, %v4090
        %v4092 = vpop.f32.mrb[0].mxu0
        %v4093 = vpop.f32.mrb[0].mxu0
        %v4094 = vpop.f32.mrb[0].mxu0
        %4095 = vdwg.mxu0
        %v4096 = vadd.f32 %v4046, %v4091
        %4097 = vrot.lane.b32.xlu0 %v3746, 106
        %v4098 = vpop.permute.xlu0 %4097
        %v4100 = vld [vmem:[%s1563] sm:$0xf]
        %v4102 = vsel %vm216, %v4100, 0
        %v4104 = vsel %vm220, %v4098, 0
        %4106 = vmatprep.subr.bf16.mxu0 0
        %4107 = vmatpush1.bf16.msra.mxu0 %v4104
        %4108 = vmatprep.subr.bf16.mxu0 0
        %4109 = vmatpush1.bf16.msra.mxu0 0
        %4110 = vmatprep.subr.bf16.mxu0 0
        %4111 = vmatpush1.bf16.msra.mxu0 0
        %4112 = vmatprep.subr.bf16.mxu0 0
        %4113 = vmatpush1.bf16.msra.mxu0 0
        %4114 = vmatprep.subr.bf16.mxu0 0
        %4115 = vmatpush1.bf16.msra.mxu0 0
        %4116 = vmatprep.subr.bf16.mxu0 0
        %4117 = vmatpush1.bf16.msra.mxu0 0
        %4118 = vmatprep.subr.bf16.mxu0 0
        %4119 = vmatpush1.bf16.msra.mxu0 0
        %4120 = vmatprep.subr.bf16.mxu0 0
        %4121 = vmatpush1.bf16.msra.mxu0 0
        %4122 = vmatprep.subr.bf16.mxu0 0
        %4123 = vmatpush1.bf16.msra.mxu0 0
        %4124 = vmatprep.subr.bf16.mxu0 0
        %4125 = vmatpush1.bf16.msra.mxu0 0
        %4126 = vmatprep.subr.bf16.mxu0 0
        %4127 = vmatpush1.bf16.msra.mxu0 0
        %4128 = vmatprep.subr.bf16.mxu0 0
        %4129 = vmatpush1.bf16.msra.mxu0 0
        %4130 = vmatprep.subr.bf16.mxu0 0
        %4131 = vmatpush1.bf16.msra.mxu0 0
        %4132 = vmatprep.subr.bf16.mxu0 0
        %4133 = vmatpush1.bf16.msra.mxu0 0
        %4134 = vmatprep.subr.bf16.mxu0 0
        %4135 = vmatpush1.bf16.msra.mxu0 0
        %4136 = vmatprep.subr.bf16.mxu0 0
        %4137 = vmatpush1.bf16.msra.mxu0 0
        %4138 = vmatprep.mubr.bf16.mxu0 0
        %4139 = vmatmul.mubr.bf16.gmra.mrb[0].mxu0 %v4102
        %v4140 = vpop.f32.mrb[0].mxu0
        %v4141 = vadd.f32 0.0, %v4140
        %v4142 = vpop.f32.mrb[0].mxu0
        %v4143 = vpop.f32.mrb[0].mxu0
        %v4144 = vpop.f32.mrb[0].mxu0
        %4145 = vdwg.mxu0
        %v4146 = vadd.f32 %v4096, %v4141
        %v4147 = vmax.f32 %v4146, 0.0
        %4148 = vst [vmem:[%s177 + $0x10] sm:$0xff] %v4147
        %v4149 = vld [vmem:[%s1] sm:$0xf]
        %v4151 = vsel %vm216, %v4149, 0
        %4153 = vmatprep.subr.bf16.mxu0 0
        %4154 = vmatpush1.bf16.msra.mxu0 %v2428
        %4155 = vmatprep.subr.bf16.mxu0 0
        %4156 = vmatpush1.bf16.msra.mxu0 0
        %4157 = vmatprep.subr.bf16.mxu0 0
        %4158 = vmatpush1.bf16.msra.mxu0 0
        %4159 = vmatprep.subr.bf16.mxu0 0
        %4160 = vmatpush1.bf16.msra.mxu0 0
        %4161 = vmatprep.subr.bf16.mxu0 0
        %4162 = vmatpush1.bf16.msra.mxu0 0
        %4163 = vmatprep.subr.bf16.mxu0 0
        %4164 = vmatpush1.bf16.msra.mxu0 0
        %4165 = vmatprep.subr.bf16.mxu0 0
        %4166 = vmatpush1.bf16.msra.mxu0 0
        %4167 = vmatprep.subr.bf16.mxu0 0
        %4168 = vmatpush1.bf16.msra.mxu0 0
        %4169 = vmatprep.subr.bf16.mxu0 0
        %4170 = vmatpush1.bf16.msra.mxu0 0
        %4171 = vmatprep.subr.bf16.mxu0 0
        %4172 = vmatpush1.bf16.msra.mxu0 0
        %4173 = vmatprep.subr.bf16.mxu0 0
        %4174 = vmatpush1.bf16.msra.mxu0 0
        %4175 = vmatprep.subr.bf16.mxu0 0
        %4176 = vmatpush1.bf16.msra.mxu0 0
        %4177 = vmatprep.subr.bf16.mxu0 0
        %4178 = vmatpush1.bf16.msra.mxu0 0
        %4179 = vmatprep.subr.bf16.mxu0 0
        %4180 = vmatpush1.bf16.msra.mxu0 0
        %4181 = vmatprep.subr.bf16.mxu0 0
        %4182 = vmatpush1.bf16.msra.mxu0 0
        %4183 = vmatprep.subr.bf16.mxu0 0
        %4184 = vmatpush1.bf16.msra.mxu0 0
        %4185 = vmatprep.mubr.bf16.mxu0 0
        %4186 = vmatmul.mubr.bf16.gmra.mrb[0].mxu0 %v4151
        %v4187 = vpop.f32.mrb[0].mxu0
        %v4188 = vadd.f32 0.0, %v4187
        %v4189 = vpop.f32.mrb[0].mxu0
        %v4190 = vpop.f32.mrb[0].mxu0
        %v4191 = vpop.f32.mrb[0].mxu0
        %4192 = vdwg.mxu0
        %v4193 = vadd.f32 %v190, %v4188
        %v4194 = vld [vmem:[%s276] sm:$0xf]
        %v4196 = vsel %vm216, %v4194, 0
        %4198 = vmatprep.subr.bf16.mxu0 0
        %4199 = vmatpush1.bf16.msra.mxu0 %v2486
        %4200 = vmatprep.subr.bf16.mxu0 0
        %4201 = vmatpush1.bf16.msra.mxu0 0
        %4202 = vmatprep.subr.bf16.mxu0 0
        %4203 = vmatpush1.bf16.msra.mxu0 0
        %4204 = vmatprep.subr.bf16.mxu0 0
        %4205 = vmatpush1.bf16.msra.mxu0 0
        %4206 = vmatprep.subr.bf16.mxu0 0
        %4207 = vmatpush1.bf16.msra.mxu0 0
        %4208 = vmatprep.subr.bf16.mxu0 0
        %4209 = vmatpush1.bf16.msra.mxu0 0
        %4210 = vmatprep.subr.bf16.mxu0 0
        %4211 = vmatpush1.bf16.msra.mxu0 0
        %4212 = vmatprep.subr.bf16.mxu0 0
        %4213 = vmatpush1.bf16.msra.mxu0 0
        %4214 = vmatprep.subr.bf16.mxu0 0
        %4215 = vmatpush1.bf16.msra.mxu0 0
        %4216 = vmatprep.subr.bf16.mxu0 0
        %4217 = vmatpush1.bf16.msra.mxu0 0
        %4218 = vmatprep.subr.bf16.mxu0 0
        %4219 = vmatpush1.bf16.msra.mxu0 0
        %4220 = vmatprep.subr.bf16.mxu0 0
        %4221 = vmatpush1.bf16.msra.mxu0 0
        %4222 = vmatprep.subr.bf16.mxu0 0
        %4223 = vmatpush1.bf16.msra.mxu0 0
        %4224 = vmatprep.subr.bf16.mxu0 0
        %4225 = vmatpush1.bf16.msra.mxu0 0
        %4226 = vmatprep.subr.bf16.mxu0 0
        %4227 = vmatpush1.bf16.msra.mxu0 0
        %4228 = vmatprep.subr.bf16.mxu0 0
        %4229 = vmatpush1.bf16.msra.mxu0 0
        %4230 = vmatprep.mubr.bf16.mxu0 0
        %4231 = vmatmul.mubr.bf16.gmra.mrb[0].mxu0 %v4196
        %v4232 = vpop.f32.mrb[0].mxu0
        %v4233 = vadd.f32 0.0, %v4232
        %v4234 = vpop.f32.mrb[0].mxu0
        %v4235 = vpop.f32.mrb[0].mxu0
        %v4236 = vpop.f32.mrb[0].mxu0
        %4237 = vdwg.mxu0
        %v4238 = vadd.f32 %v4193, %v4233
        %v4239 = vld [vmem:[%s327] sm:$0xf]
        %v4241 = vsel %vm216, %v4239, 0
        %4243 = vmatprep.subr.bf16.mxu0 0
        %4244 = vmatpush1.bf16.msra.mxu0 %v2536
        %4245 = vmatprep.subr.bf16.mxu0 0
        %4246 = vmatpush1.bf16.msra.mxu0 0
        %4247 = vmatprep.subr.bf16.mxu0 0
        %4248 = vmatpush1.bf16.msra.mxu0 0
        %4249 = vmatprep.subr.bf16.mxu0 0
        %4250 = vmatpush1.bf16.msra.mxu0 0
        %4251 = vmatprep.subr.bf16.mxu0 0
        %4252 = vmatpush1.bf16.msra.mxu0 0
        %4253 = vmatprep.subr.bf16.mxu0 0
        %4254 = vmatpush1.bf16.msra.mxu0 0
        %4255 = vmatprep.subr.bf16.mxu0 0
        %4256 = vmatpush1.bf16.msra.mxu0 0
        %4257 = vmatprep.subr.bf16.mxu0 0
        %4258 = vmatpush1.bf16.msra.mxu0 0
        %4259 = vmatprep.subr.bf16.mxu0 0
        %4260 = vmatpush1.bf16.msra.mxu0 0
        %4261 = vmatprep.subr.bf16.mxu0 0
        %4262 = vmatpush1.bf16.msra.mxu0 0
        %4263 = vmatprep.subr.bf16.mxu0 0
        %4264 = vmatpush1.bf16.msra.mxu0 0
        %4265 = vmatprep.subr.bf16.mxu0 0
        %4266 = vmatpush1.bf16.msra.mxu0 0
        %4267 = vmatprep.subr.bf16.mxu0 0
        %4268 = vmatpush1.bf16.msra.mxu0 0
        %4269 = vmatprep.subr.bf16.mxu0 0
        %4270 = vmatpush1.bf16.msra.mxu0 0
        %4271 = vmatprep.subr.bf16.mxu0 0
        %4272 = vmatpush1.bf16.msra.mxu0 0
        %4273 = vmatprep.subr.bf16.mxu0 0
        %4274 = vmatpush1.bf16.msra.mxu0 0
        %4275 = vmatprep.mubr.bf16.mxu0 0
        %4276 = vmatmul.mubr.bf16.gmra.mrb[0].mxu0 %v4241
        %v4277 = vpop.f32.mrb[0].mxu0
        %v4278 = vadd.f32 0.0, %v4277
        %v4279 = vpop.f32.mrb[0].mxu0
        %v4280 = vpop.f32.mrb[0].mxu0
        %v4281 = vpop.f32.mrb[0].mxu0
        %4282 = vdwg.mxu0
        %v4283 = vadd.f32 %v4238, %v4278
        %v4284 = vld [vmem:[%s378] sm:$0xf]
        %v4286 = vsel %vm216, %v4284, 0
        %4288 = vmatprep.subr.bf16.mxu0 0
        %4289 = vmatpush1.bf16.msra.mxu0 %v2586
        %4290 = vmatprep.subr.bf16.mxu0 0
        %4291 = vmatpush1.bf16.msra.mxu0 0
        %4292 = vmatprep.subr.bf16.mxu0 0
        %4293 = vmatpush1.bf16.msra.mxu0 0
        %4294 = vmatprep.subr.bf16.mxu0 0
        %4295 = vmatpush1.bf16.msra.mxu0 0
        %4296 = vmatprep.subr.bf16.mxu0 0
        %4297 = vmatpush1.bf16.msra.mxu0 0
        %4298 = vmatprep.subr.bf16.mxu0 0
        %4299 = vmatpush1.bf16.msra.mxu0 0
        %4300 = vmatprep.subr.bf16.mxu0 0
        %4301 = vmatpush1.bf16.msra.mxu0 0
        %4302 = vmatprep.subr.bf16.mxu0 0
        %4303 = vmatpush1.bf16.msra.mxu0 0
        %4304 = vmatprep.subr.bf16.mxu0 0
        %4305 = vmatpush1.bf16.msra.mxu0 0
        %4306 = vmatprep.subr.bf16.mxu0 0
        %4307 = vmatpush1.bf16.msra.mxu0 0
        %4308 = vmatprep.subr.bf16.mxu0 0
        %4309 = vmatpush1.bf16.msra.mxu0 0
        %4310 = vmatprep.subr.bf16.mxu0 0
        %4311 = vmatpush1.bf16.msra.mxu0 0
        %4312 = vmatprep.subr.bf16.mxu0 0
        %4313 = vmatpush1.bf16.msra.mxu0 0
        %4314 = vmatprep.subr.bf16.mxu0 0
        %4315 = vmatpush1.bf16.msra.mxu0 0
        %4316 = vmatprep.subr.bf16.mxu0 0
        %4317 = vmatpush1.bf16.msra.mxu0 0
        %4318 = vmatprep.subr.bf16.mxu0 0
        %4319 = vmatpush1.bf16.msra.mxu0 0
        %4320 = vmatprep.mubr.bf16.mxu0 0
        %4321 = vmatmul.mubr.bf16.gmra.mrb[0].mxu0 %v4286
        %v4322 = vpop.f32.mrb[0].mxu0
        %v4323 = vadd.f32 0.0, %v4322
        %v4324 = vpop.f32.mrb[0].mxu0
        %v4325 = vpop.f32.mrb[0].mxu0
        %v4326 = vpop.f32.mrb[0].mxu0
        %4327 = vdwg.mxu0
        %v4328 = vadd.f32 %v4283, %v4323
        %v4329 = vld [vmem:[%s429] sm:$0xf]
        %v4331 = vsel %vm216, %v4329, 0
        %4333 = vmatprep.subr.bf16.mxu0 0
        %4334 = vmatpush1.bf16.msra.mxu0 %v2636
        %4335 = vmatprep.subr.bf16.mxu0 0
        %4336 = vmatpush1.bf16.msra.mxu0 0
        %4337 = vmatprep.subr.bf16.mxu0 0
        %4338 = vmatpush1.bf16.msra.mxu0 0
        %4339 = vmatprep.subr.bf16.mxu0 0
        %4340 = vmatpush1.bf16.msra.mxu0 0
        %4341 = vmatprep.subr.bf16.mxu0 0
        %4342 = vmatpush1.bf16.msra.mxu0 0
        %4343 = vmatprep.subr.bf16.mxu0 0
        %4344 = vmatpush1.bf16.msra.mxu0 0
        %4345 = vmatprep.subr.bf16.mxu0 0
        %4346 = vmatpush1.bf16.msra.mxu0 0
        %4347 = vmatprep.subr.bf16.mxu0 0
        %4348 = vmatpush1.bf16.msra.mxu0 0
        %4349 = vmatprep.subr.bf16.mxu0 0
        %4350 = vmatpush1.bf16.msra.mxu0 0
        %4351 = vmatprep.subr.bf16.mxu0 0
        %4352 = vmatpush1.bf16.msra.mxu0 0
        %4353 = vmatprep.subr.bf16.mxu0 0
        %4354 = vmatpush1.bf16.msra.mxu0 0
        %4355 = vmatprep.subr.bf16.mxu0 0
        %4356 = vmatpush1.bf16.msra.mxu0 0
        %4357 = vmatprep.subr.bf16.mxu0 0
        %4358 = vmatpush1.bf16.msra.mxu0 0
        %4359 = vmatprep.subr.bf16.mxu0 0
        %4360 = vmatpush1.bf16.msra.mxu0 0
        %4361 = vmatprep.subr.bf16.mxu0 0
        %4362 = vmatpush1.bf16.msra.mxu0 0
        %4363 = vmatprep.subr.bf16.mxu0 0
        %4364 = vmatpush1.bf16.msra.mxu0 0
        %4365 = vmatprep.mubr.bf16.mxu0 0
        %4366 = vmatmul.mubr.bf16.gmra.mrb[0].mxu0 %v4331
        %v4367 = vpop.f32.mrb[0].mxu0
        %v4368 = vadd.f32 0.0, %v4367
        %v4369 = vpop.f32.mrb[0].mxu0
        %v4370 = vpop.f32.mrb[0].mxu0
        %v4371 = vpop.f32.mrb[0].mxu0
        %4372 = vdwg.mxu0
        %v4373 = vadd.f32 %v4328, %v4368
        %v4374 = vld [vmem:[%s480] sm:$0xf]
        %v4376 = vsel %vm216, %v4374, 0
        %4378 = vmatprep.subr.bf16.mxu0 0
        %4379 = vmatpush1.bf16.msra.mxu0 %v2686
        %4380 = vmatprep.subr.bf16.mxu0 0
        %4381 = vmatpush1.bf16.msra.mxu0 0
        %4382 = vmatprep.subr.bf16.mxu0 0
        %4383 = vmatpush1.bf16.msra.mxu0 0
        %4384 = vmatprep.subr.bf16.mxu0 0
        %4385 = vmatpush1.bf16.msra.mxu0 0
        %4386 = vmatprep.subr.bf16.mxu0 0
        %4387 = vmatpush1.bf16.msra.mxu0 0
        %4388 = vmatprep.subr.bf16.mxu0 0
        %4389 = vmatpush1.bf16.msra.mxu0 0
        %4390 = vmatprep.subr.bf16.mxu0 0
        %4391 = vmatpush1.bf16.msra.mxu0 0
        %4392 = vmatprep.subr.bf16.mxu0 0
        %4393 = vmatpush1.bf16.msra.mxu0 0
        %4394 = vmatprep.subr.bf16.mxu0 0
        %4395 = vmatpush1.bf16.msra.mxu0 0
        %4396 = vmatprep.subr.bf16.mxu0 0
        %4397 = vmatpush1.bf16.msra.mxu0 0
        %4398 = vmatprep.subr.bf16.mxu0 0
        %4399 = vmatpush1.bf16.msra.mxu0 0
        %4400 = vmatprep.subr.bf16.mxu0 0
        %4401 = vmatpush1.bf16.msra.mxu0 0
        %4402 = vmatprep.subr.bf16.mxu0 0
        %4403 = vmatpush1.bf16.msra.mxu0 0
        %4404 = vmatprep.subr.bf16.mxu0 0
        %4405 = vmatpush1.bf16.msra.mxu0 0
        %4406 = vmatprep.subr.bf16.mxu0 0
        %4407 = vmatpush1.bf16.msra.mxu0 0
        %4408 = vmatprep.subr.bf16.mxu0 0
        %4409 = vmatpush1.bf16.msra.mxu0 0
        %4410 = vmatprep.mubr.bf16.mxu0 0
        %4411 = vmatmul.mubr.bf16.gmra.mrb[0].mxu0 %v4376
        %v4412 = vpop.f32.mrb[0].mxu0
        %v4413 = vadd.f32 0.0, %v4412
        %v4414 = vpop.f32.mrb[0].mxu0
        %v4415 = vpop.f32.mrb[0].mxu0
        %v4416 = vpop.f32.mrb[0].mxu0
        %4417 = vdwg.mxu0
        %v4418 = vadd.f32 %v4373, %v4413
        %v4419 = vld [vmem:[%s531] sm:$0xf]
        %v4421 = vsel %vm216, %v4419, 0
        %4423 = vmatprep.subr.bf16.mxu0 0
        %4424 = vmatpush1.bf16.msra.mxu0 %v2736
        %4425 = vmatprep.subr.bf16.mxu0 0
        %4426 = vmatpush1.bf16.msra.mxu0 0
        %4427 = vmatprep.subr.bf16.mxu0 0
        %4428 = vmatpush1.bf16.msra.mxu0 0
        %4429 = vmatprep.subr.bf16.mxu0 0
        %4430 = vmatpush1.bf16.msra.mxu0 0
        %4431 = vmatprep.subr.bf16.mxu0 0
        %4432 = vmatpush1.bf16.msra.mxu0 0
        %4433 = vmatprep.subr.bf16.mxu0 0
        %4434 = vmatpush1.bf16.msra.mxu0 0
        %4435 = vmatprep.subr.bf16.mxu0 0
        %4436 = vmatpush1.bf16.msra.mxu0 0
        %4437 = vmatprep.subr.bf16.mxu0 0
        %4438 = vmatpush1.bf16.msra.mxu0 0
        %4439 = vmatprep.subr.bf16.mxu0 0
        %4440 = vmatpush1.bf16.msra.mxu0 0
        %4441 = vmatprep.subr.bf16.mxu0 0
        %4442 = vmatpush1.bf16.msra.mxu0 0
        %4443 = vmatprep.subr.bf16.mxu0 0
        %4444 = vmatpush1.bf16.msra.mxu0 0
        %4445 = vmatprep.subr.bf16.mxu0 0
        %4446 = vmatpush1.bf16.msra.mxu0 0
        %4447 = vmatprep.subr.bf16.mxu0 0
        %4448 = vmatpush1.bf16.msra.mxu0 0
        %4449 = vmatprep.subr.bf16.mxu0 0
        %4450 = vmatpush1.bf16.msra.mxu0 0
        %4451 = vmatprep.subr.bf16.mxu0 0
        %4452 = vmatpush1.bf16.msra.mxu0 0
        %4453 = vmatprep.subr.bf16.mxu0 0
        %4454 = vmatpush1.bf16.msra.mxu0 0
        %4455 = vmatprep.mubr.bf16.mxu0 0
        %4456 = vmatmul.mubr.bf16.gmra.mrb[0].mxu0 %v4421
        %v4457 = vpop.f32.mrb[0].mxu0
        %v4458 = vadd.f32 0.0, %v4457
        %v4459 = vpop.f32.mrb[0].mxu0
        %v4460 = vpop.f32.mrb[0].mxu0
        %v4461 = vpop.f32.mrb[0].mxu0
        %4462 = vdwg.mxu0
        %v4463 = vadd.f32 %v4418, %v4458
        %v4464 = vld [vmem:[%s582] sm:$0xf]
        %v4466 = vsel %vm216, %v4464, 0
        %4468 = vmatprep.subr.bf16.mxu0 0
        %4469 = vmatpush1.bf16.msra.mxu0 %v2786
        %4470 = vmatprep.subr.bf16.mxu0 0
        %4471 = vmatpush1.bf16.msra.mxu0 0
        %4472 = vmatprep.subr.bf16.mxu0 0
        %4473 = vmatpush1.bf16.msra.mxu0 0
        %4474 = vmatprep.subr.bf16.mxu0 0
        %4475 = vmatpush1.bf16.msra.mxu0 0
        %4476 = vmatprep.subr.bf16.mxu0 0
        %4477 = vmatpush1.bf16.msra.mxu0 0
        %4478 = vmatprep.subr.bf16.mxu0 0
        %4479 = vmatpush1.bf16.msra.mxu0 0
        %4480 = vmatprep.subr.bf16.mxu0 0
        %4481 = vmatpush1.bf16.msra.mxu0 0
        %4482 = vmatprep.subr.bf16.mxu0 0
        %4483 = vmatpush1.bf16.msra.mxu0 0
        %4484 = vmatprep.subr.bf16.mxu0 0
        %4485 = vmatpush1.bf16.msra.mxu0 0
        %4486 = vmatprep.subr.bf16.mxu0 0
        %4487 = vmatpush1.bf16.msra.mxu0 0
        %4488 = vmatprep.subr.bf16.mxu0 0
        %4489 = vmatpush1.bf16.msra.mxu0 0
        %4490 = vmatprep.subr.bf16.mxu0 0
        %4491 = vmatpush1.bf16.msra.mxu0 0
        %4492 = vmatprep.subr.bf16.mxu0 0
        %4493 = vmatpush1.bf16.msra.mxu0 0
        %4494 = vmatprep.subr.bf16.mxu0 0
        %4495 = vmatpush1.bf16.msra.mxu0 0
        %4496 = vmatprep.subr.bf16.mxu0 0
        %4497 = vmatpush1.bf16.msra.mxu0 0
        %4498 = vmatprep.subr.bf16.mxu0 0
        %4499 = vmatpush1.bf16.msra.mxu0 0
        %4500 = vmatprep.mubr.bf16.mxu0 0
        %4501 = vmatmul.mubr.bf16.gmra.mrb[0].mxu0 %v4466
        %v4502 = vpop.f32.mrb[0].mxu0
        %v4503 = vadd.f32 0.0, %v4502
        %v4504 = vpop.f32.mrb[0].mxu0
        %v4505 = vpop.f32.mrb[0].mxu0
        %v4506 = vpop.f32.mrb[0].mxu0
        %4507 = vdwg.mxu0
        %v4508 = vadd.f32 %v4463, %v4503
        %v4509 = vld [vmem:[%s633] sm:$0xf]
        %v4511 = vsel %vm216, %v4509, 0
        %4513 = vmatprep.subr.bf16.mxu0 0
        %4514 = vmatpush1.bf16.msra.mxu0 %v2836
        %4515 = vmatprep.subr.bf16.mxu0 0
        %4516 = vmatpush1.bf16.msra.mxu0 0
        %4517 = vmatprep.subr.bf16.mxu0 0
        %4518 = vmatpush1.bf16.msra.mxu0 0
        %4519 = vmatprep.subr.bf16.mxu0 0
        %4520 = vmatpush1.bf16.msra.mxu0 0
        %4521 = vmatprep.subr.bf16.mxu0 0
        %4522 = vmatpush1.bf16.msra.mxu0 0
        %4523 = vmatprep.subr.bf16.mxu0 0
        %4524 = vmatpush1.bf16.msra.mxu0 0
        %4525 = vmatprep.subr.bf16.mxu0 0
        %4526 = vmatpush1.bf16.msra.mxu0 0
        %4527 = vmatprep.subr.bf16.mxu0 0
        %4528 = vmatpush1.bf16.msra.mxu0 0
        %4529 = vmatprep.subr.bf16.mxu0 0
        %4530 = vmatpush1.bf16.msra.mxu0 0
        %4531 = vmatprep.subr.bf16.mxu0 0
        %4532 = vmatpush1.bf16.msra.mxu0 0
        %4533 = vmatprep.subr.bf16.mxu0 0
        %4534 = vmatpush1.bf16.msra.mxu0 0
        %4535 = vmatprep.subr.bf16.mxu0 0
        %4536 = vmatpush1.bf16.msra.mxu0 0
        %4537 = vmatprep.subr.bf16.mxu0 0
        %4538 = vmatpush1.bf16.msra.mxu0 0
        %4539 = vmatprep.subr.bf16.mxu0 0
        %4540 = vmatpush1.bf16.msra.mxu0 0
        %4541 = vmatprep.subr.bf16.mxu0 0
        %4542 = vmatpush1.bf16.msra.mxu0 0
        %4543 = vmatprep.subr.bf16.mxu0 0
        %4544 = vmatpush1.bf16.msra.mxu0 0
        %4545 = vmatprep.mubr.bf16.mxu0 0
        %4546 = vmatmul.mubr.bf16.gmra.mrb[0].mxu0 %v4511
        %v4547 = vpop.f32.mrb[0].mxu0
        %v4548 = vadd.f32 0.0, %v4547
        %v4549 = vpop.f32.mrb[0].mxu0
        %v4550 = vpop.f32.mrb[0].mxu0
        %v4551 = vpop.f32.mrb[0].mxu0
        %4552 = vdwg.mxu0
        %v4553 = vadd.f32 %v4508, %v4548
        %v4554 = vld [vmem:[%s681] sm:$0xf]
        %v4556 = vsel %vm216, %v4554, 0
        %4558 = vmatprep.subr.bf16.mxu0 0
        %4559 = vmatpush1.bf16.msra.mxu0 %v3696
        %4560 = vmatprep.subr.bf16.mxu0 0
        %4561 = vmatpush1.bf16.msra.mxu0 0
        %4562 = vmatprep.subr.bf16.mxu0 0
        %4563 = vmatpush1.bf16.msra.mxu0 0
        %4564 = vmatprep.subr.bf16.mxu0 0
        %4565 = vmatpush1.bf16.msra.mxu0 0
        %4566 = vmatprep.subr.bf16.mxu0 0
        %4567 = vmatpush1.bf16.msra.mxu0 0
        %4568 = vmatprep.subr.bf16.mxu0 0
        %4569 = vmatpush1.bf16.msra.mxu0 0
        %4570 = vmatprep.subr.bf16.mxu0 0
        %4571 = vmatpush1.bf16.msra.mxu0 0
        %4572 = vmatprep.subr.bf16.mxu0 0
        %4573 = vmatpush1.bf16.msra.mxu0 0
        %4574 = vmatprep.subr.bf16.mxu0 0
        %4575 = vmatpush1.bf16.msra.mxu0 0
        %4576 = vmatprep.subr.bf16.mxu0 0
        %4577 = vmatpush1.bf16.msra.mxu0 0
        %4578 = vmatprep.subr.bf16.mxu0 0
        %4579 = vmatpush1.bf16.msra.mxu0 0
        %4580 = vmatprep.subr.bf16.mxu0 0
        %4581 = vmatpush1.bf16.msra.mxu0 0
        %4582 = vmatprep.subr.bf16.mxu0 0
        %4583 = vmatpush1.bf16.msra.mxu0 0
        %4584 = vmatprep.subr.bf16.mxu0 0
        %4585 = vmatpush1.bf16.msra.mxu0 0
        %4586 = vmatprep.subr.bf16.mxu0 0
        %4587 = vmatpush1.bf16.msra.mxu0 0
        %4588 = vmatprep.subr.bf16.mxu0 0
        %4589 = vmatpush1.bf16.msra.mxu0 0
        %4590 = vmatprep.mubr.bf16.mxu0 0
        %4591 = vmatmul.mubr.bf16.gmra.mrb[0].mxu0 %v4556
        %v4592 = vpop.f32.mrb[0].mxu0
        %v4593 = vadd.f32 0.0, %v4592
        %v4594 = vpop.f32.mrb[0].mxu0
        %v4595 = vpop.f32.mrb[0].mxu0
        %v4596 = vpop.f32.mrb[0].mxu0
        %4597 = vdwg.mxu0
        %v4598 = vadd.f32 %v4553, %v4593
        %v4599 = vld [vmem:[%s741] sm:$0xf]
        %v4601 = vsel %vm216, %v4599, 0
        %4603 = vmatprep.subr.bf16.mxu0 0
        %4604 = vmatpush1.bf16.msra.mxu0 %v3754
        %4605 = vmatprep.subr.bf16.mxu0 0
        %4606 = vmatpush1.bf16.msra.mxu0 0
        %4607 = vmatprep.subr.bf16.mxu0 0
        %4608 = vmatpush1.bf16.msra.mxu0 0
        %4609 = vmatprep.subr.bf16.mxu0 0
        %4610 = vmatpush1.bf16.msra.mxu0 0
        %4611 = vmatprep.subr.bf16.mxu0 0
        %4612 = vmatpush1.bf16.msra.mxu0 0
        %4613 = vmatprep.subr.bf16.mxu0 0
        %4614 = vmatpush1.bf16.msra.mxu0 0
        %4615 = vmatprep.subr.bf16.mxu0 0
        %4616 = vmatpush1.bf16.msra.mxu0 0
        %4617 = vmatprep.subr.bf16.mxu0 0
        %4618 = vmatpush1.bf16.msra.mxu0 0
        %4619 = vmatprep.subr.bf16.mxu0 0
        %4620 = vmatpush1.bf16.msra.mxu0 0
        %4621 = vmatprep.subr.bf16.mxu0 0
        %4622 = vmatpush1.bf16.msra.mxu0 0
        %4623 = vmatprep.subr.bf16.mxu0 0
        %4624 = vmatpush1.bf16.msra.mxu0 0
        %4625 = vmatprep.subr.bf16.mxu0 0
        %4626 = vmatpush1.bf16.msra.mxu0 0
        %4627 = vmatprep.subr.bf16.mxu0 0
        %4628 = vmatpush1.bf16.msra.mxu0 0
        %4629 = vmatprep.subr.bf16.mxu0 0
        %4630 = vmatpush1.bf16.msra.mxu0 0
        %4631 = vmatprep.subr.bf16.mxu0 0
        %4632 = vmatpush1.bf16.msra.mxu0 0
        %4633 = vmatprep.subr.bf16.mxu0 0
        %4634 = vmatpush1.bf16.msra.mxu0 0
        %4635 = vmatprep.mubr.bf16.mxu0 0
        %4636 = vmatmul.mubr.bf16.gmra.mrb[0].mxu0 %v4601
        %v4637 = vpop.f32.mrb[0].mxu0
        %v4638 = vadd.f32 0.0, %v4637
        %v4639 = vpop.f32.mrb[0].mxu0
        %v4640 = vpop.f32.mrb[0].mxu0
        %v4641 = vpop.f32.mrb[0].mxu0
        %4642 = vdwg.mxu0
        %v4643 = vadd.f32 %v4598, %v4638
        %v4644 = vld [vmem:[%s792] sm:$0xf]
        %v4646 = vsel %vm216, %v4644, 0
        %4648 = vmatprep.subr.bf16.mxu0 0
        %4649 = vmatpush1.bf16.msra.mxu0 %v3804
        %4650 = vmatprep.subr.bf16.mxu0 0
        %4651 = vmatpush1.bf16.msra.mxu0 0
        %4652 = vmatprep.subr.bf16.mxu0 0
        %4653 = vmatpush1.bf16.msra.mxu0 0
        %4654 = vmatprep.subr.bf16.mxu0 0
        %4655 = vmatpush1.bf16.msra.mxu0 0
        %4656 = vmatprep.subr.bf16.mxu0 0
        %4657 = vmatpush1.bf16.msra.mxu0 0
        %4658 = vmatprep.subr.bf16.mxu0 0
        %4659 = vmatpush1.bf16.msra.mxu0 0
        %4660 = vmatprep.subr.bf16.mxu0 0
        %4661 = vmatpush1.bf16.msra.mxu0 0
        %4662 = vmatprep.subr.bf16.mxu0 0
        %4663 = vmatpush1.bf16.msra.mxu0 0
        %4664 = vmatprep.subr.bf16.mxu0 0
        %4665 = vmatpush1.bf16.msra.mxu0 0
        %4666 = vmatprep.subr.bf16.mxu0 0
        %4667 = vmatpush1.bf16.msra.mxu0 0
        %4668 = vmatprep.subr.bf16.mxu0 0
        %4669 = vmatpush1.bf16.msra.mxu0 0
        %4670 = vmatprep.subr.bf16.mxu0 0
        %4671 = vmatpush1.bf16.msra.mxu0 0
        %4672 = vmatprep.subr.bf16.mxu0 0
        %4673 = vmatpush1.bf16.msra.mxu0 0
        %4674 = vmatprep.subr.bf16.mxu0 0
        %4675 = vmatpush1.bf16.msra.mxu0 0
        %4676 = vmatprep.subr.bf16.mxu0 0
        %4677 = vmatpush1.bf16.msra.mxu0 0
        %4678 = vmatprep.subr.bf16.mxu0 0
        %4679 = vmatpush1.bf16.msra.mxu0 0
        %4680 = vmatprep.mubr.bf16.mxu0 0
        %4681 = vmatmul.mubr.bf16.gmra.mrb[0].mxu0 %v4646
        %v4682 = vpop.f32.mrb[0].mxu0
        %v4683 = vadd.f32 0.0, %v4682
        %v4684 = vpop.f32.mrb[0].mxu0
        %v4685 = vpop.f32.mrb[0].mxu0
        %v4686 = vpop.f32.mrb[0].mxu0
        %4687 = vdwg.mxu0
        %v4688 = vadd.f32 %v4643, %v4683
        %v4689 = vld [vmem:[%s843] sm:$0xf]
        %v4691 = vsel %vm216, %v4689, 0
        %4693 = vmatprep.subr.bf16.mxu0 0
        %4694 = vmatpush1.bf16.msra.mxu0 %v3854
        %4695 = vmatprep.subr.bf16.mxu0 0
        %4696 = vmatpush1.bf16.msra.mxu0 0
        %4697 = vmatprep.subr.bf16.mxu0 0
        %4698 = vmatpush1.bf16.msra.mxu0 0
        %4699 = vmatprep.subr.bf16.mxu0 0
        %4700 = vmatpush1.bf16.msra.mxu0 0
        %4701 = vmatprep.subr.bf16.mxu0 0
        %4702 = vmatpush1.bf16.msra.mxu0 0
        %4703 = vmatprep.subr.bf16.mxu0 0
        %4704 = vmatpush1.bf16.msra.mxu0 0
        %4705 = vmatprep.subr.bf16.mxu0 0
        %4706 = vmatpush1.bf16.msra.mxu0 0
        %4707 = vmatprep.subr.bf16.mxu0 0
        %4708 = vmatpush1.bf16.msra.mxu0 0
        %4709 = vmatprep.subr.bf16.mxu0 0
        %4710 = vmatpush1.bf16.msra.mxu0 0
        %4711 = vmatprep.subr.bf16.mxu0 0
        %4712 = vmatpush1.bf16.msra.mxu0 0
        %4713 = vmatprep.subr.bf16.mxu0 0
        %4714 = vmatpush1.bf16.msra.mxu0 0
        %4715 = vmatprep.subr.bf16.mxu0 0
        %4716 = vmatpush1.bf16.msra.mxu0 0
        %4717 = vmatprep.subr.bf16.mxu0 0
        %4718 = vmatpush1.bf16.msra.mxu0 0
        %4719 = vmatprep.subr.bf16.mxu0 0
        %4720 = vmatpush1.bf16.msra.mxu0 0
        %4721 = vmatprep.subr.bf16.mxu0 0
        %4722 = vmatpush1.bf16.msra.mxu0 0
        %4723 = vmatprep.subr.bf16.mxu0 0
        %4724 = vmatpush1.bf16.msra.mxu0 0
        %4725 = vmatprep.mubr.bf16.mxu0 0
        %4726 = vmatmul.mubr.bf16.gmra.mrb[0].mxu0 %v4691
        %v4727 = vpop.f32.mrb[0].mxu0
        %v4728 = vadd.f32 0.0, %v4727
        %v4729 = vpop.f32.mrb[0].mxu0
        %v4730 = vpop.f32.mrb[0].mxu0
        %v4731 = vpop.f32.mrb[0].mxu0
        %4732 = vdwg.mxu0
        %v4733 = vadd.f32 %v4688, %v4728
        %v4734 = vld [vmem:[%s894] sm:$0xf]
        %v4736 = vsel %vm216, %v4734, 0
        %4738 = vmatprep.subr.bf16.mxu0 0
        %4739 = vmatpush1.bf16.msra.mxu0 %v3904
        %4740 = vmatprep.subr.bf16.mxu0 0
        %4741 = vmatpush1.bf16.msra.mxu0 0
        %4742 = vmatprep.subr.bf16.mxu0 0
        %4743 = vmatpush1.bf16.msra.mxu0 0
        %4744 = vmatprep.subr.bf16.mxu0 0
        %4745 = vmatpush1.bf16.msra.mxu0 0
        %4746 = vmatprep.subr.bf16.mxu0 0
        %4747 = vmatpush1.bf16.msra.mxu0 0
        %4748 = vmatprep.subr.bf16.mxu0 0
        %4749 = vmatpush1.bf16.msra.mxu0 0
        %4750 = vmatprep.subr.bf16.mxu0 0
        %4751 = vmatpush1.bf16.msra.mxu0 0
        %4752 = vmatprep.subr.bf16.mxu0 0
        %4753 = vmatpush1.bf16.msra.mxu0 0
        %4754 = vmatprep.subr.bf16.mxu0 0
        %4755 = vmatpush1.bf16.msra.mxu0 0
        %4756 = vmatprep.subr.bf16.mxu0 0
        %4757 = vmatpush1.bf16.msra.mxu0 0
        %4758 = vmatprep.subr.bf16.mxu0 0
        %4759 = vmatpush1.bf16.msra.mxu0 0
        %4760 = vmatprep.subr.bf16.mxu0 0
        %4761 = vmatpush1.bf16.msra.mxu0 0
        %4762 = vmatprep.subr.bf16.mxu0 0
        %4763 = vmatpush1.bf16.msra.mxu0 0
        %4764 = vmatprep.subr.bf16.mxu0 0
        %4765 = vmatpush1.bf16.msra.mxu0 0
        %4766 = vmatprep.subr.bf16.mxu0 0
        %4767 = vmatpush1.bf16.msra.mxu0 0
        %4768 = vmatprep.subr.bf16.mxu0 0
        %4769 = vmatpush1.bf16.msra.mxu0 0
        %4770 = vmatprep.mubr.bf16.mxu0 0
        %4771 = vmatmul.mubr.bf16.gmra.mrb[0].mxu0 %v4736
        %v4772 = vpop.f32.mrb[0].mxu0
        %v4773 = vadd.f32 0.0, %v4772
        %v4774 = vpop.f32.mrb[0].mxu0
        %v4775 = vpop.f32.mrb[0].mxu0
        %v4776 = vpop.f32.mrb[0].mxu0
        %4777 = vdwg.mxu0
        %v4778 = vadd.f32 %v4733, %v4773
        %v4779 = vld [vmem:[%s945] sm:$0xf]
        %v4781 = vsel %vm216, %v4779, 0
        %4783 = vmatprep.subr.bf16.mxu0 0
        %4784 = vmatpush1.bf16.msra.mxu0 %v3954
        %4785 = vmatprep.subr.bf16.mxu0 0
        %4786 = vmatpush1.bf16.msra.mxu0 0
        %4787 = vmatprep.subr.bf16.mxu0 0
        %4788 = vmatpush1.bf16.msra.mxu0 0
        %4789 = vmatprep.subr.bf16.mxu0 0
        %4790 = vmatpush1.bf16.msra.mxu0 0
        %4791 = vmatprep.subr.bf16.mxu0 0
        %4792 = vmatpush1.bf16.msra.mxu0 0
        %4793 = vmatprep.subr.bf16.mxu0 0
        %4794 = vmatpush1.bf16.msra.mxu0 0
        %4795 = vmatprep.subr.bf16.mxu0 0
        %4796 = vmatpush1.bf16.msra.mxu0 0
        %4797 = vmatprep.subr.bf16.mxu0 0
        %4798 = vmatpush1.bf16.msra.mxu0 0
        %4799 = vmatprep.subr.bf16.mxu0 0
        %4800 = vmatpush1.bf16.msra.mxu0 0
        %4801 = vmatprep.subr.bf16.mxu0 0
        %4802 = vmatpush1.bf16.msra.mxu0 0
        %4803 = vmatprep.subr.bf16.mxu0 0
        %4804 = vmatpush1.bf16.msra.mxu0 0
        %4805 = vmatprep.subr.bf16.mxu0 0
        %4806 = vmatpush1.bf16.msra.mxu0 0
        %4807 = vmatprep.subr.bf16.mxu0 0
        %4808 = vmatpush1.bf16.msra.mxu0 0
        %4809 = vmatprep.subr.bf16.mxu0 0
        %4810 = vmatpush1.bf16.msra.mxu0 0
        %4811 = vmatprep.subr.bf16.mxu0 0
        %4812 = vmatpush1.bf16.msra.mxu0 0
        %4813 = vmatprep.subr.bf16.mxu0 0
        %4814 = vmatpush1.bf16.msra.mxu0 0
        %4815 = vmatprep.mubr.bf16.mxu0 0
        %4816 = vmatmul.mubr.bf16.gmra.mrb[0].mxu0 %v4781
        %v4817 = vpop.f32.mrb[0].mxu0
        %v4818 = vadd.f32 0.0, %v4817
        %v4819 = vpop.f32.mrb[0].mxu0
        %v4820 = vpop.f32.mrb[0].mxu0
        %v4821 = vpop.f32.mrb[0].mxu0
        %4822 = vdwg.mxu0
        %v4823 = vadd.f32 %v4778, %v4818
        %v4824 = vld [vmem:[%s996] sm:$0xf]
        %v4826 = vsel %vm216, %v4824, 0
        %4828 = vmatprep.subr.bf16.mxu0 0
        %4829 = vmatpush1.bf16.msra.mxu0 %v4004
        %4830 = vmatprep.subr.bf16.mxu0 0
        %4831 = vmatpush1.bf16.msra.mxu0 0
        %4832 = vmatprep.subr.bf16.mxu0 0
        %4833 = vmatpush1.bf16.msra.mxu0 0
        %4834 = vmatprep.subr.bf16.mxu0 0
        %4835 = vmatpush1.bf16.msra.mxu0 0
        %4836 = vmatprep.subr.bf16.mxu0 0
        %4837 = vmatpush1.bf16.msra.mxu0 0
        %4838 = vmatprep.subr.bf16.mxu0 0
        %4839 = vmatpush1.bf16.msra.mxu0 0
        %4840 = vmatprep.subr.bf16.mxu0 0
        %4841 = vmatpush1.bf16.msra.mxu0 0
        %4842 = vmatprep.subr.bf16.mxu0 0
        %4843 = vmatpush1.bf16.msra.mxu0 0
        %4844 = vmatprep.subr.bf16.mxu0 0
        %4845 = vmatpush1.bf16.msra.mxu0 0
        %4846 = vmatprep.subr.bf16.mxu0 0
        %4847 = vmatpush1.bf16.msra.mxu0 0
        %4848 = vmatprep.subr.bf16.mxu0 0
        %4849 = vmatpush1.bf16.msra.mxu0 0
        %4850 = vmatprep.subr.bf16.mxu0 0
        %4851 = vmatpush1.bf16.msra.mxu0 0
        %4852 = vmatprep.subr.bf16.mxu0 0
        %4853 = vmatpush1.bf16.msra.mxu0 0
        %4854 = vmatprep.subr.bf16.mxu0 0
        %4855 = vmatpush1.bf16.msra.mxu0 0
        %4856 = vmatprep.subr.bf16.mxu0 0
        %4857 = vmatpush1.bf16.msra.mxu0 0
        %4858 = vmatprep.subr.bf16.mxu0 0
        %4859 = vmatpush1.bf16.msra.mxu0 0
        %4860 = vmatprep.mubr.bf16.mxu0 0
        %4861 = vmatmul.mubr.bf16.gmra.mrb[0].mxu0 %v4826
        %v4862 = vpop.f32.mrb[0].mxu0
        %v4863 = vadd.f32 0.0, %v4862
        %v4864 = vpop.f32.mrb[0].mxu0
        %v4865 = vpop.f32.mrb[0].mxu0
        %v4866 = vpop.f32.mrb[0].mxu0
        %4867 = vdwg.mxu0
        %v4868 = vadd.f32 %v4823, %v4863
        %v4869 = vld [vmem:[%s1047] sm:$0xf]
        %v4871 = vsel %vm216, %v4869, 0
        %4873 = vmatprep.subr.bf16.mxu0 0
        %4874 = vmatpush1.bf16.msra.mxu0 %v4054
        %4875 = vmatprep.subr.bf16.mxu0 0
        %4876 = vmatpush1.bf16.msra.mxu0 0
        %4877 = vmatprep.subr.bf16.mxu0 0
        %4878 = vmatpush1.bf16.msra.mxu0 0
        %4879 = vmatprep.subr.bf16.mxu0 0
        %4880 = vmatpush1.bf16.msra.mxu0 0
        %4881 = vmatprep.subr.bf16.mxu0 0
        %4882 = vmatpush1.bf16.msra.mxu0 0
        %4883 = vmatprep.subr.bf16.mxu0 0
        %4884 = vmatpush1.bf16.msra.mxu0 0
        %4885 = vmatprep.subr.bf16.mxu0 0
        %4886 = vmatpush1.bf16.msra.mxu0 0
        %4887 = vmatprep.subr.bf16.mxu0 0
        %4888 = vmatpush1.bf16.msra.mxu0 0
        %4889 = vmatprep.subr.bf16.mxu0 0
        %4890 = vmatpush1.bf16.msra.mxu0 0
        %4891 = vmatprep.subr.bf16.mxu0 0
        %4892 = vmatpush1.bf16.msra.mxu0 0
        %4893 = vmatprep.subr.bf16.mxu0 0
        %4894 = vmatpush1.bf16.msra.mxu0 0
        %4895 = vmatprep.subr.bf16.mxu0 0
        %4896 = vmatpush1.bf16.msra.mxu0 0
        %4897 = vmatprep.subr.bf16.mxu0 0
        %4898 = vmatpush1.bf16.msra.mxu0 0
        %4899 = vmatprep.subr.bf16.mxu0 0
        %4900 = vmatpush1.bf16.msra.mxu0 0
        %4901 = vmatprep.subr.bf16.mxu0 0
        %4902 = vmatpush1.bf16.msra.mxu0 0
        %4903 = vmatprep.subr.bf16.mxu0 0
        %4904 = vmatpush1.bf16.msra.mxu0 0
        %4905 = vmatprep.mubr.bf16.mxu0 0
        %4906 = vmatmul.mubr.bf16.gmra.mrb[0].mxu0 %v4871
        %v4907 = vpop.f32.mrb[0].mxu0
        %v4908 = vadd.f32 0.0, %v4907
        %v4909 = vpop.f32.mrb[0].mxu0
        %v4910 = vpop.f32.mrb[0].mxu0
        %v4911 = vpop.f32.mrb[0].mxu0
        %4912 = vdwg.mxu0
        %v4913 = vadd.f32 %v4868, %v4908
        %v4914 = vld [vmem:[%s1098] sm:$0xf]
        %v4916 = vsel %vm216, %v4914, 0
        %4918 = vmatprep.subr.bf16.mxu0 0
        %4919 = vmatpush1.bf16.msra.mxu0 %v4104
        %4920 = vmatprep.subr.bf16.mxu0 0
        %4921 = vmatpush1.bf16.msra.mxu0 0
        %4922 = vmatprep.subr.bf16.mxu0 0
        %4923 = vmatpush1.bf16.msra.mxu0 0
        %4924 = vmatprep.subr.bf16.mxu0 0
        %4925 = vmatpush1.bf16.msra.mxu0 0
        %4926 = vmatprep.subr.bf16.mxu0 0
        %4927 = vmatpush1.bf16.msra.mxu0 0
        %4928 = vmatprep.subr.bf16.mxu0 0
        %4929 = vmatpush1.bf16.msra.mxu0 0
        %4930 = vmatprep.subr.bf16.mxu0 0
        %4931 = vmatpush1.bf16.msra.mxu0 0
        %4932 = vmatprep.subr.bf16.mxu0 0
        %4933 = vmatpush1.bf16.msra.mxu0 0
        %4934 = vmatprep.subr.bf16.mxu0 0
        %4935 = vmatpush1.bf16.msra.mxu0 0
        %4936 = vmatprep.subr.bf16.mxu0 0
        %4937 = vmatpush1.bf16.msra.mxu0 0
        %4938 = vmatprep.subr.bf16.mxu0 0
        %4939 = vmatpush1.bf16.msra.mxu0 0
        %4940 = vmatprep.subr.bf16.mxu0 0
        %4941 = vmatpush1.bf16.msra.mxu0 0
        %4942 = vmatprep.subr.bf16.mxu0 0
        %4943 = vmatpush1.bf16.msra.mxu0 0
        %4944 = vmatprep.subr.bf16.mxu0 0
        %4945 = vmatpush1.bf16.msra.mxu0 0
        %4946 = vmatprep.subr.bf16.mxu0 0
        %4947 = vmatpush1.bf16.msra.mxu0 0
        %4948 = vmatprep.subr.bf16.mxu0 0
        %4949 = vmatpush1.bf16.msra.mxu0 0
        %4950 = vmatprep.mubr.bf16.mxu0 0
        %4951 = vmatmul.mubr.bf16.gmra.mrb[0].mxu0 %v4916
        %v4952 = vpop.f32.mrb[0].mxu0
        %v4953 = vadd.f32 0.0, %v4952
        %v4954 = vpop.f32.mrb[0].mxu0
        %v4955 = vpop.f32.mrb[0].mxu0
        %v4956 = vpop.f32.mrb[0].mxu0
        %4957 = vdwg.mxu0
        %v4958 = vadd.f32 %v4913, %v4953
        %v4959 = vld [vmem:[%s1146] sm:$0xf]
        %v4961 = vsel %vm216, %v4959, 0
        %v4964 = vsel %vm220, %v214, 0
        %4966 = vmatprep.subr.bf16.mxu0 0
        %4967 = vmatpush1.bf16.msra.mxu0 %v4964
        %4968 = vmatprep.subr.bf16.mxu0 0
        %4969 = vmatpush1.bf16.msra.mxu0 0
        %4970 = vmatprep.subr.bf16.mxu0 0
        %4971 = vmatpush1.bf16.msra.mxu0 0
        %4972 = vmatprep.subr.bf16.mxu0 0
        %4973 = vmatpush1.bf16.msra.mxu0 0
        %4974 = vmatprep.subr.bf16.mxu0 0
        %4975 = vmatpush1.bf16.msra.mxu0 0
        %4976 = vmatprep.subr.bf16.mxu0 0
        %4977 = vmatpush1.bf16.msra.mxu0 0
        %4978 = vmatprep.subr.bf16.mxu0 0
        %4979 = vmatpush1.bf16.msra.mxu0 0
        %4980 = vmatprep.subr.bf16.mxu0 0
        %4981 = vmatpush1.bf16.msra.mxu0 0
        %4982 = vmatprep.subr.bf16.mxu0 0
        %4983 = vmatpush1.bf16.msra.mxu0 0
        %4984 = vmatprep.subr.bf16.mxu0 0
        %4985 = vmatpush1.bf16.msra.mxu0 0
        %4986 = vmatprep.subr.bf16.mxu0 0
        %4987 = vmatpush1.bf16.msra.mxu0 0
        %4988 = vmatprep.subr.bf16.mxu0 0
        %4989 = vmatpush1.bf16.msra.mxu0 0
        %4990 = vmatprep.subr.bf16.mxu0 0
        %4991 = vmatpush1.bf16.msra.mxu0 0
        %4992 = vmatprep.subr.bf16.mxu0 0
        %4993 = vmatpush1.bf16.msra.mxu0 0
        %4994 = vmatprep.subr.bf16.mxu0 0
        %4995 = vmatpush1.bf16.msra.mxu0 0
        %4996 = vmatprep.subr.bf16.mxu0 0
        %4997 = vmatpush1.bf16.msra.mxu0 0
        %4998 = vmatprep.mubr.bf16.mxu0 0
        %4999 = vmatmul.mubr.bf16.gmra.mrb[0].mxu0 %v4961
        %v5000 = vpop.f32.mrb[0].mxu0
        %v5001 = vadd.f32 0.0, %v5000
        %v5002 = vpop.f32.mrb[0].mxu0
        %v5003 = vpop.f32.mrb[0].mxu0
        %v5004 = vpop.f32.mrb[0].mxu0
        %5005 = vdwg.mxu0
        %v5006 = vadd.f32 %v4958, %v5001
        %v5009 = vunpack.c.l.s4 1983009808
        %v5010 = vunpack.c.0.s8 %v5009
        %v5011 = vlaneseq
        %v5012 = vshrl.u32 %v5011, 7
        %v5013 = vsub.s32 %v5010, %v5012
        %v5014 = vrot.slane %v214, %v5013
        %5015 = vrot.lane.b32.xlu0 %v5014, 127
        %v5016 = vpop.permute.xlu0 %5015
        %v5018 = vld [vmem:[%s1206] sm:$0xf]
        %v5020 = vsel %vm216, %v5018, 0
        %v5022 = vsel %vm220, %v5016, 0
        %5024 = vmatprep.subr.bf16.mxu0 0
        %5025 = vmatpush1.bf16.msra.mxu0 %v5022
        %5026 = vmatprep.subr.bf16.mxu0 0
        %5027 = vmatpush1.bf16.msra.mxu0 0
        %5028 = vmatprep.subr.bf16.mxu0 0
        %5029 = vmatpush1.bf16.msra.mxu0 0
        %5030 = vmatprep.subr.bf16.mxu0 0
        %5031 = vmatpush1.bf16.msra.mxu0 0
        %5032 = vmatprep.subr.bf16.mxu0 0
        %5033 = vmatpush1.bf16.msra.mxu0 0
        %5034 = vmatprep.subr.bf16.mxu0 0
        %5035 = vmatpush1.bf16.msra.mxu0 0
        %5036 = vmatprep.subr.bf16.mxu0 0
        %5037 = vmatpush1.bf16.msra.mxu0 0
        %5038 = vmatprep.subr.bf16.mxu0 0
        %5039 = vmatpush1.bf16.msra.mxu0 0
        %5040 = vmatprep.subr.bf16.mxu0 0
        %5041 = vmatpush1.bf16.msra.mxu0 0
        %5042 = vmatprep.subr.bf16.mxu0 0
        %5043 = vmatpush1.bf16.msra.mxu0 0
        %5044 = vmatprep.subr.bf16.mxu0 0
        %5045 = vmatpush1.bf16.msra.mxu0 0
        %5046 = vmatprep.subr.bf16.mxu0 0
        %5047 = vmatpush1.bf16.msra.mxu0 0
        %5048 = vmatprep.subr.bf16.mxu0 0
        %5049 = vmatpush1.bf16.msra.mxu0 0
        %5050 = vmatprep.subr.bf16.mxu0 0
        %5051 = vmatpush1.bf16.msra.mxu0 0
        %5052 = vmatprep.subr.bf16.mxu0 0
        %5053 = vmatpush1.bf16.msra.mxu0 0
        %5054 = vmatprep.subr.bf16.mxu0 0
        %5055 = vmatpush1.bf16.msra.mxu0 0
        %5056 = vmatprep.mubr.bf16.mxu0 0
        %5057 = vmatmul.mubr.bf16.gmra.mrb[0].mxu0 %v5020
        %v5058 = vpop.f32.mrb[0].mxu0
        %v5059 = vadd.f32 0.0, %v5058
        %v5060 = vpop.f32.mrb[0].mxu0
        %v5061 = vpop.f32.mrb[0].mxu0
        %v5062 = vpop.f32.mrb[0].mxu0
        %5063 = vdwg.mxu0
        %v5064 = vadd.f32 %v5006, %v5059
        %5065 = vrot.lane.b32.xlu0 %v5014, 126
        %v5066 = vpop.permute.xlu0 %5065
        %v5068 = vld [vmem:[%s1257] sm:$0xf]
        %v5070 = vsel %vm216, %v5068, 0
        %v5072 = vsel %vm220, %v5066, 0
        %5074 = vmatprep.subr.bf16.mxu0 0
        %5075 = vmatpush1.bf16.msra.mxu0 %v5072
        %5076 = vmatprep.subr.bf16.mxu0 0
        %5077 = vmatpush1.bf16.msra.mxu0 0
        %5078 = vmatprep.subr.bf16.mxu0 0
        %5079 = vmatpush1.bf16.msra.mxu0 0
        %5080 = vmatprep.subr.bf16.mxu0 0
        %5081 = vmatpush1.bf16.msra.mxu0 0
        %5082 = vmatprep.subr.bf16.mxu0 0
        %5083 = vmatpush1.bf16.msra.mxu0 0
        %5084 = vmatprep.subr.bf16.mxu0 0
        %5085 = vmatpush1.bf16.msra.mxu0 0
        %5086 = vmatprep.subr.bf16.mxu0 0
        %5087 = vmatpush1.bf16.msra.mxu0 0
        %5088 = vmatprep.subr.bf16.mxu0 0
        %5089 = vmatpush1.bf16.msra.mxu0 0
        %5090 = vmatprep.subr.bf16.mxu0 0
        %5091 = vmatpush1.bf16.msra.mxu0 0
        %5092 = vmatprep.subr.bf16.mxu0 0
        %5093 = vmatpush1.bf16.msra.mxu0 0
        %5094 = vmatprep.subr.bf16.mxu0 0
        %5095 = vmatpush1.bf16.msra.mxu0 0
        %5096 = vmatprep.subr.bf16.mxu0 0
        %5097 = vmatpush1.bf16.msra.mxu0 0
        %5098 = vmatprep.subr.bf16.mxu0 0
        %5099 = vmatpush1.bf16.msra.mxu0 0
        %5100 = vmatprep.subr.bf16.mxu0 0
        %5101 = vmatpush1.bf16.msra.mxu0 0
        %5102 = vmatprep.subr.bf16.mxu0 0
        %5103 = vmatpush1.bf16.msra.mxu0 0
        %5104 = vmatprep.subr.bf16.mxu0 0
        %5105 = vmatpush1.bf16.msra.mxu0 0
        %5106 = vmatprep.mubr.bf16.mxu0 0
        %5107 = vmatmul.mubr.bf16.gmra.mrb[0].mxu0 %v5070
        %v5108 = vpop.f32.mrb[0].mxu0
        %v5109 = vadd.f32 0.0, %v5108
        %v5110 = vpop.f32.mrb[0].mxu0
        %v5111 = vpop.f32.mrb[0].mxu0
        %v5112 = vpop.f32.mrb[0].mxu0
        %5113 = vdwg.mxu0
        %v5114 = vadd.f32 %v5064, %v5109
        %5115 = vrot.lane.b32.xlu0 %v5014, 118
        %v5116 = vpop.permute.xlu0 %5115
        %v5118 = vld [vmem:[%s1308] sm:$0xf]
        %v5120 = vsel %vm216, %v5118, 0
        %v5122 = vsel %vm220, %v5116, 0
        %5124 = vmatprep.subr.bf16.mxu0 0
        %5125 = vmatpush1.bf16.msra.mxu0 %v5122
        %5126 = vmatprep.subr.bf16.mxu0 0
        %5127 = vmatpush1.bf16.msra.mxu0 0
        %5128 = vmatprep.subr.bf16.mxu0 0
        %5129 = vmatpush1.bf16.msra.mxu0 0
        %5130 = vmatprep.subr.bf16.mxu0 0
        %5131 = vmatpush1.bf16.msra.mxu0 0
        %5132 = vmatprep.subr.bf16.mxu0 0
        %5133 = vmatpush1.bf16.msra.mxu0 0
        %5134 = vmatprep.subr.bf16.mxu0 0
        %5135 = vmatpush1.bf16.msra.mxu0 0
        %5136 = vmatprep.subr.bf16.mxu0 0
        %5137 = vmatpush1.bf16.msra.mxu0 0
        %5138 = vmatprep.subr.bf16.mxu0 0
        %5139 = vmatpush1.bf16.msra.mxu0 0
        %5140 = vmatprep.subr.bf16.mxu0 0
        %5141 = vmatpush1.bf16.msra.mxu0 0
        %5142 = vmatprep.subr.bf16.mxu0 0
        %5143 = vmatpush1.bf16.msra.mxu0 0
        %5144 = vmatprep.subr.bf16.mxu0 0
        %5145 = vmatpush1.bf16.msra.mxu0 0
        %5146 = vmatprep.subr.bf16.mxu0 0
        %5147 = vmatpush1.bf16.msra.mxu0 0
        %5148 = vmatprep.subr.bf16.mxu0 0
        %5149 = vmatpush1.bf16.msra.mxu0 0
        %5150 = vmatprep.subr.bf16.mxu0 0
        %5151 = vmatpush1.bf16.msra.mxu0 0
        %5152 = vmatprep.subr.bf16.mxu0 0
        %5153 = vmatpush1.bf16.msra.mxu0 0
        %5154 = vmatprep.subr.bf16.mxu0 0
        %5155 = vmatpush1.bf16.msra.mxu0 0
        %5156 = vmatprep.mubr.bf16.mxu0 0
        %5157 = vmatmul.mubr.bf16.gmra.mrb[0].mxu0 %v5120
        %v5158 = vpop.f32.mrb[0].mxu0
        %v5159 = vadd.f32 0.0, %v5158
        %v5160 = vpop.f32.mrb[0].mxu0
        %v5161 = vpop.f32.mrb[0].mxu0
        %v5162 = vpop.f32.mrb[0].mxu0
        %5163 = vdwg.mxu0
        %v5164 = vadd.f32 %v5114, %v5159
        %5165 = vrot.lane.b32.xlu0 %v5014, 117
        %v5166 = vpop.permute.xlu0 %5165
        %v5168 = vld [vmem:[%s1359] sm:$0xf]
        %v5170 = vsel %vm216, %v5168, 0
        %v5172 = vsel %vm220, %v5166, 0
        %5174 = vmatprep.subr.bf16.mxu0 0
        %5175 = vmatpush1.bf16.msra.mxu0 %v5172
        %5176 = vmatprep.subr.bf16.mxu0 0
        %5177 = vmatpush1.bf16.msra.mxu0 0
        %5178 = vmatprep.subr.bf16.mxu0 0
        %5179 = vmatpush1.bf16.msra.mxu0 0
        %5180 = vmatprep.subr.bf16.mxu0 0
        %5181 = vmatpush1.bf16.msra.mxu0 0
        %5182 = vmatprep.subr.bf16.mxu0 0
        %5183 = vmatpush1.bf16.msra.mxu0 0
        %5184 = vmatprep.subr.bf16.mxu0 0
        %5185 = vmatpush1.bf16.msra.mxu0 0
        %5186 = vmatprep.subr.bf16.mxu0 0
        %5187 = vmatpush1.bf16.msra.mxu0 0
        %5188 = vmatprep.subr.bf16.mxu0 0
        %5189 = vmatpush1.bf16.msra.mxu0 0
        %5190 = vmatprep.subr.bf16.mxu0 0
        %5191 = vmatpush1.bf16.msra.mxu0 0
        %5192 = vmatprep.subr.bf16.mxu0 0
        %5193 = vmatpush1.bf16.msra.mxu0 0
        %5194 = vmatprep.subr.bf16.mxu0 0
        %5195 = vmatpush1.bf16.msra.mxu0 0
        %5196 = vmatprep.subr.bf16.mxu0 0
        %5197 = vmatpush1.bf16.msra.mxu0 0
        %5198 = vmatprep.subr.bf16.mxu0 0
        %5199 = vmatpush1.bf16.msra.mxu0 0
        %5200 = vmatprep.subr.bf16.mxu0 0
        %5201 = vmatpush1.bf16.msra.mxu0 0
        %5202 = vmatprep.subr.bf16.mxu0 0
        %5203 = vmatpush1.bf16.msra.mxu0 0
        %5204 = vmatprep.subr.bf16.mxu0 0
        %5205 = vmatpush1.bf16.msra.mxu0 0
        %5206 = vmatprep.mubr.bf16.mxu0 0
        %5207 = vmatmul.mubr.bf16.gmra.mrb[0].mxu0 %v5170
        %v5208 = vpop.f32.mrb[0].mxu0
        %v5209 = vadd.f32 0.0, %v5208
        %v5210 = vpop.f32.mrb[0].mxu0
        %v5211 = vpop.f32.mrb[0].mxu0
        %v5212 = vpop.f32.mrb[0].mxu0
        %5213 = vdwg.mxu0
        %v5214 = vadd.f32 %v5164, %v5209
        %5215 = vrot.lane.b32.xlu0 %v5014, 116
        %v5216 = vpop.permute.xlu0 %5215
        %v5218 = vld [vmem:[%s1410] sm:$0xf]
        %v5220 = vsel %vm216, %v5218, 0
        %v5222 = vsel %vm220, %v5216, 0
        %5224 = vmatprep.subr.bf16.mxu0 0
        %5225 = vmatpush1.bf16.msra.mxu0 %v5222
        %5226 = vmatprep.subr.bf16.mxu0 0
        %5227 = vmatpush1.bf16.msra.mxu0 0
        %5228 = vmatprep.subr.bf16.mxu0 0
        %5229 = vmatpush1.bf16.msra.mxu0 0
        %5230 = vmatprep.subr.bf16.mxu0 0
        %5231 = vmatpush1.bf16.msra.mxu0 0
        %5232 = vmatprep.subr.bf16.mxu0 0
        %5233 = vmatpush1.bf16.msra.mxu0 0
        %5234 = vmatprep.subr.bf16.mxu0 0
        %5235 = vmatpush1.bf16.msra.mxu0 0
        %5236 = vmatprep.subr.bf16.mxu0 0
        %5237 = vmatpush1.bf16.msra.mxu0 0
        %5238 = vmatprep.subr.bf16.mxu0 0
        %5239 = vmatpush1.bf16.msra.mxu0 0
        %5240 = vmatprep.subr.bf16.mxu0 0
        %5241 = vmatpush1.bf16.msra.mxu0 0
        %5242 = vmatprep.subr.bf16.mxu0 0
        %5243 = vmatpush1.bf16.msra.mxu0 0
        %5244 = vmatprep.subr.bf16.mxu0 0
        %5245 = vmatpush1.bf16.msra.mxu0 0
        %5246 = vmatprep.subr.bf16.mxu0 0
        %5247 = vmatpush1.bf16.msra.mxu0 0
        %5248 = vmatprep.subr.bf16.mxu0 0
        %5249 = vmatpush1.bf16.msra.mxu0 0
        %5250 = vmatprep.subr.bf16.mxu0 0
        %5251 = vmatpush1.bf16.msra.mxu0 0
        %5252 = vmatprep.subr.bf16.mxu0 0
        %5253 = vmatpush1.bf16.msra.mxu0 0
        %5254 = vmatprep.subr.bf16.mxu0 0
        %5255 = vmatpush1.bf16.msra.mxu0 0
        %5256 = vmatprep.mubr.bf16.mxu0 0
        %5257 = vmatmul.mubr.bf16.gmra.mrb[0].mxu0 %v5220
        %v5258 = vpop.f32.mrb[0].mxu0
        %v5259 = vadd.f32 0.0, %v5258
        %v5260 = vpop.f32.mrb[0].mxu0
        %v5261 = vpop.f32.mrb[0].mxu0
        %v5262 = vpop.f32.mrb[0].mxu0
        %5263 = vdwg.mxu0
        %v5264 = vadd.f32 %v5214, %v5259
        %5265 = vrot.lane.b32.xlu0 %v5014, 108
        %v5266 = vpop.permute.xlu0 %5265
        %v5268 = vld [vmem:[%s1461] sm:$0xf]
        %v5270 = vsel %vm216, %v5268, 0
        %v5272 = vsel %vm220, %v5266, 0
        %5274 = vmatprep.subr.bf16.mxu0 0
        %5275 = vmatpush1.bf16.msra.mxu0 %v5272
        %5276 = vmatprep.subr.bf16.mxu0 0
        %5277 = vmatpush1.bf16.msra.mxu0 0
        %5278 = vmatprep.subr.bf16.mxu0 0
        %5279 = vmatpush1.bf16.msra.mxu0 0
        %5280 = vmatprep.subr.bf16.mxu0 0
        %5281 = vmatpush1.bf16.msra.mxu0 0
        %5282 = vmatprep.subr.bf16.mxu0 0
        %5283 = vmatpush1.bf16.msra.mxu0 0
        %5284 = vmatprep.subr.bf16.mxu0 0
        %5285 = vmatpush1.bf16.msra.mxu0 0
        %5286 = vmatprep.subr.bf16.mxu0 0
        %5287 = vmatpush1.bf16.msra.mxu0 0
        %5288 = vmatprep.subr.bf16.mxu0 0
        %5289 = vmatpush1.bf16.msra.mxu0 0
        %5290 = vmatprep.subr.bf16.mxu0 0
        %5291 = vmatpush1.bf16.msra.mxu0 0
        %5292 = vmatprep.subr.bf16.mxu0 0
        %5293 = vmatpush1.bf16.msra.mxu0 0
        %5294 = vmatprep.subr.bf16.mxu0 0
        %5295 = vmatpush1.bf16.msra.mxu0 0
        %5296 = vmatprep.subr.bf16.mxu0 0
        %5297 = vmatpush1.bf16.msra.mxu0 0
        %5298 = vmatprep.subr.bf16.mxu0 0
        %5299 = vmatpush1.bf16.msra.mxu0 0
        %5300 = vmatprep.subr.bf16.mxu0 0
        %5301 = vmatpush1.bf16.msra.mxu0 0
        %5302 = vmatprep.subr.bf16.mxu0 0
        %5303 = vmatpush1.bf16.msra.mxu0 0
        %5304 = vmatprep.subr.bf16.mxu0 0
        %5305 = vmatpush1.bf16.msra.mxu0 0
        %5306 = vmatprep.mubr.bf16.mxu0 0
        %5307 = vmatmul.mubr.bf16.gmra.mrb[0].mxu0 %v5270
        %v5308 = vpop.f32.mrb[0].mxu0
        %v5309 = vadd.f32 0.0, %v5308
        %v5310 = vpop.f32.mrb[0].mxu0
        %v5311 = vpop.f32.mrb[0].mxu0
        %v5312 = vpop.f32.mrb[0].mxu0
        %5313 = vdwg.mxu0
        %v5314 = vadd.f32 %v5264, %v5309
        %5315 = vrot.lane.b32.xlu0 %v5014, 107
        %v5316 = vpop.permute.xlu0 %5315
        %v5318 = vld [vmem:[%s1512] sm:$0xf]
        %v5320 = vsel %vm216, %v5318, 0
        %v5322 = vsel %vm220, %v5316, 0
        %5324 = vmatprep.subr.bf16.mxu0 0
        %5325 = vmatpush1.bf16.msra.mxu0 %v5322
        %5326 = vmatprep.subr.bf16.mxu0 0
        %5327 = vmatpush1.bf16.msra.mxu0 0
        %5328 = vmatprep.subr.bf16.mxu0 0
        %5329 = vmatpush1.bf16.msra.mxu0 0
        %5330 = vmatprep.subr.bf16.mxu0 0
        %5331 = vmatpush1.bf16.msra.mxu0 0
        %5332 = vmatprep.subr.bf16.mxu0 0
        %5333 = vmatpush1.bf16.msra.mxu0 0
        %5334 = vmatprep.subr.bf16.mxu0 0
        %5335 = vmatpush1.bf16.msra.mxu0 0
        %5336 = vmatprep.subr.bf16.mxu0 0
        %5337 = vmatpush1.bf16.msra.mxu0 0
        %5338 = vmatprep.subr.bf16.mxu0 0
        %5339 = vmatpush1.bf16.msra.mxu0 0
        %5340 = vmatprep.subr.bf16.mxu0 0
        %5341 = vmatpush1.bf16.msra.mxu0 0
        %5342 = vmatprep.subr.bf16.mxu0 0
        %5343 = vmatpush1.bf16.msra.mxu0 0
        %5344 = vmatprep.subr.bf16.mxu0 0
        %5345 = vmatpush1.bf16.msra.mxu0 0
        %5346 = vmatprep.subr.bf16.mxu0 0
        %5347 = vmatpush1.bf16.msra.mxu0 0
        %5348 = vmatprep.subr.bf16.mxu0 0
        %5349 = vmatpush1.bf16.msra.mxu0 0
        %5350 = vmatprep.subr.bf16.mxu0 0
        %5351 = vmatpush1.bf16.msra.mxu0 0
        %5352 = vmatprep.subr.bf16.mxu0 0
        %5353 = vmatpush1.bf16.msra.mxu0 0
        %5354 = vmatprep.subr.bf16.mxu0 0
        %5355 = vmatpush1.bf16.msra.mxu0 0
        %5356 = vmatprep.mubr.bf16.mxu0 0
        %5357 = vmatmul.mubr.bf16.gmra.mrb[0].mxu0 %v5320
        %v5358 = vpop.f32.mrb[0].mxu0
        %v5359 = vadd.f32 0.0, %v5358
        %v5360 = vpop.f32.mrb[0].mxu0
        %v5361 = vpop.f32.mrb[0].mxu0
        %v5362 = vpop.f32.mrb[0].mxu0
        %5363 = vdwg.mxu0
        %v5364 = vadd.f32 %v5314, %v5359
        %5365 = vrot.lane.b32.xlu0 %v5014, 106
        %v5366 = vpop.permute.xlu0 %5365
        %v5368 = vld [vmem:[%s1563] sm:$0xf]
        %v5370 = vsel %vm216, %v5368, 0
        %v5372 = vsel %vm220, %v5366, 0
        %5374 = vmatprep.subr.bf16.mxu0 0
        %5375 = vmatpush1.bf16.msra.mxu0 %v5372
        %5376 = vmatprep.subr.bf16.mxu0 0
        %5377 = vmatpush1.bf16.msra.mxu0 0
        %5378 = vmatprep.subr.bf16.mxu0 0
        %5379 = vmatpush1.bf16.msra.mxu0 0
        %5380 = vmatprep.subr.bf16.mxu0 0
        %5381 = vmatpush1.bf16.msra.mxu0 0
        %5382 = vmatprep.subr.bf16.mxu0 0
        %5383 = vmatpush1.bf16.msra.mxu0 0
        %5384 = vmatprep.subr.bf16.mxu0 0
        %5385 = vmatpush1.bf16.msra.mxu0 0
        %5386 = vmatprep.subr.bf16.mxu0 0
        %5387 = vmatpush1.bf16.msra.mxu0 0
        %5388 = vmatprep.subr.bf16.mxu0 0
        %5389 = vmatpush1.bf16.msra.mxu0 0
        %5390 = vmatprep.subr.bf16.mxu0 0
        %5391 = vmatpush1.bf16.msra.mxu0 0
        %5392 = vmatprep.subr.bf16.mxu0 0
        %5393 = vmatpush1.bf16.msra.mxu0 0
        %5394 = vmatprep.subr.bf16.mxu0 0
        %5395 = vmatpush1.bf16.msra.mxu0 0
        %5396 = vmatprep.subr.bf16.mxu0 0
        %5397 = vmatpush1.bf16.msra.mxu0 0
        %5398 = vmatprep.subr.bf16.mxu0 0
        %5399 = vmatpush1.bf16.msra.mxu0 0
        %5400 = vmatprep.subr.bf16.mxu0 0
        %5401 = vmatpush1.bf16.msra.mxu0 0
        %5402 = vmatprep.subr.bf16.mxu0 0
        %5403 = vmatpush1.bf16.msra.mxu0 0
        %5404 = vmatprep.subr.bf16.mxu0 0
        %5405 = vmatpush1.bf16.msra.mxu0 0
        %5406 = vmatprep.mubr.bf16.mxu0 0
        %5407 = vmatmul.mubr.bf16.gmra.mrb[0].mxu0 %v5370
        %v5408 = vpop.f32.mrb[0].mxu0
        %v5409 = vadd.f32 0.0, %v5408
        %v5410 = vpop.f32.mrb[0].mxu0
        %v5411 = vpop.f32.mrb[0].mxu0
        %v5412 = vpop.f32.mrb[0].mxu0
        %5413 = vdwg.mxu0
        %v5414 = vadd.f32 %v5364, %v5409
        %v5415 = vmax.f32 %v5414, 0.0
        %5416 = vst [vmem:[%s177 + $0x18] sm:$0xff] %v5415
        %s5417 = sand.u32 %s107, 1
        %s5418 = scalar_lea.sflag [#allocation3], %s5417
        %s5419 = sand.u32 %s107, 1
        %s5420 = smul.addr %s5419, 32
        %s5421 = scalar_lea.vmem [#allocation2], %s5420
        // Predicated region
        $region33: #{tpu_custom_call.1} parent=31 // pred_check
          %p5422 = pneg %p117
        $region34: #{tpu_custom_call.1} parent=31 // pred_check_branch
          %5424 = sbr.rel (%p5422) target = $region36
        $region35: #{tpu_custom_call.1} parent=31 // pred_region
          %s5425 = smul.u32 4, %s22
          %s5427 = ssub.s32 512, 512
          %5428 = vsyncadd %s5418, %s5427
          %s5429 = smul.addr %s21, 8
          %s5430 = sadd.s32 %s5425, %s5429
          %s5431 = smul.addr %s5430, 128
          %s5432 = scalar_lea.hbm %s3, %s5431
          %s5434 = sshll.u32 %s5421, 4
          %s5435 = int_to_ptr.vmem [resolvable:$true] %s5434
          %5437 = dma.vmem_to_hbm [thread:$0]  %s5435, 512, %s5432, %s5418
        $region36: #{tpu_custom_call.1} parent=31 // pred_fallthru
          _
      $region32: #{tpu_custom_call.1} parent=5 // pred_fallthru
        _
      %p5438 = scmp.le.s32.totalorder 2, %s12
      // Predicated region
      $region37: #{tpu_custom_call.1} parent=5 // pred_check
        %p5439 = pneg %p5438
      $region38: #{tpu_custom_call.1} parent=5 // pred_check_branch
        %5441 = sbr.rel (%p5439) target = $region40
      $region39: #{tpu_custom_call.1} parent=5 // pred_region
        %s5442 = ssub.s32 %s12, 2
        // Predicated region
        $region41: #{tpu_custom_call.1} parent=39 // pred_check
          %p5443 = pneg %p123
        $region42: #{tpu_custom_call.1} parent=39 // pred_check_branch
          %5445 = sbr.rel (%p5443) target = $region44
        $region43: #{tpu_custom_call.1} parent=39 // pred_region
          %s5446 = sand.u32 %s108, 1
          %s5447 = scalar_lea.sflag [#allocation3], %s5446
          %s5448 = sand.u32 %s108, 1
          %s5449 = smul.addr %s5448, 32
          %s5450 = scalar_lea.vmem [#allocation2], %s5449
          %5451 = dma.done %s5447, 512
        $region44: #{tpu_custom_call.1} parent=39 // pred_fallthru
          _
      $region40: #{tpu_custom_call.1} parent=5 // pred_fallthru
        _
    $region6: #{tpu_custom_call.1} parent=1 // loop_footer
      %s16 = sadd.s32 1, %s12
    $region7: #{tpu_custom_call.1} parent=1 // loop_footer_branch
      %11 = sbr.rel target = $region3
    $region8: #{tpu_custom_call.1} parent=1 // loop_exit
      _
    %5452 = vsyncpa [#allocation3], 1
    %s5453 = scalar_lea.sflag [#allocation3], 1
    %5454 = vsyncpa %s5453, 1

</llo_original>
